<compile_context>
chip_gen: v7x
topology: tpu7x:2x2x1
jax: 0.10.0
libtpu: 0.0.40
codegen_flags: <defaults>
</compile_context>

<pallas_src>
import math
import jax
import jax.numpy as jnp
from jax.experimental import pallas as pl
from jax.experimental.pallas import tpu as pltpu

# MXU input precision for the conv matmuls (accumulation is always float32).
DOT_DTYPE = jnp.bfloat16


def _nbytes(a):
    return math.prod(a.shape) * a.dtype.itemsize


# ---------------------------------------------------------------------------
# Pallas kernel: fused (im2col + concat + matmul-accumulate + bias [+ ReLU]).
# ---------------------------------------------------------------------------
def _make_conv_kernel(tap_plan, n_src, n_seg, ho, relu):
    """tap_plan[seg][dh] = (src_ref_index, row_offset) for that vertical tap."""

    def kernel(*refs):
        src_refs = refs[:n_src]
        rhs_refs = refs[n_src:n_src + n_seg]
        b_ref = refs[n_src + n_seg]
        o_ref = refs[n_src + n_seg + 1]

        acc = None
        for seg in range(n_seg):
            for dh in range(3):
                si, off = tap_plan[seg][dh]
                lhs = src_refs[si][0, off:off + ho, :].astype(DOT_DTYPE)
                part = jnp.dot(lhs, rhs_refs[seg][dh],
                               preferred_element_type=jnp.float32)
                acc = part if acc is None else acc + part
        acc = acc + b_ref[...]           # (1, Wo*Cout) broadcasts over rows
        if relu:
            acc = jnp.maximum(acc, 0.0)
        o_ref[0, :, :] = acc

    return kernel


def conv3x3_reflect(xs, w, b, *, stride=1, relu=True):
    """3x3 conv (reflect padding=1) over the channel-concatenation of `xs`.

    xs : list of NHWC float32 tensors sharing (B, H, W)  (implicit concat).
    w  : (Cout, sum(Cin_seg), 3, 3) float32 (PyTorch layout);  b: (Cout,)
    Returns (B, Ho, Wo, Cout) float32.
    """
    B, H, W, _ = xs[0].shape
    for x in xs:
        assert x.shape[:3] == (B, H, W)
    assert H >= 2 and W >= 2, "reflect padding needs spatial dims >= 2"
    assert stride in (1, 2)
    Cout = w.shape[0]
    Ho = (H - 1) // stride + 1
    Wo = (W - 1) // stride + 1
    Hp, Wp = H + 2, W + 2
    n_lanes = Wo * Cout

    srcs, rhs_list, tap_plan = [], [], []
    wi = jnp.arange(Wp)[:, None]
    wo = jnp.arange(Wo)[None, :]
    cstart = 0
    for x in xs:
        Cs = x.shape[-1]
        xp = jnp.pad(x, ((0, 0), (1, 1), (1, 1), (0, 0)), mode="reflect")
        xp = xp.reshape(B, Hp, Wp * Cs).astype(DOT_DTYPE)
        if stride == 1:
            si = len(srcs)
            srcs.append(xp)
            tap_plan.append([(si, 0), (si, 1), (si, 2)])
        else:  # stride == 2: even/odd row split so kernel slices are contiguous
            se = len(srcs)
            srcs.append(xp[:, 0::2, :])          # padded rows 0, 2, 4, ...
            so = len(srcs)
            srcs.append(xp[:, 1::2, :])          # padded rows 1, 3, 5, ...
            tap_plan.append([(se, 0), (so, 0), (se, 1)])

        # Banded RHS_dh[(stride*w + dw)*Cs + c, w*Cout + co] = W[co, c, dh, dw]
        wt = jnp.transpose(w[:, cstart:cstart + Cs], (2, 3, 1, 0))  # (3,3,Cs,Cout)
        per_dh = []
        for dh in range(3):
            m = jnp.zeros((Wp * Cs, n_lanes), jnp.float32)
            for dw in range(3):
                sel = (wi == stride * wo + dw).astype(jnp.float32)
                m = m + jnp.kron(sel, wt[dh, dw])
            per_dh.append(m)
        rhs_list.append(jnp.stack(per_dh).astype(DOT_DTYPE))
        cstart += Cs

    # bias laid out to match the (w, cout) lane order of the output block
    bias_row = jnp.tile(b.astype(jnp.float32), Wo).reshape(1, n_lanes)

    in_specs = []
    for s in srcs:
        in_specs.append(pl.BlockSpec((1,) + s.shape[1:], lambda bb: (bb, 0, 0)))
    for r in rhs_list:
        in_specs.append(pl.BlockSpec(r.shape, lambda bb: (0, 0, 0)))
    in_specs.append(pl.BlockSpec((1, n_lanes), lambda bb: (0, 0)))

    flops = 2 * B * Ho * n_lanes * 3 * Wp * sum(int(x.shape[-1]) for x in xs)
    bytes_accessed = (sum(_nbytes(s) for s in srcs)
                      + sum(_nbytes(r) for r in rhs_list)
                      + _nbytes(bias_row)
                      + B * Ho * n_lanes * 4)

    kernel = _make_conv_kernel(tap_plan, len(srcs), len(xs), Ho, relu)
    out = pl.pallas_call(
        kernel,
        out_shape=jax.ShapeDtypeStruct((B, Ho, n_lanes), jnp.float32),
        grid=(B,),
        in_specs=in_specs,
        out_specs=pl.BlockSpec((1, Ho, n_lanes), lambda bb: (bb, 0, 0)),
        compiler_params=pltpu.CompilerParams(
            dimension_semantics=("parallel",)),
        cost_estimate=pl.CostEstimate(
            flops=flops, transcendentals=0, bytes_accessed=bytes_accessed),
    )(*srcs, *rhs_list, bias_row)

    return out.reshape(B, Ho, Wo, Cout)


# ---------------------------------------------------------------------------
# Bilinear x2 upsample, align_corners=True (matches nn.Upsample in the module).
# ---------------------------------------------------------------------------
def upsample_bilinear_x2(x):
    B, H, W, C = x.shape
    Ho, Wo = 2 * H, 2 * W

    def coords(n_in, n_out):
        if n_in == 1:
            z = jnp.zeros((n_out,), jnp.int32)
            return z, z, jnp.zeros((n_out,), jnp.float32)
        src = jnp.arange(n_out, dtype=jnp.float32) * (n_in - 1) / (n_out - 1)
        i0 = jnp.clip(jnp.floor(src).astype(jnp.int32), 0, n_in - 1)
        i1 = jnp.minimum(i0 + 1, n_in - 1)
        return i0, i1, src - i0.astype(jnp.float32)

    r0, r1, rf = coords(H, Ho)
    c0, c1, cf = coords(W, Wo)
    cfb = cf[None, None, :, None]
    rfb = rf[None, :, None, None]

    x_r0 = x[:, r0]
    x_r1 = x[:, r1]
    top = x_r0[:, :, c0] * (1.0 - cfb) + x_r0[:, :, c1] * cfb
    bot = x_r1[:, :, c0] * (1.0 - cfb) + x_r1[:, :, c1] * cfb
    return top * (1.0 - rfb) + bot * rfb


# ---------------------------------------------------------------------------
# Deterministic parameter init (PyTorch-Conv2d-like uniform bounds).
# ---------------------------------------------------------------------------
def _init_conv(key, cin, cout):
    k1, k2 = jax.random.split(key)
    bound = 1.0 / math.sqrt(cin * 9)
    w = jax.random.uniform(k1, (cout, cin, 3, 3), jnp.float32, -bound, bound)
    b = jax.random.uniform(k2, (cout,), jnp.float32, -bound, bound)
    return w, b


def init_params(key, num_layers, base):
    keys = iter(jax.random.split(key, 4 * num_layers + 8))
    params = {}
    params["inp"] = _init_conv(next(keys), 3, base)
    params["enc"] = []
    for i in range(num_layers):
        cin, cout = base * 2 ** i, base * 2 ** (i + 1)
        w1, b1 = _init_conv(next(keys), cin, cout)
        w2, b2 = _init_conv(next(keys), cout, cout)
        params["enc"].append((w1, b1, w2, b2))
    bott = base * 2 ** num_layers
    params["bottleneck"] = _init_conv(next(keys), bott, bott)
    params["dec"] = []
    for i in range(num_layers):
        if i == 0:
            cin = bott + base * 2 ** (num_layers - 1)
            cout = base * 2 ** (num_layers - 1)
        elif i < num_layers - 1:
            cin = base * 2 ** (num_layers - i) + base * 2 ** (num_layers - i - 1)
            cout = base * 2 ** (num_layers - i - 1)
        else:
            cin = base * 2 + base + 3
            cout = base
        w1, b1 = _init_conv(next(keys), cin, cout)
        w2, b2 = _init_conv(next(keys), cout, cout)
        params["dec"].append((w1, b1, w2, b2))
    params["out"] = _init_conv(next(keys), base, 1)
    return params


# ---------------------------------------------------------------------------
# UNet forward (matches the PyTorch module op-for-op; dropout p=0 is a no-op).
# ---------------------------------------------------------------------------
def unet_forward(params, x_nchw, num_layers):
    x_input = jnp.transpose(x_nchw, (0, 2, 3, 1))  # NCHW -> NHWC

    # inp: conv + relu
    x = conv3x3_reflect([x_input], *params["inp"], stride=1, relu=True)
    encoder_outs = [x]

    # encoder blocks: strided conv + relu, conv + relu
    for i in range(num_layers):
        w1, b1, w2, b2 = params["enc"][i]
        x = conv3x3_reflect([x], w1, b1, stride=2, relu=True)
        x = conv3x3_reflect([x], w2, b2, stride=1, relu=True)
        encoder_outs.append(x)

    # bottleneck + initial upsample
    x = conv3x3_reflect([encoder_outs[-1]], *params["bottleneck"],
                        stride=1, relu=True)
    x = upsample_bilinear_x2(x)

    # decoder blocks (skip concats are fused into the conv kernels)
    for i in range(num_layers):
        w1, b1, w2, b2 = params["dec"][i]
        if i < num_layers - 1:
            # torch order: Conv -> Upsample -> ReLU -> Conv -> ReLU
            x = conv3x3_reflect([x, encoder_outs[-(i + 2)]], w1, b1,
                                stride=1, relu=False)
            x = upsample_bilinear_x2(x)
            x = jnp.maximum(x, 0.0)
            x = conv3x3_reflect([x], w2, b2, stride=1, relu=True)
        else:
            # torch order: Conv -> Identity -> ReLU -> Conv -> ReLU
            x = conv3x3_reflect([x, encoder_outs[0], x_input], w1, b1,
                                stride=1, relu=True)
            x = conv3x3_reflect([x], w2, b2, stride=1, relu=True)

    out = conv3x3_reflect([x], *params["out"], stride=1, relu=False)
    return jnp.transpose(out, (0, 3, 1, 2))  # NHWC -> NCHW


if __name__ == "__main__":
    # Small configuration: num_layers=2, base_channels=8, spatial=16.
    # (num_layers=4 on 16x16 would shrink the bottleneck to 1x1, where reflect
    #  padding itself would be invalid, so we use 2 levels.)
    NUM_LAYERS = 2
    BASE = 8

    key = jax.random.PRNGKey(0)
    pkey, xkey = jax.random.split(key)
    params = init_params(pkey, NUM_LAYERS, BASE)

    x = jax.random.normal(xkey, (2, 3, 16, 16), jnp.float32)  # NCHW like PyTorch

    fwd = jax.jit(unet_forward, static_argnums=(2,))
    out = jax.block_until_ready(fwd(params, x, NUM_LAYERS))
    assert out.shape == (2, 1, 16, 16), out.shape
    print("KERNEL_OK")
</pallas_src>

<mosaic_0001>
module attributes {stable_mosaic.version = 11 : i64} {
  func.func @kernel(%arg0: i32, %arg1: memref<1x18x54xbf16, #tpu.memory_space<vmem>>, %arg2: memref<3x54x128xbf16, #tpu.memory_space<vmem>>, %arg3: memref<1x128xf32, #tpu.memory_space<vmem>>, %arg4: memref<1x16x128xf32, #tpu.memory_space<vmem>>) attributes {dimension_semantics = [#tpu.dimension_semantics<parallel>], iteration_bounds = array<i64: 2>, scalar_prefetch = 0 : i64, scratch_operands = 0 : i64, tpu.core_type = #tpu.core_type<tc>, window_params = [{transform_indices = @transform_0, window_bounds = array<i64: 1, 18, 54>}, {pipeline_mode = #tpu.pipeline_mode<synchronous>, transform_indices = @transform_1, window_bounds = array<i64: 3, 54, 128>}, {pipeline_mode = #tpu.pipeline_mode<synchronous>, transform_indices = @transform_2, window_bounds = array<i64: 1, 128>}, {transform_indices = @transform_3, window_bounds = array<i64: 1, 16, 128>}]} {
    %c0 = arith.constant 0 : index
    %c0_0 = arith.constant 0 : index
    %c0_1 = arith.constant 0 : index
    %0 = vector.load %arg1[%c0, %c0_0, %c0_1] : memref<1x18x54xbf16, #tpu.memory_space<vmem>>, vector<1x16x54xbf16>
    %1 = vector.shape_cast %0 : vector<1x16x54xbf16> to vector<16x54xbf16>
    %c0_2 = arith.constant 0 : index
    %c0_3 = arith.constant 0 : index
    %c0_4 = arith.constant 0 : index
    %2 = vector.load %arg2[%c0_2, %c0_3, %c0_4] : memref<3x54x128xbf16, #tpu.memory_space<vmem>>, vector<1x54x128xbf16>
    %3 = vector.shape_cast %2 : vector<1x54x128xbf16> to vector<54x128xbf16>
    %cst = arith.constant dense<0.000000e+00> : vector<16x128xf32>
    %4 = tpu.matmul %1, %3, %cst {dimension_numbers = #tpu.dot_dimension_numbers<[1], [0], [0], [1], [0, 0, 1, 1], [], []>} : vector<16x54xbf16>, vector<54x128xbf16>, vector<16x128xf32> -> vector<16x128xf32>
    %c0_5 = arith.constant 0 : index
    %c1 = arith.constant 1 : index
    %c0_6 = arith.constant 0 : index
    %5 = vector.load %arg1[%c0_5, %c1, %c0_6] : memref<1x18x54xbf16, #tpu.memory_space<vmem>>, vector<1x16x54xbf16>
    %6 = vector.shape_cast %5 : vector<1x16x54xbf16> to vector<16x54xbf16>
    %c1_7 = arith.constant 1 : index
    %c0_8 = arith.constant 0 : index
    %c0_9 = arith.constant 0 : index
    %7 = vector.load %arg2[%c1_7, %c0_8, %c0_9] : memref<3x54x128xbf16, #tpu.memory_space<vmem>>, vector<1x54x128xbf16>
    %8 = vector.shape_cast %7 : vector<1x54x128xbf16> to vector<54x128xbf16>
    %cst_10 = arith.constant dense<0.000000e+00> : vector<16x128xf32>
    %9 = tpu.matmul %6, %8, %cst_10 {dimension_numbers = #tpu.dot_dimension_numbers<[1], [0], [0], [1], [0, 0, 1, 1], [], []>} : vector<16x54xbf16>, vector<54x128xbf16>, vector<16x128xf32> -> vector<16x128xf32>
    %10 = arith.addf %4, %9 : vector<16x128xf32>
    %c0_11 = arith.constant 0 : index
    %c2 = arith.constant 2 : index
    %c0_12 = arith.constant 0 : index
    %11 = vector.load %arg1[%c0_11, %c2, %c0_12] : memref<1x18x54xbf16, #tpu.memory_space<vmem>>, vector<1x16x54xbf16>
    %12 = vector.shape_cast %11 : vector<1x16x54xbf16> to vector<16x54xbf16>
    %c2_13 = arith.constant 2 : index
    %c0_14 = arith.constant 0 : index
    %c0_15 = arith.constant 0 : index
    %13 = vector.load %arg2[%c2_13, %c0_14, %c0_15] : memref<3x54x128xbf16, #tpu.memory_space<vmem>>, vector<1x54x128xbf16>
    %14 = vector.shape_cast %13 : vector<1x54x128xbf16> to vector<54x128xbf16>
    %cst_16 = arith.constant dense<0.000000e+00> : vector<16x128xf32>
    %15 = tpu.matmul %12, %14, %cst_16 {dimension_numbers = #tpu.dot_dimension_numbers<[1], [0], [0], [1], [0, 0, 1, 1], [], []>} : vector<16x54xbf16>, vector<54x128xbf16>, vector<16x128xf32> -> vector<16x128xf32>
    %16 = arith.addf %10, %15 : vector<16x128xf32>
    %c0_17 = arith.constant 0 : index
    %c0_18 = arith.constant 0 : index
    %17 = vector.load %arg3[%c0_17, %c0_18] : memref<1x128xf32, #tpu.memory_space<vmem>>, vector<1x128xf32>
    %18 = vector.broadcast %17 : vector<1x128xf32> to vector<16x128xf32>
    %19 = arith.addf %16, %18 : vector<16x128xf32>
    %cst_19 = arith.constant 0.000000e+00 : f32
    %20 = vector.broadcast %cst_19 : f32 to vector<16x128xf32>
    %21 = arith.maximumf %19, %20 : vector<16x128xf32>
    %c0_20 = arith.constant 0 : index
    %c0_21 = arith.constant 0 : index
    %c0_22 = arith.constant 0 : index
    %22 = vector.load %arg4[%c0_20, %c0_21, %c0_22] : memref<1x16x128xf32, #tpu.memory_space<vmem>>, vector<1x16x128xf32>
    %23 = vector.shape_cast %22 : vector<1x16x128xf32> to vector<16x128xf32>
    %24 = vector.shape_cast %21 : vector<16x128xf32> to vector<1x16x128xf32>
    tpu.vector_store %arg4[%c0_20, %c0_21, %c0_22], %24 {strides = array<i32>} : memref<1x16x128xf32, #tpu.memory_space<vmem>>, vector<1x16x128xf32>,
    return
  }
  func.func @transform_0(%arg0: i32) -> (i32, i32, i32) {
    %c0_i32 = arith.constant 0 : i32
    %c0_i32_0 = arith.constant 0 : i32
    %c0_i32_1 = arith.constant 0 : i32
    return %arg0, %c0_i32, %c0_i32_0 : i32, i32, i32
  }
  func.func @transform_1(%arg0: i32) -> (i32, i32, i32) {
    %c0_i32 = arith.constant 0 : i32
    %c0_i32_0 = arith.constant 0 : i32
    %c0_i32_1 = arith.constant 0 : i32
    %c0_i32_2 = arith.constant 0 : i32
    return %c0_i32, %c0_i32_0, %c0_i32_1 : i32, i32, i32
  }
  func.func @transform_2(%arg0: i32) -> (i32, i32) {
    %c0_i32 = arith.constant 0 : i32
    %c0_i32_0 = arith.constant 0 : i32
    %c0_i32_1 = arith.constant 0 : i32
    return %c0_i32, %c0_i32_0 : i32, i32
  }
  func.func @transform_3(%arg0: i32) -> (i32, i32, i32) {
    %c0_i32 = arith.constant 0 : i32
    %c0_i32_0 = arith.constant 0 : i32
    %c0_i32_1 = arith.constant 0 : i32
    return %arg0, %c0_i32, %c0_i32_0 : i32, i32, i32
  }
}

module attributes {stable_mosaic.version = 11 : i64} {
  func.func @kernel(%arg0: i32, %arg1: memref<1x9x144xbf16, #tpu.memory_space<vmem>>, %arg2: memref<1x9x144xbf16, #tpu.memory_space<vmem>>, %arg3: memref<3x144x128xbf16, #tpu.memory_space<vmem>>, %arg4: memref<1x128xf32, #tpu.memory_space<vmem>>, %arg5: memref<1x8x128xf32, #tpu.memory_space<vmem>>) attributes {dimension_semantics = [#tpu.dimension_semantics<parallel>], iteration_bounds = array<i64: 2>, scalar_prefetch = 0 : i64, scratch_operands = 0 : i64, tpu.core_type = #tpu.core_type<tc>, window_params = [{transform_indices = @transform_0, window_bounds = array<i64: 1, 9, 144>}, {transform_indices = @transform_1, window_bounds = array<i64: 1, 9, 144>}, {pipeline_mode = #tpu.pipeline_mode<synchronous>, transform_indices = @transform_2, window_bounds = array<i64: 3, 144, 128>}, {pipeline_mode = #tpu.pipeline_mode<synchronous>, transform_indices = @transform_3, window_bounds = array<i64: 1, 128>}, {transform_indices = @transform_4, window_bounds = array<i64: 1, 8, 128>}]} {
    %c0 = arith.constant 0 : index
    %c0_0 = arith.constant 0 : index
    %c0_1 = arith.constant 0 : index
    %0 = vector.load %arg1[%c0, %c0_0, %c0_1] : memref<1x9x144xbf16, #tpu.memory_space<vmem>>, vector<1x8x144xbf16>
    %1 = vector.shape_cast %0 : vector<1x8x144xbf16> to vector<8x144xbf16>
    %c0_2 = arith.constant 0 : index
    %c0_3 = arith.constant 0 : index
    %c0_4 = arith.constant 0 : index
    %2 = vector.load %arg3[%c0_2, %c0_3, %c0_4] : memref<3x144x128xbf16, #tpu.memory_space<vmem>>, vector<1x144x128xbf16>
    %3 = vector.shape_cast %2 : vector<1x144x128xbf16> to vector<144x128xbf16>
    %cst = arith.constant dense<0.000000e+00> : vector<8x128xf32>
    %4 = tpu.matmul %1, %3, %cst {dimension_numbers = #tpu.dot_dimension_numbers<[1], [0], [0], [1], [0, 0, 1, 1], [], []>} : vector<8x144xbf16>, vector<144x128xbf16>, vector<8x128xf32> -> vector<8x128xf32>
    %c0_5 = arith.constant 0 : index
    %c0_6 = arith.constant 0 : index
    %c0_7 = arith.constant 0 : index
    %5 = vector.load %arg2[%c0_5, %c0_6, %c0_7] : memref<1x9x144xbf16, #tpu.memory_space<vmem>>, vector<1x8x144xbf16>
    %6 = vector.shape_cast %5 : vector<1x8x144xbf16> to vector<8x144xbf16>
    %c1 = arith.constant 1 : index
    %c0_8 = arith.constant 0 : index
    %c0_9 = arith.constant 0 : index
    %7 = vector.load %arg3[%c1, %c0_8, %c0_9] : memref<3x144x128xbf16, #tpu.memory_space<vmem>>, vector<1x144x128xbf16>
    %8 = vector.shape_cast %7 : vector<1x144x128xbf16> to vector<144x128xbf16>
    %cst_10 = arith.constant dense<0.000000e+00> : vector<8x128xf32>
    %9 = tpu.matmul %6, %8, %cst_10 {dimension_numbers = #tpu.dot_dimension_numbers<[1], [0], [0], [1], [0, 0, 1, 1], [], []>} : vector<8x144xbf16>, vector<144x128xbf16>, vector<8x128xf32> -> vector<8x128xf32>
    %10 = arith.addf %4, %9 : vector<8x128xf32>
    %c0_11 = arith.constant 0 : index
    %c1_12 = arith.constant 1 : index
    %c0_13 = arith.constant 0 : index
    %11 = vector.load %arg1[%c0_11, %c1_12, %c0_13] : memref<1x9x144xbf16, #tpu.memory_space<vmem>>, vector<1x8x144xbf16>
    %12 = vector.shape_cast %11 : vector<1x8x144xbf16> to vector<8x144xbf16>
    %c2 = arith.constant 2 : index
    %c0_14 = arith.constant 0 : index
    %c0_15 = arith.constant 0 : index
    %13 = vector.load %arg3[%c2, %c0_14, %c0_15] : memref<3x144x128xbf16, #tpu.memory_space<vmem>>, vector<1x144x128xbf16>
    %14 = vector.shape_cast %13 : vector<1x144x128xbf16> to vector<144x128xbf16>
    %cst_16 = arith.constant dense<0.000000e+00> : vector<8x128xf32>
    %15 = tpu.matmul %12, %14, %cst_16 {dimension_numbers = #tpu.dot_dimension_numbers<[1], [0], [0], [1], [0, 0, 1, 1], [], []>} : vector<8x144xbf16>, vector<144x128xbf16>, vector<8x128xf32> -> vector<8x128xf32>
    %16 = arith.addf %10, %15 : vector<8x128xf32>
    %c0_17 = arith.constant 0 : index
    %c0_18 = arith.constant 0 : index
    %17 = vector.load %arg4[%c0_17, %c0_18] : memref<1x128xf32, #tpu.memory_space<vmem>>, vector<1x128xf32>
    %18 = vector.broadcast %17 : vector<1x128xf32> to vector<8x128xf32>
    %19 = arith.addf %16, %18 : vector<8x128xf32>
    %cst_19 = arith.constant 0.000000e+00 : f32
    %20 = vector.broadcast %cst_19 : f32 to vector<8x128xf32>
    %21 = arith.maximumf %19, %20 : vector<8x128xf32>
    %c0_20 = arith.constant 0 : index
    %c0_21 = arith.constant 0 : index
    %c0_22 = arith.constant 0 : index
    %22 = vector.load %arg5[%c0_20, %c0_21, %c0_22] : memref<1x8x128xf32, #tpu.memory_space<vmem>>, vector<1x8x128xf32>
    %23 = vector.shape_cast %22 : vector<1x8x128xf32> to vector<8x128xf32>
    %24 = vector.shape_cast %21 : vector<8x128xf32> to vector<1x8x128xf32>
    tpu.vector_store %arg5[%c0_20, %c0_21, %c0_22], %24 {strides = array<i32>} : memref<1x8x128xf32, #tpu.memory_space<vmem>>, vector<1x8x128xf32>,
    return
  }
  func.func @transform_0(%arg0: i32) -> (i32, i32, i32) {
    %c0_i32 = arith.constant 0 : i32
    %c0_i32_0 = arith.constant 0 : i32
    %c0_i32_1 = arith.constant 0 : i32
    return %arg0, %c0_i32, %c0_i32_0 : i32, i32, i32
  }
  func.func @transform_1(%arg0: i32) -> (i32, i32, i32) {
    %c0_i32 = arith.constant 0 : i32
    %c0_i32_0 = arith.constant 0 : i32
    %c0_i32_1 = arith.constant 0 : i32
    return %arg0, %c0_i32, %c0_i32_0 : i32, i32, i32
  }
  func.func @transform_2(%arg0: i32) -> (i32, i32, i32) {
    %c0_i32 = arith.constant 0 : i32
    %c0_i32_0 = arith.constant 0 : i32
    %c0_i32_1 = arith.constant 0 : i32
    %c0_i32_2 = arith.constant 0 : i32
    return %c0_i32, %c0_i32_0, %c0_i32_1 : i32, i32, i32
  }
  func.func @transform_3(%arg0: i32) -> (i32, i32) {
    %c0_i32 = arith.constant 0 : i32
    %c0_i32_0 = arith.constant 0 : i32
    %c0_i32_1 = arith.constant 0 : i32
    return %c0_i32, %c0_i32_0 : i32, i32
  }
  func.func @transform_4(%arg0: i32) -> (i32, i32, i32) {
    %c0_i32 = arith.constant 0 : i32
    %c0_i32_0 = arith.constant 0 : i32
    %c0_i32_1 = arith.constant 0 : i32
    return %arg0, %c0_i32, %c0_i32_0 : i32, i32, i32
  }
}

module attributes {stable_mosaic.version = 11 : i64} {
  func.func @kernel(%arg0: i32, %arg1: memref<1x10x160xbf16, #tpu.memory_space<vmem>>, %arg2: memref<3x160x128xbf16, #tpu.memory_space<vmem>>, %arg3: memref<1x128xf32, #tpu.memory_space<vmem>>, %arg4: memref<1x8x128xf32, #tpu.memory_space<vmem>>) attributes {dimension_semantics = [#tpu.dimension_semantics<parallel>], iteration_bounds = array<i64: 2>, scalar_prefetch = 0 : i64, scratch_operands = 0 : i64, tpu.core_type = #tpu.core_type<tc>, window_params = [{transform_indices = @transform_0, window_bounds = array<i64: 1, 10, 160>}, {pipeline_mode = #tpu.pipeline_mode<synchronous>, transform_indices = @transform_1, window_bounds = array<i64: 3, 160, 128>}, {pipeline_mode = #tpu.pipeline_mode<synchronous>, transform_indices = @transform_2, window_bounds = array<i64: 1, 128>}, {transform_indices = @transform_3, window_bounds = array<i64: 1, 8, 128>}]} {
    %c0 = arith.constant 0 : index
    %c0_0 = arith.constant 0 : index
    %c0_1 = arith.constant 0 : index
    %0 = vector.load %arg1[%c0, %c0_0, %c0_1] : memref<1x10x160xbf16, #tpu.memory_space<vmem>>, vector<1x8x160xbf16>
    %1 = vector.shape_cast %0 : vector<1x8x160xbf16> to vector<8x160xbf16>
    %c0_2 = arith.constant 0 : index
    %c0_3 = arith.constant 0 : index
    %c0_4 = arith.constant 0 : index
    %2 = vector.load %arg2[%c0_2, %c0_3, %c0_4] : memref<3x160x128xbf16, #tpu.memory_space<vmem>>, vector<1x160x128xbf16>
    %3 = vector.shape_cast %2 : vector<1x160x128xbf16> to vector<160x128xbf16>
    %cst = arith.constant dense<0.000000e+00> : vector<8x128xf32>
    %4 = tpu.matmul %1, %3, %cst {dimension_numbers = #tpu.dot_dimension_numbers<[1], [0], [0], [1], [0, 0, 1, 1], [], []>} : vector<8x160xbf16>, vector<160x128xbf16>, vector<8x128xf32> -> vector<8x128xf32>
    %c0_5 = arith.constant 0 : index
    %c1 = arith.constant 1 : index
    %c0_6 = arith.constant 0 : index
    %5 = vector.load %arg1[%c0_5, %c1, %c0_6] : memref<1x10x160xbf16, #tpu.memory_space<vmem>>, vector<1x8x160xbf16>
    %6 = vector.shape_cast %5 : vector<1x8x160xbf16> to vector<8x160xbf16>
    %c1_7 = arith.constant 1 : index
    %c0_8 = arith.constant 0 : index
    %c0_9 = arith.constant 0 : index
    %7 = vector.load %arg2[%c1_7, %c0_8, %c0_9] : memref<3x160x128xbf16, #tpu.memory_space<vmem>>, vector<1x160x128xbf16>
    %8 = vector.shape_cast %7 : vector<1x160x128xbf16> to vector<160x128xbf16>
    %cst_10 = arith.constant dense<0.000000e+00> : vector<8x128xf32>
    %9 = tpu.matmul %6, %8, %cst_10 {dimension_numbers = #tpu.dot_dimension_numbers<[1], [0], [0], [1], [0, 0, 1, 1], [], []>} : vector<8x160xbf16>, vector<160x128xbf16>, vector<8x128xf32> -> vector<8x128xf32>
    %10 = arith.addf %4, %9 : vector<8x128xf32>
    %c0_11 = arith.constant 0 : index
    %c2 = arith.constant 2 : index
    %c0_12 = arith.constant 0 : index
    %11 = vector.load %arg1[%c0_11, %c2, %c0_12] : memref<1x10x160xbf16, #tpu.memory_space<vmem>>, vector<1x8x160xbf16>
    %12 = vector.shape_cast %11 : vector<1x8x160xbf16> to vector<8x160xbf16>
    %c2_13 = arith.constant 2 : index
    %c0_14 = arith.constant 0 : index
    %c0_15 = arith.constant 0 : index
    %13 = vector.load %arg2[%c2_13, %c0_14, %c0_15] : memref<3x160x128xbf16, #tpu.memory_space<vmem>>, vector<1x160x128xbf16>
    %14 = vector.shape_cast %13 : vector<1x160x128xbf16> to vector<160x128xbf16>
    %cst_16 = arith.constant dense<0.000000e+00> : vector<8x128xf32>
    %15 = tpu.matmul %12, %14, %cst_16 {dimension_numbers = #tpu.dot_dimension_numbers<[1], [0], [0], [1], [0, 0, 1, 1], [], []>} : vector<8x160xbf16>, vector<160x128xbf16>, vector<8x128xf32> -> vector<8x128xf32>
    %16 = arith.addf %10, %15 : vector<8x128xf32>
    %c0_17 = arith.constant 0 : index
    %c0_18 = arith.constant 0 : index
    %17 = vector.load %arg3[%c0_17, %c0_18] : memref<1x128xf32, #tpu.memory_space<vmem>>, vector<1x128xf32>
    %18 = vector.broadcast %17 : vector<1x128xf32> to vector<8x128xf32>
    %19 = arith.addf %16, %18 : vector<8x128xf32>
    %cst_19 = arith.constant 0.000000e+00 : f32
    %20 = vector.broadcast %cst_19 : f32 to vector<8x128xf32>
    %21 = arith.maximumf %19, %20 : vector<8x128xf32>
    %c0_20 = arith.constant 0 : index
    %c0_21 = arith.constant 0 : index
    %c0_22 = arith.constant 0 : index
    %22 = vector.load %arg4[%c0_20, %c0_21, %c0_22] : memref<1x8x128xf32, #tpu.memory_space<vmem>>, vector<1x8x128xf32>
    %23 = vector.shape_cast %22 : vector<1x8x128xf32> to vector<8x128xf32>
    %24 = vector.shape_cast %21 : vector<8x128xf32> to vector<1x8x128xf32>
    tpu.vector_store %arg4[%c0_20, %c0_21, %c0_22], %24 {strides = array<i32>} : memref<1x8x128xf32, #tpu.memory_space<vmem>>, vector<1x8x128xf32>,
    return
  }
  func.func @transform_0(%arg0: i32) -> (i32, i32, i32) {
    %c0_i32 = arith.constant 0 : i32
    %c0_i32_0 = arith.constant 0 : i32
    %c0_i32_1 = arith.constant 0 : i32
    return %arg0, %c0_i32, %c0_i32_0 : i32, i32, i32
  }
  func.func @transform_1(%arg0: i32) -> (i32, i32, i32) {
    %c0_i32 = arith.constant 0 : i32
    %c0_i32_0 = arith.constant 0 : i32
    %c0_i32_1 = arith.constant 0 : i32
    %c0_i32_2 = arith.constant 0 : i32
    return %c0_i32, %c0_i32_0, %c0_i32_1 : i32, i32, i32
  }
  func.func @transform_2(%arg0: i32) -> (i32, i32) {
    %c0_i32 = arith.constant 0 : i32
    %c0_i32_0 = arith.constant 0 : i32
    %c0_i32_1 = arith.constant 0 : i32
    return %c0_i32, %c0_i32_0 : i32, i32
  }
  func.func @transform_3(%arg0: i32) -> (i32, i32, i32) {
    %c0_i32 = arith.constant 0 : i32
    %c0_i32_0 = arith.constant 0 : i32
    %c0_i32_1 = arith.constant 0 : i32
    return %arg0, %c0_i32, %c0_i32_0 : i32, i32, i32
  }
}

module attributes {stable_mosaic.version = 11 : i64} {
  func.func @kernel(%arg0: i32, %arg1: memref<1x5x160xbf16, #tpu.memory_space<vmem>>, %arg2: memref<1x5x160xbf16, #tpu.memory_space<vmem>>, %arg3: memref<3x160x128xbf16, #tpu.memory_space<vmem>>, %arg4: memref<1x128xf32, #tpu.memory_space<vmem>>, %arg5: memref<1x4x128xf32, #tpu.memory_space<vmem>>) attributes {dimension_semantics = [#tpu.dimension_semantics<parallel>], iteration_bounds = array<i64: 2>, scalar_prefetch = 0 : i64, scratch_operands = 0 : i64, tpu.core_type = #tpu.core_type<tc>, window_params = [{transform_indices = @transform_0, window_bounds = array<i64: 1, 5, 160>}, {transform_indices = @transform_1, window_bounds = array<i64: 1, 5, 160>}, {pipeline_mode = #tpu.pipeline_mode<synchronous>, transform_indices = @transform_2, window_bounds = array<i64: 3, 160, 128>}, {pipeline_mode = #tpu.pipeline_mode<synchronous>, transform_indices = @transform_3, window_bounds = array<i64: 1, 128>}, {transform_indices = @transform_4, window_bounds = array<i64: 1, 4, 128>}]} {
    %c0 = arith.constant 0 : index
    %c0_0 = arith.constant 0 : index
    %c0_1 = arith.constant 0 : index
    %0 = vector.load %arg1[%c0, %c0_0, %c0_1] : memref<1x5x160xbf16, #tpu.memory_space<vmem>>, vector<1x4x160xbf16>
    %1 = vector.shape_cast %0 : vector<1x4x160xbf16> to vector<4x160xbf16>
    %c0_2 = arith.constant 0 : index
    %c0_3 = arith.constant 0 : index
    %c0_4 = arith.constant 0 : index
    %2 = vector.load %arg3[%c0_2, %c0_3, %c0_4] : memref<3x160x128xbf16, #tpu.memory_space<vmem>>, vector<1x160x128xbf16>
    %3 = vector.shape_cast %2 : vector<1x160x128xbf16> to vector<160x128xbf16>
    %cst = arith.constant dense<0.000000e+00> : vector<4x128xf32>
    %4 = tpu.matmul %1, %3, %cst {dimension_numbers = #tpu.dot_dimension_numbers<[1], [0], [0], [1], [0, 0, 1, 1], [], []>} : vector<4x160xbf16>, vector<160x128xbf16>, vector<4x128xf32> -> vector<4x128xf32>
    %c0_5 = arith.constant 0 : index
    %c0_6 = arith.constant 0 : index
    %c0_7 = arith.constant 0 : index
    %5 = vector.load %arg2[%c0_5, %c0_6, %c0_7] : memref<1x5x160xbf16, #tpu.memory_space<vmem>>, vector<1x4x160xbf16>
    %6 = vector.shape_cast %5 : vector<1x4x160xbf16> to vector<4x160xbf16>
    %c1 = arith.constant 1 : index
    %c0_8 = arith.constant 0 : index
    %c0_9 = arith.constant 0 : index
    %7 = vector.load %arg3[%c1, %c0_8, %c0_9] : memref<3x160x128xbf16, #tpu.memory_space<vmem>>, vector<1x160x128xbf16>
    %8 = vector.shape_cast %7 : vector<1x160x128xbf16> to vector<160x128xbf16>
    %cst_10 = arith.constant dense<0.000000e+00> : vector<4x128xf32>
    %9 = tpu.matmul %6, %8, %cst_10 {dimension_numbers = #tpu.dot_dimension_numbers<[1], [0], [0], [1], [0, 0, 1, 1], [], []>} : vector<4x160xbf16>, vector<160x128xbf16>, vector<4x128xf32> -> vector<4x128xf32>
    %10 = arith.addf %4, %9 : vector<4x128xf32>
    %c0_11 = arith.constant 0 : index
    %c1_12 = arith.constant 1 : index
    %c0_13 = arith.constant 0 : index
    %11 = vector.load %arg1[%c0_11, %c1_12, %c0_13] : memref<1x5x160xbf16, #tpu.memory_space<vmem>>, vector<1x4x160xbf16>
    %12 = vector.shape_cast %11 : vector<1x4x160xbf16> to vector<4x160xbf16>
    %c2 = arith.constant 2 : index
    %c0_14 = arith.constant 0 : index
    %c0_15 = arith.constant 0 : index
    %13 = vector.load %arg3[%c2, %c0_14, %c0_15] : memref<3x160x128xbf16, #tpu.memory_space<vmem>>, vector<1x160x128xbf16>
    %14 = vector.shape_cast %13 : vector<1x160x128xbf16> to vector<160x128xbf16>
    %cst_16 = arith.constant dense<0.000000e+00> : vector<4x128xf32>
    %15 = tpu.matmul %12, %14, %cst_16 {dimension_numbers = #tpu.dot_dimension_numbers<[1], [0], [0], [1], [0, 0, 1, 1], [], []>} : vector<4x160xbf16>, vector<160x128xbf16>, vector<4x128xf32> -> vector<4x128xf32>
    %16 = arith.addf %10, %15 : vector<4x128xf32>
    %c0_17 = arith.constant 0 : index
    %c0_18 = arith.constant 0 : index
    %17 = vector.load %arg4[%c0_17, %c0_18] : memref<1x128xf32, #tpu.memory_space<vmem>>, vector<1x128xf32>
    %18 = vector.broadcast %17 : vector<1x128xf32> to vector<4x128xf32>
    %19 = arith.addf %16, %18 : vector<4x128xf32>
    %cst_19 = arith.constant 0.000000e+00 : f32
    %20 = vector.broadcast %cst_19 : f32 to vector<4x128xf32>
    %21 = arith.maximumf %19, %20 : vector<4x128xf32>
    %c0_20 = arith.constant 0 : index
    %c0_21 = arith.constant 0 : index
    %c0_22 = arith.constant 0 : index
    %22 = vector.load %arg5[%c0_20, %c0_21, %c0_22] : memref<1x4x128xf32, #tpu.memory_space<vmem>>, vector<1x4x128xf32>
    %23 = vector.shape_cast %22 : vector<1x4x128xf32> to vector<4x128xf32>
    %24 = vector.shape_cast %21 : vector<4x128xf32> to vector<1x4x128xf32>
    tpu.vector_store %arg5[%c0_20, %c0_21, %c0_22], %24 {strides = array<i32>} : memref<1x4x128xf32, #tpu.memory_space<vmem>>, vector<1x4x128xf32>,
    return
  }
  func.func @transform_0(%arg0: i32) -> (i32, i32, i32) {
    %c0_i32 = arith.constant 0 : i32
    %c0_i32_0 = arith.constant 0 : i32
    %c0_i32_1 = arith.constant 0 : i32
    return %arg0, %c0_i32, %c0_i32_0 : i32, i32, i32
  }
  func.func @transform_1(%arg0: i32) -> (i32, i32, i32) {
    %c0_i32 = arith.constant 0 : i32
    %c0_i32_0 = arith.constant 0 : i32
    %c0_i32_1 = arith.constant 0 : i32
    return %arg0, %c0_i32, %c0_i32_0 : i32, i32, i32
  }
  func.func @transform_2(%arg0: i32) -> (i32, i32, i32) {
    %c0_i32 = arith.constant 0 : i32
    %c0_i32_0 = arith.constant 0 : i32
    %c0_i32_1 = arith.constant 0 : i32
    %c0_i32_2 = arith.constant 0 : i32
    return %c0_i32, %c0_i32_0, %c0_i32_1 : i32, i32, i32
  }
  func.func @transform_3(%arg0: i32) -> (i32, i32) {
    %c0_i32 = arith.constant 0 : i32
    %c0_i32_0 = arith.constant 0 : i32
    %c0_i32_1 = arith.constant 0 : i32
    return %c0_i32, %c0_i32_0 : i32, i32
  }
  func.func @transform_4(%arg0: i32) -> (i32, i32, i32) {
    %c0_i32 = arith.constant 0 : i32
    %c0_i32_0 = arith.constant 0 : i32
    %c0_i32_1 = arith.constant 0 : i32
    return %arg0, %c0_i32, %c0_i32_0 : i32, i32, i32
  }
}

module attributes {stable_mosaic.version = 11 : i64} {
  func.func @kernel(%arg0: i32, %arg1: memref<1x6x192xbf16, #tpu.memory_space<vmem>>, %arg2: memref<3x192x128xbf16, #tpu.memory_space<vmem>>, %arg3: memref<1x128xf32, #tpu.memory_space<vmem>>, %arg4: memref<1x4x128xf32, #tpu.memory_space<vmem>>) attributes {dimension_semantics = [#tpu.dimension_semantics<parallel>], iteration_bounds = array<i64: 2>, scalar_prefetch = 0 : i64, scratch_operands = 0 : i64, tpu.core_type = #tpu.core_type<tc>, window_params = [{transform_indices = @transform_0, window_bounds = array<i64: 1, 6, 192>}, {pipeline_mode = #tpu.pipeline_mode<synchronous>, transform_indices = @transform_1, window_bounds = array<i64: 3, 192, 128>}, {pipeline_mode = #tpu.pipeline_mode<synchronous>, transform_indices = @transform_2, window_bounds = array<i64: 1, 128>}, {transform_indices = @transform_3, window_bounds = array<i64: 1, 4, 128>}]} {
    %c0 = arith.constant 0 : index
    %c0_0 = arith.constant 0 : index
    %c0_1 = arith.constant 0 : index
    %0 = vector.load %arg1[%c0, %c0_0, %c0_1] : memref<1x6x192xbf16, #tpu.memory_space<vmem>>, vector<1x4x192xbf16>
    %1 = vector.shape_cast %0 : vector<1x4x192xbf16> to vector<4x192xbf16>
    %c0_2 = arith.constant 0 : index
    %c0_3 = arith.constant 0 : index
    %c0_4 = arith.constant 0 : index
    %2 = vector.load %arg2[%c0_2, %c0_3, %c0_4] : memref<3x192x128xbf16, #tpu.memory_space<vmem>>, vector<1x192x128xbf16>
    %3 = vector.shape_cast %2 : vector<1x192x128xbf16> to vector<192x128xbf16>
    %cst = arith.constant dense<0.000000e+00> : vector<4x128xf32>
    %4 = tpu.matmul %1, %3, %cst {dimension_numbers = #tpu.dot_dimension_numbers<[1], [0], [0], [1], [0, 0, 1, 1], [], []>} : vector<4x192xbf16>, vector<192x128xbf16>, vector<4x128xf32> -> vector<4x128xf32>
    %c0_5 = arith.constant 0 : index
    %c1 = arith.constant 1 : index
    %c0_6 = arith.constant 0 : index
    %5 = vector.load %arg1[%c0_5, %c1, %c0_6] : memref<1x6x192xbf16, #tpu.memory_space<vmem>>, vector<1x4x192xbf16>
    %6 = vector.shape_cast %5 : vector<1x4x192xbf16> to vector<4x192xbf16>
    %c1_7 = arith.constant 1 : index
    %c0_8 = arith.constant 0 : index
    %c0_9 = arith.constant 0 : index
    %7 = vector.load %arg2[%c1_7, %c0_8, %c0_9] : memref<3x192x128xbf16, #tpu.memory_space<vmem>>, vector<1x192x128xbf16>
    %8 = vector.shape_cast %7 : vector<1x192x128xbf16> to vector<192x128xbf16>
    %cst_10 = arith.constant dense<0.000000e+00> : vector<4x128xf32>
    %9 = tpu.matmul %6, %8, %cst_10 {dimension_numbers = #tpu.dot_dimension_numbers<[1], [0], [0], [1], [0, 0, 1, 1], [], []>} : vector<4x192xbf16>, vector<192x128xbf16>, vector<4x128xf32> -> vector<4x128xf32>
    %10 = arith.addf %4, %9 : vector<4x128xf32>
    %c0_11 = arith.constant 0 : index
    %c2 = arith.constant 2 : index
    %c0_12 = arith.constant 0 : index
    %11 = vector.load %arg1[%c0_11, %c2, %c0_12] : memref<1x6x192xbf16, #tpu.memory_space<vmem>>, vector<1x4x192xbf16>
    %12 = vector.shape_cast %11 : vector<1x4x192xbf16> to vector<4x192xbf16>
    %c2_13 = arith.constant 2 : index
    %c0_14 = arith.constant 0 : index
    %c0_15 = arith.constant 0 : index
    %13 = vector.load %arg2[%c2_13, %c0_14, %c0_15] : memref<3x192x128xbf16, #tpu.memory_space<vmem>>, vector<1x192x128xbf16>
    %14 = vector.shape_cast %13 : vector<1x192x128xbf16> to vector<192x128xbf16>
    %cst_16 = arith.constant dense<0.000000e+00> : vector<4x128xf32>
    %15 = tpu.matmul %12, %14, %cst_16 {dimension_numbers = #tpu.dot_dimension_numbers<[1], [0], [0], [1], [0, 0, 1, 1], [], []>} : vector<4x192xbf16>, vector<192x128xbf16>, vector<4x128xf32> -> vector<4x128xf32>
    %16 = arith.addf %10, %15 : vector<4x128xf32>
    %c0_17 = arith.constant 0 : index
    %c0_18 = arith.constant 0 : index
    %17 = vector.load %arg3[%c0_17, %c0_18] : memref<1x128xf32, #tpu.memory_space<vmem>>, vector<1x128xf32>
    %18 = vector.broadcast %17 : vector<1x128xf32> to vector<4x128xf32>
    %19 = arith.addf %16, %18 : vector<4x128xf32>
    %cst_19 = arith.constant 0.000000e+00 : f32
    %20 = vector.broadcast %cst_19 : f32 to vector<4x128xf32>
    %21 = arith.maximumf %19, %20 : vector<4x128xf32>
    %c0_20 = arith.constant 0 : index
    %c0_21 = arith.constant 0 : index
    %c0_22 = arith.constant 0 : index
    %22 = vector.load %arg4[%c0_20, %c0_21, %c0_22] : memref<1x4x128xf32, #tpu.memory_space<vmem>>, vector<1x4x128xf32>
    %23 = vector.shape_cast %22 : vector<1x4x128xf32> to vector<4x128xf32>
    %24 = vector.shape_cast %21 : vector<4x128xf32> to vector<1x4x128xf32>
    tpu.vector_store %arg4[%c0_20, %c0_21, %c0_22], %24 {strides = array<i32>} : memref<1x4x128xf32, #tpu.memory_space<vmem>>, vector<1x4x128xf32>,
    return
  }
  func.func @transform_0(%arg0: i32) -> (i32, i32, i32) {
    %c0_i32 = arith.constant 0 : i32
    %c0_i32_0 = arith.constant 0 : i32
    %c0_i32_1 = arith.constant 0 : i32
    return %arg0, %c0_i32, %c0_i32_0 : i32, i32, i32
  }
  func.func @transform_1(%arg0: i32) -> (i32, i32, i32) {
    %c0_i32 = arith.constant 0 : i32
    %c0_i32_0 = arith.constant 0 : i32
    %c0_i32_1 = arith.constant 0 : i32
    %c0_i32_2 = arith.constant 0 : i32
    return %c0_i32, %c0_i32_0, %c0_i32_1 : i32, i32, i32
  }
  func.func @transform_2(%arg0: i32) -> (i32, i32) {
    %c0_i32 = arith.constant 0 : i32
    %c0_i32_0 = arith.constant 0 : i32
    %c0_i32_1 = arith.constant 0 : i32
    return %c0_i32, %c0_i32_0 : i32, i32
  }
  func.func @transform_3(%arg0: i32) -> (i32, i32, i32) {
    %c0_i32 = arith.constant 0 : i32
    %c0_i32_0 = arith.constant 0 : i32
    %c0_i32_1 = arith.constant 0 : i32
    return %arg0, %c0_i32, %c0_i32_0 : i32, i32, i32
  }
}

module attributes {stable_mosaic.version = 11 : i64} {
  func.func @kernel(%arg0: i32, %arg1: memref<1x10x320xbf16, #tpu.memory_space<vmem>>, %arg2: memref<1x10x160xbf16, #tpu.memory_space<vmem>>, %arg3: memref<3x320x128xbf16, #tpu.memory_space<vmem>>, %arg4: memref<3x160x128xbf16, #tpu.memory_space<vmem>>, %arg5: memref<1x128xf32, #tpu.memory_space<vmem>>, %arg6: memref<1x8x128xf32, #tpu.memory_space<vmem>>) attributes {dimension_semantics = [#tpu.dimension_semantics<parallel>], iteration_bounds = array<i64: 2>, scalar_prefetch = 0 : i64, scratch_operands = 0 : i64, tpu.core_type = #tpu.core_type<tc>, window_params = [{transform_indices = @transform_0, window_bounds = array<i64: 1, 10, 320>}, {transform_indices = @transform_1, window_bounds = array<i64: 1, 10, 160>}, {pipeline_mode = #tpu.pipeline_mode<synchronous>, transform_indices = @transform_2, window_bounds = array<i64: 3, 320, 128>}, {pipeline_mode = #tpu.pipeline_mode<synchronous>, transform_indices = @transform_3, window_bounds = array<i64: 3, 160, 128>}, {pipeline_mode = #tpu.pipeline_mode<synchronous>, transform_indices = @transform_4, window_bounds = array<i64: 1, 128>}, {transform_indices = @transform_5, window_bounds = array<i64: 1, 8, 128>}]} {
    %c0 = arith.constant 0 : index
    %c0_0 = arith.constant 0 : index
    %c0_1 = arith.constant 0 : index
    %0 = vector.load %arg1[%c0, %c0_0, %c0_1] : memref<1x10x320xbf16, #tpu.memory_space<vmem>>, vector<1x8x320xbf16>
    %1 = vector.shape_cast %0 : vector<1x8x320xbf16> to vector<8x320xbf16>
    %c0_2 = arith.constant 0 : index
    %c0_3 = arith.constant 0 : index
    %c0_4 = arith.constant 0 : index
    %2 = vector.load %arg3[%c0_2, %c0_3, %c0_4] : memref<3x320x128xbf16, #tpu.memory_space<vmem>>, vector<1x320x128xbf16>
    %3 = vector.shape_cast %2 : vector<1x320x128xbf16> to vector<320x128xbf16>
    %cst = arith.constant dense<0.000000e+00> : vector<8x128xf32>
    %4 = tpu.matmul %1, %3, %cst {dimension_numbers = #tpu.dot_dimension_numbers<[1], [0], [0], [1], [0, 0, 1, 1], [], []>} : vector<8x320xbf16>, vector<320x128xbf16>, vector<8x128xf32> -> vector<8x128xf32>
    %c0_5 = arith.constant 0 : index
    %c1 = arith.constant 1 : index
    %c0_6 = arith.constant 0 : index
    %5 = vector.load %arg1[%c0_5, %c1, %c0_6] : memref<1x10x320xbf16, #tpu.memory_space<vmem>>, vector<1x8x320xbf16>
    %6 = vector.shape_cast %5 : vector<1x8x320xbf16> to vector<8x320xbf16>
    %c1_7 = arith.constant 1 : index
    %c0_8 = arith.constant 0 : index
    %c0_9 = arith.constant 0 : index
    %7 = vector.load %arg3[%c1_7, %c0_8, %c0_9] : memref<3x320x128xbf16, #tpu.memory_space<vmem>>, vector<1x320x128xbf16>
    %8 = vector.shape_cast %7 : vector<1x320x128xbf16> to vector<320x128xbf16>
    %cst_10 = arith.constant dense<0.000000e+00> : vector<8x128xf32>
    %9 = tpu.matmul %6, %8, %cst_10 {dimension_numbers = #tpu.dot_dimension_numbers<[1], [0], [0], [1], [0, 0, 1, 1], [], []>} : vector<8x320xbf16>, vector<320x128xbf16>, vector<8x128xf32> -> vector<8x128xf32>
    %10 = arith.addf %4, %9 : vector<8x128xf32>
    %c0_11 = arith.constant 0 : index
    %c2 = arith.constant 2 : index
    %c0_12 = arith.constant 0 : index
    %11 = vector.load %arg1[%c0_11, %c2, %c0_12] : memref<1x10x320xbf16, #tpu.memory_space<vmem>>, vector<1x8x320xbf16>
    %12 = vector.shape_cast %11 : vector<1x8x320xbf16> to vector<8x320xbf16>
    %c2_13 = arith.constant 2 : index
    %c0_14 = arith.constant 0 : index
    %c0_15 = arith.constant 0 : index
    %13 = vector.load %arg3[%c2_13, %c0_14, %c0_15] : memref<3x320x128xbf16, #tpu.memory_space<vmem>>, vector<1x320x128xbf16>
    %14 = vector.shape_cast %13 : vector<1x320x128xbf16> to vector<320x128xbf16>
    %cst_16 = arith.constant dense<0.000000e+00> : vector<8x128xf32>
    %15 = tpu.matmul %12, %14, %cst_16 {dimension_numbers = #tpu.dot_dimension_numbers<[1], [0], [0], [1], [0, 0, 1, 1], [], []>} : vector<8x320xbf16>, vector<320x128xbf16>, vector<8x128xf32> -> vector<8x128xf32>
    %16 = arith.addf %10, %15 : vector<8x128xf32>
    %c0_17 = arith.constant 0 : index
    %c0_18 = arith.constant 0 : index
    %c0_19 = arith.constant 0 : index
    %17 = vector.load %arg2[%c0_17, %c0_18, %c0_19] : memref<1x10x160xbf16, #tpu.memory_space<vmem>>, vector<1x8x160xbf16>
    %18 = vector.shape_cast %17 : vector<1x8x160xbf16> to vector<8x160xbf16>
    %c0_20 = arith.constant 0 : index
    %c0_21 = arith.constant 0 : index
    %c0_22 = arith.constant 0 : index
    %19 = vector.load %arg4[%c0_20, %c0_21, %c0_22] : memref<3x160x128xbf16, #tpu.memory_space<vmem>>, vector<1x160x128xbf16>
    %20 = vector.shape_cast %19 : vector<1x160x128xbf16> to vector<160x128xbf16>
    %cst_23 = arith.constant dense<0.000000e+00> : vector<8x128xf32>
    %21 = tpu.matmul %18, %20, %cst_23 {dimension_numbers = #tpu.dot_dimension_numbers<[1], [0], [0], [1], [0, 0, 1, 1], [], []>} : vector<8x160xbf16>, vector<160x128xbf16>, vector<8x128xf32> -> vector<8x128xf32>
    %22 = arith.addf %16, %21 : vector<8x128xf32>
    %c0_24 = arith.constant 0 : index
    %c1_25 = arith.constant 1 : index
    %c0_26 = arith.constant 0 : index
    %23 = vector.load %arg2[%c0_24, %c1_25, %c0_26] : memref<1x10x160xbf16, #tpu.memory_space<vmem>>, vector<1x8x160xbf16>
    %24 = vector.shape_cast %23 : vector<1x8x160xbf16> to vector<8x160xbf16>
    %c1_27 = arith.constant 1 : index
    %c0_28 = arith.constant 0 : index
    %c0_29 = arith.constant 0 : index
    %25 = vector.load %arg4[%c1_27, %c0_28, %c0_29] : memref<3x160x128xbf16, #tpu.memory_space<vmem>>, vector<1x160x128xbf16>
    %26 = vector.shape_cast %25 : vector<1x160x128xbf16> to vector<160x128xbf16>
    %cst_30 = arith.constant dense<0.000000e+00> : vector<8x128xf32>
    %27 = tpu.matmul %24, %26, %cst_30 {dimension_numbers = #tpu.dot_dimension_numbers<[1], [0], [0], [1], [0, 0, 1, 1], [], []>} : vector<8x160xbf16>, vector<160x128xbf16>, vector<8x128xf32> -> vector<8x128xf32>
    %28 = arith.addf %22, %27 : vector<8x128xf32>
    %c0_31 = arith.constant 0 : index
    %c2_32 = arith.constant 2 : index
    %c0_33 = arith.constant 0 : index
    %29 = vector.load %arg2[%c0_31, %c2_32, %c0_33] : memref<1x10x160xbf16, #tpu.memory_space<vmem>>, vector<1x8x160xbf16>
    %30 = vector.shape_cast %29 : vector<1x8x160xbf16> to vector<8x160xbf16>
    %c2_34 = arith.constant 2 : index
    %c0_35 = arith.constant 0 : index
    %c0_36 = arith.constant 0 : index
    %31 = vector.load %arg4[%c2_34, %c0_35, %c0_36] : memref<3x160x128xbf16, #tpu.memory_space<vmem>>, vector<1x160x128xbf16>
    %32 = vector.shape_cast %31 : vector<1x160x128xbf16> to vector<160x128xbf16>
    %cst_37 = arith.constant dense<0.000000e+00> : vector<8x128xf32>
    %33 = tpu.matmul %30, %32, %cst_37 {dimension_numbers = #tpu.dot_dimension_numbers<[1], [0], [0], [1], [0, 0, 1, 1], [], []>} : vector<8x160xbf16>, vector<160x128xbf16>, vector<8x128xf32> -> vector<8x128xf32>
    %34 = arith.addf %28, %33 : vector<8x128xf32>
    %c0_38 = arith.constant 0 : index
    %c0_39 = arith.constant 0 : index
    %35 = vector.load %arg5[%c0_38, %c0_39] : memref<1x128xf32, #tpu.memory_space<vmem>>, vector<1x128xf32>
    %36 = vector.broadcast %35 : vector<1x128xf32> to vector<8x128xf32>
    %37 = arith.addf %34, %36 : vector<8x128xf32>
    %c0_40 = arith.constant 0 : index
    %c0_41 = arith.constant 0 : index
    %c0_42 = arith.constant 0 : index
    %38 = vector.load %arg6[%c0_40, %c0_41, %c0_42] : memref<1x8x128xf32, #tpu.memory_space<vmem>>, vector<1x8x128xf32>
    %39 = vector.shape_cast %38 : vector<1x8x128xf32> to vector<8x128xf32>
    %40 = vector.shape_cast %37 : vector<8x128xf32> to vector<1x8x128xf32>
    tpu.vector_store %arg6[%c0_40, %c0_41, %c0_42], %40 {strides = array<i32>} : memref<1x8x128xf32, #tpu.memory_space<vmem>>, vector<1x8x128xf32>,
    return
  }
  func.func @transform_0(%arg0: i32) -> (i32, i32, i32) {
    %c0_i32 = arith.constant 0 : i32
    %c0_i32_0 = arith.constant 0 : i32
    %c0_i32_1 = arith.constant 0 : i32
    return %arg0, %c0_i32, %c0_i32_0 : i32, i32, i32
  }
  func.func @transform_1(%arg0: i32) -> (i32, i32, i32) {
    %c0_i32 = arith.constant 0 : i32
    %c0_i32_0 = arith.constant 0 : i32
    %c0_i32_1 = arith.constant 0 : i32
    return %arg0, %c0_i32, %c0_i32_0 : i32, i32, i32
  }
  func.func @transform_2(%arg0: i32) -> (i32, i32, i32) {
    %c0_i32 = arith.constant 0 : i32
    %c0_i32_0 = arith.constant 0 : i32
    %c0_i32_1 = arith.constant 0 : i32
    %c0_i32_2 = arith.constant 0 : i32
    return %c0_i32, %c0_i32_0, %c0_i32_1 : i32, i32, i32
  }
  func.func @transform_3(%arg0: i32) -> (i32, i32, i32) {
    %c0_i32 = arith.constant 0 : i32
    %c0_i32_0 = arith.constant 0 : i32
    %c0_i32_1 = arith.constant 0 : i32
    %c0_i32_2 = arith.constant 0 : i32
    return %c0_i32, %c0_i32_0, %c0_i32_1 : i32, i32, i32
  }
  func.func @transform_4(%arg0: i32) -> (i32, i32) {
    %c0_i32 = arith.constant 0 : i32
    %c0_i32_0 = arith.constant 0 : i32
    %c0_i32_1 = arith.constant 0 : i32
    return %c0_i32, %c0_i32_0 : i32, i32
  }
  func.func @transform_5(%arg0: i32) -> (i32, i32, i32) {
    %c0_i32 = arith.constant 0 : i32
    %c0_i32_0 = arith.constant 0 : i32
    %c0_i32_1 = arith.constant 0 : i32
    return %arg0, %c0_i32, %c0_i32_0 : i32, i32, i32
  }
}

module attributes {stable_mosaic.version = 11 : i64} {
  func.func @kernel(%arg0: i32, %arg1: memref<1x18x288xbf16, #tpu.memory_space<vmem>>, %arg2: memref<3x288x256xbf16, #tpu.memory_space<vmem>>, %arg3: memref<1x256xf32, #tpu.memory_space<vmem>>, %arg4: memref<1x16x256xf32, #tpu.memory_space<vmem>>) attributes {dimension_semantics = [#tpu.dimension_semantics<parallel>], iteration_bounds = array<i64: 2>, scalar_prefetch = 0 : i64, scratch_operands = 0 : i64, tpu.core_type = #tpu.core_type<tc>, window_params = [{transform_indices = @transform_0, window_bounds = array<i64: 1, 18, 288>}, {pipeline_mode = #tpu.pipeline_mode<synchronous>, transform_indices = @transform_1, window_bounds = array<i64: 3, 288, 256>}, {pipeline_mode = #tpu.pipeline_mode<synchronous>, transform_indices = @transform_2, window_bounds = array<i64: 1, 256>}, {transform_indices = @transform_3, window_bounds = array<i64: 1, 16, 256>}]} {
    %c0 = arith.constant 0 : index
    %c0_0 = arith.constant 0 : index
    %c0_1 = arith.constant 0 : index
    %0 = vector.load %arg1[%c0, %c0_0, %c0_1] : memref<1x18x288xbf16, #tpu.memory_space<vmem>>, vector<1x16x288xbf16>
    %1 = vector.shape_cast %0 : vector<1x16x288xbf16> to vector<16x288xbf16>
    %c0_2 = arith.constant 0 : index
    %c0_3 = arith.constant 0 : index
    %c0_4 = arith.constant 0 : index
    %2 = vector.load %arg2[%c0_2, %c0_3, %c0_4] : memref<3x288x256xbf16, #tpu.memory_space<vmem>>, vector<1x288x256xbf16>
    %3 = vector.shape_cast %2 : vector<1x288x256xbf16> to vector<288x256xbf16>
    %cst = arith.constant dense<0.000000e+00> : vector<16x256xf32>
    %4 = tpu.matmul %1, %3, %cst {dimension_numbers = #tpu.dot_dimension_numbers<[1], [0], [0], [1], [0, 0, 1, 1], [], []>} : vector<16x288xbf16>, vector<288x256xbf16>, vector<16x256xf32> -> vector<16x256xf32>
    %c0_5 = arith.constant 0 : index
    %c1 = arith.constant 1 : index
    %c0_6 = arith.constant 0 : index
    %5 = vector.load %arg1[%c0_5, %c1, %c0_6] : memref<1x18x288xbf16, #tpu.memory_space<vmem>>, vector<1x16x288xbf16>
    %6 = vector.shape_cast %5 : vector<1x16x288xbf16> to vector<16x288xbf16>
    %c1_7 = arith.constant 1 : index
    %c0_8 = arith.constant 0 : index
    %c0_9 = arith.constant 0 : index
    %7 = vector.load %arg2[%c1_7, %c0_8, %c0_9] : memref<3x288x256xbf16, #tpu.memory_space<vmem>>, vector<1x288x256xbf16>
    %8 = vector.shape_cast %7 : vector<1x288x256xbf16> to vector<288x256xbf16>
    %cst_10 = arith.constant dense<0.000000e+00> : vector<16x256xf32>
    %9 = tpu.matmul %6, %8, %cst_10 {dimension_numbers = #tpu.dot_dimension_numbers<[1], [0], [0], [1], [0, 0, 1, 1], [], []>} : vector<16x288xbf16>, vector<288x256xbf16>, vector<16x256xf32> -> vector<16x256xf32>
    %10 = arith.addf %4, %9 : vector<16x256xf32>
    %c0_11 = arith.constant 0 : index
    %c2 = arith.constant 2 : index
    %c0_12 = arith.constant 0 : index
    %11 = vector.load %arg1[%c0_11, %c2, %c0_12] : memref<1x18x288xbf16, #tpu.memory_space<vmem>>, vector<1x16x288xbf16>
    %12 = vector.shape_cast %11 : vector<1x16x288xbf16> to vector<16x288xbf16>
    %c2_13 = arith.constant 2 : index
    %c0_14 = arith.constant 0 : index
    %c0_15 = arith.constant 0 : index
    %13 = vector.load %arg2[%c2_13, %c0_14, %c0_15] : memref<3x288x256xbf16, #tpu.memory_space<vmem>>, vector<1x288x256xbf16>
    %14 = vector.shape_cast %13 : vector<1x288x256xbf16> to vector<288x256xbf16>
    %cst_16 = arith.constant dense<0.000000e+00> : vector<16x256xf32>
    %15 = tpu.matmul %12, %14, %cst_16 {dimension_numbers = #tpu.dot_dimension_numbers<[1], [0], [0], [1], [0, 0, 1, 1], [], []>} : vector<16x288xbf16>, vector<288x256xbf16>, vector<16x256xf32> -> vector<16x256xf32>
    %16 = arith.addf %10, %15 : vector<16x256xf32>
    %c0_17 = arith.constant 0 : index
    %c0_18 = arith.constant 0 : index
    %17 = vector.load %arg3[%c0_17, %c0_18] : memref<1x256xf32, #tpu.memory_space<vmem>>, vector<1x256xf32>
    %18 = vector.broadcast %17 : vector<1x256xf32> to vector<16x256xf32>
    %19 = arith.addf %16, %18 : vector<16x256xf32>
    %cst_19 = arith.constant 0.000000e+00 : f32
    %20 = vector.broadcast %cst_19 : f32 to vector<16x256xf32>
    %21 = arith.maximumf %19, %20 : vector<16x256xf32>
    %c0_20 = arith.constant 0 : index
    %c0_21 = arith.constant 0 : index
    %c0_22 = arith.constant 0 : index
    %22 = vector.load %arg4[%c0_20, %c0_21, %c0_22] : memref<1x16x256xf32, #tpu.memory_space<vmem>>, vector<1x16x256xf32>
    %23 = vector.shape_cast %22 : vector<1x16x256xf32> to vector<16x256xf32>
    %24 = vector.shape_cast %21 : vector<16x256xf32> to vector<1x16x256xf32>
    tpu.vector_store %arg4[%c0_20, %c0_21, %c0_22], %24 {strides = array<i32>} : memref<1x16x256xf32, #tpu.memory_space<vmem>>, vector<1x16x256xf32>,
    return
  }
  func.func @transform_0(%arg0: i32) -> (i32, i32, i32) {
    %c0_i32 = arith.constant 0 : i32
    %c0_i32_0 = arith.constant 0 : i32
    %c0_i32_1 = arith.constant 0 : i32
    return %arg0, %c0_i32, %c0_i32_0 : i32, i32, i32
  }
  func.func @transform_1(%arg0: i32) -> (i32, i32, i32) {
    %c0_i32 = arith.constant 0 : i32
    %c0_i32_0 = arith.constant 0 : i32
    %c0_i32_1 = arith.constant 0 : i32
    %c0_i32_2 = arith.constant 0 : i32
    return %c0_i32, %c0_i32_0, %c0_i32_1 : i32, i32, i32
  }
  func.func @transform_2(%arg0: i32) -> (i32, i32) {
    %c0_i32 = arith.constant 0 : i32
    %c0_i32_0 = arith.constant 0 : i32
    %c0_i32_1 = arith.constant 0 : i32
    return %c0_i32, %c0_i32_0 : i32, i32
  }
  func.func @transform_3(%arg0: i32) -> (i32, i32, i32) {
    %c0_i32 = arith.constant 0 : i32
    %c0_i32_0 = arith.constant 0 : i32
    %c0_i32_1 = arith.constant 0 : i32
    return %arg0, %c0_i32, %c0_i32_0 : i32, i32, i32
  }
}

module attributes {stable_mosaic.version = 11 : i64} {
  func.func @kernel(%arg0: i32, %arg1: memref<1x18x288xbf16, #tpu.memory_space<vmem>>, %arg2: memref<1x18x144xbf16, #tpu.memory_space<vmem>>, %arg3: memref<1x18x54xbf16, #tpu.memory_space<vmem>>, %arg4: memref<3x288x128xbf16, #tpu.memory_space<vmem>>, %arg5: memref<3x144x128xbf16, #tpu.memory_space<vmem>>, %arg6: memref<3x54x128xbf16, #tpu.memory_space<vmem>>, %arg7: memref<1x128xf32, #tpu.memory_space<vmem>>, %arg8: memref<1x16x128xf32, #tpu.memory_space<vmem>>) attributes {dimension_semantics = [#tpu.dimension_semantics<parallel>], iteration_bounds = array<i64: 2>, scalar_prefetch = 0 : i64, scratch_operands = 0 : i64, tpu.core_type = #tpu.core_type<tc>, window_params = [{transform_indices = @transform_0, window_bounds = array<i64: 1, 18, 288>}, {transform_indices = @transform_1, window_bounds = array<i64: 1, 18, 144>}, {transform_indices = @transform_2, window_bounds = array<i64: 1, 18, 54>}, {pipeline_mode = #tpu.pipeline_mode<synchronous>, transform_indices = @transform_3, window_bounds = array<i64: 3, 288, 128>}, {pipeline_mode = #tpu.pipeline_mode<synchronous>, transform_indices = @transform_4, window_bounds = array<i64: 3, 144, 128>}, {pipeline_mode = #tpu.pipeline_mode<synchronous>, transform_indices = @transform_5, window_bounds = array<i64: 3, 54, 128>}, {pipeline_mode = #tpu.pipeline_mode<synchronous>, transform_indices = @transform_6, window_bounds = array<i64: 1, 128>}, {transform_indices = @transform_7, window_bounds = array<i64: 1, 16, 128>}]} {
    %c0 = arith.constant 0 : index
    %c0_0 = arith.constant 0 : index
    %c0_1 = arith.constant 0 : index
    %0 = vector.load %arg1[%c0, %c0_0, %c0_1] : memref<1x18x288xbf16, #tpu.memory_space<vmem>>, vector<1x16x288xbf16>
    %1 = vector.shape_cast %0 : vector<1x16x288xbf16> to vector<16x288xbf16>
    %c0_2 = arith.constant 0 : index
    %c0_3 = arith.constant 0 : index
    %c0_4 = arith.constant 0 : index
    %2 = vector.load %arg4[%c0_2, %c0_3, %c0_4] : memref<3x288x128xbf16, #tpu.memory_space<vmem>>, vector<1x288x128xbf16>
    %3 = vector.shape_cast %2 : vector<1x288x128xbf16> to vector<288x128xbf16>
    %cst = arith.constant dense<0.000000e+00> : vector<16x128xf32>
    %4 = tpu.matmul %1, %3, %cst {dimension_numbers = #tpu.dot_dimension_numbers<[1], [0], [0], [1], [0, 0, 1, 1], [], []>} : vector<16x288xbf16>, vector<288x128xbf16>, vector<16x128xf32> -> vector<16x128xf32>
    %c0_5 = arith.constant 0 : index
    %c1 = arith.constant 1 : index
    %c0_6 = arith.constant 0 : index
    %5 = vector.load %arg1[%c0_5, %c1, %c0_6] : memref<1x18x288xbf16, #tpu.memory_space<vmem>>, vector<1x16x288xbf16>
    %6 = vector.shape_cast %5 : vector<1x16x288xbf16> to vector<16x288xbf16>
    %c1_7 = arith.constant 1 : index
    %c0_8 = arith.constant 0 : index
    %c0_9 = arith.constant 0 : index
    %7 = vector.load %arg4[%c1_7, %c0_8, %c0_9] : memref<3x288x128xbf16, #tpu.memory_space<vmem>>, vector<1x288x128xbf16>
    %8 = vector.shape_cast %7 : vector<1x288x128xbf16> to vector<288x128xbf16>
    %cst_10 = arith.constant dense<0.000000e+00> : vector<16x128xf32>
    %9 = tpu.matmul %6, %8, %cst_10 {dimension_numbers = #tpu.dot_dimension_numbers<[1], [0], [0], [1], [0, 0, 1, 1], [], []>} : vector<16x288xbf16>, vector<288x128xbf16>, vector<16x128xf32> -> vector<16x128xf32>
    %10 = arith.addf %4, %9 : vector<16x128xf32>
    %c0_11 = arith.constant 0 : index
    %c2 = arith.constant 2 : index
    %c0_12 = arith.constant 0 : index
    %11 = vector.load %arg1[%c0_11, %c2, %c0_12] : memref<1x18x288xbf16, #tpu.memory_space<vmem>>, vector<1x16x288xbf16>
    %12 = vector.shape_cast %11 : vector<1x16x288xbf16> to vector<16x288xbf16>
    %c2_13 = arith.constant 2 : index
    %c0_14 = arith.constant 0 : index
    %c0_15 = arith.constant 0 : index
    %13 = vector.load %arg4[%c2_13, %c0_14, %c0_15] : memref<3x288x128xbf16, #tpu.memory_space<vmem>>, vector<1x288x128xbf16>
    %14 = vector.shape_cast %13 : vector<1x288x128xbf16> to vector<288x128xbf16>
    %cst_16 = arith.constant dense<0.000000e+00> : vector<16x128xf32>
    %15 = tpu.matmul %12, %14, %cst_16 {dimension_numbers = #tpu.dot_dimension_numbers<[1], [0], [0], [1], [0, 0, 1, 1], [], []>} : vector<16x288xbf16>, vector<288x128xbf16>, vector<16x128xf32> -> vector<16x128xf32>
    %16 = arith.addf %10, %15 : vector<16x128xf32>
    %c0_17 = arith.constant 0 : index
    %c0_18 = arith.constant 0 : index
    %c0_19 = arith.constant 0 : index
    %17 = vector.load %arg2[%c0_17, %c0_18, %c0_19] : memref<1x18x144xbf16, #tpu.memory_space<vmem>>, vector<1x16x144xbf16>
    %18 = vector.shape_cast %17 : vector<1x16x144xbf16> to vector<16x144xbf16>
    %c0_20 = arith.constant 0 : index
    %c0_21 = arith.constant 0 : index
    %c0_22 = arith.constant 0 : index
    %19 = vector.load %arg5[%c0_20, %c0_21, %c0_22] : memref<3x144x128xbf16, #tpu.memory_space<vmem>>, vector<1x144x128xbf16>
    %20 = vector.shape_cast %19 : vector<1x144x128xbf16> to vector<144x128xbf16>
    %cst_23 = arith.constant dense<0.000000e+00> : vector<16x128xf32>
    %21 = tpu.matmul %18, %20, %cst_23 {dimension_numbers = #tpu.dot_dimension_numbers<[1], [0], [0], [1], [0, 0, 1, 1], [], []>} : vector<16x144xbf16>, vector<144x128xbf16>, vector<16x128xf32> -> vector<16x128xf32>
    %22 = arith.addf %16, %21 : vector<16x128xf32>
    %c0_24 = arith.constant 0 : index
    %c1_25 = arith.constant 1 : index
    %c0_26 = arith.constant 0 : index
    %23 = vector.load %arg2[%c0_24, %c1_25, %c0_26] : memref<1x18x144xbf16, #tpu.memory_space<vmem>>, vector<1x16x144xbf16>
    %24 = vector.shape_cast %23 : vector<1x16x144xbf16> to vector<16x144xbf16>
    %c1_27 = arith.constant 1 : index
    %c0_28 = arith.constant 0 : index
    %c0_29 = arith.constant 0 : index
    %25 = vector.load %arg5[%c1_27, %c0_28, %c0_29] : memref<3x144x128xbf16, #tpu.memory_space<vmem>>, vector<1x144x128xbf16>
    %26 = vector.shape_cast %25 : vector<1x144x128xbf16> to vector<144x128xbf16>
    %cst_30 = arith.constant dense<0.000000e+00> : vector<16x128xf32>
    %27 = tpu.matmul %24, %26, %cst_30 {dimension_numbers = #tpu.dot_dimension_numbers<[1], [0], [0], [1], [0, 0, 1, 1], [], []>} : vector<16x144xbf16>, vector<144x128xbf16>, vector<16x128xf32> -> vector<16x128xf32>
    %28 = arith.addf %22, %27 : vector<16x128xf32>
    %c0_31 = arith.constant 0 : index
    %c2_32 = arith.constant 2 : index
    %c0_33 = arith.constant 0 : index
    %29 = vector.load %arg2[%c0_31, %c2_32, %c0_33] : memref<1x18x144xbf16, #tpu.memory_space<vmem>>, vector<1x16x144xbf16>
    %30 = vector.shape_cast %29 : vector<1x16x144xbf16> to vector<16x144xbf16>
    %c2_34 = arith.constant 2 : index
    %c0_35 = arith.constant 0 : index
    %c0_36 = arith.constant 0 : index
    %31 = vector.load %arg5[%c2_34, %c0_35, %c0_36] : memref<3x144x128xbf16, #tpu.memory_space<vmem>>, vector<1x144x128xbf16>
    %32 = vector.shape_cast %31 : vector<1x144x128xbf16> to vector<144x128xbf16>
    %cst_37 = arith.constant dense<0.000000e+00> : vector<16x128xf32>
    %33 = tpu.matmul %30, %32, %cst_37 {dimension_numbers = #tpu.dot_dimension_numbers<[1], [0], [0], [1], [0, 0, 1, 1], [], []>} : vector<16x144xbf16>, vector<144x128xbf16>, vector<16x128xf32> -> vector<16x128xf32>
    %34 = arith.addf %28, %33 : vector<16x128xf32>
    %c0_38 = arith.constant 0 : index
    %c0_39 = arith.constant 0 : index
    %c0_40 = arith.constant 0 : index
    %35 = vector.load %arg3[%c0_38, %c0_39, %c0_40] : memref<1x18x54xbf16, #tpu.memory_space<vmem>>, vector<1x16x54xbf16>
    %36 = vector.shape_cast %35 : vector<1x16x54xbf16> to vector<16x54xbf16>
    %c0_41 = arith.constant 0 : index
    %c0_42 = arith.constant 0 : index
    %c0_43 = arith.constant 0 : index
    %37 = vector.load %arg6[%c0_41, %c0_42, %c0_43] : memref<3x54x128xbf16, #tpu.memory_space<vmem>>, vector<1x54x128xbf16>
    %38 = vector.shape_cast %37 : vector<1x54x128xbf16> to vector<54x128xbf16>
    %cst_44 = arith.constant dense<0.000000e+00> : vector<16x128xf32>
    %39 = tpu.matmul %36, %38, %cst_44 {dimension_numbers = #tpu.dot_dimension_numbers<[1], [0], [0], [1], [0, 0, 1, 1], [], []>} : vector<16x54xbf16>, vector<54x128xbf16>, vector<16x128xf32> -> vector<16x128xf32>
    %40 = arith.addf %34, %39 : vector<16x128xf32>
    %c0_45 = arith.constant 0 : index
    %c1_46 = arith.constant 1 : index
    %c0_47 = arith.constant 0 : index
    %41 = vector.load %arg3[%c0_45, %c1_46, %c0_47] : memref<1x18x54xbf16, #tpu.memory_space<vmem>>, vector<1x16x54xbf16>
    %42 = vector.shape_cast %41 : vector<1x16x54xbf16> to vector<16x54xbf16>
    %c1_48 = arith.constant 1 : index
    %c0_49 = arith.constant 0 : index
    %c0_50 = arith.constant 0 : index
    %43 = vector.load %arg6[%c1_48, %c0_49, %c0_50] : memref<3x54x128xbf16, #tpu.memory_space<vmem>>, vector<1x54x128xbf16>
    %44 = vector.shape_cast %43 : vector<1x54x128xbf16> to vector<54x128xbf16>
    %cst_51 = arith.constant dense<0.000000e+00> : vector<16x128xf32>
    %45 = tpu.matmul %42, %44, %cst_51 {dimension_numbers = #tpu.dot_dimension_numbers<[1], [0], [0], [1], [0, 0, 1, 1], [], []>} : vector<16x54xbf16>, vector<54x128xbf16>, vector<16x128xf32> -> vector<16x128xf32>
    %46 = arith.addf %40, %45 : vector<16x128xf32>
    %c0_52 = arith.constant 0 : index
    %c2_53 = arith.constant 2 : index
    %c0_54 = arith.constant 0 : index
    %47 = vector.load %arg3[%c0_52, %c2_53, %c0_54] : memref<1x18x54xbf16, #tpu.memory_space<vmem>>, vector<1x16x54xbf16>
    %48 = vector.shape_cast %47 : vector<1x16x54xbf16> to vector<16x54xbf16>
    %c2_55 = arith.constant 2 : index
    %c0_56 = arith.constant 0 : index
    %c0_57 = arith.constant 0 : index
    %49 = vector.load %arg6[%c2_55, %c0_56, %c0_57] : memref<3x54x128xbf16, #tpu.memory_space<vmem>>, vector<1x54x128xbf16>
    %50 = vector.shape_cast %49 : vector<1x54x128xbf16> to vector<54x128xbf16>
    %cst_58 = arith.constant dense<0.000000e+00> : vector<16x128xf32>
    %51 = tpu.matmul %48, %50, %cst_58 {dimension_numbers = #tpu.dot_dimension_numbers<[1], [0], [0], [1], [0, 0, 1, 1], [], []>} : vector<16x54xbf16>, vector<54x128xbf16>, vector<16x128xf32> -> vector<16x128xf32>
    %52 = arith.addf %46, %51 : vector<16x128xf32>
    %c0_59 = arith.constant 0 : index
    %c0_60 = arith.constant 0 : index
    %53 = vector.load %arg7[%c0_59, %c0_60] : memref<1x128xf32, #tpu.memory_space<vmem>>, vector<1x128xf32>
    %54 = vector.broadcast %53 : vector<1x128xf32> to vector<16x128xf32>
    %55 = arith.addf %52, %54 : vector<16x128xf32>
    %cst_61 = arith.constant 0.000000e+00 : f32
    %56 = vector.broadcast %cst_61 : f32 to vector<16x128xf32>
    %57 = arith.maximumf %55, %56 : vector<16x128xf32>
    %c0_62 = arith.constant 0 : index
    %c0_63 = arith.constant 0 : index
    %c0_64 = arith.constant 0 : index
    %58 = vector.load %arg8[%c0_62, %c0_63, %c0_64] : memref<1x16x128xf32, #tpu.memory_space<vmem>>, vector<1x16x128xf32>
    %59 = vector.shape_cast %58 : vector<1x16x128xf32> to vector<16x128xf32>
    %60 = vector.shape_cast %57 : vector<16x128xf32> to vector<1x16x128xf32>
    tpu.vector_store %arg8[%c0_62, %c0_63, %c0_64], %60 {strides = array<i32>} : memref<1x16x128xf32, #tpu.memory_space<vmem>>, vector<1x16x128xf32>,
    return
  }
  func.func @transform_0(%arg0: i32) -> (i32, i32, i32) {
    %c0_i32 = arith.constant 0 : i32
    %c0_i32_0 = arith.constant 0 : i32
    %c0_i32_1 = arith.constant 0 : i32
    return %arg0, %c0_i32, %c0_i32_0 : i32, i32, i32
  }
  func.func @transform_1(%arg0: i32) -> (i32, i32, i32) {
    %c0_i32 = arith.constant 0 : i32
    %c0_i32_0 = arith.constant 0 : i32
    %c0_i32_1 = arith.constant 0 : i32
    return %arg0, %c0_i32, %c0_i32_0 : i32, i32, i32
  }
  func.func @transform_2(%arg0: i32) -> (i32, i32, i32) {
    %c0_i32 = arith.constant 0 : i32
    %c0_i32_0 = arith.constant 0 : i32
    %c0_i32_1 = arith.constant 0 : i32
    return %arg0, %c0_i32, %c0_i32_0 : i32, i32, i32
  }
  func.func @transform_3(%arg0: i32) -> (i32, i32, i32) {
    %c0_i32 = arith.constant 0 : i32
    %c0_i32_0 = arith.constant 0 : i32
    %c0_i32_1 = arith.constant 0 : i32
    %c0_i32_2 = arith.constant 0 : i32
    return %c0_i32, %c0_i32_0, %c0_i32_1 : i32, i32, i32
  }
  func.func @transform_4(%arg0: i32) -> (i32, i32, i32) {
    %c0_i32 = arith.constant 0 : i32
    %c0_i32_0 = arith.constant 0 : i32
    %c0_i32_1 = arith.constant 0 : i32
    %c0_i32_2 = arith.constant 0 : i32
    return %c0_i32, %c0_i32_0, %c0_i32_1 : i32, i32, i32
  }
  func.func @transform_5(%arg0: i32) -> (i32, i32, i32) {
    %c0_i32 = arith.constant 0 : i32
    %c0_i32_0 = arith.constant 0 : i32
    %c0_i32_1 = arith.constant 0 : i32
    %c0_i32_2 = arith.constant 0 : i32
    return %c0_i32, %c0_i32_0, %c0_i32_1 : i32, i32, i32
  }
  func.func @transform_6(%arg0: i32) -> (i32, i32) {
    %c0_i32 = arith.constant 0 : i32
    %c0_i32_0 = arith.constant 0 : i32
    %c0_i32_1 = arith.constant 0 : i32
    return %c0_i32, %c0_i32_0 : i32, i32
  }
  func.func @transform_7(%arg0: i32) -> (i32, i32, i32) {
    %c0_i32 = arith.constant 0 : i32
    %c0_i32_0 = arith.constant 0 : i32
    %c0_i32_1 = arith.constant 0 : i32
    return %arg0, %c0_i32, %c0_i32_0 : i32, i32, i32
  }
}

module attributes {stable_mosaic.version = 11 : i64} {
  func.func @kernel(%arg0: i32, %arg1: memref<1x18x144xbf16, #tpu.memory_space<vmem>>, %arg2: memref<3x144x128xbf16, #tpu.memory_space<vmem>>, %arg3: memref<1x128xf32, #tpu.memory_space<vmem>>, %arg4: memref<1x16x128xf32, #tpu.memory_space<vmem>>) attributes {dimension_semantics = [#tpu.dimension_semantics<parallel>], iteration_bounds = array<i64: 2>, scalar_prefetch = 0 : i64, scratch_operands = 0 : i64, tpu.core_type = #tpu.core_type<tc>, window_params = [{transform_indices = @transform_0, window_bounds = array<i64: 1, 18, 144>}, {pipeline_mode = #tpu.pipeline_mode<synchronous>, transform_indices = @transform_1, window_bounds = array<i64: 3, 144, 128>}, {pipeline_mode = #tpu.pipeline_mode<synchronous>, transform_indices = @transform_2, window_bounds = array<i64: 1, 128>}, {transform_indices = @transform_3, window_bounds = array<i64: 1, 16, 128>}]} {
    %c0 = arith.constant 0 : index
    %c0_0 = arith.constant 0 : index
    %c0_1 = arith.constant 0 : index
    %0 = vector.load %arg1[%c0, %c0_0, %c0_1] : memref<1x18x144xbf16, #tpu.memory_space<vmem>>, vector<1x16x144xbf16>
    %1 = vector.shape_cast %0 : vector<1x16x144xbf16> to vector<16x144xbf16>
    %c0_2 = arith.constant 0 : index
    %c0_3 = arith.constant 0 : index
    %c0_4 = arith.constant 0 : index
    %2 = vector.load %arg2[%c0_2, %c0_3, %c0_4] : memref<3x144x128xbf16, #tpu.memory_space<vmem>>, vector<1x144x128xbf16>
    %3 = vector.shape_cast %2 : vector<1x144x128xbf16> to vector<144x128xbf16>
    %cst = arith.constant dense<0.000000e+00> : vector<16x128xf32>
    %4 = tpu.matmul %1, %3, %cst {dimension_numbers = #tpu.dot_dimension_numbers<[1], [0], [0], [1], [0, 0, 1, 1], [], []>} : vector<16x144xbf16>, vector<144x128xbf16>, vector<16x128xf32> -> vector<16x128xf32>
    %c0_5 = arith.constant 0 : index
    %c1 = arith.constant 1 : index
    %c0_6 = arith.constant 0 : index
    %5 = vector.load %arg1[%c0_5, %c1, %c0_6] : memref<1x18x144xbf16, #tpu.memory_space<vmem>>, vector<1x16x144xbf16>
    %6 = vector.shape_cast %5 : vector<1x16x144xbf16> to vector<16x144xbf16>
    %c1_7 = arith.constant 1 : index
    %c0_8 = arith.constant 0 : index
    %c0_9 = arith.constant 0 : index
    %7 = vector.load %arg2[%c1_7, %c0_8, %c0_9] : memref<3x144x128xbf16, #tpu.memory_space<vmem>>, vector<1x144x128xbf16>
    %8 = vector.shape_cast %7 : vector<1x144x128xbf16> to vector<144x128xbf16>
    %cst_10 = arith.constant dense<0.000000e+00> : vector<16x128xf32>
    %9 = tpu.matmul %6, %8, %cst_10 {dimension_numbers = #tpu.dot_dimension_numbers<[1], [0], [0], [1], [0, 0, 1, 1], [], []>} : vector<16x144xbf16>, vector<144x128xbf16>, vector<16x128xf32> -> vector<16x128xf32>
    %10 = arith.addf %4, %9 : vector<16x128xf32>
    %c0_11 = arith.constant 0 : index
    %c2 = arith.constant 2 : index
    %c0_12 = arith.constant 0 : index
    %11 = vector.load %arg1[%c0_11, %c2, %c0_12] : memref<1x18x144xbf16, #tpu.memory_space<vmem>>, vector<1x16x144xbf16>
    %12 = vector.shape_cast %11 : vector<1x16x144xbf16> to vector<16x144xbf16>
    %c2_13 = arith.constant 2 : index
    %c0_14 = arith.constant 0 : index
    %c0_15 = arith.constant 0 : index
    %13 = vector.load %arg2[%c2_13, %c0_14, %c0_15] : memref<3x144x128xbf16, #tpu.memory_space<vmem>>, vector<1x144x128xbf16>
    %14 = vector.shape_cast %13 : vector<1x144x128xbf16> to vector<144x128xbf16>
    %cst_16 = arith.constant dense<0.000000e+00> : vector<16x128xf32>
    %15 = tpu.matmul %12, %14, %cst_16 {dimension_numbers = #tpu.dot_dimension_numbers<[1], [0], [0], [1], [0, 0, 1, 1], [], []>} : vector<16x144xbf16>, vector<144x128xbf16>, vector<16x128xf32> -> vector<16x128xf32>
    %16 = arith.addf %10, %15 : vector<16x128xf32>
    %c0_17 = arith.constant 0 : index
    %c0_18 = arith.constant 0 : index
    %17 = vector.load %arg3[%c0_17, %c0_18] : memref<1x128xf32, #tpu.memory_space<vmem>>, vector<1x128xf32>
    %18 = vector.broadcast %17 : vector<1x128xf32> to vector<16x128xf32>
    %19 = arith.addf %16, %18 : vector<16x128xf32>
    %cst_19 = arith.constant 0.000000e+00 : f32
    %20 = vector.broadcast %cst_19 : f32 to vector<16x128xf32>
    %21 = arith.maximumf %19, %20 : vector<16x128xf32>
    %c0_20 = arith.constant 0 : index
    %c0_21 = arith.constant 0 : index
    %c0_22 = arith.constant 0 : index
    %22 = vector.load %arg4[%c0_20, %c0_21, %c0_22] : memref<1x16x128xf32, #tpu.memory_space<vmem>>, vector<1x16x128xf32>
    %23 = vector.shape_cast %22 : vector<1x16x128xf32> to vector<16x128xf32>
    %24 = vector.shape_cast %21 : vector<16x128xf32> to vector<1x16x128xf32>
    tpu.vector_store %arg4[%c0_20, %c0_21, %c0_22], %24 {strides = array<i32>} : memref<1x16x128xf32, #tpu.memory_space<vmem>>, vector<1x16x128xf32>,
    return
  }
  func.func @transform_0(%arg0: i32) -> (i32, i32, i32) {
    %c0_i32 = arith.constant 0 : i32
    %c0_i32_0 = arith.constant 0 : i32
    %c0_i32_1 = arith.constant 0 : i32
    return %arg0, %c0_i32, %c0_i32_0 : i32, i32, i32
  }
  func.func @transform_1(%arg0: i32) -> (i32, i32, i32) {
    %c0_i32 = arith.constant 0 : i32
    %c0_i32_0 = arith.constant 0 : i32
    %c0_i32_1 = arith.constant 0 : i32
    %c0_i32_2 = arith.constant 0 : i32
    return %c0_i32, %c0_i32_0, %c0_i32_1 : i32, i32, i32
  }
  func.func @transform_2(%arg0: i32) -> (i32, i32) {
    %c0_i32 = arith.constant 0 : i32
    %c0_i32_0 = arith.constant 0 : i32
    %c0_i32_1 = arith.constant 0 : i32
    return %c0_i32, %c0_i32_0 : i32, i32
  }
  func.func @transform_3(%arg0: i32) -> (i32, i32, i32) {
    %c0_i32 = arith.constant 0 : i32
    %c0_i32_0 = arith.constant 0 : i32
    %c0_i32_1 = arith.constant 0 : i32
    return %arg0, %c0_i32, %c0_i32_0 : i32, i32, i32
  }
}

module attributes {stable_mosaic.version = 11 : i64} {
  func.func @kernel(%arg0: i32, %arg1: memref<1x18x144xbf16, #tpu.memory_space<vmem>>, %arg2: memref<3x144x16xbf16, #tpu.memory_space<vmem>>, %arg3: memref<1x16xf32, #tpu.memory_space<vmem>>, %arg4: memref<1x16x16xf32, #tpu.memory_space<vmem>>) attributes {dimension_semantics = [#tpu.dimension_semantics<parallel>], iteration_bounds = array<i64: 2>, scalar_prefetch = 0 : i64, scratch_operands = 0 : i64, tpu.core_type = #tpu.core_type<tc>, window_params = [{transform_indices = @transform_0, window_bounds = array<i64: 1, 18, 144>}, {pipeline_mode = #tpu.pipeline_mode<synchronous>, transform_indices = @transform_1, window_bounds = array<i64: 3, 144, 16>}, {pipeline_mode = #tpu.pipeline_mode<synchronous>, transform_indices = @transform_2, window_bounds = array<i64: 1, 16>}, {transform_indices = @transform_3, window_bounds = array<i64: 1, 16, 16>}]} {
    %c0 = arith.constant 0 : index
    %c0_0 = arith.constant 0 : index
    %c0_1 = arith.constant 0 : index
    %0 = vector.load %arg1[%c0, %c0_0, %c0_1] : memref<1x18x144xbf16, #tpu.memory_space<vmem>>, vector<1x16x144xbf16>
    %1 = vector.shape_cast %0 : vector<1x16x144xbf16> to vector<16x144xbf16>
    %c0_2 = arith.constant 0 : index
    %c0_3 = arith.constant 0 : index
    %c0_4 = arith.constant 0 : index
    %2 = vector.load %arg2[%c0_2, %c0_3, %c0_4] : memref<3x144x16xbf16, #tpu.memory_space<vmem>>, vector<1x144x16xbf16>
    %3 = vector.shape_cast %2 : vector<1x144x16xbf16> to vector<144x16xbf16>
    %cst = arith.constant dense<0.000000e+00> : vector<16x16xf32>
    %4 = tpu.matmul %1, %3, %cst {dimension_numbers = #tpu.dot_dimension_numbers<[1], [0], [0], [1], [0, 0, 1, 1], [], []>} : vector<16x144xbf16>, vector<144x16xbf16>, vector<16x16xf32> -> vector<16x16xf32>
    %c0_5 = arith.constant 0 : index
    %c1 = arith.constant 1 : index
    %c0_6 = arith.constant 0 : index
    %5 = vector.load %arg1[%c0_5, %c1, %c0_6] : memref<1x18x144xbf16, #tpu.memory_space<vmem>>, vector<1x16x144xbf16>
    %6 = vector.shape_cast %5 : vector<1x16x144xbf16> to vector<16x144xbf16>
    %c1_7 = arith.constant 1 : index
    %c0_8 = arith.constant 0 : index
    %c0_9 = arith.constant 0 : index
    %7 = vector.load %arg2[%c1_7, %c0_8, %c0_9] : memref<3x144x16xbf16, #tpu.memory_space<vmem>>, vector<1x144x16xbf16>
    %8 = vector.shape_cast %7 : vector<1x144x16xbf16> to vector<144x16xbf16>
    %cst_10 = arith.constant dense<0.000000e+00> : vector<16x16xf32>
    %9 = tpu.matmul %6, %8, %cst_10 {dimension_numbers = #tpu.dot_dimension_numbers<[1], [0], [0], [1], [0, 0, 1, 1], [], []>} : vector<16x144xbf16>, vector<144x16xbf16>, vector<16x16xf32> -> vector<16x16xf32>
    %10 = arith.addf %4, %9 : vector<16x16xf32>
    %c0_11 = arith.constant 0 : index
    %c2 = arith.constant 2 : index
    %c0_12 = arith.constant 0 : index
    %11 = vector.load %arg1[%c0_11, %c2, %c0_12] : memref<1x18x144xbf16, #tpu.memory_space<vmem>>, vector<1x16x144xbf16>
    %12 = vector.shape_cast %11 : vector<1x16x144xbf16> to vector<16x144xbf16>
    %c2_13 = arith.constant 2 : index
    %c0_14 = arith.constant 0 : index
    %c0_15 = arith.constant 0 : index
    %13 = vector.load %arg2[%c2_13, %c0_14, %c0_15] : memref<3x144x16xbf16, #tpu.memory_space<vmem>>, vector<1x144x16xbf16>
    %14 = vector.shape_cast %13 : vector<1x144x16xbf16> to vector<144x16xbf16>
    %cst_16 = arith.constant dense<0.000000e+00> : vector<16x16xf32>
    %15 = tpu.matmul %12, %14, %cst_16 {dimension_numbers = #tpu.dot_dimension_numbers<[1], [0], [0], [1], [0, 0, 1, 1], [], []>} : vector<16x144xbf16>, vector<144x16xbf16>, vector<16x16xf32> -> vector<16x16xf32>
    %16 = arith.addf %10, %15 : vector<16x16xf32>
    %c0_17 = arith.constant 0 : index
    %c0_18 = arith.constant 0 : index
    %17 = vector.load %arg3[%c0_17, %c0_18] : memref<1x16xf32, #tpu.memory_space<vmem>>, vector<1x16xf32>
    %18 = vector.broadcast %17 : vector<1x16xf32> to vector<16x16xf32>
    %19 = arith.addf %16, %18 : vector<16x16xf32>
    %c0_19 = arith.constant 0 : index
    %c0_20 = arith.constant 0 : index
    %c0_21 = arith.constant 0 : index
    %20 = vector.load %arg4[%c0_19, %c0_20, %c0_21] : memref<1x16x16xf32, #tpu.memory_space<vmem>>, vector<1x16x16xf32>
    %21 = vector.shape_cast %20 : vector<1x16x16xf32> to vector<16x16xf32>
    %22 = vector.shape_cast %19 : vector<16x16xf32> to vector<1x16x16xf32>
    tpu.vector_store %arg4[%c0_19, %c0_20, %c0_21], %22 {strides = array<i32>} : memref<1x16x16xf32, #tpu.memory_space<vmem>>, vector<1x16x16xf32>,
    return
  }
  func.func @transform_0(%arg0: i32) -> (i32, i32, i32) {
    %c0_i32 = arith.constant 0 : i32
    %c0_i32_0 = arith.constant 0 : i32
    %c0_i32_1 = arith.constant 0 : i32
    return %arg0, %c0_i32, %c0_i32_0 : i32, i32, i32
  }
  func.func @transform_1(%arg0: i32) -> (i32, i32, i32) {
    %c0_i32 = arith.constant 0 : i32
    %c0_i32_0 = arith.constant 0 : i32
    %c0_i32_1 = arith.constant 0 : i32
    %c0_i32_2 = arith.constant 0 : i32
    return %c0_i32, %c0_i32_0, %c0_i32_1 : i32, i32, i32
  }
  func.func @transform_2(%arg0: i32) -> (i32, i32) {
    %c0_i32 = arith.constant 0 : i32
    %c0_i32_0 = arith.constant 0 : i32
    %c0_i32_1 = arith.constant 0 : i32
    return %c0_i32, %c0_i32_0 : i32, i32
  }
  func.func @transform_3(%arg0: i32) -> (i32, i32, i32) {
    %c0_i32 = arith.constant 0 : i32
    %c0_i32_0 = arith.constant 0 : i32
    %c0_i32_1 = arith.constant 0 : i32
    return %arg0, %c0_i32, %c0_i32_0 : i32, i32, i32
  }
}

</mosaic_0001>

<llo_original>
// kernel: tile.58
$region0: #{tile.58}
  #allocation0 [shape = 's32[1]{0}', space=sflag, size = 0x4, scoped, tag = 'scoped memory for tile.58']
  %s0 = inlined_call_operand.vmem [shape: f32[8], index: 0, kind: input, shape index: {}]
  %s1 = inlined_call_operand.vmem [shape: f32[16,8], index: 1, kind: output, shape index: {}]
  // Predicated region
  $region2: #{tile.58} parent=0 // pred_check
    _
  $region3: #{tile.58} parent=0 // pred_check_branch
    %3 = sbr.rel (0) target = $region5
  $region4: #{tile.58} parent=0 // pred_region
    _
  $region5: #{tile.58} parent=0 // pred_fallthru
    _
  %v4 = vld [vmem:[%s0] ss:$0 sm:$0xff]
  %5 = vst [vmem:[%s1] sm:$0xff] %v4
  %s6 = scalar_lea.vmem %s1, 8
  %7 = vst [vmem:[%s6] sm:$0xff] %v4

// kernel: tile.59
$region0: #{tile.59}
  %s0 = inlined_call_operand.vmem [shape: f32[16,8], index: 0, kind: input, shape index: {}]
  %s1 = inlined_call_operand.vmem [shape: f32[1,128], index: 1, kind: output, shape index: {}]
  $region1: #{tile.59} parent=0
    #allocation0 [shape = 'u8[4096]{0}', space=vmem, size = 0x1000, scoped, tag = 'scoped mem for output reshape']
    %v2 = vld [vmem:[%s0] sm:$0x1]
    %vm3 = vcmask 64512
    %4 = vst.msk [vmem:[#allocation0] sm:$0x1] %vm3, %v2
    %s5 = scalar_lea.vmem %s0, 15
    %v6 = vld [vmem:[%s5] sm:$0x1]
    %7 = vrot.lane.b32.xlu0 %v6, 120
    %v8 = vpop.permute.xlu0 %7
    %vm9 = vcmask 1048512
    %10 = vst.msk [vmem:[#allocation0] sm:$0x1] %vm9, %v8
    %s11 = scalar_lea.vmem %s0, 14
    %v12 = vld [vmem:[%s11] sm:$0x1]
    %13 = vrot.lane.b32.xlu0 %v12, 112
    %v14 = vpop.permute.xlu0 %13
    %vm15 = vcmask 982912
    %16 = vst.msk [vmem:[#allocation0] sm:$0x1] %vm15, %v14
    %s17 = scalar_lea.vmem %s0, 13
    %v18 = vld [vmem:[%s17] sm:$0x1]
    %19 = vrot.lane.b32.xlu0 %v18, 104
    %v20 = vpop.permute.xlu0 %19
    %vm21 = vcmask 917312
    %22 = vst.msk [vmem:[#allocation0] sm:$0x1] %vm21, %v20
    %s23 = scalar_lea.vmem %s0, 12
    %v24 = vld [vmem:[%s23] sm:$0x1]
    %25 = vrot.lane.b32.xlu0 %v24, 96
    %v26 = vpop.permute.xlu0 %25
    %vm27 = vcmask 851712
    %28 = vst.msk [vmem:[#allocation0] sm:$0x1] %vm27, %v26
    %s29 = scalar_lea.vmem %s0, 11
    %v30 = vld [vmem:[%s29] sm:$0x1]
    %31 = vrot.lane.b32.xlu0 %v30, 88
    %v32 = vpop.permute.xlu0 %31
    %vm33 = vcmask 786112
    %34 = vst.msk [vmem:[#allocation0] sm:$0x1] %vm33, %v32
    %s35 = scalar_lea.vmem %s0, 10
    %v36 = vld [vmem:[%s35] sm:$0x1]
    %37 = vrot.lane.b32.xlu0 %v36, 80
    %v38 = vpop.permute.xlu0 %37
    %vm39 = vcmask 720512
    %40 = vst.msk [vmem:[#allocation0] sm:$0x1] %vm39, %v38
    %s41 = scalar_lea.vmem %s0, 9
    %v42 = vld [vmem:[%s41] sm:$0x1]
    %43 = vrot.lane.b32.xlu0 %v42, 72
    %v44 = vpop.permute.xlu0 %43
    %vm45 = vcmask 654912
    %46 = vst.msk [vmem:[#allocation0] sm:$0x1] %vm45, %v44
    %s47 = scalar_lea.vmem %s0, 8
    %v48 = vld [vmem:[%s47] sm:$0x1]
    %49 = vrot.lane.b32.xlu0 %v48, 64
    %v50 = vpop.permute.xlu0 %49
    %vm51 = vcmask 589312
    %52 = vst.msk [vmem:[#allocation0] sm:$0x1] %vm51, %v50
    %s53 = scalar_lea.vmem %s0, 7
    %v54 = vld [vmem:[%s53] sm:$0x1]
    %55 = vrot.lane.b32.xlu0 %v54, 56
    %v56 = vpop.permute.xlu0 %55
    %vm57 = vcmask 523712
    %58 = vst.msk [vmem:[#allocation0] sm:$0x1] %vm57, %v56
    %s59 = scalar_lea.vmem %s0, 6
    %v60 = vld [vmem:[%s59] sm:$0x1]
    %61 = vrot.lane.b32.xlu0 %v60, 48
    %v62 = vpop.permute.xlu0 %61
    %vm63 = vcmask 458112
    %64 = vst.msk [vmem:[#allocation0] sm:$0x1] %vm63, %v62
    %s65 = scalar_lea.vmem %s0, 5
    %v66 = vld [vmem:[%s65] sm:$0x1]
    %67 = vrot.lane.b32.xlu0 %v66, 40
    %v68 = vpop.permute.xlu0 %67
    %vm69 = vcmask 392512
    %70 = vst.msk [vmem:[#allocation0] sm:$0x1] %vm69, %v68
    %s71 = scalar_lea.vmem %s0, 4
    %v72 = vld [vmem:[%s71] sm:$0x1]
    %73 = vrot.lane.b32.xlu0 %v72, 32
    %v74 = vpop.permute.xlu0 %73
    %vm75 = vcmask 326912
    %76 = vst.msk [vmem:[#allocation0] sm:$0x1] %vm75, %v74
    %s77 = scalar_lea.vmem %s0, 3
    %v78 = vld [vmem:[%s77] sm:$0x1]
    %79 = vrot.lane.b32.xlu0 %v78, 24
    %v80 = vpop.permute.xlu0 %79
    %vm81 = vcmask 261312
    %82 = vst.msk [vmem:[#allocation0] sm:$0x1] %vm81, %v80
    %s83 = scalar_lea.vmem %s0, 2
    %v84 = vld [vmem:[%s83] sm:$0x1]
    %85 = vrot.lane.b32.xlu0 %v84, 16
    %v86 = vpop.permute.xlu0 %85
    %vm87 = vcmask 195712
    %88 = vst.msk [vmem:[#allocation0] sm:$0x1] %vm87, %v86
    %s89 = scalar_lea.vmem %s0, 1
    %v90 = vld [vmem:[%s89] sm:$0x1]
    %91 = vrot.lane.b32.xlu0 %v90, 8
    %v92 = vpop.permute.xlu0 %91
    %vm93 = vcmask 130112
    %94 = vst.msk [vmem:[#allocation0] sm:$0x1] %vm93, %v92
    %s96 = sshllo.u32 0, 1
    %v98 = vld [vmem:[#allocation0] sm:%s96]
    %s99 = sshllo.u32 0, 1
    %100 = vst [vmem:[%s1] sm:%s99] %v98

// kernel: unet_forward.11
$region0: #{unet_forward.11}
  #allocation0 [shape = 'u32[]', space=smem, size = 0x4, offset = 0x4, fixed_abs, tag = 'smem constant byte address 0x4 - core index']
  #allocation1 [shape = 'u32[144,128]{1,0:T(1,128)}', space=vmem, size = 0x12000, scoped, tag = 'internal scratch']
  %s0 = inlined_call_operand.vmem [shape: bf16[2,18,54], index: 0, kind: input, shape index: {}]
  %s1 = inlined_call_operand.vmem [shape: bf16[3,54,128], index: 1, kind: input, shape index: {}]
  %s2 = inlined_call_operand.vmem [shape: f32[1,128], index: 2, kind: input, shape index: {}]
  %s3 = inlined_call_operand.vmem [shape: f32[2,16,128], index: 3, kind: output, shape index: {}]
  %s4 = sld [smem:[#allocation0]]
  $region45: #{unet_forward.11} parent=0
    _
  %s6 = ssub.s32 1, %s4
  %s7 = scalar_select 0, %s6, %s4
  loop: start=0, step=1, limit=4
  $region2: #{unet_forward.11} parent=0 // loop_pre_header
    _
  $region3: #{unet_forward.11} parent=0 // loop_header
    %s9 = sphi 0, %s13
    %p10 = scmp.ge.s32.totalorder %s9, 4
    %s19 = sphi 0, %s21
    %s22 = sphi 0, %s19
    %s23 = sphi 0, %s22
    %s39 = sphi 0, %s23
    %s43 = sphi 0, %s43
    %s45 = sphi 0, %s43
    %s46 = sphi 0, %s45
    %s60 = sphi 0, %s46
    %s64 = sphi 0, %s64
    %s66 = sphi 0, %s64
    %s67 = sphi 0, %s66
    %s81 = sphi 0, %s67
    %s87 = sphi 0, %s89
    %s90 = sphi 0, %s87
    %s91 = sphi 0, %s90
    %s107 = sphi 0, %s91
  $region4: #{unet_forward.11} parent=0 // loop_header_branch
    %12 = sbr.rel (%p10) target = $region8
  $region5: #{unet_forward.11} parent=0 // loop_body
    %s14 = ssub.s32 %s9, 1
    %s15 = ssub.s32 %s9, 2
    %s16 = sadd.s32 %s9, 1
    %s17 = ssub.s32 %s9, %s16
    %p18 = scmp.eq.s32.totalorder %s17, 0
    %s20 = sadd.s32 %s19, 1
    %s21 = scalar_select %p18, %s19, %s20
    %p24 = pneg %p18
    %p25 = scmp.eq.s32.totalorder %s9, 1
    %p26 = por %p24, %p25
    %p27 = scmp.ne.s32.totalorder %s19, %s22
    %p28 = scmp.eq.s32.totalorder %s9, 0
    %p29 = por %p27, %p28
    %p30 = scmp.ne.s32.totalorder %s19, %s22
    %p31 = scmp.eq.s32.totalorder %s14, 1
    %p32 = por %p30, %p31
    %p33 = scmp.ne.s32.totalorder %s22, %s23
    %p34 = scmp.eq.s32.totalorder %s14, 0
    %p35 = por %p33, %p34
    %p36 = scmp.ne.s32.totalorder %s22, %s23
    %p37 = scmp.eq.s32.totalorder %s15, 1
    %p38 = por %p36, %p37
    %p40 = scmp.ne.s32.totalorder %s23, %s39
    %p41 = scmp.eq.s32.totalorder %s15, 0
    %p42 = por %p40, %p41
    %s44 = sadd.s32 %s43, 1
    %p47 = scmp.eq.s32.totalorder %s9, 1
    %p48 = scmp.ne.s32.totalorder %s43, %s45
    %p49 = scmp.eq.s32.totalorder %s9, 0
    %p50 = por %p48, %p49
    %p51 = scmp.ne.s32.totalorder %s43, %s45
    %p52 = scmp.eq.s32.totalorder %s14, 1
    %p53 = por %p51, %p52
    %p54 = scmp.ne.s32.totalorder %s45, %s46
    %p55 = scmp.eq.s32.totalorder %s14, 0
    %p56 = por %p54, %p55
    %p57 = scmp.ne.s32.totalorder %s45, %s46
    %p58 = scmp.eq.s32.totalorder %s15, 1
    %p59 = por %p57, %p58
    %p61 = scmp.ne.s32.totalorder %s46, %s60
    %p62 = scmp.eq.s32.totalorder %s15, 0
    %p63 = por %p61, %p62
    %s65 = sadd.s32 %s64, 1
    %p68 = scmp.eq.s32.totalorder %s9, 1
    %p69 = scmp.ne.s32.totalorder %s64, %s66
    %p70 = scmp.eq.s32.totalorder %s9, 0
    %p71 = por %p69, %p70
    %p72 = scmp.ne.s32.totalorder %s64, %s66
    %p73 = scmp.eq.s32.totalorder %s14, 1
    %p74 = por %p72, %p73
    %p75 = scmp.ne.s32.totalorder %s66, %s67
    %p76 = scmp.eq.s32.totalorder %s14, 0
    %p77 = por %p75, %p76
    %p78 = scmp.ne.s32.totalorder %s66, %s67
    %p79 = scmp.eq.s32.totalorder %s15, 1
    %p80 = por %p78, %p79
    %p82 = scmp.ne.s32.totalorder %s67, %s81
    %p83 = scmp.eq.s32.totalorder %s15, 0
    %p84 = por %p82, %p83
    %s85 = ssub.s32 %s9, %s16
    %p86 = scmp.eq.s32.totalorder %s85, 0
    %s88 = sadd.s32 %s87, 1
    %s89 = scalar_select %p86, %s87, %s88
    %p92 = pneg %p86
    %p93 = scmp.eq.s32.totalorder %s9, 1
    %p94 = por %p92, %p93
    %p95 = scmp.ne.s32.totalorder %s87, %s90
    %p96 = scmp.eq.s32.totalorder %s9, 0
    %p97 = por %p95, %p96
    %p98 = scmp.ne.s32.totalorder %s87, %s90
    %p99 = scmp.eq.s32.totalorder %s14, 1
    %p100 = por %p98, %p99
    %p101 = scmp.ne.s32.totalorder %s90, %s91
    %p102 = scmp.eq.s32.totalorder %s14, 0
    %p103 = por %p101, %p102
    %p104 = scmp.ne.s32.totalorder %s90, %s91
    %p105 = scmp.eq.s32.totalorder %s15, 1
    %p106 = por %p104, %p105
    %p108 = scmp.ne.s32.totalorder %s91, %s107
    %p109 = scmp.eq.s32.totalorder %s15, 0
    %p110 = por %p108, %p109
    %p111 = scmp.le.s32.totalorder 1, %s9
    %p112 = scmp.lt.s32.totalorder %s9, 3
    %p113 = pnand %p111, %p112
    %p114 = pneg %p113
    // Predicated region
    $region9: #{unet_forward.11} parent=5 // pred_check
      _
    $region10: #{unet_forward.11} parent=5 // pred_check_branch
      %116 = sbr.rel (%p113) target = $region12
    $region11: #{unet_forward.11} parent=5 // pred_region
      %s117 = ssub.s32 %s9, 1
      // Predicated region
      $region13: #{unet_forward.11} parent=11 // pred_check
        %p118 = pneg %p56
      $region14: #{unet_forward.11} parent=11 // pred_check_branch
        %120 = sbr.rel (%p118) target = $region16
      $region15: #{unet_forward.11} parent=11 // pred_region
        _
      $region16: #{unet_forward.11} parent=11 // pred_fallthru
        _
      // Predicated region
      $region17: #{unet_forward.11} parent=11 // pred_check
        %p121 = pneg %p77
      $region18: #{unet_forward.11} parent=11 // pred_check_branch
        %123 = sbr.rel (%p121) target = $region20
      $region19: #{unet_forward.11} parent=11 // pred_region
        _
      $region20: #{unet_forward.11} parent=11 // pred_fallthru
        _
    $region12: #{unet_forward.11} parent=5 // pred_fallthru
      _
    %p124 = scmp.lt.s32.totalorder %s9, 2
    // Predicated region
    $region21: #{unet_forward.11} parent=5 // pred_check
      %p125 = pneg %p124
    $region22: #{unet_forward.11} parent=5 // pred_check_branch
      %127 = sbr.rel (%p125) target = $region24
    $region23: #{unet_forward.11} parent=5 // pred_region
      // Predicated region
      $region25: #{unet_forward.11} parent=23 // pred_check
        %p128 = pneg %p29
      $region26: #{unet_forward.11} parent=23 // pred_check_branch
        %130 = sbr.rel (%p128) target = $region28
      $region27: #{unet_forward.11} parent=23 // pred_region
        %p131 = scmp.lt.s32.totalorder %s9, 1
        %s132 = scalar_select %p131, %s9, 1
        %s133 = smul.addr %s132, 3
        %s134 = smul.addr %s133, 4
        %s135 = scalar_lea.vmem %s0, %s134
      $region28: #{unet_forward.11} parent=23 // pred_fallthru
        _
    $region24: #{unet_forward.11} parent=5 // pred_fallthru
      _
    %p136 = scmp.le.s32.totalorder 1, %s9
    %p137 = scmp.lt.s32.totalorder %s9, 3
    %p138 = pnand %p136, %p137
    %p139 = pneg %p138
    // Predicated region
    $region29: #{unet_forward.11} parent=5 // pred_check
      _
    $region30: #{unet_forward.11} parent=5 // pred_check_branch
      %141 = sbr.rel (%p138) target = $region32
    $region31: #{unet_forward.11} parent=5 // pred_region
      %s142 = ssub.s32 %s9, 1
      %p143 = scmp.lt.s32.totalorder %s14, 1
      %s144 = scalar_select %p143, %s14, 1
      %s145 = smul.addr %s144, 3
      %s146 = smul.addr %s145, 4
      %s147 = scalar_lea.vmem %s0, %s146
      %p148 = pneg %p35
      %p149 = pneg %p32
      %p150 = pneg %p56
      %p151 = pneg %p53
      %p152 = pneg %p77
      %p153 = pneg %p74
      %p154 = pneg %p103
      %p155 = pneg %p100
      %p156 = scmp.lt.s32.totalorder %s14, 1
      %s157 = scalar_select %p156, %s14, 1
      %s158 = smul.addr %s157, 2
      %s159 = smul.addr %s158, 8
      %s160 = scalar_lea.vmem %s3, %s159
      %p161 = scmp.lt.s32.totalorder %s14, 1
      %s162 = scalar_select %p161, %s14, 1
      %s163 = smul.addr %s162, 3
      %s164 = smul.addr %s163, 4
      %s165 = scalar_lea.vmem %s0, %s164
      %p166 = scmp.lt.s32.totalorder %s14, 1
      %s167 = scalar_select %p166, %s14, 1
      %s168 = smul.addr %s167, 2
      %s169 = smul.addr %s168, 8
      %s170 = scalar_lea.vmem %s3, %s169
      %v172 = vld [vmem:[%s165] sm:$0xf]
      %v173 = vld [vmem:[%s165 + $0x4] sm:$0xf]
      %v174 = vld [vmem:[%s1] sm:$0xf]
      %v175 = vld [vmem:[%s1 + $0x4] sm:$0xf]
      %v176 = vld [vmem:[%s1 + $0x8] sm:$0xf]
      %v177 = vld [vmem:[%s1 + $0xc] sm:$0xf]
      %v178 = vld [vmem:[%s1 + $0x10] sm:$0xf]
      %v179 = vld [vmem:[%s1 + $0x14] sm:$0xf]
      %v180 = vld [vmem:[%s1 + $0x18] sm:$0x7]
      %v181 = vld [vmem:[%s165 + $0x8] sm:$0x1]
      %s182 = scalar_lea.vmem %s1, 28
      %v183 = vld [vmem:[%s182] sm:$0xf]
      %v184 = vld [vmem:[%s182 + $0x4] sm:$0xf]
      %v185 = vld [vmem:[%s182 + $0x8] sm:$0xf]
      %v186 = vld [vmem:[%s182 + $0xc] sm:$0xf]
      %v187 = vld [vmem:[%s182 + $0x10] sm:$0xf]
      %v188 = vld [vmem:[%s182 + $0x14] sm:$0xf]
      %v189 = vld [vmem:[%s182 + $0x18] sm:$0x7]
      %v193 = vunpack.c.l.b16 %v172
      %v194 = vunpack.c.l.b16 %v173
      %v195 = vunpack.c.l.b16 %v181
      %v196 = vpack.c.b16 %v194, %v193
      %v197 = vpack.c.b16 %v195, %v195
      %vm198 = vsmask.f32 7424
      %v200 = vshrl.u32 %v196, 16
      %v202 = vshll.u32 %v196, 16
      %v204 = vrot.slane %v202, 1
      %v205 = vor.u32 %v200, %v204
      %v207 = vshll.u32 %v197, 16
      %v209 = vrot.slane %v207, 1
      %v210 = vsel %vm198, %v205, %v209
      %v218 = vunpack.c.l.b16 %v183
      %v219 = vunpack.c.l.b16 %v184
      %v220 = vunpack.c.l.b16 %v185
      %v221 = vunpack.c.l.b16 %v186
      %v222 = vunpack.c.l.b16 %v187
      %v223 = vunpack.c.l.b16 %v188
      %v224 = vunpack.c.l.b16 %v189
      %v225 = vpack.c.b16 %v219, %v218
      %v226 = vpack.c.b16 %v221, %v220
      %v227 = vpack.c.b16 %v223, %v222
      %v228 = vpack.c.b16 %v224, %v224
      %vm232 = vcmask 441344
      %v234 = vsel %vm232, %v210, 0
      %vm236 = vcmask 1042432
      %v238 = vsel %vm236, %v228, 0
      %240 = vmatprep.subr.bf16.mxu0 0
      %241 = vmatpush1.bf16.msra.mxu0 %v225
      %242 = vmatprep.subr.bf16.mxu0 0
      %243 = vmatpush1.bf16.msra.mxu0 %v226
      %244 = vmatprep.subr.bf16.mxu0 0
      %245 = vmatpush1.bf16.msra.mxu0 %v227
      %246 = vmatprep.subr.bf16.mxu0 0
      %247 = vmatpush1.bf16.msra.mxu0 %v238
      %248 = vmatprep.subr.bf16.mxu0 0
      %249 = vmatpush1.bf16.msra.mxu0 0
      %250 = vmatprep.subr.bf16.mxu0 0
      %251 = vmatpush1.bf16.msra.mxu0 0
      %252 = vmatprep.subr.bf16.mxu0 0
      %253 = vmatpush1.bf16.msra.mxu0 0
      %254 = vmatprep.subr.bf16.mxu0 0
      %255 = vmatpush1.bf16.msra.mxu0 0
      %256 = vmatprep.subr.bf16.mxu0 0
      %257 = vmatpush1.bf16.msra.mxu0 0
      %258 = vmatprep.subr.bf16.mxu0 0
      %259 = vmatpush1.bf16.msra.mxu0 0
      %260 = vmatprep.subr.bf16.mxu0 0
      %261 = vmatpush1.bf16.msra.mxu0 0
      %262 = vmatprep.subr.bf16.mxu0 0
      %263 = vmatpush1.bf16.msra.mxu0 0
      %264 = vmatprep.subr.bf16.mxu0 0
      %265 = vmatpush1.bf16.msra.mxu0 0
      %266 = vmatprep.subr.bf16.mxu0 0
      %267 = vmatpush1.bf16.msra.mxu0 0
      %268 = vmatprep.subr.bf16.mxu0 0
      %269 = vmatpush1.bf16.msra.mxu0 0
      %270 = vmatprep.subr.bf16.mxu0 0
      %271 = vmatpush1.bf16.msra.mxu0 0
      %272 = vmatprep.mubr.bf16.mxu0 0
      %273 = vmatmul.mubr.bf16.gmra.mrb[0].mxu0 %v234
      %v274 = vpop.f32.mrb[0].mxu0
      %v275 = vadd.f32 0.0, %v274
      %v276 = vpop.f32.mrb[0].mxu0
      %v277 = vpop.f32.mrb[0].mxu0
      %v278 = vadd.f32 0.0, %v277
      %v279 = vpop.f32.mrb[0].mxu0
      %280 = vdwg.mxu0
      %v288 = vunpack.c.l.b16 %v174
      %v289 = vunpack.c.l.b16 %v175
      %v290 = vunpack.c.l.b16 %v176
      %v291 = vunpack.c.l.b16 %v177
      %v292 = vunpack.c.l.b16 %v178
      %v293 = vunpack.c.l.b16 %v179
      %v294 = vunpack.c.l.b16 %v180
      %v295 = vpack.c.b16 %v289, %v288
      %v296 = vpack.c.b16 %v291, %v290
      %v297 = vpack.c.b16 %v293, %v292
      %v298 = vpack.c.b16 %v294, %v294
      %v302 = vsel %vm232, %v196, 0
      %v305 = vsel %vm236, %v298, 0
      %307 = vmatprep.subr.bf16.mxu0 0
      %308 = vmatpush1.bf16.msra.mxu0 %v295
      %309 = vmatprep.subr.bf16.mxu0 0
      %310 = vmatpush1.bf16.msra.mxu0 %v296
      %311 = vmatprep.subr.bf16.mxu0 0
      %312 = vmatpush1.bf16.msra.mxu0 %v297
      %313 = vmatprep.subr.bf16.mxu0 0
      %314 = vmatpush1.bf16.msra.mxu0 %v305
      %315 = vmatprep.subr.bf16.mxu0 0
      %316 = vmatpush1.bf16.msra.mxu0 0
      %317 = vmatprep.subr.bf16.mxu0 0
      %318 = vmatpush1.bf16.msra.mxu0 0
      %319 = vmatprep.subr.bf16.mxu0 0
      %320 = vmatpush1.bf16.msra.mxu0 0
      %321 = vmatprep.subr.bf16.mxu0 0
      %322 = vmatpush1.bf16.msra.mxu0 0
      %323 = vmatprep.subr.bf16.mxu0 0
      %324 = vmatpush1.bf16.msra.mxu0 0
      %325 = vmatprep.subr.bf16.mxu0 0
      %326 = vmatpush1.bf16.msra.mxu0 0
      %327 = vmatprep.subr.bf16.mxu0 0
      %328 = vmatpush1.bf16.msra.mxu0 0
      %329 = vmatprep.subr.bf16.mxu0 0
      %330 = vmatpush1.bf16.msra.mxu0 0
      %331 = vmatprep.subr.bf16.mxu0 0
      %332 = vmatpush1.bf16.msra.mxu0 0
      %333 = vmatprep.subr.bf16.mxu0 0
      %334 = vmatpush1.bf16.msra.mxu0 0
      %335 = vmatprep.subr.bf16.mxu0 0
      %336 = vmatpush1.bf16.msra.mxu0 0
      %337 = vmatprep.subr.bf16.mxu0 0
      %338 = vmatpush1.bf16.msra.mxu0 0
      %339 = vmatprep.mubr.bf16.mxu0 0
      %340 = vmatmul.mubr.bf16.gmra.mrb[0].mxu0 %v302
      %v341 = vpop.f32.mrb[0].mxu0
      %v342 = vadd.f32 %v275, %v341
      %v343 = vpop.f32.mrb[0].mxu0
      %v344 = vpop.f32.mrb[0].mxu0
      %v345 = vadd.f32 %v278, %v344
      %v346 = vpop.f32.mrb[0].mxu0
      %347 = vdwg.mxu0
      %v348 = vld [vmem:[%s165] sm:$0xe]
      %s349 = scalar_lea.vmem %s1, 56
      %v350 = vld [vmem:[%s349] sm:$0xf]
      %v351 = vld [vmem:[%s349 + $0x4] sm:$0xf]
      %v352 = vld [vmem:[%s349 + $0x8] sm:$0xf]
      %v353 = vld [vmem:[%s349 + $0xc] sm:$0xf]
      %v354 = vld [vmem:[%s349 + $0x10] sm:$0xf]
      %v355 = vld [vmem:[%s349 + $0x14] sm:$0xf]
      %v356 = vld [vmem:[%s349 + $0x18] sm:$0x7]
      %v358 = vunpack.c.l.b16 %v348
      %v359 = vpack.c.b16 %v194, %v358
      %vm360 = vcmask 1046528
      %v361 = vrot.slane %v359, 1
      %v362 = vrot.slane %v197, 1
      %v363 = vsel %vm360, %v361, %v362
      %v371 = vunpack.c.l.b16 %v350
      %v372 = vunpack.c.l.b16 %v351
      %v373 = vunpack.c.l.b16 %v352
      %v374 = vunpack.c.l.b16 %v353
      %v375 = vunpack.c.l.b16 %v354
      %v376 = vunpack.c.l.b16 %v355
      %v377 = vunpack.c.l.b16 %v356
      %v378 = vpack.c.b16 %v372, %v371
      %v379 = vpack.c.b16 %v374, %v373
      %v380 = vpack.c.b16 %v376, %v375
      %v381 = vpack.c.b16 %v377, %v377
      %v386 = vsel %vm232, %v363, 0
      %v389 = vsel %vm236, %v381, 0
      %391 = vmatprep.subr.bf16.mxu0 0
      %392 = vmatpush1.bf16.msra.mxu0 %v378
      %393 = vmatprep.subr.bf16.mxu0 0
      %394 = vmatpush1.bf16.msra.mxu0 %v379
      %395 = vmatprep.subr.bf16.mxu0 0
      %396 = vmatpush1.bf16.msra.mxu0 %v380
      %397 = vmatprep.subr.bf16.mxu0 0
      %398 = vmatpush1.bf16.msra.mxu0 %v389
      %399 = vmatprep.subr.bf16.mxu0 0
      %400 = vmatpush1.bf16.msra.mxu0 0
      %401 = vmatprep.subr.bf16.mxu0 0
      %402 = vmatpush1.bf16.msra.mxu0 0
      %403 = vmatprep.subr.bf16.mxu0 0
      %404 = vmatpush1.bf16.msra.mxu0 0
      %405 = vmatprep.subr.bf16.mxu0 0
      %406 = vmatpush1.bf16.msra.mxu0 0
      %407 = vmatprep.subr.bf16.mxu0 0
      %408 = vmatpush1.bf16.msra.mxu0 0
      %409 = vmatprep.subr.bf16.mxu0 0
      %410 = vmatpush1.bf16.msra.mxu0 0
      %411 = vmatprep.subr.bf16.mxu0 0
      %412 = vmatpush1.bf16.msra.mxu0 0
      %413 = vmatprep.subr.bf16.mxu0 0
      %414 = vmatpush1.bf16.msra.mxu0 0
      %415 = vmatprep.subr.bf16.mxu0 0
      %416 = vmatpush1.bf16.msra.mxu0 0
      %417 = vmatprep.subr.bf16.mxu0 0
      %418 = vmatpush1.bf16.msra.mxu0 0
      %419 = vmatprep.subr.bf16.mxu0 0
      %420 = vmatpush1.bf16.msra.mxu0 0
      %421 = vmatprep.subr.bf16.mxu0 0
      %422 = vmatpush1.bf16.msra.mxu0 0
      %423 = vmatprep.mubr.bf16.mxu0 0
      %424 = vmatmul.mubr.bf16.gmra.mrb[0].mxu0 %v386
      %v425 = vpop.f32.mrb[0].mxu0
      %v426 = vadd.f32 0.0, %v425
      %v427 = vpop.f32.mrb[0].mxu0
      %v428 = vpop.f32.mrb[0].mxu0
      %v429 = vadd.f32 0.0, %v428
      %v430 = vpop.f32.mrb[0].mxu0
      %431 = vdwg.mxu0
      %v432 = vadd.f32 %v342, %v426
      %v433 = vadd.f32 %v345, %v429
      %v434 = vld [vmem:[%s2] sm:$0x1]
      %v436 = vlaneseq
      %v437 = vshrl.u32 %v436, 7
      %v438 = vsub.s32 0, %v437
      %v439 = vrot.slane %v434, %v438
      %v441 = vadd.f32 %v432, %v439
      %v442 = vadd.f32 %v433, %v439
      %v443 = vmax.f32 %v441, 0.0
      %v444 = vmax.f32 %v442, 0.0
      %445 = vst [vmem:[%s170] sm:$0xff] %v443
      %446 = vst [vmem:[%s170 + $0x8] sm:$0xff] %v444
      %p447 = scmp.lt.s32.totalorder %s14, 1
      %s448 = scalar_select %p447, %s14, 1
      %s449 = smul.addr %s448, 2
      %s450 = smul.addr %s449, 8
      %s451 = scalar_lea.vmem %s3, %s450
      // Predicated region
      $region33: #{unet_forward.11} parent=31 // pred_check
        %p452 = pneg %p100
      $region34: #{unet_forward.11} parent=31 // pred_check_branch
        %454 = sbr.rel (%p452) target = $region36
      $region35: #{unet_forward.11} parent=31 // pred_region
        _
      $region36: #{unet_forward.11} parent=31 // pred_fallthru
        _
    $region32: #{unet_forward.11} parent=5 // pred_fallthru
      _
    %p455 = scmp.le.s32.totalorder 2, %s9
    // Predicated region
    $region37: #{unet_forward.11} parent=5 // pred_check
      %p456 = pneg %p455
    $region38: #{unet_forward.11} parent=5 // pred_check_branch
      %458 = sbr.rel (%p456) target = $region40
    $region39: #{unet_forward.11} parent=5 // pred_region
      %s459 = ssub.s32 %s9, 2
      // Predicated region
      $region41: #{unet_forward.11} parent=39 // pred_check
        %p460 = pneg %p106
      $region42: #{unet_forward.11} parent=39 // pred_check_branch
        %462 = sbr.rel (%p460) target = $region44
      $region43: #{unet_forward.11} parent=39 // pred_region
        %p463 = scmp.lt.s32.totalorder %s15, 1
        %s464 = scalar_select %p463, %s15, 1
        %s465 = smul.addr %s464, 2
        %s466 = smul.addr %s465, 8
        %s467 = scalar_lea.vmem %s3, %s466
      $region44: #{unet_forward.11} parent=39 // pred_fallthru
        _
    $region40: #{unet_forward.11} parent=5 // pred_fallthru
      _
  $region6: #{unet_forward.11} parent=0 // loop_footer
    %s13 = sadd.s32 1, %s9
  $region7: #{unet_forward.11} parent=0 // loop_footer_branch
    %8 = sbr.rel target = $region3
  $region8: #{unet_forward.11} parent=0 // loop_exit
    _

// kernel: tile.63
$region0: #{tile.63}
  #allocation0 [shape = 's32[1]{0}', space=sflag, size = 0x4, scoped, tag = 'scoped memory for tile.63']
  %s0 = inlined_call_operand.vmem [shape: f32[16], index: 0, kind: input, shape index: {}]
  %s1 = inlined_call_operand.vmem [shape: f32[8,16], index: 1, kind: output, shape index: {}]
  // Predicated region
  $region2: #{tile.63} parent=0 // pred_check
    _
  $region3: #{tile.63} parent=0 // pred_check_branch
    %3 = sbr.rel (0) target = $region5
  $region4: #{tile.63} parent=0 // pred_region
    _
  $region5: #{tile.63} parent=0 // pred_fallthru
    _
  %v4 = vld [vmem:[%s0] ss:$0 sm:$0xff]
  %5 = vst [vmem:[%s1] sm:$0xff] %v4

// kernel: tile.64
$region0: #{tile.64}
  %s0 = inlined_call_operand.vmem [shape: f32[8,16], index: 0, kind: input, shape index: {}]
  %s1 = inlined_call_operand.vmem [shape: f32[1,128], index: 1, kind: output, shape index: {}]
  $region1: #{tile.64} parent=0
    #allocation0 [shape = 'u8[4096]{0}', space=vmem, size = 0x1000, scoped, tag = 'scoped mem for output reshape']
    %v2 = vld [vmem:[%s0] sm:$0x1]
    %vm3 = vcmask 130048
    %4 = vst.msk [vmem:[#allocation0] sm:$0x1] %vm3, %v2
    %s5 = scalar_lea.vmem %s0, 7
    %v6 = vld [vmem:[%s5] sm:$0x1]
    %7 = vrot.lane.b32.xlu0 %v6, 112
    %v8 = vpop.permute.xlu0 %7
    %vm9 = vcmask 1048448
    %10 = vst.msk [vmem:[#allocation0] sm:$0x1] %vm9, %v8
    %s11 = scalar_lea.vmem %s0, 6
    %v12 = vld [vmem:[%s11] sm:$0x1]
    %13 = vrot.lane.b32.xlu0 %v12, 96
    %v14 = vpop.permute.xlu0 %13
    %vm15 = vcmask 917248
    %16 = vst.msk [vmem:[#allocation0] sm:$0x1] %vm15, %v14
    %s17 = scalar_lea.vmem %s0, 5
    %v18 = vld [vmem:[%s17] sm:$0x1]
    %19 = vrot.lane.b32.xlu0 %v18, 80
    %v20 = vpop.permute.xlu0 %19
    %vm21 = vcmask 786048
    %22 = vst.msk [vmem:[#allocation0] sm:$0x1] %vm21, %v20
    %s23 = scalar_lea.vmem %s0, 4
    %v24 = vld [vmem:[%s23] sm:$0x1]
    %25 = vrot.lane.b32.xlu0 %v24, 64
    %v26 = vpop.permute.xlu0 %25
    %vm27 = vcmask 654848
    %28 = vst.msk [vmem:[#allocation0] sm:$0x1] %vm27, %v26
    %s29 = scalar_lea.vmem %s0, 3
    %v30 = vld [vmem:[%s29] sm:$0x1]
    %31 = vrot.lane.b32.xlu0 %v30, 48
    %v32 = vpop.permute.xlu0 %31
    %vm33 = vcmask 523648
    %34 = vst.msk [vmem:[#allocation0] sm:$0x1] %vm33, %v32
    %s35 = scalar_lea.vmem %s0, 2
    %v36 = vld [vmem:[%s35] sm:$0x1]
    %37 = vrot.lane.b32.xlu0 %v36, 32
    %v38 = vpop.permute.xlu0 %37
    %vm39 = vcmask 392448
    %40 = vst.msk [vmem:[#allocation0] sm:$0x1] %vm39, %v38
    %s41 = scalar_lea.vmem %s0, 1
    %v42 = vld [vmem:[%s41] sm:$0x1]
    %43 = vrot.lane.b32.xlu0 %v42, 16
    %v44 = vpop.permute.xlu0 %43
    %vm45 = vcmask 261248
    %46 = vst.msk [vmem:[#allocation0] sm:$0x1] %vm45, %v44
    %s48 = sshllo.u32 0, 1
    %v50 = vld [vmem:[#allocation0] sm:%s48]
    %s51 = sshllo.u32 0, 1
    %52 = vst [vmem:[%s1] sm:%s51] %v50

// kernel: unet_forward.12
$region0: #{unet_forward.12}
  #allocation0 [shape = 'u32[]', space=smem, size = 0x4, offset = 0x4, fixed_abs, tag = 'smem constant byte address 0x4 - core index']
  #allocation1 [shape = 'u32[144,128]{1,0:T(1,128)}', space=vmem, size = 0x12000, scoped, tag = 'internal scratch']
  %s0 = inlined_call_operand.vmem [shape: bf16[2,9,144], index: 0, kind: input, shape index: {}]
  %s1 = inlined_call_operand.vmem [shape: bf16[2,9,144], index: 1, kind: input, shape index: {}]
  %s2 = inlined_call_operand.vmem [shape: bf16[3,144,128], index: 2, kind: input, shape index: {}]
  %s3 = inlined_call_operand.vmem [shape: f32[1,128], index: 3, kind: input, shape index: {}]
  %s4 = inlined_call_operand.vmem [shape: f32[2,8,128], index: 4, kind: output, shape index: {}]
  %s5 = sld [smem:[#allocation0]]
  $region49: #{unet_forward.12} parent=0
    _
  %s7 = ssub.s32 1, %s5
  %s8 = scalar_select 0, %s7, %s5
  loop: start=0, step=1, limit=4
  $region2: #{unet_forward.12} parent=0 // loop_pre_header
    _
  $region3: #{unet_forward.12} parent=0 // loop_header
    %s10 = sphi 0, %s14
    %p11 = scmp.ge.s32.totalorder %s10, 4
    %s20 = sphi 0, %s22
    %s23 = sphi 0, %s20
    %s24 = sphi 0, %s23
    %s40 = sphi 0, %s24
    %s46 = sphi 0, %s48
    %s49 = sphi 0, %s46
    %s50 = sphi 0, %s49
    %s66 = sphi 0, %s50
    %s70 = sphi 0, %s70
    %s72 = sphi 0, %s70
    %s73 = sphi 0, %s72
    %s87 = sphi 0, %s73
    %s91 = sphi 0, %s91
    %s93 = sphi 0, %s91
    %s94 = sphi 0, %s93
    %s108 = sphi 0, %s94
    %s114 = sphi 0, %s116
    %s117 = sphi 0, %s114
    %s118 = sphi 0, %s117
    %s134 = sphi 0, %s118
  $region4: #{unet_forward.12} parent=0 // loop_header_branch
    %13 = sbr.rel (%p11) target = $region8
  $region5: #{unet_forward.12} parent=0 // loop_body
    %s15 = ssub.s32 %s10, 1
    %s16 = ssub.s32 %s10, 2
    %s17 = sadd.s32 %s10, 1
    %s18 = ssub.s32 %s10, %s17
    %p19 = scmp.eq.s32.totalorder %s18, 0
    %s21 = sadd.s32 %s20, 1
    %s22 = scalar_select %p19, %s20, %s21
    %p25 = pneg %p19
    %p26 = scmp.eq.s32.totalorder %s10, 1
    %p27 = por %p25, %p26
    %p28 = scmp.ne.s32.totalorder %s20, %s23
    %p29 = scmp.eq.s32.totalorder %s10, 0
    %p30 = por %p28, %p29
    %p31 = scmp.ne.s32.totalorder %s20, %s23
    %p32 = scmp.eq.s32.totalorder %s15, 1
    %p33 = por %p31, %p32
    %p34 = scmp.ne.s32.totalorder %s23, %s24
    %p35 = scmp.eq.s32.totalorder %s15, 0
    %p36 = por %p34, %p35
    %p37 = scmp.ne.s32.totalorder %s23, %s24
    %p38 = scmp.eq.s32.totalorder %s16, 1
    %p39 = por %p37, %p38
    %p41 = scmp.ne.s32.totalorder %s24, %s40
    %p42 = scmp.eq.s32.totalorder %s16, 0
    %p43 = por %p41, %p42
    %s44 = ssub.s32 %s10, %s17
    %p45 = scmp.eq.s32.totalorder %s44, 0
    %s47 = sadd.s32 %s46, 1
    %s48 = scalar_select %p45, %s46, %s47
    %p51 = pneg %p45
    %p52 = scmp.eq.s32.totalorder %s10, 1
    %p53 = por %p51, %p52
    %p54 = scmp.ne.s32.totalorder %s46, %s49
    %p55 = scmp.eq.s32.totalorder %s10, 0
    %p56 = por %p54, %p55
    %p57 = scmp.ne.s32.totalorder %s46, %s49
    %p58 = scmp.eq.s32.totalorder %s15, 1
    %p59 = por %p57, %p58
    %p60 = scmp.ne.s32.totalorder %s49, %s50
    %p61 = scmp.eq.s32.totalorder %s15, 0
    %p62 = por %p60, %p61
    %p63 = scmp.ne.s32.totalorder %s49, %s50
    %p64 = scmp.eq.s32.totalorder %s16, 1
    %p65 = por %p63, %p64
    %p67 = scmp.ne.s32.totalorder %s50, %s66
    %p68 = scmp.eq.s32.totalorder %s16, 0
    %p69 = por %p67, %p68
    %s71 = sadd.s32 %s70, 1
    %p74 = scmp.eq.s32.totalorder %s10, 1
    %p75 = scmp.ne.s32.totalorder %s70, %s72
    %p76 = scmp.eq.s32.totalorder %s10, 0
    %p77 = por %p75, %p76
    %p78 = scmp.ne.s32.totalorder %s70, %s72
    %p79 = scmp.eq.s32.totalorder %s15, 1
    %p80 = por %p78, %p79
    %p81 = scmp.ne.s32.totalorder %s72, %s73
    %p82 = scmp.eq.s32.totalorder %s15, 0
    %p83 = por %p81, %p82
    %p84 = scmp.ne.s32.totalorder %s72, %s73
    %p85 = scmp.eq.s32.totalorder %s16, 1
    %p86 = por %p84, %p85
    %p88 = scmp.ne.s32.totalorder %s73, %s87
    %p89 = scmp.eq.s32.totalorder %s16, 0
    %p90 = por %p88, %p89
    %s92 = sadd.s32 %s91, 1
    %p95 = scmp.eq.s32.totalorder %s10, 1
    %p96 = scmp.ne.s32.totalorder %s91, %s93
    %p97 = scmp.eq.s32.totalorder %s10, 0
    %p98 = por %p96, %p97
    %p99 = scmp.ne.s32.totalorder %s91, %s93
    %p100 = scmp.eq.s32.totalorder %s15, 1
    %p101 = por %p99, %p100
    %p102 = scmp.ne.s32.totalorder %s93, %s94
    %p103 = scmp.eq.s32.totalorder %s15, 0
    %p104 = por %p102, %p103
    %p105 = scmp.ne.s32.totalorder %s93, %s94
    %p106 = scmp.eq.s32.totalorder %s16, 1
    %p107 = por %p105, %p106
    %p109 = scmp.ne.s32.totalorder %s94, %s108
    %p110 = scmp.eq.s32.totalorder %s16, 0
    %p111 = por %p109, %p110
    %s112 = ssub.s32 %s10, %s17
    %p113 = scmp.eq.s32.totalorder %s112, 0
    %s115 = sadd.s32 %s114, 1
    %s116 = scalar_select %p113, %s114, %s115
    %p119 = pneg %p113
    %p120 = scmp.eq.s32.totalorder %s10, 1
    %p121 = por %p119, %p120
    %p122 = scmp.ne.s32.totalorder %s114, %s117
    %p123 = scmp.eq.s32.totalorder %s10, 0
    %p124 = por %p122, %p123
    %p125 = scmp.ne.s32.totalorder %s114, %s117
    %p126 = scmp.eq.s32.totalorder %s15, 1
    %p127 = por %p125, %p126
    %p128 = scmp.ne.s32.totalorder %s117, %s118
    %p129 = scmp.eq.s32.totalorder %s15, 0
    %p130 = por %p128, %p129
    %p131 = scmp.ne.s32.totalorder %s117, %s118
    %p132 = scmp.eq.s32.totalorder %s16, 1
    %p133 = por %p131, %p132
    %p135 = scmp.ne.s32.totalorder %s118, %s134
    %p136 = scmp.eq.s32.totalorder %s16, 0
    %p137 = por %p135, %p136
    %p138 = scmp.le.s32.totalorder 1, %s10
    %p139 = scmp.lt.s32.totalorder %s10, 3
    %p140 = pnand %p138, %p139
    %p141 = pneg %p140
    // Predicated region
    $region9: #{unet_forward.12} parent=5 // pred_check
      _
    $region10: #{unet_forward.12} parent=5 // pred_check_branch
      %143 = sbr.rel (%p140) target = $region12
    $region11: #{unet_forward.12} parent=5 // pred_region
      %s144 = ssub.s32 %s10, 1
      // Predicated region
      $region13: #{unet_forward.12} parent=11 // pred_check
        %p145 = pneg %p83
      $region14: #{unet_forward.12} parent=11 // pred_check_branch
        %147 = sbr.rel (%p145) target = $region16
      $region15: #{unet_forward.12} parent=11 // pred_region
        _
      $region16: #{unet_forward.12} parent=11 // pred_fallthru
        _
      // Predicated region
      $region17: #{unet_forward.12} parent=11 // pred_check
        %p148 = pneg %p104
      $region18: #{unet_forward.12} parent=11 // pred_check_branch
        %150 = sbr.rel (%p148) target = $region20
      $region19: #{unet_forward.12} parent=11 // pred_region
        _
      $region20: #{unet_forward.12} parent=11 // pred_fallthru
        _
    $region12: #{unet_forward.12} parent=5 // pred_fallthru
      _
    %p151 = scmp.lt.s32.totalorder %s10, 2
    // Predicated region
    $region21: #{unet_forward.12} parent=5 // pred_check
      %p152 = pneg %p151
    $region22: #{unet_forward.12} parent=5 // pred_check_branch
      %154 = sbr.rel (%p152) target = $region24
    $region23: #{unet_forward.12} parent=5 // pred_region
      // Predicated region
      $region25: #{unet_forward.12} parent=23 // pred_check
        %p155 = pneg %p30
      $region26: #{unet_forward.12} parent=23 // pred_check_branch
        %157 = sbr.rel (%p155) target = $region28
      $region27: #{unet_forward.12} parent=23 // pred_region
        %p158 = scmp.lt.s32.totalorder %s10, 1
        %s159 = scalar_select %p158, %s10, 1
        %s160 = smul.addr %s159, 4
        %s161 = smul.addr %s160, 4
        %s162 = scalar_lea.vmem %s0, %s161
      $region28: #{unet_forward.12} parent=23 // pred_fallthru
        _
      // Predicated region
      $region29: #{unet_forward.12} parent=23 // pred_check
        %p163 = pneg %p56
      $region30: #{unet_forward.12} parent=23 // pred_check_branch
        %165 = sbr.rel (%p163) target = $region32
      $region31: #{unet_forward.12} parent=23 // pred_region
        %p166 = scmp.lt.s32.totalorder %s10, 1
        %s167 = scalar_select %p166, %s10, 1
        %s168 = smul.addr %s167, 4
        %s169 = smul.addr %s168, 4
        %s170 = scalar_lea.vmem %s1, %s169
      $region32: #{unet_forward.12} parent=23 // pred_fallthru
        _
    $region24: #{unet_forward.12} parent=5 // pred_fallthru
      _
    %p171 = scmp.le.s32.totalorder 1, %s10
    %p172 = scmp.lt.s32.totalorder %s10, 3
    %p173 = pnand %p171, %p172
    %p174 = pneg %p173
    // Predicated region
    $region33: #{unet_forward.12} parent=5 // pred_check
      _
    $region34: #{unet_forward.12} parent=5 // pred_check_branch
      %176 = sbr.rel (%p173) target = $region36
    $region35: #{unet_forward.12} parent=5 // pred_region
      %s177 = ssub.s32 %s10, 1
      %p178 = scmp.lt.s32.totalorder %s15, 1
      %s179 = scalar_select %p178, %s15, 1
      %s180 = smul.addr %s179, 4
      %s181 = smul.addr %s180, 4
      %s182 = scalar_lea.vmem %s0, %s181
      %p183 = pneg %p36
      %p184 = pneg %p33
      %p185 = scmp.lt.s32.totalorder %s15, 1
      %s186 = scalar_select %p185, %s15, 1
      %s187 = smul.addr %s186, 4
      %s188 = smul.addr %s187, 4
      %s189 = scalar_lea.vmem %s1, %s188
      %p190 = pneg %p62
      %p191 = pneg %p59
      %p192 = pneg %p83
      %p193 = pneg %p80
      %p194 = pneg %p104
      %p195 = pneg %p101
      %p196 = pneg %p130
      %p197 = pneg %p127
      %p198 = scmp.lt.s32.totalorder %s15, 1
      %s199 = scalar_select %p198, %s15, 1
      %s200 = smul.addr %s199, 8
      %s201 = scalar_lea.vmem %s4, %s200
      %p202 = scmp.lt.s32.totalorder %s15, 1
      %s203 = scalar_select %p202, %s15, 1
      %s204 = smul.addr %s203, 4
      %s205 = smul.addr %s204, 4
      %s206 = scalar_lea.vmem %s0, %s205
      %p207 = scmp.lt.s32.totalorder %s15, 1
      %s208 = scalar_select %p207, %s15, 1
      %s209 = smul.addr %s208, 4
      %s210 = smul.addr %s209, 4
      %s211 = scalar_lea.vmem %s1, %s210
      %p212 = scmp.lt.s32.totalorder %s15, 1
      %s213 = scalar_select %p212, %s15, 1
      %s214 = smul.addr %s213, 8
      %s215 = scalar_lea.vmem %s4, %s214
      %v217 = vld [vmem:[%s206] sm:$0xff]
      %v218 = vld [vmem:[%s2] sm:$0xf]
      %v219 = vld [vmem:[%s2 + $0x4] sm:$0xf]
      %v220 = vld [vmem:[%s2 + $0x8] sm:$0xf]
      %v221 = vld [vmem:[%s2 + $0xc] sm:$0xf]
      %v222 = vld [vmem:[%s2 + $0x10] sm:$0xf]
      %v223 = vld [vmem:[%s2 + $0x14] sm:$0xf]
      %v224 = vld [vmem:[%s2 + $0x18] sm:$0xf]
      %v225 = vld [vmem:[%s2 + $0x1c] sm:$0xf]
      %v226 = vld [vmem:[%s2 + $0x20] sm:$0xf]
      %v227 = vld [vmem:[%s2 + $0x24] sm:$0xf]
      %v228 = vld [vmem:[%s2 + $0x28] sm:$0xf]
      %v229 = vld [vmem:[%s2 + $0x2c] sm:$0xf]
      %v230 = vld [vmem:[%s2 + $0x30] sm:$0xf]
      %v231 = vld [vmem:[%s2 + $0x34] sm:$0xf]
      %v232 = vld [vmem:[%s2 + $0x38] sm:$0xf]
      %v233 = vld [vmem:[%s2 + $0x3c] sm:$0xf]
      %v234 = vld [vmem:[%s2 + $0x40] sm:$0xf]
      %v235 = vld [vmem:[%s2 + $0x44] sm:$0xf]
      %v236 = vld [vmem:[%s211] sm:$0xff]
      %s237 = scalar_lea.vmem %s2, 72
      %v238 = vld [vmem:[%s237] sm:$0xf]
      %v239 = vld [vmem:[%s237 + $0x4] sm:$0xf]
      %v240 = vld [vmem:[%s237 + $0x8] sm:$0xf]
      %v241 = vld [vmem:[%s237 + $0xc] sm:$0xf]
      %v242 = vld [vmem:[%s237 + $0x10] sm:$0xf]
      %v243 = vld [vmem:[%s237 + $0x14] sm:$0xf]
      %v244 = vld [vmem:[%s237 + $0x18] sm:$0xf]
      %v245 = vld [vmem:[%s237 + $0x1c] sm:$0xf]
      %v246 = vld [vmem:[%s237 + $0x20] sm:$0xf]
      %v247 = vld [vmem:[%s237 + $0x24] sm:$0xf]
      %v248 = vld [vmem:[%s237 + $0x28] sm:$0xf]
      %v249 = vld [vmem:[%s237 + $0x2c] sm:$0xf]
      %v250 = vld [vmem:[%s237 + $0x30] sm:$0xf]
      %v251 = vld [vmem:[%s237 + $0x34] sm:$0xf]
      %v252 = vld [vmem:[%s237 + $0x38] sm:$0xf]
      %v253 = vld [vmem:[%s237 + $0x3c] sm:$0xf]
      %v254 = vld [vmem:[%s237 + $0x40] sm:$0xf]
      %v255 = vld [vmem:[%s237 + $0x44] sm:$0xf]
      %v257 = vunpack.c.l.b16 %v236
      %v258 = vunpack.c.h.b16 %v236
      %v259 = vpack.c.b16 %v257, %v257
      %v260 = vpack.c.b16 %v258, %v258
      %v280 = vunpack.c.l.b16 %v238
      %v281 = vunpack.c.l.b16 %v239
      %v282 = vunpack.c.l.b16 %v240
      %v283 = vunpack.c.l.b16 %v241
      %v284 = vunpack.c.l.b16 %v242
      %v285 = vunpack.c.l.b16 %v243
      %v286 = vunpack.c.l.b16 %v244
      %v287 = vunpack.c.l.b16 %v245
      %v288 = vunpack.c.l.b16 %v246
      %v289 = vunpack.c.l.b16 %v247
      %v290 = vunpack.c.l.b16 %v248
      %v291 = vunpack.c.l.b16 %v249
      %v292 = vunpack.c.l.b16 %v250
      %v293 = vunpack.c.l.b16 %v251
      %v294 = vunpack.c.l.b16 %v252
      %v295 = vunpack.c.l.b16 %v253
      %v296 = vunpack.c.l.b16 %v254
      %v297 = vunpack.c.l.b16 %v255
      %v298 = vpack.c.b16 %v281, %v280
      %v299 = vpack.c.b16 %v283, %v282
      %v300 = vpack.c.b16 %v285, %v284
      %v301 = vpack.c.b16 %v287, %v286
      %v302 = vpack.c.b16 %v289, %v288
      %v303 = vpack.c.b16 %v291, %v290
      %v304 = vpack.c.b16 %v293, %v292
      %v305 = vpack.c.b16 %v295, %v294
      %v306 = vpack.c.b16 %v297, %v296
      %vm316 = vcmask 130048
      %v318 = vsel %vm316, %v260, 0
      %320 = vmatprep.subr.bf16.mxu0 0
      %321 = vmatpush1.bf16.msra.mxu0 %v298
      %322 = vmatprep.subr.bf16.mxu0 0
      %323 = vmatpush1.bf16.msra.mxu0 %v299
      %324 = vmatprep.subr.bf16.mxu0 0
      %325 = vmatpush1.bf16.msra.mxu0 %v300
      %326 = vmatprep.subr.bf16.mxu0 0
      %327 = vmatpush1.bf16.msra.mxu0 %v301
      %328 = vmatprep.subr.bf16.mxu0 0
      %329 = vmatpush1.bf16.msra.mxu0 %v302
      %330 = vmatprep.subr.bf16.mxu0 0
      %331 = vmatpush1.bf16.msra.mxu0 %v303
      %332 = vmatprep.subr.bf16.mxu0 0
      %333 = vmatpush1.bf16.msra.mxu0 %v304
      %334 = vmatprep.subr.bf16.mxu0 0
      %335 = vmatpush1.bf16.msra.mxu0 %v305
      %336 = vmatprep.subr.bf16.mxu0 0
      %337 = vmatpush1.bf16.msra.mxu0 %v306
      %338 = vmatprep.subr.bf16.mxu0 0
      %339 = vmatpush1.bf16.msra.mxu0 0
      %340 = vmatprep.subr.bf16.mxu0 0
      %341 = vmatpush1.bf16.msra.mxu0 0
      %342 = vmatprep.subr.bf16.mxu0 0
      %343 = vmatpush1.bf16.msra.mxu0 0
      %344 = vmatprep.subr.bf16.mxu0 0
      %345 = vmatpush1.bf16.msra.mxu0 0
      %346 = vmatprep.subr.bf16.mxu0 0
      %347 = vmatpush1.bf16.msra.mxu0 0
      %348 = vmatprep.subr.bf16.mxu0 0
      %349 = vmatpush1.bf16.msra.mxu0 0
      %350 = vmatprep.subr.bf16.mxu0 0
      %351 = vmatpush1.bf16.msra.mxu0 0
      %352 = vmatprep.mubr.bf16.mxu0 %v318
      %353 = vmatmul.mubr.bf16.gmra.mrb[0].mxu0 %v259
      %v354 = vpop.f32.mrb[0].mxu0
      %v355 = vadd.f32 0.0, %v354
      %v356 = vpop.f32.mrb[0].mxu0
      %v357 = vpop.f32.mrb[0].mxu0
      %v358 = vpop.f32.mrb[0].mxu0
      %359 = vdwg.mxu0
      %v361 = vunpack.c.l.b16 %v217
      %v362 = vunpack.c.h.b16 %v217
      %v363 = vpack.c.b16 %v361, %v361
      %v364 = vpack.c.b16 %v362, %v362
      %v384 = vunpack.c.l.b16 %v218
      %v385 = vunpack.c.l.b16 %v219
      %v386 = vunpack.c.l.b16 %v220
      %v387 = vunpack.c.l.b16 %v221
      %v388 = vunpack.c.l.b16 %v222
      %v389 = vunpack.c.l.b16 %v223
      %v390 = vunpack.c.l.b16 %v224
      %v391 = vunpack.c.l.b16 %v225
      %v392 = vunpack.c.l.b16 %v226
      %v393 = vunpack.c.l.b16 %v227
      %v394 = vunpack.c.l.b16 %v228
      %v395 = vunpack.c.l.b16 %v229
      %v396 = vunpack.c.l.b16 %v230
      %v397 = vunpack.c.l.b16 %v231
      %v398 = vunpack.c.l.b16 %v232
      %v399 = vunpack.c.l.b16 %v233
      %v400 = vunpack.c.l.b16 %v234
      %v401 = vunpack.c.l.b16 %v235
      %v402 = vpack.c.b16 %v385, %v384
      %v403 = vpack.c.b16 %v387, %v386
      %v404 = vpack.c.b16 %v389, %v388
      %v405 = vpack.c.b16 %v391, %v390
      %v406 = vpack.c.b16 %v393, %v392
      %v407 = vpack.c.b16 %v395, %v394
      %v408 = vpack.c.b16 %v397, %v396
      %v409 = vpack.c.b16 %v399, %v398
      %v410 = vpack.c.b16 %v401, %v400
      %v421 = vsel %vm316, %v364, 0
      %423 = vmatprep.subr.bf16.mxu0 0
      %424 = vmatpush1.bf16.msra.mxu0 %v402
      %425 = vmatprep.subr.bf16.mxu0 0
      %426 = vmatpush1.bf16.msra.mxu0 %v403
      %427 = vmatprep.subr.bf16.mxu0 0
      %428 = vmatpush1.bf16.msra.mxu0 %v404
      %429 = vmatprep.subr.bf16.mxu0 0
      %430 = vmatpush1.bf16.msra.mxu0 %v405
      %431 = vmatprep.subr.bf16.mxu0 0
      %432 = vmatpush1.bf16.msra.mxu0 %v406
      %433 = vmatprep.subr.bf16.mxu0 0
      %434 = vmatpush1.bf16.msra.mxu0 %v407
      %435 = vmatprep.subr.bf16.mxu0 0
      %436 = vmatpush1.bf16.msra.mxu0 %v408
      %437 = vmatprep.subr.bf16.mxu0 0
      %438 = vmatpush1.bf16.msra.mxu0 %v409
      %439 = vmatprep.subr.bf16.mxu0 0
      %440 = vmatpush1.bf16.msra.mxu0 %v410
      %441 = vmatprep.subr.bf16.mxu0 0
      %442 = vmatpush1.bf16.msra.mxu0 0
      %443 = vmatprep.subr.bf16.mxu0 0
      %444 = vmatpush1.bf16.msra.mxu0 0
      %445 = vmatprep.subr.bf16.mxu0 0
      %446 = vmatpush1.bf16.msra.mxu0 0
      %447 = vmatprep.subr.bf16.mxu0 0
      %448 = vmatpush1.bf16.msra.mxu0 0
      %449 = vmatprep.subr.bf16.mxu0 0
      %450 = vmatpush1.bf16.msra.mxu0 0
      %451 = vmatprep.subr.bf16.mxu0 0
      %452 = vmatpush1.bf16.msra.mxu0 0
      %453 = vmatprep.subr.bf16.mxu0 0
      %454 = vmatpush1.bf16.msra.mxu0 0
      %455 = vmatprep.mubr.bf16.mxu0 %v421
      %456 = vmatmul.mubr.bf16.gmra.mrb[0].mxu0 %v363
      %v457 = vpop.f32.mrb[0].mxu0
      %v458 = vadd.f32 %v355, %v457
      %v459 = vpop.f32.mrb[0].mxu0
      %v460 = vpop.f32.mrb[0].mxu0
      %v461 = vpop.f32.mrb[0].mxu0
      %462 = vdwg.mxu0
      %v463 = vld [vmem:[%s206] sm:$0xff]
      %v464 = vld [vmem:[%s206 + $0x8] sm:$0x11]
      %s465 = scalar_lea.vmem %s2, 144
      %v466 = vld [vmem:[%s465] sm:$0xf]
      %v467 = vld [vmem:[%s465 + $0x4] sm:$0xf]
      %v468 = vld [vmem:[%s465 + $0x8] sm:$0xf]
      %v469 = vld [vmem:[%s465 + $0xc] sm:$0xf]
      %v470 = vld [vmem:[%s465 + $0x10] sm:$0xf]
      %v471 = vld [vmem:[%s465 + $0x14] sm:$0xf]
      %v472 = vld [vmem:[%s465 + $0x18] sm:$0xf]
      %v473 = vld [vmem:[%s465 + $0x1c] sm:$0xf]
      %v474 = vld [vmem:[%s465 + $0x20] sm:$0xf]
      %v475 = vld [vmem:[%s465 + $0x24] sm:$0xf]
      %v476 = vld [vmem:[%s465 + $0x28] sm:$0xf]
      %v477 = vld [vmem:[%s465 + $0x2c] sm:$0xf]
      %v478 = vld [vmem:[%s465 + $0x30] sm:$0xf]
      %v479 = vld [vmem:[%s465 + $0x34] sm:$0xf]
      %v480 = vld [vmem:[%s465 + $0x38] sm:$0xf]
      %v481 = vld [vmem:[%s465 + $0x3c] sm:$0xf]
      %v482 = vld [vmem:[%s465 + $0x40] sm:$0xf]
      %v483 = vld [vmem:[%s465 + $0x44] sm:$0xf]
      %v486 = vunpack.c.l.b16 %v463
      %v487 = vunpack.c.h.b16 %v463
      %v488 = vunpack.c.l.b16 %v464
      %v489 = vunpack.c.h.b16 %v464
      %v490 = vpack.c.b16 %v488, %v486
      %v491 = vpack.c.b16 %v489, %v487
      %v493 = vshrl.u32 %v490, 16
      %v495 = vshll.u32 %v490, 16
      %v497 = vrot.slane %v495, 1
      %v498 = vor.u32 %v493, %v497
      %v500 = vshrl.u32 %v491, 16
      %v502 = vshll.u32 %v491, 16
      %v504 = vrot.slane %v502, 1
      %v505 = vor.u32 %v500, %v504
      %v525 = vunpack.c.l.b16 %v466
      %v526 = vunpack.c.l.b16 %v467
      %v527 = vunpack.c.l.b16 %v468
      %v528 = vunpack.c.l.b16 %v469
      %v529 = vunpack.c.l.b16 %v470
      %v530 = vunpack.c.l.b16 %v471
      %v531 = vunpack.c.l.b16 %v472
      %v532 = vunpack.c.l.b16 %v473
      %v533 = vunpack.c.l.b16 %v474
      %v534 = vunpack.c.l.b16 %v475
      %v535 = vunpack.c.l.b16 %v476
      %v536 = vunpack.c.l.b16 %v477
      %v537 = vunpack.c.l.b16 %v478
      %v538 = vunpack.c.l.b16 %v479
      %v539 = vunpack.c.l.b16 %v480
      %v540 = vunpack.c.l.b16 %v481
      %v541 = vunpack.c.l.b16 %v482
      %v542 = vunpack.c.l.b16 %v483
      %v543 = vpack.c.b16 %v526, %v525
      %v544 = vpack.c.b16 %v528, %v527
      %v545 = vpack.c.b16 %v530, %v529
      %v546 = vpack.c.b16 %v532, %v531
      %v547 = vpack.c.b16 %v534, %v533
      %v548 = vpack.c.b16 %v536, %v535
      %v549 = vpack.c.b16 %v538, %v537
      %v550 = vpack.c.b16 %v540, %v539
      %v551 = vpack.c.b16 %v542, %v541
      %v562 = vsel %vm316, %v505, 0
      %564 = vmatprep.subr.bf16.mxu0 0
      %565 = vmatpush1.bf16.msra.mxu0 %v543
      %566 = vmatprep.subr.bf16.mxu0 0
      %567 = vmatpush1.bf16.msra.mxu0 %v544
      %568 = vmatprep.subr.bf16.mxu0 0
      %569 = vmatpush1.bf16.msra.mxu0 %v545
      %570 = vmatprep.subr.bf16.mxu0 0
      %571 = vmatpush1.bf16.msra.mxu0 %v546
      %572 = vmatprep.subr.bf16.mxu0 0
      %573 = vmatpush1.bf16.msra.mxu0 %v547
      %574 = vmatprep.subr.bf16.mxu0 0
      %575 = vmatpush1.bf16.msra.mxu0 %v548
      %576 = vmatprep.subr.bf16.mxu0 0
      %577 = vmatpush1.bf16.msra.mxu0 %v549
      %578 = vmatprep.subr.bf16.mxu0 0
      %579 = vmatpush1.bf16.msra.mxu0 %v550
      %580 = vmatprep.subr.bf16.mxu0 0
      %581 = vmatpush1.bf16.msra.mxu0 %v551
      %582 = vmatprep.subr.bf16.mxu0 0
      %583 = vmatpush1.bf16.msra.mxu0 0
      %584 = vmatprep.subr.bf16.mxu0 0
      %585 = vmatpush1.bf16.msra.mxu0 0
      %586 = vmatprep.subr.bf16.mxu0 0
      %587 = vmatpush1.bf16.msra.mxu0 0
      %588 = vmatprep.subr.bf16.mxu0 0
      %589 = vmatpush1.bf16.msra.mxu0 0
      %590 = vmatprep.subr.bf16.mxu0 0
      %591 = vmatpush1.bf16.msra.mxu0 0
      %592 = vmatprep.subr.bf16.mxu0 0
      %593 = vmatpush1.bf16.msra.mxu0 0
      %594 = vmatprep.subr.bf16.mxu0 0
      %595 = vmatpush1.bf16.msra.mxu0 0
      %596 = vmatprep.mubr.bf16.mxu0 %v562
      %597 = vmatmul.mubr.bf16.gmra.mrb[0].mxu0 %v498
      %v598 = vpop.f32.mrb[0].mxu0
      %v599 = vadd.f32 0.0, %v598
      %v600 = vpop.f32.mrb[0].mxu0
      %v601 = vpop.f32.mrb[0].mxu0
      %v602 = vpop.f32.mrb[0].mxu0
      %603 = vdwg.mxu0
      %v604 = vadd.f32 %v458, %v599
      %v605 = vld [vmem:[%s3] sm:$0x1]
      %v607 = vlaneseq
      %v608 = vshrl.u32 %v607, 7
      %v609 = vsub.s32 0, %v608
      %v610 = vrot.slane %v605, %v609
      %v612 = vadd.f32 %v604, %v610
      %v613 = vmax.f32 %v612, 0.0
      %614 = vst [vmem:[%s215] sm:$0xff] %v613
      %p615 = scmp.lt.s32.totalorder %s15, 1
      %s616 = scalar_select %p615, %s15, 1
      %s617 = smul.addr %s616, 8
      %s618 = scalar_lea.vmem %s4, %s617
      // Predicated region
      $region37: #{unet_forward.12} parent=35 // pred_check
        %p619 = pneg %p127
      $region38: #{unet_forward.12} parent=35 // pred_check_branch
        %621 = sbr.rel (%p619) target = $region40
      $region39: #{unet_forward.12} parent=35 // pred_region
        _
      $region40: #{unet_forward.12} parent=35 // pred_fallthru
        _
    $region36: #{unet_forward.12} parent=5 // pred_fallthru
      _
    %p622 = scmp.le.s32.totalorder 2, %s10
    // Predicated region
    $region41: #{unet_forward.12} parent=5 // pred_check
      %p623 = pneg %p622
    $region42: #{unet_forward.12} parent=5 // pred_check_branch
      %625 = sbr.rel (%p623) target = $region44
    $region43: #{unet_forward.12} parent=5 // pred_region
      %s626 = ssub.s32 %s10, 2
      // Predicated region
      $region45: #{unet_forward.12} parent=43 // pred_check
        %p627 = pneg %p133
      $region46: #{unet_forward.12} parent=43 // pred_check_branch
        %629 = sbr.rel (%p627) target = $region48
      $region47: #{unet_forward.12} parent=43 // pred_region
        %p630 = scmp.lt.s32.totalorder %s16, 1
        %s631 = scalar_select %p630, %s16, 1
        %s632 = smul.addr %s631, 8
        %s633 = scalar_lea.vmem %s4, %s632
      $region48: #{unet_forward.12} parent=43 // pred_fallthru
        _
    $region44: #{unet_forward.12} parent=5 // pred_fallthru
      _
  $region6: #{unet_forward.12} parent=0 // loop_footer
    %s14 = sadd.s32 1, %s10
  $region7: #{unet_forward.12} parent=0 // loop_footer_branch
    %9 = sbr.rel target = $region3
  $region8: #{unet_forward.12} parent=0 // loop_exit
    _

// kernel: unet_forward.13
$region0: #{unet_forward.13}
  #allocation0 [shape = 'u32[]', space=smem, size = 0x4, offset = 0x4, fixed_abs, tag = 'smem constant byte address 0x4 - core index']
  #allocation1 [shape = 'u32[144,128]{1,0:T(1,128)}', space=vmem, size = 0x12000, scoped, tag = 'internal scratch']
  %s0 = inlined_call_operand.vmem [shape: bf16[2,10,160], index: 0, kind: input, shape index: {}]
  %s1 = inlined_call_operand.vmem [shape: bf16[3,160,128], index: 1, kind: input, shape index: {}]
  %s2 = inlined_call_operand.vmem [shape: f32[1,128], index: 2, kind: input, shape index: {}]
  %s3 = inlined_call_operand.vmem [shape: f32[2,8,128], index: 3, kind: output, shape index: {}]
  %s4 = sld [smem:[#allocation0]]
  $region45: #{unet_forward.13} parent=0
    _
  %s6 = ssub.s32 1, %s4
  %s7 = scalar_select 0, %s6, %s4
  loop: start=0, step=1, limit=4
  $region2: #{unet_forward.13} parent=0 // loop_pre_header
    _
  $region3: #{unet_forward.13} parent=0 // loop_header
    %s9 = sphi 0, %s13
    %p10 = scmp.ge.s32.totalorder %s9, 4
    %s19 = sphi 0, %s21
    %s22 = sphi 0, %s19
    %s23 = sphi 0, %s22
    %s39 = sphi 0, %s23
    %s43 = sphi 0, %s43
    %s45 = sphi 0, %s43
    %s46 = sphi 0, %s45
    %s60 = sphi 0, %s46
    %s64 = sphi 0, %s64
    %s66 = sphi 0, %s64
    %s67 = sphi 0, %s66
    %s81 = sphi 0, %s67
    %s87 = sphi 0, %s89
    %s90 = sphi 0, %s87
    %s91 = sphi 0, %s90
    %s107 = sphi 0, %s91
  $region4: #{unet_forward.13} parent=0 // loop_header_branch
    %12 = sbr.rel (%p10) target = $region8
  $region5: #{unet_forward.13} parent=0 // loop_body
    %s14 = ssub.s32 %s9, 1
    %s15 = ssub.s32 %s9, 2
    %s16 = sadd.s32 %s9, 1
    %s17 = ssub.s32 %s9, %s16
    %p18 = scmp.eq.s32.totalorder %s17, 0
    %s20 = sadd.s32 %s19, 1
    %s21 = scalar_select %p18, %s19, %s20
    %p24 = pneg %p18
    %p25 = scmp.eq.s32.totalorder %s9, 1
    %p26 = por %p24, %p25
    %p27 = scmp.ne.s32.totalorder %s19, %s22
    %p28 = scmp.eq.s32.totalorder %s9, 0
    %p29 = por %p27, %p28
    %p30 = scmp.ne.s32.totalorder %s19, %s22
    %p31 = scmp.eq.s32.totalorder %s14, 1
    %p32 = por %p30, %p31
    %p33 = scmp.ne.s32.totalorder %s22, %s23
    %p34 = scmp.eq.s32.totalorder %s14, 0
    %p35 = por %p33, %p34
    %p36 = scmp.ne.s32.totalorder %s22, %s23
    %p37 = scmp.eq.s32.totalorder %s15, 1
    %p38 = por %p36, %p37
    %p40 = scmp.ne.s32.totalorder %s23, %s39
    %p41 = scmp.eq.s32.totalorder %s15, 0
    %p42 = por %p40, %p41
    %s44 = sadd.s32 %s43, 1
    %p47 = scmp.eq.s32.totalorder %s9, 1
    %p48 = scmp.ne.s32.totalorder %s43, %s45
    %p49 = scmp.eq.s32.totalorder %s9, 0
    %p50 = por %p48, %p49
    %p51 = scmp.ne.s32.totalorder %s43, %s45
    %p52 = scmp.eq.s32.totalorder %s14, 1
    %p53 = por %p51, %p52
    %p54 = scmp.ne.s32.totalorder %s45, %s46
    %p55 = scmp.eq.s32.totalorder %s14, 0
    %p56 = por %p54, %p55
    %p57 = scmp.ne.s32.totalorder %s45, %s46
    %p58 = scmp.eq.s32.totalorder %s15, 1
    %p59 = por %p57, %p58
    %p61 = scmp.ne.s32.totalorder %s46, %s60
    %p62 = scmp.eq.s32.totalorder %s15, 0
    %p63 = por %p61, %p62
    %s65 = sadd.s32 %s64, 1
    %p68 = scmp.eq.s32.totalorder %s9, 1
    %p69 = scmp.ne.s32.totalorder %s64, %s66
    %p70 = scmp.eq.s32.totalorder %s9, 0
    %p71 = por %p69, %p70
    %p72 = scmp.ne.s32.totalorder %s64, %s66
    %p73 = scmp.eq.s32.totalorder %s14, 1
    %p74 = por %p72, %p73
    %p75 = scmp.ne.s32.totalorder %s66, %s67
    %p76 = scmp.eq.s32.totalorder %s14, 0
    %p77 = por %p75, %p76
    %p78 = scmp.ne.s32.totalorder %s66, %s67
    %p79 = scmp.eq.s32.totalorder %s15, 1
    %p80 = por %p78, %p79
    %p82 = scmp.ne.s32.totalorder %s67, %s81
    %p83 = scmp.eq.s32.totalorder %s15, 0
    %p84 = por %p82, %p83
    %s85 = ssub.s32 %s9, %s16
    %p86 = scmp.eq.s32.totalorder %s85, 0
    %s88 = sadd.s32 %s87, 1
    %s89 = scalar_select %p86, %s87, %s88
    %p92 = pneg %p86
    %p93 = scmp.eq.s32.totalorder %s9, 1
    %p94 = por %p92, %p93
    %p95 = scmp.ne.s32.totalorder %s87, %s90
    %p96 = scmp.eq.s32.totalorder %s9, 0
    %p97 = por %p95, %p96
    %p98 = scmp.ne.s32.totalorder %s87, %s90
    %p99 = scmp.eq.s32.totalorder %s14, 1
    %p100 = por %p98, %p99
    %p101 = scmp.ne.s32.totalorder %s90, %s91
    %p102 = scmp.eq.s32.totalorder %s14, 0
    %p103 = por %p101, %p102
    %p104 = scmp.ne.s32.totalorder %s90, %s91
    %p105 = scmp.eq.s32.totalorder %s15, 1
    %p106 = por %p104, %p105
    %p108 = scmp.ne.s32.totalorder %s91, %s107
    %p109 = scmp.eq.s32.totalorder %s15, 0
    %p110 = por %p108, %p109
    %p111 = scmp.le.s32.totalorder 1, %s9
    %p112 = scmp.lt.s32.totalorder %s9, 3
    %p113 = pnand %p111, %p112
    %p114 = pneg %p113
    // Predicated region
    $region9: #{unet_forward.13} parent=5 // pred_check
      _
    $region10: #{unet_forward.13} parent=5 // pred_check_branch
      %116 = sbr.rel (%p113) target = $region12
    $region11: #{unet_forward.13} parent=5 // pred_region
      %s117 = ssub.s32 %s9, 1
      // Predicated region
      $region13: #{unet_forward.13} parent=11 // pred_check
        %p118 = pneg %p56
      $region14: #{unet_forward.13} parent=11 // pred_check_branch
        %120 = sbr.rel (%p118) target = $region16
      $region15: #{unet_forward.13} parent=11 // pred_region
        _
      $region16: #{unet_forward.13} parent=11 // pred_fallthru
        _
      // Predicated region
      $region17: #{unet_forward.13} parent=11 // pred_check
        %p121 = pneg %p77
      $region18: #{unet_forward.13} parent=11 // pred_check_branch
        %123 = sbr.rel (%p121) target = $region20
      $region19: #{unet_forward.13} parent=11 // pred_region
        _
      $region20: #{unet_forward.13} parent=11 // pred_fallthru
        _
    $region12: #{unet_forward.13} parent=5 // pred_fallthru
      _
    %p124 = scmp.lt.s32.totalorder %s9, 2
    // Predicated region
    $region21: #{unet_forward.13} parent=5 // pred_check
      %p125 = pneg %p124
    $region22: #{unet_forward.13} parent=5 // pred_check_branch
      %127 = sbr.rel (%p125) target = $region24
    $region23: #{unet_forward.13} parent=5 // pred_region
      // Predicated region
      $region25: #{unet_forward.13} parent=23 // pred_check
        %p128 = pneg %p29
      $region26: #{unet_forward.13} parent=23 // pred_check_branch
        %130 = sbr.rel (%p128) target = $region28
      $region27: #{unet_forward.13} parent=23 // pred_region
        %p131 = scmp.lt.s32.totalorder %s9, 1
        %s132 = scalar_select %p131, %s9, 1
        %s133 = smul.addr %s132, 4
        %s134 = smul.addr %s133, 4
        %s135 = scalar_lea.vmem %s0, %s134
      $region28: #{unet_forward.13} parent=23 // pred_fallthru
        _
    $region24: #{unet_forward.13} parent=5 // pred_fallthru
      _
    %p136 = scmp.le.s32.totalorder 1, %s9
    %p137 = scmp.lt.s32.totalorder %s9, 3
    %p138 = pnand %p136, %p137
    %p139 = pneg %p138
    // Predicated region
    $region29: #{unet_forward.13} parent=5 // pred_check
      _
    $region30: #{unet_forward.13} parent=5 // pred_check_branch
      %141 = sbr.rel (%p138) target = $region32
    $region31: #{unet_forward.13} parent=5 // pred_region
      %s142 = ssub.s32 %s9, 1
      %p143 = scmp.lt.s32.totalorder %s14, 1
      %s144 = scalar_select %p143, %s14, 1
      %s145 = smul.addr %s144, 4
      %s146 = smul.addr %s145, 4
      %s147 = scalar_lea.vmem %s0, %s146
      %p148 = pneg %p35
      %p149 = pneg %p32
      %p150 = pneg %p56
      %p151 = pneg %p53
      %p152 = pneg %p77
      %p153 = pneg %p74
      %p154 = pneg %p103
      %p155 = pneg %p100
      %p156 = scmp.lt.s32.totalorder %s14, 1
      %s157 = scalar_select %p156, %s14, 1
      %s158 = smul.addr %s157, 8
      %s159 = scalar_lea.vmem %s3, %s158
      %p160 = scmp.lt.s32.totalorder %s14, 1
      %s161 = scalar_select %p160, %s14, 1
      %s162 = smul.addr %s161, 4
      %s163 = smul.addr %s162, 4
      %s164 = scalar_lea.vmem %s0, %s163
      %p165 = scmp.lt.s32.totalorder %s14, 1
      %s166 = scalar_select %p165, %s14, 1
      %s167 = smul.addr %s166, 8
      %s168 = scalar_lea.vmem %s3, %s167
      %v170 = vld [vmem:[%s164] sm:$0xff]
      %v171 = vld [vmem:[%s1] sm:$0xf]
      %v172 = vld [vmem:[%s1 + $0x4] sm:$0xf]
      %v173 = vld [vmem:[%s1 + $0x8] sm:$0xf]
      %v174 = vld [vmem:[%s1 + $0xc] sm:$0xf]
      %v175 = vld [vmem:[%s1 + $0x10] sm:$0xf]
      %v176 = vld [vmem:[%s1 + $0x14] sm:$0xf]
      %v177 = vld [vmem:[%s1 + $0x18] sm:$0xf]
      %v178 = vld [vmem:[%s1 + $0x1c] sm:$0xf]
      %v179 = vld [vmem:[%s1 + $0x20] sm:$0xf]
      %v180 = vld [vmem:[%s1 + $0x24] sm:$0xf]
      %v181 = vld [vmem:[%s1 + $0x28] sm:$0xf]
      %v182 = vld [vmem:[%s1 + $0x2c] sm:$0xf]
      %v183 = vld [vmem:[%s1 + $0x30] sm:$0xf]
      %v184 = vld [vmem:[%s1 + $0x34] sm:$0xf]
      %v185 = vld [vmem:[%s1 + $0x38] sm:$0xf]
      %v186 = vld [vmem:[%s1 + $0x3c] sm:$0xf]
      %v187 = vld [vmem:[%s1 + $0x40] sm:$0xf]
      %v188 = vld [vmem:[%s1 + $0x44] sm:$0xf]
      %v189 = vld [vmem:[%s1 + $0x48] sm:$0xf]
      %v190 = vld [vmem:[%s1 + $0x4c] sm:$0xf]
      %v191 = vld [vmem:[%s164 + $0x8] sm:$0x11]
      %s192 = scalar_lea.vmem %s1, 80
      %v193 = vld [vmem:[%s192] sm:$0xf]
      %v194 = vld [vmem:[%s192 + $0x4] sm:$0xf]
      %v195 = vld [vmem:[%s192 + $0x8] sm:$0xf]
      %v196 = vld [vmem:[%s192 + $0xc] sm:$0xf]
      %v197 = vld [vmem:[%s192 + $0x10] sm:$0xf]
      %v198 = vld [vmem:[%s192 + $0x14] sm:$0xf]
      %v199 = vld [vmem:[%s192 + $0x18] sm:$0xf]
      %v200 = vld [vmem:[%s192 + $0x1c] sm:$0xf]
      %v201 = vld [vmem:[%s192 + $0x20] sm:$0xf]
      %v202 = vld [vmem:[%s192 + $0x24] sm:$0xf]
      %v203 = vld [vmem:[%s192 + $0x28] sm:$0xf]
      %v204 = vld [vmem:[%s192 + $0x2c] sm:$0xf]
      %v205 = vld [vmem:[%s192 + $0x30] sm:$0xf]
      %v206 = vld [vmem:[%s192 + $0x34] sm:$0xf]
      %v207 = vld [vmem:[%s192 + $0x38] sm:$0xf]
      %v208 = vld [vmem:[%s192 + $0x3c] sm:$0xf]
      %v209 = vld [vmem:[%s192 + $0x40] sm:$0xf]
      %v210 = vld [vmem:[%s192 + $0x44] sm:$0xf]
      %v211 = vld [vmem:[%s192 + $0x48] sm:$0xf]
      %v212 = vld [vmem:[%s192 + $0x4c] sm:$0xf]
      %v215 = vunpack.c.l.b16 %v170
      %v216 = vunpack.c.h.b16 %v170
      %v217 = vunpack.c.l.b16 %v191
      %v218 = vunpack.c.h.b16 %v191
      %v219 = vpack.c.b16 %v217, %v215
      %v220 = vpack.c.b16 %v218, %v216
      %v222 = vshrl.u32 %v219, 16
      %v224 = vshll.u32 %v219, 16
      %v226 = vrot.slane %v224, 1
      %v227 = vor.u32 %v222, %v226
      %v229 = vshrl.u32 %v220, 16
      %v231 = vshll.u32 %v220, 16
      %v233 = vrot.slane %v231, 1
      %v234 = vor.u32 %v229, %v233
      %v256 = vunpack.c.l.b16 %v193
      %v257 = vunpack.c.l.b16 %v194
      %v258 = vunpack.c.l.b16 %v195
      %v259 = vunpack.c.l.b16 %v196
      %v260 = vunpack.c.l.b16 %v197
      %v261 = vunpack.c.l.b16 %v198
      %v262 = vunpack.c.l.b16 %v199
      %v263 = vunpack.c.l.b16 %v200
      %v264 = vunpack.c.l.b16 %v201
      %v265 = vunpack.c.l.b16 %v202
      %v266 = vunpack.c.l.b16 %v203
      %v267 = vunpack.c.l.b16 %v204
      %v268 = vunpack.c.l.b16 %v205
      %v269 = vunpack.c.l.b16 %v206
      %v270 = vunpack.c.l.b16 %v207
      %v271 = vunpack.c.l.b16 %v208
      %v272 = vunpack.c.l.b16 %v209
      %v273 = vunpack.c.l.b16 %v210
      %v274 = vunpack.c.l.b16 %v211
      %v275 = vunpack.c.l.b16 %v212
      %v276 = vpack.c.b16 %v257, %v256
      %v277 = vpack.c.b16 %v259, %v258
      %v278 = vpack.c.b16 %v261, %v260
      %v279 = vpack.c.b16 %v263, %v262
      %v280 = vpack.c.b16 %v265, %v264
      %v281 = vpack.c.b16 %v267, %v266
      %v282 = vpack.c.b16 %v269, %v268
      %v283 = vpack.c.b16 %v271, %v270
      %v284 = vpack.c.b16 %v273, %v272
      %v285 = vpack.c.b16 %v275, %v274
      %vm296 = vcmask 261120
      %v298 = vsel %vm296, %v234, 0
      %300 = vmatprep.subr.bf16.mxu0 0
      %301 = vmatpush1.bf16.msra.mxu0 %v276
      %302 = vmatprep.subr.bf16.mxu0 0
      %303 = vmatpush1.bf16.msra.mxu0 %v277
      %304 = vmatprep.subr.bf16.mxu0 0
      %305 = vmatpush1.bf16.msra.mxu0 %v278
      %306 = vmatprep.subr.bf16.mxu0 0
      %307 = vmatpush1.bf16.msra.mxu0 %v279
      %308 = vmatprep.subr.bf16.mxu0 0
      %309 = vmatpush1.bf16.msra.mxu0 %v280
      %310 = vmatprep.subr.bf16.mxu0 0
      %311 = vmatpush1.bf16.msra.mxu0 %v281
      %312 = vmatprep.subr.bf16.mxu0 0
      %313 = vmatpush1.bf16.msra.mxu0 %v282
      %314 = vmatprep.subr.bf16.mxu0 0
      %315 = vmatpush1.bf16.msra.mxu0 %v283
      %316 = vmatprep.subr.bf16.mxu0 0
      %317 = vmatpush1.bf16.msra.mxu0 %v284
      %318 = vmatprep.subr.bf16.mxu0 0
      %319 = vmatpush1.bf16.msra.mxu0 %v285
      %320 = vmatprep.subr.bf16.mxu0 0
      %321 = vmatpush1.bf16.msra.mxu0 0
      %322 = vmatprep.subr.bf16.mxu0 0
      %323 = vmatpush1.bf16.msra.mxu0 0
      %324 = vmatprep.subr.bf16.mxu0 0
      %325 = vmatpush1.bf16.msra.mxu0 0
      %326 = vmatprep.subr.bf16.mxu0 0
      %327 = vmatpush1.bf16.msra.mxu0 0
      %328 = vmatprep.subr.bf16.mxu0 0
      %329 = vmatpush1.bf16.msra.mxu0 0
      %330 = vmatprep.subr.bf16.mxu0 0
      %331 = vmatpush1.bf16.msra.mxu0 0
      %332 = vmatprep.mubr.bf16.mxu0 %v298
      %333 = vmatmul.mubr.bf16.gmra.mrb[0].mxu0 %v227
      %v334 = vpop.f32.mrb[0].mxu0
      %v335 = vadd.f32 0.0, %v334
      %v336 = vpop.f32.mrb[0].mxu0
      %v337 = vpop.f32.mrb[0].mxu0
      %v338 = vpop.f32.mrb[0].mxu0
      %339 = vdwg.mxu0
      %v340 = vpack.c.b16 %v215, %v215
      %v341 = vpack.c.b16 %v216, %v216
      %v363 = vunpack.c.l.b16 %v171
      %v364 = vunpack.c.l.b16 %v172
      %v365 = vunpack.c.l.b16 %v173
      %v366 = vunpack.c.l.b16 %v174
      %v367 = vunpack.c.l.b16 %v175
      %v368 = vunpack.c.l.b16 %v176
      %v369 = vunpack.c.l.b16 %v177
      %v370 = vunpack.c.l.b16 %v178
      %v371 = vunpack.c.l.b16 %v179
      %v372 = vunpack.c.l.b16 %v180
      %v373 = vunpack.c.l.b16 %v181
      %v374 = vunpack.c.l.b16 %v182
      %v375 = vunpack.c.l.b16 %v183
      %v376 = vunpack.c.l.b16 %v184
      %v377 = vunpack.c.l.b16 %v185
      %v378 = vunpack.c.l.b16 %v186
      %v379 = vunpack.c.l.b16 %v187
      %v380 = vunpack.c.l.b16 %v188
      %v381 = vunpack.c.l.b16 %v189
      %v382 = vunpack.c.l.b16 %v190
      %v383 = vpack.c.b16 %v364, %v363
      %v384 = vpack.c.b16 %v366, %v365
      %v385 = vpack.c.b16 %v368, %v367
      %v386 = vpack.c.b16 %v370, %v369
      %v387 = vpack.c.b16 %v372, %v371
      %v388 = vpack.c.b16 %v374, %v373
      %v389 = vpack.c.b16 %v376, %v375
      %v390 = vpack.c.b16 %v378, %v377
      %v391 = vpack.c.b16 %v380, %v379
      %v392 = vpack.c.b16 %v382, %v381
      %v404 = vsel %vm296, %v341, 0
      %406 = vmatprep.subr.bf16.mxu0 0
      %407 = vmatpush1.bf16.msra.mxu0 %v383
      %408 = vmatprep.subr.bf16.mxu0 0
      %409 = vmatpush1.bf16.msra.mxu0 %v384
      %410 = vmatprep.subr.bf16.mxu0 0
      %411 = vmatpush1.bf16.msra.mxu0 %v385
      %412 = vmatprep.subr.bf16.mxu0 0
      %413 = vmatpush1.bf16.msra.mxu0 %v386
      %414 = vmatprep.subr.bf16.mxu0 0
      %415 = vmatpush1.bf16.msra.mxu0 %v387
      %416 = vmatprep.subr.bf16.mxu0 0
      %417 = vmatpush1.bf16.msra.mxu0 %v388
      %418 = vmatprep.subr.bf16.mxu0 0
      %419 = vmatpush1.bf16.msra.mxu0 %v389
      %420 = vmatprep.subr.bf16.mxu0 0
      %421 = vmatpush1.bf16.msra.mxu0 %v390
      %422 = vmatprep.subr.bf16.mxu0 0
      %423 = vmatpush1.bf16.msra.mxu0 %v391
      %424 = vmatprep.subr.bf16.mxu0 0
      %425 = vmatpush1.bf16.msra.mxu0 %v392
      %426 = vmatprep.subr.bf16.mxu0 0
      %427 = vmatpush1.bf16.msra.mxu0 0
      %428 = vmatprep.subr.bf16.mxu0 0
      %429 = vmatpush1.bf16.msra.mxu0 0
      %430 = vmatprep.subr.bf16.mxu0 0
      %431 = vmatpush1.bf16.msra.mxu0 0
      %432 = vmatprep.subr.bf16.mxu0 0
      %433 = vmatpush1.bf16.msra.mxu0 0
      %434 = vmatprep.subr.bf16.mxu0 0
      %435 = vmatpush1.bf16.msra.mxu0 0
      %436 = vmatprep.subr.bf16.mxu0 0
      %437 = vmatpush1.bf16.msra.mxu0 0
      %438 = vmatprep.mubr.bf16.mxu0 %v404
      %439 = vmatmul.mubr.bf16.gmra.mrb[0].mxu0 %v340
      %v440 = vpop.f32.mrb[0].mxu0
      %v441 = vadd.f32 %v335, %v440
      %v442 = vpop.f32.mrb[0].mxu0
      %v443 = vpop.f32.mrb[0].mxu0
      %v444 = vpop.f32.mrb[0].mxu0
      %445 = vdwg.mxu0
      %v446 = vld [vmem:[%s164] sm:$0xee]
      %s447 = scalar_lea.vmem %s1, 160
      %v448 = vld [vmem:[%s447] sm:$0xf]
      %v449 = vld [vmem:[%s447 + $0x4] sm:$0xf]
      %v450 = vld [vmem:[%s447 + $0x8] sm:$0xf]
      %v451 = vld [vmem:[%s447 + $0xc] sm:$0xf]
      %v452 = vld [vmem:[%s447 + $0x10] sm:$0xf]
      %v453 = vld [vmem:[%s447 + $0x14] sm:$0xf]
      %v454 = vld [vmem:[%s447 + $0x18] sm:$0xf]
      %v455 = vld [vmem:[%s447 + $0x1c] sm:$0xf]
      %v456 = vld [vmem:[%s447 + $0x20] sm:$0xf]
      %v457 = vld [vmem:[%s447 + $0x24] sm:$0xf]
      %v458 = vld [vmem:[%s447 + $0x28] sm:$0xf]
      %v459 = vld [vmem:[%s447 + $0x2c] sm:$0xf]
      %v460 = vld [vmem:[%s447 + $0x30] sm:$0xf]
      %v461 = vld [vmem:[%s447 + $0x34] sm:$0xf]
      %v462 = vld [vmem:[%s447 + $0x38] sm:$0xf]
      %v463 = vld [vmem:[%s447 + $0x3c] sm:$0xf]
      %v464 = vld [vmem:[%s447 + $0x40] sm:$0xf]
      %v465 = vld [vmem:[%s447 + $0x44] sm:$0xf]
      %v466 = vld [vmem:[%s447 + $0x48] sm:$0xf]
      %v467 = vld [vmem:[%s447 + $0x4c] sm:$0xf]
      %v469 = vunpack.c.l.b16 %v446
      %v470 = vunpack.c.h.b16 %v446
      %v471 = vpack.c.b16 %v217, %v469
      %v472 = vpack.c.b16 %v218, %v470
      %v473 = vrot.slane %v471, 1
      %v474 = vrot.slane %v472, 1
      %v496 = vunpack.c.l.b16 %v448
      %v497 = vunpack.c.l.b16 %v449
      %v498 = vunpack.c.l.b16 %v450
      %v499 = vunpack.c.l.b16 %v451
      %v500 = vunpack.c.l.b16 %v452
      %v501 = vunpack.c.l.b16 %v453
      %v502 = vunpack.c.l.b16 %v454
      %v503 = vunpack.c.l.b16 %v455
      %v504 = vunpack.c.l.b16 %v456
      %v505 = vunpack.c.l.b16 %v457
      %v506 = vunpack.c.l.b16 %v458
      %v507 = vunpack.c.l.b16 %v459
      %v508 = vunpack.c.l.b16 %v460
      %v509 = vunpack.c.l.b16 %v461
      %v510 = vunpack.c.l.b16 %v462
      %v511 = vunpack.c.l.b16 %v463
      %v512 = vunpack.c.l.b16 %v464
      %v513 = vunpack.c.l.b16 %v465
      %v514 = vunpack.c.l.b16 %v466
      %v515 = vunpack.c.l.b16 %v467
      %v516 = vpack.c.b16 %v497, %v496
      %v517 = vpack.c.b16 %v499, %v498
      %v518 = vpack.c.b16 %v501, %v500
      %v519 = vpack.c.b16 %v503, %v502
      %v520 = vpack.c.b16 %v505, %v504
      %v521 = vpack.c.b16 %v507, %v506
      %v522 = vpack.c.b16 %v509, %v508
      %v523 = vpack.c.b16 %v511, %v510
      %v524 = vpack.c.b16 %v513, %v512
      %v525 = vpack.c.b16 %v515, %v514
      %v537 = vsel %vm296, %v474, 0
      %539 = vmatprep.subr.bf16.mxu0 0
      %540 = vmatpush1.bf16.msra.mxu0 %v516
      %541 = vmatprep.subr.bf16.mxu0 0
      %542 = vmatpush1.bf16.msra.mxu0 %v517
      %543 = vmatprep.subr.bf16.mxu0 0
      %544 = vmatpush1.bf16.msra.mxu0 %v518
      %545 = vmatprep.subr.bf16.mxu0 0
      %546 = vmatpush1.bf16.msra.mxu0 %v519
      %547 = vmatprep.subr.bf16.mxu0 0
      %548 = vmatpush1.bf16.msra.mxu0 %v520
      %549 = vmatprep.subr.bf16.mxu0 0
      %550 = vmatpush1.bf16.msra.mxu0 %v521
      %551 = vmatprep.subr.bf16.mxu0 0
      %552 = vmatpush1.bf16.msra.mxu0 %v522
      %553 = vmatprep.subr.bf16.mxu0 0
      %554 = vmatpush1.bf16.msra.mxu0 %v523
      %555 = vmatprep.subr.bf16.mxu0 0
      %556 = vmatpush1.bf16.msra.mxu0 %v524
      %557 = vmatprep.subr.bf16.mxu0 0
      %558 = vmatpush1.bf16.msra.mxu0 %v525
      %559 = vmatprep.subr.bf16.mxu0 0
      %560 = vmatpush1.bf16.msra.mxu0 0
      %561 = vmatprep.subr.bf16.mxu0 0
      %562 = vmatpush1.bf16.msra.mxu0 0
      %563 = vmatprep.subr.bf16.mxu0 0
      %564 = vmatpush1.bf16.msra.mxu0 0
      %565 = vmatprep.subr.bf16.mxu0 0
      %566 = vmatpush1.bf16.msra.mxu0 0
      %567 = vmatprep.subr.bf16.mxu0 0
      %568 = vmatpush1.bf16.msra.mxu0 0
      %569 = vmatprep.subr.bf16.mxu0 0
      %570 = vmatpush1.bf16.msra.mxu0 0
      %571 = vmatprep.mubr.bf16.mxu0 %v537
      %572 = vmatmul.mubr.bf16.gmra.mrb[0].mxu0 %v473
      %v573 = vpop.f32.mrb[0].mxu0
      %v574 = vadd.f32 0.0, %v573
      %v575 = vpop.f32.mrb[0].mxu0
      %v576 = vpop.f32.mrb[0].mxu0
      %v577 = vpop.f32.mrb[0].mxu0
      %578 = vdwg.mxu0
      %v579 = vadd.f32 %v441, %v574
      %v580 = vld [vmem:[%s2] sm:$0x1]
      %v582 = vlaneseq
      %v583 = vshrl.u32 %v582, 7
      %v584 = vsub.s32 0, %v583
      %v585 = vrot.slane %v580, %v584
      %v587 = vadd.f32 %v579, %v585
      %v588 = vmax.f32 %v587, 0.0
      %589 = vst [vmem:[%s168] sm:$0xff] %v588
      %p590 = scmp.lt.s32.totalorder %s14, 1
      %s591 = scalar_select %p590, %s14, 1
      %s592 = smul.addr %s591, 8
      %s593 = scalar_lea.vmem %s3, %s592
      // Predicated region
      $region33: #{unet_forward.13} parent=31 // pred_check
        %p594 = pneg %p100
      $region34: #{unet_forward.13} parent=31 // pred_check_branch
        %596 = sbr.rel (%p594) target = $region36
      $region35: #{unet_forward.13} parent=31 // pred_region
        _
      $region36: #{unet_forward.13} parent=31 // pred_fallthru
        _
    $region32: #{unet_forward.13} parent=5 // pred_fallthru
      _
    %p597 = scmp.le.s32.totalorder 2, %s9
    // Predicated region
    $region37: #{unet_forward.13} parent=5 // pred_check
      %p598 = pneg %p597
    $region38: #{unet_forward.13} parent=5 // pred_check_branch
      %600 = sbr.rel (%p598) target = $region40
    $region39: #{unet_forward.13} parent=5 // pred_region
      %s601 = ssub.s32 %s9, 2
      // Predicated region
      $region41: #{unet_forward.13} parent=39 // pred_check
        %p602 = pneg %p106
      $region42: #{unet_forward.13} parent=39 // pred_check_branch
        %604 = sbr.rel (%p602) target = $region44
      $region43: #{unet_forward.13} parent=39 // pred_region
        %p605 = scmp.lt.s32.totalorder %s15, 1
        %s606 = scalar_select %p605, %s15, 1
        %s607 = smul.addr %s606, 8
        %s608 = scalar_lea.vmem %s3, %s607
      $region44: #{unet_forward.13} parent=39 // pred_fallthru
        _
    $region40: #{unet_forward.13} parent=5 // pred_fallthru
      _
  $region6: #{unet_forward.13} parent=0 // loop_footer
    %s13 = sadd.s32 1, %s9
  $region7: #{unet_forward.13} parent=0 // loop_footer_branch
    %8 = sbr.rel target = $region3
  $region8: #{unet_forward.13} parent=0 // loop_exit
    _

// kernel: tile.73
$region0: #{tile.73}
  #allocation0 [shape = 's32[1]{0}', space=sflag, size = 0x4, scoped, tag = 'scoped memory for tile.73']
  %s0 = inlined_call_operand.vmem [shape: f32[32], index: 0, kind: input, shape index: {}]
  %s1 = inlined_call_operand.vmem [shape: f32[4,32], index: 1, kind: output, shape index: {}]
  // Predicated region
  $region2: #{tile.73} parent=0 // pred_check
    _
  $region3: #{tile.73} parent=0 // pred_check_branch
    %3 = sbr.rel (0) target = $region5
  $region4: #{tile.73} parent=0 // pred_region
    _
  $region5: #{tile.73} parent=0 // pred_fallthru
    _
  %v4 = vld [vmem:[%s0] ss:$0 sm:$0xff]
  %5 = vst [vmem:[%s1] sm:$0xf] %v4

// kernel: tile.74
$region0: #{tile.74}
  %s0 = inlined_call_operand.vmem [shape: f32[4,32], index: 0, kind: input, shape index: {}]
  %s1 = inlined_call_operand.vmem [shape: f32[1,128], index: 1, kind: output, shape index: {}]
  $region1: #{tile.74} parent=0
    #allocation0 [shape = 'u8[4096]{0}', space=vmem, size = 0x1000, scoped, tag = 'scoped mem for output reshape']
    #allocation1 [shape = 'u8[4096]{0}', space=vmem, size = 0x1000, scoped, tag = 'scoped mem for input reshape']
    %s3 = sshllo.u32 0, 4
    %v4 = vld [vmem:[%s0] sm:%s3]
    %5 = vst [vmem:[#allocation1] sm:%s3] %v4
    %v6 = vld [vmem:[#allocation1] sm:$0x1]
    %vm7 = vcmask 261120
    %8 = vst.msk [vmem:[#allocation0] sm:$0x1] %vm7, %v6
    %s9 = scalar_lea.vmem [#allocation1], 3
    %v10 = vld [vmem:[%s9] sm:$0x1]
    %11 = vrot.lane.b32.xlu0 %v10, 96
    %v12 = vpop.permute.xlu0 %11
    %vm13 = vcmask 1048320
    %14 = vst.msk [vmem:[#allocation0] sm:$0x1] %vm13, %v12
    %s15 = scalar_lea.vmem [#allocation1], 2
    %v16 = vld [vmem:[%s15] sm:$0x1]
    %17 = vrot.lane.b32.xlu0 %v16, 64
    %v18 = vpop.permute.xlu0 %17
    %vm19 = vcmask 785920
    %20 = vst.msk [vmem:[#allocation0] sm:$0x1] %vm19, %v18
    %s21 = scalar_lea.vmem [#allocation1], 1
    %v22 = vld [vmem:[%s21] sm:$0x1]
    %23 = vrot.lane.b32.xlu0 %v22, 32
    %v24 = vpop.permute.xlu0 %23
    %vm25 = vcmask 523520
    %26 = vst.msk [vmem:[#allocation0] sm:$0x1] %vm25, %v24
    %s28 = sshllo.u32 0, 1
    %v30 = vld [vmem:[#allocation0] sm:%s28]
    %s31 = sshllo.u32 0, 1
    %32 = vst [vmem:[%s1] sm:%s31] %v30

// kernel: unet_forward.14
$region0: #{unet_forward.14}
  #allocation0 [shape = 'u32[]', space=smem, size = 0x4, offset = 0x4, fixed_abs, tag = 'smem constant byte address 0x4 - core index']
  #allocation1 [shape = 'u32[144,128]{1,0:T(1,128)}', space=vmem, size = 0x12000, scoped, tag = 'internal scratch']
  %s0 = inlined_call_operand.vmem [shape: bf16[2,5,160], index: 0, kind: input, shape index: {}]
  %s1 = inlined_call_operand.vmem [shape: bf16[2,5,160], index: 1, kind: input, shape index: {}]
  %s2 = inlined_call_operand.vmem [shape: bf16[3,160,128], index: 2, kind: input, shape index: {}]
  %s3 = inlined_call_operand.vmem [shape: f32[1,128], index: 3, kind: input, shape index: {}]
  %s4 = inlined_call_operand.vmem [shape: f32[2,4,128], index: 4, kind: output, shape index: {}]
  %s5 = sld [smem:[#allocation0]]
  $region49: #{unet_forward.14} parent=0
    _
  %s7 = ssub.s32 1, %s5
  %s8 = scalar_select 0, %s7, %s5
  loop: start=0, step=1, limit=4
  $region2: #{unet_forward.14} parent=0 // loop_pre_header
    _
  $region3: #{unet_forward.14} parent=0 // loop_header
    %s10 = sphi 0, %s14
    %p11 = scmp.ge.s32.totalorder %s10, 4
    %s20 = sphi 0, %s22
    %s23 = sphi 0, %s20
    %s24 = sphi 0, %s23
    %s40 = sphi 0, %s24
    %s46 = sphi 0, %s48
    %s49 = sphi 0, %s46
    %s50 = sphi 0, %s49
    %s66 = sphi 0, %s50
    %s70 = sphi 0, %s70
    %s72 = sphi 0, %s70
    %s73 = sphi 0, %s72
    %s87 = sphi 0, %s73
    %s91 = sphi 0, %s91
    %s93 = sphi 0, %s91
    %s94 = sphi 0, %s93
    %s108 = sphi 0, %s94
    %s114 = sphi 0, %s116
    %s117 = sphi 0, %s114
    %s118 = sphi 0, %s117
    %s134 = sphi 0, %s118
  $region4: #{unet_forward.14} parent=0 // loop_header_branch
    %13 = sbr.rel (%p11) target = $region8
  $region5: #{unet_forward.14} parent=0 // loop_body
    %s15 = ssub.s32 %s10, 1
    %s16 = ssub.s32 %s10, 2
    %s17 = sadd.s32 %s10, 1
    %s18 = ssub.s32 %s10, %s17
    %p19 = scmp.eq.s32.totalorder %s18, 0
    %s21 = sadd.s32 %s20, 1
    %s22 = scalar_select %p19, %s20, %s21
    %p25 = pneg %p19
    %p26 = scmp.eq.s32.totalorder %s10, 1
    %p27 = por %p25, %p26
    %p28 = scmp.ne.s32.totalorder %s20, %s23
    %p29 = scmp.eq.s32.totalorder %s10, 0
    %p30 = por %p28, %p29
    %p31 = scmp.ne.s32.totalorder %s20, %s23
    %p32 = scmp.eq.s32.totalorder %s15, 1
    %p33 = por %p31, %p32
    %p34 = scmp.ne.s32.totalorder %s23, %s24
    %p35 = scmp.eq.s32.totalorder %s15, 0
    %p36 = por %p34, %p35
    %p37 = scmp.ne.s32.totalorder %s23, %s24
    %p38 = scmp.eq.s32.totalorder %s16, 1
    %p39 = por %p37, %p38
    %p41 = scmp.ne.s32.totalorder %s24, %s40
    %p42 = scmp.eq.s32.totalorder %s16, 0
    %p43 = por %p41, %p42
    %s44 = ssub.s32 %s10, %s17
    %p45 = scmp.eq.s32.totalorder %s44, 0
    %s47 = sadd.s32 %s46, 1
    %s48 = scalar_select %p45, %s46, %s47
    %p51 = pneg %p45
    %p52 = scmp.eq.s32.totalorder %s10, 1
    %p53 = por %p51, %p52
    %p54 = scmp.ne.s32.totalorder %s46, %s49
    %p55 = scmp.eq.s32.totalorder %s10, 0
    %p56 = por %p54, %p55
    %p57 = scmp.ne.s32.totalorder %s46, %s49
    %p58 = scmp.eq.s32.totalorder %s15, 1
    %p59 = por %p57, %p58
    %p60 = scmp.ne.s32.totalorder %s49, %s50
    %p61 = scmp.eq.s32.totalorder %s15, 0
    %p62 = por %p60, %p61
    %p63 = scmp.ne.s32.totalorder %s49, %s50
    %p64 = scmp.eq.s32.totalorder %s16, 1
    %p65 = por %p63, %p64
    %p67 = scmp.ne.s32.totalorder %s50, %s66
    %p68 = scmp.eq.s32.totalorder %s16, 0
    %p69 = por %p67, %p68
    %s71 = sadd.s32 %s70, 1
    %p74 = scmp.eq.s32.totalorder %s10, 1
    %p75 = scmp.ne.s32.totalorder %s70, %s72
    %p76 = scmp.eq.s32.totalorder %s10, 0
    %p77 = por %p75, %p76
    %p78 = scmp.ne.s32.totalorder %s70, %s72
    %p79 = scmp.eq.s32.totalorder %s15, 1
    %p80 = por %p78, %p79
    %p81 = scmp.ne.s32.totalorder %s72, %s73
    %p82 = scmp.eq.s32.totalorder %s15, 0
    %p83 = por %p81, %p82
    %p84 = scmp.ne.s32.totalorder %s72, %s73
    %p85 = scmp.eq.s32.totalorder %s16, 1
    %p86 = por %p84, %p85
    %p88 = scmp.ne.s32.totalorder %s73, %s87
    %p89 = scmp.eq.s32.totalorder %s16, 0
    %p90 = por %p88, %p89
    %s92 = sadd.s32 %s91, 1
    %p95 = scmp.eq.s32.totalorder %s10, 1
    %p96 = scmp.ne.s32.totalorder %s91, %s93
    %p97 = scmp.eq.s32.totalorder %s10, 0
    %p98 = por %p96, %p97
    %p99 = scmp.ne.s32.totalorder %s91, %s93
    %p100 = scmp.eq.s32.totalorder %s15, 1
    %p101 = por %p99, %p100
    %p102 = scmp.ne.s32.totalorder %s93, %s94
    %p103 = scmp.eq.s32.totalorder %s15, 0
    %p104 = por %p102, %p103
    %p105 = scmp.ne.s32.totalorder %s93, %s94
    %p106 = scmp.eq.s32.totalorder %s16, 1
    %p107 = por %p105, %p106
    %p109 = scmp.ne.s32.totalorder %s94, %s108
    %p110 = scmp.eq.s32.totalorder %s16, 0
    %p111 = por %p109, %p110
    %s112 = ssub.s32 %s10, %s17
    %p113 = scmp.eq.s32.totalorder %s112, 0
    %s115 = sadd.s32 %s114, 1
    %s116 = scalar_select %p113, %s114, %s115
    %p119 = pneg %p113
    %p120 = scmp.eq.s32.totalorder %s10, 1
    %p121 = por %p119, %p120
    %p122 = scmp.ne.s32.totalorder %s114, %s117
    %p123 = scmp.eq.s32.totalorder %s10, 0
    %p124 = por %p122, %p123
    %p125 = scmp.ne.s32.totalorder %s114, %s117
    %p126 = scmp.eq.s32.totalorder %s15, 1
    %p127 = por %p125, %p126
    %p128 = scmp.ne.s32.totalorder %s117, %s118
    %p129 = scmp.eq.s32.totalorder %s15, 0
    %p130 = por %p128, %p129
    %p131 = scmp.ne.s32.totalorder %s117, %s118
    %p132 = scmp.eq.s32.totalorder %s16, 1
    %p133 = por %p131, %p132
    %p135 = scmp.ne.s32.totalorder %s118, %s134
    %p136 = scmp.eq.s32.totalorder %s16, 0
    %p137 = por %p135, %p136
    %p138 = scmp.le.s32.totalorder 1, %s10
    %p139 = scmp.lt.s32.totalorder %s10, 3
    %p140 = pnand %p138, %p139
    %p141 = pneg %p140
    // Predicated region
    $region9: #{unet_forward.14} parent=5 // pred_check
      _
    $region10: #{unet_forward.14} parent=5 // pred_check_branch
      %143 = sbr.rel (%p140) target = $region12
    $region11: #{unet_forward.14} parent=5 // pred_region
      %s144 = ssub.s32 %s10, 1
      // Predicated region
      $region13: #{unet_forward.14} parent=11 // pred_check
        %p145 = pneg %p83
      $region14: #{unet_forward.14} parent=11 // pred_check_branch
        %147 = sbr.rel (%p145) target = $region16
      $region15: #{unet_forward.14} parent=11 // pred_region
        _
      $region16: #{unet_forward.14} parent=11 // pred_fallthru
        _
      // Predicated region
      $region17: #{unet_forward.14} parent=11 // pred_check
        %p148 = pneg %p104
      $region18: #{unet_forward.14} parent=11 // pred_check_branch
        %150 = sbr.rel (%p148) target = $region20
      $region19: #{unet_forward.14} parent=11 // pred_region
        _
      $region20: #{unet_forward.14} parent=11 // pred_fallthru
        _
    $region12: #{unet_forward.14} parent=5 // pred_fallthru
      _
    %p151 = scmp.lt.s32.totalorder %s10, 2
    // Predicated region
    $region21: #{unet_forward.14} parent=5 // pred_check
      %p152 = pneg %p151
    $region22: #{unet_forward.14} parent=5 // pred_check_branch
      %154 = sbr.rel (%p152) target = $region24
    $region23: #{unet_forward.14} parent=5 // pred_region
      // Predicated region
      $region25: #{unet_forward.14} parent=23 // pred_check
        %p155 = pneg %p30
      $region26: #{unet_forward.14} parent=23 // pred_check_branch
        %157 = sbr.rel (%p155) target = $region28
      $region27: #{unet_forward.14} parent=23 // pred_region
        %p158 = scmp.lt.s32.totalorder %s10, 1
        %s159 = scalar_select %p158, %s10, 1
        %s160 = smul.addr %s159, 2
        %s161 = smul.addr %s160, 4
        %s162 = scalar_lea.vmem %s0, %s161
      $region28: #{unet_forward.14} parent=23 // pred_fallthru
        _
      // Predicated region
      $region29: #{unet_forward.14} parent=23 // pred_check
        %p163 = pneg %p56
      $region30: #{unet_forward.14} parent=23 // pred_check_branch
        %165 = sbr.rel (%p163) target = $region32
      $region31: #{unet_forward.14} parent=23 // pred_region
        %p166 = scmp.lt.s32.totalorder %s10, 1
        %s167 = scalar_select %p166, %s10, 1
        %s168 = smul.addr %s167, 2
        %s169 = smul.addr %s168, 4
        %s170 = scalar_lea.vmem %s1, %s169
      $region32: #{unet_forward.14} parent=23 // pred_fallthru
        _
    $region24: #{unet_forward.14} parent=5 // pred_fallthru
      _
    %p171 = scmp.le.s32.totalorder 1, %s10
    %p172 = scmp.lt.s32.totalorder %s10, 3
    %p173 = pnand %p171, %p172
    %p174 = pneg %p173
    // Predicated region
    $region33: #{unet_forward.14} parent=5 // pred_check
      _
    $region34: #{unet_forward.14} parent=5 // pred_check_branch
      %176 = sbr.rel (%p173) target = $region36
    $region35: #{unet_forward.14} parent=5 // pred_region
      %s177 = ssub.s32 %s10, 1
      %p178 = scmp.lt.s32.totalorder %s15, 1
      %s179 = scalar_select %p178, %s15, 1
      %s180 = smul.addr %s179, 2
      %s181 = smul.addr %s180, 4
      %s182 = scalar_lea.vmem %s0, %s181
      %p183 = pneg %p36
      %p184 = pneg %p33
      %p185 = scmp.lt.s32.totalorder %s15, 1
      %s186 = scalar_select %p185, %s15, 1
      %s187 = smul.addr %s186, 2
      %s188 = smul.addr %s187, 4
      %s189 = scalar_lea.vmem %s1, %s188
      %p190 = pneg %p62
      %p191 = pneg %p59
      %p192 = pneg %p83
      %p193 = pneg %p80
      %p194 = pneg %p104
      %p195 = pneg %p101
      %p196 = pneg %p130
      %p197 = pneg %p127
      %p198 = scmp.lt.s32.totalorder %s15, 1
      %s199 = scalar_select %p198, %s15, 1
      %s200 = smul.addr %s199, 4
      %s201 = scalar_lea.vmem %s4, %s200
      %p202 = scmp.lt.s32.totalorder %s15, 1
      %s203 = scalar_select %p202, %s15, 1
      %s204 = smul.addr %s203, 2
      %s205 = smul.addr %s204, 4
      %s206 = scalar_lea.vmem %s0, %s205
      %p207 = scmp.lt.s32.totalorder %s15, 1
      %s208 = scalar_select %p207, %s15, 1
      %s209 = smul.addr %s208, 2
      %s210 = smul.addr %s209, 4
      %s211 = scalar_lea.vmem %s1, %s210
      %p212 = scmp.lt.s32.totalorder %s15, 1
      %s213 = scalar_select %p212, %s15, 1
      %s214 = smul.addr %s213, 4
      %s215 = scalar_lea.vmem %s4, %s214
      %v217 = vld [vmem:[%s206] sm:$0x33]
      %v218 = vld [vmem:[%s2] sm:$0xf]
      %v219 = vld [vmem:[%s2 + $0x4] sm:$0xf]
      %v220 = vld [vmem:[%s2 + $0x8] sm:$0xf]
      %v221 = vld [vmem:[%s2 + $0xc] sm:$0xf]
      %v222 = vld [vmem:[%s2 + $0x10] sm:$0xf]
      %v223 = vld [vmem:[%s2 + $0x14] sm:$0xf]
      %v224 = vld [vmem:[%s2 + $0x18] sm:$0xf]
      %v225 = vld [vmem:[%s2 + $0x1c] sm:$0xf]
      %v226 = vld [vmem:[%s2 + $0x20] sm:$0xf]
      %v227 = vld [vmem:[%s2 + $0x24] sm:$0xf]
      %v228 = vld [vmem:[%s2 + $0x28] sm:$0xf]
      %v229 = vld [vmem:[%s2 + $0x2c] sm:$0xf]
      %v230 = vld [vmem:[%s2 + $0x30] sm:$0xf]
      %v231 = vld [vmem:[%s2 + $0x34] sm:$0xf]
      %v232 = vld [vmem:[%s2 + $0x38] sm:$0xf]
      %v233 = vld [vmem:[%s2 + $0x3c] sm:$0xf]
      %v234 = vld [vmem:[%s2 + $0x40] sm:$0xf]
      %v235 = vld [vmem:[%s2 + $0x44] sm:$0xf]
      %v236 = vld [vmem:[%s2 + $0x48] sm:$0xf]
      %v237 = vld [vmem:[%s2 + $0x4c] sm:$0xf]
      %v238 = vld [vmem:[%s211] sm:$0x33]
      %s239 = scalar_lea.vmem %s2, 80
      %v240 = vld [vmem:[%s239] sm:$0xf]
      %v241 = vld [vmem:[%s239 + $0x4] sm:$0xf]
      %v242 = vld [vmem:[%s239 + $0x8] sm:$0xf]
      %v243 = vld [vmem:[%s239 + $0xc] sm:$0xf]
      %v244 = vld [vmem:[%s239 + $0x10] sm:$0xf]
      %v245 = vld [vmem:[%s239 + $0x14] sm:$0xf]
      %v246 = vld [vmem:[%s239 + $0x18] sm:$0xf]
      %v247 = vld [vmem:[%s239 + $0x1c] sm:$0xf]
      %v248 = vld [vmem:[%s239 + $0x20] sm:$0xf]
      %v249 = vld [vmem:[%s239 + $0x24] sm:$0xf]
      %v250 = vld [vmem:[%s239 + $0x28] sm:$0xf]
      %v251 = vld [vmem:[%s239 + $0x2c] sm:$0xf]
      %v252 = vld [vmem:[%s239 + $0x30] sm:$0xf]
      %v253 = vld [vmem:[%s239 + $0x34] sm:$0xf]
      %v254 = vld [vmem:[%s239 + $0x38] sm:$0xf]
      %v255 = vld [vmem:[%s239 + $0x3c] sm:$0xf]
      %v256 = vld [vmem:[%s239 + $0x40] sm:$0xf]
      %v257 = vld [vmem:[%s239 + $0x44] sm:$0xf]
      %v258 = vld [vmem:[%s239 + $0x48] sm:$0xf]
      %v259 = vld [vmem:[%s239 + $0x4c] sm:$0xf]
      %v261 = vunpack.c.l.b16 %v238
      %v262 = vunpack.c.h.b16 %v238
      %v263 = vpack.c.b16 %v261, %v261
      %v264 = vpack.c.b16 %v262, %v262
      %v286 = vunpack.c.l.b16 %v240
      %v287 = vunpack.c.l.b16 %v241
      %v288 = vunpack.c.l.b16 %v242
      %v289 = vunpack.c.l.b16 %v243
      %v290 = vunpack.c.l.b16 %v244
      %v291 = vunpack.c.l.b16 %v245
      %v292 = vunpack.c.l.b16 %v246
      %v293 = vunpack.c.l.b16 %v247
      %v294 = vunpack.c.l.b16 %v248
      %v295 = vunpack.c.l.b16 %v249
      %v296 = vunpack.c.l.b16 %v250
      %v297 = vunpack.c.l.b16 %v251
      %v298 = vunpack.c.l.b16 %v252
      %v299 = vunpack.c.l.b16 %v253
      %v300 = vunpack.c.l.b16 %v254
      %v301 = vunpack.c.l.b16 %v255
      %v302 = vunpack.c.l.b16 %v256
      %v303 = vunpack.c.l.b16 %v257
      %v304 = vunpack.c.l.b16 %v258
      %v305 = vunpack.c.l.b16 %v259
      %v306 = vpack.c.b16 %v287, %v286
      %v307 = vpack.c.b16 %v289, %v288
      %v308 = vpack.c.b16 %v291, %v290
      %v309 = vpack.c.b16 %v293, %v292
      %v310 = vpack.c.b16 %v295, %v294
      %v311 = vpack.c.b16 %v297, %v296
      %v312 = vpack.c.b16 %v299, %v298
      %v313 = vpack.c.b16 %v301, %v300
      %v314 = vpack.c.b16 %v303, %v302
      %v315 = vpack.c.b16 %v305, %v304
      %vm326 = vcmask 261120
      %v328 = vsel %vm326, %v264, 0
      %330 = vmatprep.subr.bf16.mxu0 0
      %331 = vmatpush1.bf16.msra.mxu0 %v306
      %332 = vmatprep.subr.bf16.mxu0 0
      %333 = vmatpush1.bf16.msra.mxu0 %v307
      %334 = vmatprep.subr.bf16.mxu0 0
      %335 = vmatpush1.bf16.msra.mxu0 %v308
      %336 = vmatprep.subr.bf16.mxu0 0
      %337 = vmatpush1.bf16.msra.mxu0 %v309
      %338 = vmatprep.subr.bf16.mxu0 0
      %339 = vmatpush1.bf16.msra.mxu0 %v310
      %340 = vmatprep.subr.bf16.mxu0 0
      %341 = vmatpush1.bf16.msra.mxu0 %v311
      %342 = vmatprep.subr.bf16.mxu0 0
      %343 = vmatpush1.bf16.msra.mxu0 %v312
      %344 = vmatprep.subr.bf16.mxu0 0
      %345 = vmatpush1.bf16.msra.mxu0 %v313
      %346 = vmatprep.subr.bf16.mxu0 0
      %347 = vmatpush1.bf16.msra.mxu0 %v314
      %348 = vmatprep.subr.bf16.mxu0 0
      %349 = vmatpush1.bf16.msra.mxu0 %v315
      %350 = vmatprep.subr.bf16.mxu0 0
      %351 = vmatpush1.bf16.msra.mxu0 0
      %352 = vmatprep.subr.bf16.mxu0 0
      %353 = vmatpush1.bf16.msra.mxu0 0
      %354 = vmatprep.subr.bf16.mxu0 0
      %355 = vmatpush1.bf16.msra.mxu0 0
      %356 = vmatprep.subr.bf16.mxu0 0
      %357 = vmatpush1.bf16.msra.mxu0 0
      %358 = vmatprep.subr.bf16.mxu0 0
      %359 = vmatpush1.bf16.msra.mxu0 0
      %360 = vmatprep.subr.bf16.mxu0 0
      %361 = vmatpush1.bf16.msra.mxu0 0
      %362 = vmatprep.mubr.bf16.mxu0 %v328
      %363 = vmatmul.mubr.bf16.gmra.mrb[0].mxu0 %v263
      %v364 = vpop.f32.mrb[0].mxu0
      %v365 = vadd.f32 0.0, %v364
      %v366 = vpop.f32.mrb[0].mxu0
      %v367 = vpop.f32.mrb[0].mxu0
      %v368 = vpop.f32.mrb[0].mxu0
      %369 = vdwg.mxu0
      %v371 = vunpack.c.l.b16 %v217
      %v372 = vunpack.c.h.b16 %v217
      %v373 = vpack.c.b16 %v371, %v371
      %v374 = vpack.c.b16 %v372, %v372
      %v396 = vunpack.c.l.b16 %v218
      %v397 = vunpack.c.l.b16 %v219
      %v398 = vunpack.c.l.b16 %v220
      %v399 = vunpack.c.l.b16 %v221
      %v400 = vunpack.c.l.b16 %v222
      %v401 = vunpack.c.l.b16 %v223
      %v402 = vunpack.c.l.b16 %v224
      %v403 = vunpack.c.l.b16 %v225
      %v404 = vunpack.c.l.b16 %v226
      %v405 = vunpack.c.l.b16 %v227
      %v406 = vunpack.c.l.b16 %v228
      %v407 = vunpack.c.l.b16 %v229
      %v408 = vunpack.c.l.b16 %v230
      %v409 = vunpack.c.l.b16 %v231
      %v410 = vunpack.c.l.b16 %v232
      %v411 = vunpack.c.l.b16 %v233
      %v412 = vunpack.c.l.b16 %v234
      %v413 = vunpack.c.l.b16 %v235
      %v414 = vunpack.c.l.b16 %v236
      %v415 = vunpack.c.l.b16 %v237
      %v416 = vpack.c.b16 %v397, %v396
      %v417 = vpack.c.b16 %v399, %v398
      %v418 = vpack.c.b16 %v401, %v400
      %v419 = vpack.c.b16 %v403, %v402
      %v420 = vpack.c.b16 %v405, %v404
      %v421 = vpack.c.b16 %v407, %v406
      %v422 = vpack.c.b16 %v409, %v408
      %v423 = vpack.c.b16 %v411, %v410
      %v424 = vpack.c.b16 %v413, %v412
      %v425 = vpack.c.b16 %v415, %v414
      %v437 = vsel %vm326, %v374, 0
      %439 = vmatprep.subr.bf16.mxu0 0
      %440 = vmatpush1.bf16.msra.mxu0 %v416
      %441 = vmatprep.subr.bf16.mxu0 0
      %442 = vmatpush1.bf16.msra.mxu0 %v417
      %443 = vmatprep.subr.bf16.mxu0 0
      %444 = vmatpush1.bf16.msra.mxu0 %v418
      %445 = vmatprep.subr.bf16.mxu0 0
      %446 = vmatpush1.bf16.msra.mxu0 %v419
      %447 = vmatprep.subr.bf16.mxu0 0
      %448 = vmatpush1.bf16.msra.mxu0 %v420
      %449 = vmatprep.subr.bf16.mxu0 0
      %450 = vmatpush1.bf16.msra.mxu0 %v421
      %451 = vmatprep.subr.bf16.mxu0 0
      %452 = vmatpush1.bf16.msra.mxu0 %v422
      %453 = vmatprep.subr.bf16.mxu0 0
      %454 = vmatpush1.bf16.msra.mxu0 %v423
      %455 = vmatprep.subr.bf16.mxu0 0
      %456 = vmatpush1.bf16.msra.mxu0 %v424
      %457 = vmatprep.subr.bf16.mxu0 0
      %458 = vmatpush1.bf16.msra.mxu0 %v425
      %459 = vmatprep.subr.bf16.mxu0 0
      %460 = vmatpush1.bf16.msra.mxu0 0
      %461 = vmatprep.subr.bf16.mxu0 0
      %462 = vmatpush1.bf16.msra.mxu0 0
      %463 = vmatprep.subr.bf16.mxu0 0
      %464 = vmatpush1.bf16.msra.mxu0 0
      %465 = vmatprep.subr.bf16.mxu0 0
      %466 = vmatpush1.bf16.msra.mxu0 0
      %467 = vmatprep.subr.bf16.mxu0 0
      %468 = vmatpush1.bf16.msra.mxu0 0
      %469 = vmatprep.subr.bf16.mxu0 0
      %470 = vmatpush1.bf16.msra.mxu0 0
      %471 = vmatprep.mubr.bf16.mxu0 %v437
      %472 = vmatmul.mubr.bf16.gmra.mrb[0].mxu0 %v373
      %v473 = vpop.f32.mrb[0].mxu0
      %v474 = vadd.f32 %v365, %v473
      %v475 = vpop.f32.mrb[0].mxu0
      %v476 = vpop.f32.mrb[0].mxu0
      %v477 = vpop.f32.mrb[0].mxu0
      %478 = vdwg.mxu0
      %v479 = vld [vmem:[%s206] sm:$0x77]
      %s480 = scalar_lea.vmem %s2, 160
      %v481 = vld [vmem:[%s480] sm:$0xf]
      %v482 = vld [vmem:[%s480 + $0x4] sm:$0xf]
      %v483 = vld [vmem:[%s480 + $0x8] sm:$0xf]
      %v484 = vld [vmem:[%s480 + $0xc] sm:$0xf]
      %v485 = vld [vmem:[%s480 + $0x10] sm:$0xf]
      %v486 = vld [vmem:[%s480 + $0x14] sm:$0xf]
      %v487 = vld [vmem:[%s480 + $0x18] sm:$0xf]
      %v488 = vld [vmem:[%s480 + $0x1c] sm:$0xf]
      %v489 = vld [vmem:[%s480 + $0x20] sm:$0xf]
      %v490 = vld [vmem:[%s480 + $0x24] sm:$0xf]
      %v491 = vld [vmem:[%s480 + $0x28] sm:$0xf]
      %v492 = vld [vmem:[%s480 + $0x2c] sm:$0xf]
      %v493 = vld [vmem:[%s480 + $0x30] sm:$0xf]
      %v494 = vld [vmem:[%s480 + $0x34] sm:$0xf]
      %v495 = vld [vmem:[%s480 + $0x38] sm:$0xf]
      %v496 = vld [vmem:[%s480 + $0x3c] sm:$0xf]
      %v497 = vld [vmem:[%s480 + $0x40] sm:$0xf]
      %v498 = vld [vmem:[%s480 + $0x44] sm:$0xf]
      %v499 = vld [vmem:[%s480 + $0x48] sm:$0xf]
      %v500 = vld [vmem:[%s480 + $0x4c] sm:$0xf]
      %v502 = vunpack.c.l.b16 %v479
      %v503 = vunpack.c.h.b16 %v479
      %v504 = vpack.c.b16 %v502, %v502
      %v505 = vpack.c.b16 %v503, %v503
      %v507 = vshrl.u32 %v504, 16
      %v509 = vshll.u32 %v504, 16
      %v511 = vrot.slane %v509, 1
      %v512 = vor.u32 %v507, %v511
      %v514 = vshrl.u32 %v505, 16
      %v516 = vshll.u32 %v505, 16
      %v518 = vrot.slane %v516, 1
      %v519 = vor.u32 %v514, %v518
      %v541 = vunpack.c.l.b16 %v481
      %v542 = vunpack.c.l.b16 %v482
      %v543 = vunpack.c.l.b16 %v483
      %v544 = vunpack.c.l.b16 %v484
      %v545 = vunpack.c.l.b16 %v485
      %v546 = vunpack.c.l.b16 %v486
      %v547 = vunpack.c.l.b16 %v487
      %v548 = vunpack.c.l.b16 %v488
      %v549 = vunpack.c.l.b16 %v489
      %v550 = vunpack.c.l.b16 %v490
      %v551 = vunpack.c.l.b16 %v491
      %v552 = vunpack.c.l.b16 %v492
      %v553 = vunpack.c.l.b16 %v493
      %v554 = vunpack.c.l.b16 %v494
      %v555 = vunpack.c.l.b16 %v495
      %v556 = vunpack.c.l.b16 %v496
      %v557 = vunpack.c.l.b16 %v497
      %v558 = vunpack.c.l.b16 %v498
      %v559 = vunpack.c.l.b16 %v499
      %v560 = vunpack.c.l.b16 %v500
      %v561 = vpack.c.b16 %v542, %v541
      %v562 = vpack.c.b16 %v544, %v543
      %v563 = vpack.c.b16 %v546, %v545
      %v564 = vpack.c.b16 %v548, %v547
      %v565 = vpack.c.b16 %v550, %v549
      %v566 = vpack.c.b16 %v552, %v551
      %v567 = vpack.c.b16 %v554, %v553
      %v568 = vpack.c.b16 %v556, %v555
      %v569 = vpack.c.b16 %v558, %v557
      %v570 = vpack.c.b16 %v560, %v559
      %v582 = vsel %vm326, %v519, 0
      %584 = vmatprep.subr.bf16.mxu0 0
      %585 = vmatpush1.bf16.msra.mxu0 %v561
      %586 = vmatprep.subr.bf16.mxu0 0
      %587 = vmatpush1.bf16.msra.mxu0 %v562
      %588 = vmatprep.subr.bf16.mxu0 0
      %589 = vmatpush1.bf16.msra.mxu0 %v563
      %590 = vmatprep.subr.bf16.mxu0 0
      %591 = vmatpush1.bf16.msra.mxu0 %v564
      %592 = vmatprep.subr.bf16.mxu0 0
      %593 = vmatpush1.bf16.msra.mxu0 %v565
      %594 = vmatprep.subr.bf16.mxu0 0
      %595 = vmatpush1.bf16.msra.mxu0 %v566
      %596 = vmatprep.subr.bf16.mxu0 0
      %597 = vmatpush1.bf16.msra.mxu0 %v567
      %598 = vmatprep.subr.bf16.mxu0 0
      %599 = vmatpush1.bf16.msra.mxu0 %v568
      %600 = vmatprep.subr.bf16.mxu0 0
      %601 = vmatpush1.bf16.msra.mxu0 %v569
      %602 = vmatprep.subr.bf16.mxu0 0
      %603 = vmatpush1.bf16.msra.mxu0 %v570
      %604 = vmatprep.subr.bf16.mxu0 0
      %605 = vmatpush1.bf16.msra.mxu0 0
      %606 = vmatprep.subr.bf16.mxu0 0
      %607 = vmatpush1.bf16.msra.mxu0 0
      %608 = vmatprep.subr.bf16.mxu0 0
      %609 = vmatpush1.bf16.msra.mxu0 0
      %610 = vmatprep.subr.bf16.mxu0 0
      %611 = vmatpush1.bf16.msra.mxu0 0
      %612 = vmatprep.subr.bf16.mxu0 0
      %613 = vmatpush1.bf16.msra.mxu0 0
      %614 = vmatprep.subr.bf16.mxu0 0
      %615 = vmatpush1.bf16.msra.mxu0 0
      %616 = vmatprep.mubr.bf16.mxu0 %v582
      %617 = vmatmul.mubr.bf16.gmra.mrb[0].mxu0 %v512
      %v618 = vpop.f32.mrb[0].mxu0
      %v619 = vadd.f32 0.0, %v618
      %v620 = vpop.f32.mrb[0].mxu0
      %v621 = vpop.f32.mrb[0].mxu0
      %v622 = vpop.f32.mrb[0].mxu0
      %623 = vdwg.mxu0
      %v624 = vadd.f32 %v474, %v619
      %v625 = vld [vmem:[%s3] sm:$0x1]
      %v627 = vlaneseq
      %v628 = vshrl.u32 %v627, 7
      %v629 = vsub.s32 0, %v628
      %v630 = vrot.slane %v625, %v629
      %v632 = vadd.f32 %v624, %v630
      %v633 = vmax.f32 %v632, 0.0
      %634 = vst [vmem:[%s215] sm:$0xf] %v633
      %p635 = scmp.lt.s32.totalorder %s15, 1
      %s636 = scalar_select %p635, %s15, 1
      %s637 = smul.addr %s636, 4
      %s638 = scalar_lea.vmem %s4, %s637
      // Predicated region
      $region37: #{unet_forward.14} parent=35 // pred_check
        %p639 = pneg %p127
      $region38: #{unet_forward.14} parent=35 // pred_check_branch
        %641 = sbr.rel (%p639) target = $region40
      $region39: #{unet_forward.14} parent=35 // pred_region
        _
      $region40: #{unet_forward.14} parent=35 // pred_fallthru
        _
    $region36: #{unet_forward.14} parent=5 // pred_fallthru
      _
    %p642 = scmp.le.s32.totalorder 2, %s10
    // Predicated region
    $region41: #{unet_forward.14} parent=5 // pred_check
      %p643 = pneg %p642
    $region42: #{unet_forward.14} parent=5 // pred_check_branch
      %645 = sbr.rel (%p643) target = $region44
    $region43: #{unet_forward.14} parent=5 // pred_region
      %s646 = ssub.s32 %s10, 2
      // Predicated region
      $region45: #{unet_forward.14} parent=43 // pred_check
        %p647 = pneg %p133
      $region46: #{unet_forward.14} parent=43 // pred_check_branch
        %649 = sbr.rel (%p647) target = $region48
      $region47: #{unet_forward.14} parent=43 // pred_region
        %p650 = scmp.lt.s32.totalorder %s16, 1
        %s651 = scalar_select %p650, %s16, 1
        %s652 = smul.addr %s651, 4
        %s653 = scalar_lea.vmem %s4, %s652
      $region48: #{unet_forward.14} parent=43 // pred_fallthru
        _
    $region44: #{unet_forward.14} parent=5 // pred_fallthru
      _
  $region6: #{unet_forward.14} parent=0 // loop_footer
    %s14 = sadd.s32 1, %s10
  $region7: #{unet_forward.14} parent=0 // loop_footer_branch
    %9 = sbr.rel target = $region3
  $region8: #{unet_forward.14} parent=0 // loop_exit
    _

// kernel: unet_forward.15
$region0: #{unet_forward.15}
  #allocation0 [shape = 'u32[]', space=smem, size = 0x4, offset = 0x4, fixed_abs, tag = 'smem constant byte address 0x4 - core index']
  #allocation1 [shape = 'u32[144,128]{1,0:T(1,128)}', space=vmem, size = 0x12000, scoped, tag = 'internal scratch']
  %s0 = inlined_call_operand.vmem [shape: bf16[2,6,192], index: 0, kind: input, shape index: {}]
  %s1 = inlined_call_operand.vmem [shape: bf16[3,192,128], index: 1, kind: input, shape index: {}]
  %s2 = inlined_call_operand.vmem [shape: f32[1,128], index: 2, kind: input, shape index: {}]
  %s3 = inlined_call_operand.vmem [shape: f32[2,4,128], index: 3, kind: output, shape index: {}]
  %s4 = sld [smem:[#allocation0]]
  $region45: #{unet_forward.15} parent=0
    _
  %s6 = ssub.s32 1, %s4
  %s7 = scalar_select 0, %s6, %s4
  loop: start=0, step=1, limit=4
  $region2: #{unet_forward.15} parent=0 // loop_pre_header
    _
  $region3: #{unet_forward.15} parent=0 // loop_header
    %s9 = sphi 0, %s13
    %p10 = scmp.ge.s32.totalorder %s9, 4
    %s19 = sphi 0, %s21
    %s22 = sphi 0, %s19
    %s23 = sphi 0, %s22
    %s39 = sphi 0, %s23
    %s43 = sphi 0, %s43
    %s45 = sphi 0, %s43
    %s46 = sphi 0, %s45
    %s60 = sphi 0, %s46
    %s64 = sphi 0, %s64
    %s66 = sphi 0, %s64
    %s67 = sphi 0, %s66
    %s81 = sphi 0, %s67
    %s87 = sphi 0, %s89
    %s90 = sphi 0, %s87
    %s91 = sphi 0, %s90
    %s107 = sphi 0, %s91
  $region4: #{unet_forward.15} parent=0 // loop_header_branch
    %12 = sbr.rel (%p10) target = $region8
  $region5: #{unet_forward.15} parent=0 // loop_body
    %s14 = ssub.s32 %s9, 1
    %s15 = ssub.s32 %s9, 2
    %s16 = sadd.s32 %s9, 1
    %s17 = ssub.s32 %s9, %s16
    %p18 = scmp.eq.s32.totalorder %s17, 0
    %s20 = sadd.s32 %s19, 1
    %s21 = scalar_select %p18, %s19, %s20
    %p24 = pneg %p18
    %p25 = scmp.eq.s32.totalorder %s9, 1
    %p26 = por %p24, %p25
    %p27 = scmp.ne.s32.totalorder %s19, %s22
    %p28 = scmp.eq.s32.totalorder %s9, 0
    %p29 = por %p27, %p28
    %p30 = scmp.ne.s32.totalorder %s19, %s22
    %p31 = scmp.eq.s32.totalorder %s14, 1
    %p32 = por %p30, %p31
    %p33 = scmp.ne.s32.totalorder %s22, %s23
    %p34 = scmp.eq.s32.totalorder %s14, 0
    %p35 = por %p33, %p34
    %p36 = scmp.ne.s32.totalorder %s22, %s23
    %p37 = scmp.eq.s32.totalorder %s15, 1
    %p38 = por %p36, %p37
    %p40 = scmp.ne.s32.totalorder %s23, %s39
    %p41 = scmp.eq.s32.totalorder %s15, 0
    %p42 = por %p40, %p41
    %s44 = sadd.s32 %s43, 1
    %p47 = scmp.eq.s32.totalorder %s9, 1
    %p48 = scmp.ne.s32.totalorder %s43, %s45
    %p49 = scmp.eq.s32.totalorder %s9, 0
    %p50 = por %p48, %p49
    %p51 = scmp.ne.s32.totalorder %s43, %s45
    %p52 = scmp.eq.s32.totalorder %s14, 1
    %p53 = por %p51, %p52
    %p54 = scmp.ne.s32.totalorder %s45, %s46
    %p55 = scmp.eq.s32.totalorder %s14, 0
    %p56 = por %p54, %p55
    %p57 = scmp.ne.s32.totalorder %s45, %s46
    %p58 = scmp.eq.s32.totalorder %s15, 1
    %p59 = por %p57, %p58
    %p61 = scmp.ne.s32.totalorder %s46, %s60
    %p62 = scmp.eq.s32.totalorder %s15, 0
    %p63 = por %p61, %p62
    %s65 = sadd.s32 %s64, 1
    %p68 = scmp.eq.s32.totalorder %s9, 1
    %p69 = scmp.ne.s32.totalorder %s64, %s66
    %p70 = scmp.eq.s32.totalorder %s9, 0
    %p71 = por %p69, %p70
    %p72 = scmp.ne.s32.totalorder %s64, %s66
    %p73 = scmp.eq.s32.totalorder %s14, 1
    %p74 = por %p72, %p73
    %p75 = scmp.ne.s32.totalorder %s66, %s67
    %p76 = scmp.eq.s32.totalorder %s14, 0
    %p77 = por %p75, %p76
    %p78 = scmp.ne.s32.totalorder %s66, %s67
    %p79 = scmp.eq.s32.totalorder %s15, 1
    %p80 = por %p78, %p79
    %p82 = scmp.ne.s32.totalorder %s67, %s81
    %p83 = scmp.eq.s32.totalorder %s15, 0
    %p84 = por %p82, %p83
    %s85 = ssub.s32 %s9, %s16
    %p86 = scmp.eq.s32.totalorder %s85, 0
    %s88 = sadd.s32 %s87, 1
    %s89 = scalar_select %p86, %s87, %s88
    %p92 = pneg %p86
    %p93 = scmp.eq.s32.totalorder %s9, 1
    %p94 = por %p92, %p93
    %p95 = scmp.ne.s32.totalorder %s87, %s90
    %p96 = scmp.eq.s32.totalorder %s9, 0
    %p97 = por %p95, %p96
    %p98 = scmp.ne.s32.totalorder %s87, %s90
    %p99 = scmp.eq.s32.totalorder %s14, 1
    %p100 = por %p98, %p99
    %p101 = scmp.ne.s32.totalorder %s90, %s91
    %p102 = scmp.eq.s32.totalorder %s14, 0
    %p103 = por %p101, %p102
    %p104 = scmp.ne.s32.totalorder %s90, %s91
    %p105 = scmp.eq.s32.totalorder %s15, 1
    %p106 = por %p104, %p105
    %p108 = scmp.ne.s32.totalorder %s91, %s107
    %p109 = scmp.eq.s32.totalorder %s15, 0
    %p110 = por %p108, %p109
    %p111 = scmp.le.s32.totalorder 1, %s9
    %p112 = scmp.lt.s32.totalorder %s9, 3
    %p113 = pnand %p111, %p112
    %p114 = pneg %p113
    // Predicated region
    $region9: #{unet_forward.15} parent=5 // pred_check
      _
    $region10: #{unet_forward.15} parent=5 // pred_check_branch
      %116 = sbr.rel (%p113) target = $region12
    $region11: #{unet_forward.15} parent=5 // pred_region
      %s117 = ssub.s32 %s9, 1
      // Predicated region
      $region13: #{unet_forward.15} parent=11 // pred_check
        %p118 = pneg %p56
      $region14: #{unet_forward.15} parent=11 // pred_check_branch
        %120 = sbr.rel (%p118) target = $region16
      $region15: #{unet_forward.15} parent=11 // pred_region
        _
      $region16: #{unet_forward.15} parent=11 // pred_fallthru
        _
      // Predicated region
      $region17: #{unet_forward.15} parent=11 // pred_check
        %p121 = pneg %p77
      $region18: #{unet_forward.15} parent=11 // pred_check_branch
        %123 = sbr.rel (%p121) target = $region20
      $region19: #{unet_forward.15} parent=11 // pred_region
        _
      $region20: #{unet_forward.15} parent=11 // pred_fallthru
        _
    $region12: #{unet_forward.15} parent=5 // pred_fallthru
      _
    %p124 = scmp.lt.s32.totalorder %s9, 2
    // Predicated region
    $region21: #{unet_forward.15} parent=5 // pred_check
      %p125 = pneg %p124
    $region22: #{unet_forward.15} parent=5 // pred_check_branch
      %127 = sbr.rel (%p125) target = $region24
    $region23: #{unet_forward.15} parent=5 // pred_region
      // Predicated region
      $region25: #{unet_forward.15} parent=23 // pred_check
        %p128 = pneg %p29
      $region26: #{unet_forward.15} parent=23 // pred_check_branch
        %130 = sbr.rel (%p128) target = $region28
      $region27: #{unet_forward.15} parent=23 // pred_region
        %p131 = scmp.lt.s32.totalorder %s9, 1
        %s132 = scalar_select %p131, %s9, 1
        %s133 = smul.addr %s132, 2
        %s134 = smul.addr %s133, 4
        %s135 = scalar_lea.vmem %s0, %s134
      $region28: #{unet_forward.15} parent=23 // pred_fallthru
        _
    $region24: #{unet_forward.15} parent=5 // pred_fallthru
      _
    %p136 = scmp.le.s32.totalorder 1, %s9
    %p137 = scmp.lt.s32.totalorder %s9, 3
    %p138 = pnand %p136, %p137
    %p139 = pneg %p138
    // Predicated region
    $region29: #{unet_forward.15} parent=5 // pred_check
      _
    $region30: #{unet_forward.15} parent=5 // pred_check_branch
      %141 = sbr.rel (%p138) target = $region32
    $region31: #{unet_forward.15} parent=5 // pred_region
      %s142 = ssub.s32 %s9, 1
      %p143 = scmp.lt.s32.totalorder %s14, 1
      %s144 = scalar_select %p143, %s14, 1
      %s145 = smul.addr %s144, 2
      %s146 = smul.addr %s145, 4
      %s147 = scalar_lea.vmem %s0, %s146
      %p148 = pneg %p35
      %p149 = pneg %p32
      %p150 = pneg %p56
      %p151 = pneg %p53
      %p152 = pneg %p77
      %p153 = pneg %p74
      %p154 = pneg %p103
      %p155 = pneg %p100
      %p156 = scmp.lt.s32.totalorder %s14, 1
      %s157 = scalar_select %p156, %s14, 1
      %s158 = smul.addr %s157, 4
      %s159 = scalar_lea.vmem %s3, %s158
      %p160 = scmp.lt.s32.totalorder %s14, 1
      %s161 = scalar_select %p160, %s14, 1
      %s162 = smul.addr %s161, 2
      %s163 = smul.addr %s162, 4
      %s164 = scalar_lea.vmem %s0, %s163
      %p165 = scmp.lt.s32.totalorder %s14, 1
      %s166 = scalar_select %p165, %s14, 1
      %s167 = smul.addr %s166, 4
      %s168 = scalar_lea.vmem %s3, %s167
      %v170 = vld [vmem:[%s164] sm:$0x33]
      %v171 = vld [vmem:[%s1] sm:$0xf]
      %v172 = vld [vmem:[%s1 + $0x4] sm:$0xf]
      %v173 = vld [vmem:[%s1 + $0x8] sm:$0xf]
      %v174 = vld [vmem:[%s1 + $0xc] sm:$0xf]
      %v175 = vld [vmem:[%s1 + $0x10] sm:$0xf]
      %v176 = vld [vmem:[%s1 + $0x14] sm:$0xf]
      %v177 = vld [vmem:[%s1 + $0x18] sm:$0xf]
      %v178 = vld [vmem:[%s1 + $0x1c] sm:$0xf]
      %v179 = vld [vmem:[%s1 + $0x20] sm:$0xf]
      %v180 = vld [vmem:[%s1 + $0x24] sm:$0xf]
      %v181 = vld [vmem:[%s1 + $0x28] sm:$0xf]
      %v182 = vld [vmem:[%s1 + $0x2c] sm:$0xf]
      %v183 = vld [vmem:[%s1 + $0x30] sm:$0xf]
      %v184 = vld [vmem:[%s1 + $0x34] sm:$0xf]
      %v185 = vld [vmem:[%s1 + $0x38] sm:$0xf]
      %v186 = vld [vmem:[%s1 + $0x3c] sm:$0xf]
      %v187 = vld [vmem:[%s1 + $0x40] sm:$0xf]
      %v188 = vld [vmem:[%s1 + $0x44] sm:$0xf]
      %v189 = vld [vmem:[%s1 + $0x48] sm:$0xf]
      %v190 = vld [vmem:[%s1 + $0x4c] sm:$0xf]
      %v191 = vld [vmem:[%s1 + $0x50] sm:$0xf]
      %v192 = vld [vmem:[%s1 + $0x54] sm:$0xf]
      %v193 = vld [vmem:[%s1 + $0x58] sm:$0xf]
      %v194 = vld [vmem:[%s1 + $0x5c] sm:$0xf]
      %v195 = vld [vmem:[%s164] sm:$0x77]
      %s196 = scalar_lea.vmem %s1, 96
      %v197 = vld [vmem:[%s196] sm:$0xf]
      %v198 = vld [vmem:[%s196 + $0x4] sm:$0xf]
      %v199 = vld [vmem:[%s196 + $0x8] sm:$0xf]
      %v200 = vld [vmem:[%s196 + $0xc] sm:$0xf]
      %v201 = vld [vmem:[%s196 + $0x10] sm:$0xf]
      %v202 = vld [vmem:[%s196 + $0x14] sm:$0xf]
      %v203 = vld [vmem:[%s196 + $0x18] sm:$0xf]
      %v204 = vld [vmem:[%s196 + $0x1c] sm:$0xf]
      %v205 = vld [vmem:[%s196 + $0x20] sm:$0xf]
      %v206 = vld [vmem:[%s196 + $0x24] sm:$0xf]
      %v207 = vld [vmem:[%s196 + $0x28] sm:$0xf]
      %v208 = vld [vmem:[%s196 + $0x2c] sm:$0xf]
      %v209 = vld [vmem:[%s196 + $0x30] sm:$0xf]
      %v210 = vld [vmem:[%s196 + $0x34] sm:$0xf]
      %v211 = vld [vmem:[%s196 + $0x38] sm:$0xf]
      %v212 = vld [vmem:[%s196 + $0x3c] sm:$0xf]
      %v213 = vld [vmem:[%s196 + $0x40] sm:$0xf]
      %v214 = vld [vmem:[%s196 + $0x44] sm:$0xf]
      %v215 = vld [vmem:[%s196 + $0x48] sm:$0xf]
      %v216 = vld [vmem:[%s196 + $0x4c] sm:$0xf]
      %v217 = vld [vmem:[%s196 + $0x50] sm:$0xf]
      %v218 = vld [vmem:[%s196 + $0x54] sm:$0xf]
      %v219 = vld [vmem:[%s196 + $0x58] sm:$0xf]
      %v220 = vld [vmem:[%s196 + $0x5c] sm:$0xf]
      %v222 = vunpack.c.l.b16 %v195
      %v223 = vunpack.c.h.b16 %v195
      %v224 = vpack.c.b16 %v222, %v222
      %v225 = vpack.c.b16 %v223, %v223
      %v227 = vshrl.u32 %v224, 16
      %v229 = vshll.u32 %v224, 16
      %v231 = vrot.slane %v229, 1
      %v232 = vor.u32 %v227, %v231
      %v234 = vshrl.u32 %v225, 16
      %v236 = vshll.u32 %v225, 16
      %v238 = vrot.slane %v236, 1
      %v239 = vor.u32 %v234, %v238
      %v265 = vunpack.c.l.b16 %v197
      %v266 = vunpack.c.l.b16 %v198
      %v267 = vunpack.c.l.b16 %v199
      %v268 = vunpack.c.l.b16 %v200
      %v269 = vunpack.c.l.b16 %v201
      %v270 = vunpack.c.l.b16 %v202
      %v271 = vunpack.c.l.b16 %v203
      %v272 = vunpack.c.l.b16 %v204
      %v273 = vunpack.c.l.b16 %v205
      %v274 = vunpack.c.l.b16 %v206
      %v275 = vunpack.c.l.b16 %v207
      %v276 = vunpack.c.l.b16 %v208
      %v277 = vunpack.c.l.b16 %v209
      %v278 = vunpack.c.l.b16 %v210
      %v279 = vunpack.c.l.b16 %v211
      %v280 = vunpack.c.l.b16 %v212
      %v281 = vunpack.c.l.b16 %v213
      %v282 = vunpack.c.l.b16 %v214
      %v283 = vunpack.c.l.b16 %v215
      %v284 = vunpack.c.l.b16 %v216
      %v285 = vunpack.c.l.b16 %v217
      %v286 = vunpack.c.l.b16 %v218
      %v287 = vunpack.c.l.b16 %v219
      %v288 = vunpack.c.l.b16 %v220
      %v289 = vpack.c.b16 %v266, %v265
      %v290 = vpack.c.b16 %v268, %v267
      %v291 = vpack.c.b16 %v270, %v269
      %v292 = vpack.c.b16 %v272, %v271
      %v293 = vpack.c.b16 %v274, %v273
      %v294 = vpack.c.b16 %v276, %v275
      %v295 = vpack.c.b16 %v278, %v277
      %v296 = vpack.c.b16 %v280, %v279
      %v297 = vpack.c.b16 %v282, %v281
      %v298 = vpack.c.b16 %v284, %v283
      %v299 = vpack.c.b16 %v286, %v285
      %v300 = vpack.c.b16 %v288, %v287
      %vm313 = vcmask 523264
      %v315 = vsel %vm313, %v239, 0
      %317 = vmatprep.subr.bf16.mxu0 0
      %318 = vmatpush1.bf16.msra.mxu0 %v289
      %319 = vmatprep.subr.bf16.mxu0 0
      %320 = vmatpush1.bf16.msra.mxu0 %v290
      %321 = vmatprep.subr.bf16.mxu0 0
      %322 = vmatpush1.bf16.msra.mxu0 %v291
      %323 = vmatprep.subr.bf16.mxu0 0
      %324 = vmatpush1.bf16.msra.mxu0 %v292
      %325 = vmatprep.subr.bf16.mxu0 0
      %326 = vmatpush1.bf16.msra.mxu0 %v293
      %327 = vmatprep.subr.bf16.mxu0 0
      %328 = vmatpush1.bf16.msra.mxu0 %v294
      %329 = vmatprep.subr.bf16.mxu0 0
      %330 = vmatpush1.bf16.msra.mxu0 %v295
      %331 = vmatprep.subr.bf16.mxu0 0
      %332 = vmatpush1.bf16.msra.mxu0 %v296
      %333 = vmatprep.subr.bf16.mxu0 0
      %334 = vmatpush1.bf16.msra.mxu0 %v297
      %335 = vmatprep.subr.bf16.mxu0 0
      %336 = vmatpush1.bf16.msra.mxu0 %v298
      %337 = vmatprep.subr.bf16.mxu0 0
      %338 = vmatpush1.bf16.msra.mxu0 %v299
      %339 = vmatprep.subr.bf16.mxu0 0
      %340 = vmatpush1.bf16.msra.mxu0 %v300
      %341 = vmatprep.subr.bf16.mxu0 0
      %342 = vmatpush1.bf16.msra.mxu0 0
      %343 = vmatprep.subr.bf16.mxu0 0
      %344 = vmatpush1.bf16.msra.mxu0 0
      %345 = vmatprep.subr.bf16.mxu0 0
      %346 = vmatpush1.bf16.msra.mxu0 0
      %347 = vmatprep.subr.bf16.mxu0 0
      %348 = vmatpush1.bf16.msra.mxu0 0
      %349 = vmatprep.mubr.bf16.mxu0 %v315
      %350 = vmatmul.mubr.bf16.gmra.mrb[0].mxu0 %v232
      %v351 = vpop.f32.mrb[0].mxu0
      %v352 = vadd.f32 0.0, %v351
      %v353 = vpop.f32.mrb[0].mxu0
      %v354 = vpop.f32.mrb[0].mxu0
      %v355 = vpop.f32.mrb[0].mxu0
      %356 = vdwg.mxu0
      %v358 = vunpack.c.l.b16 %v170
      %v359 = vunpack.c.h.b16 %v170
      %v360 = vpack.c.b16 %v358, %v358
      %v361 = vpack.c.b16 %v359, %v359
      %v387 = vunpack.c.l.b16 %v171
      %v388 = vunpack.c.l.b16 %v172
      %v389 = vunpack.c.l.b16 %v173
      %v390 = vunpack.c.l.b16 %v174
      %v391 = vunpack.c.l.b16 %v175
      %v392 = vunpack.c.l.b16 %v176
      %v393 = vunpack.c.l.b16 %v177
      %v394 = vunpack.c.l.b16 %v178
      %v395 = vunpack.c.l.b16 %v179
      %v396 = vunpack.c.l.b16 %v180
      %v397 = vunpack.c.l.b16 %v181
      %v398 = vunpack.c.l.b16 %v182
      %v399 = vunpack.c.l.b16 %v183
      %v400 = vunpack.c.l.b16 %v184
      %v401 = vunpack.c.l.b16 %v185
      %v402 = vunpack.c.l.b16 %v186
      %v403 = vunpack.c.l.b16 %v187
      %v404 = vunpack.c.l.b16 %v188
      %v405 = vunpack.c.l.b16 %v189
      %v406 = vunpack.c.l.b16 %v190
      %v407 = vunpack.c.l.b16 %v191
      %v408 = vunpack.c.l.b16 %v192
      %v409 = vunpack.c.l.b16 %v193
      %v410 = vunpack.c.l.b16 %v194
      %v411 = vpack.c.b16 %v388, %v387
      %v412 = vpack.c.b16 %v390, %v389
      %v413 = vpack.c.b16 %v392, %v391
      %v414 = vpack.c.b16 %v394, %v393
      %v415 = vpack.c.b16 %v396, %v395
      %v416 = vpack.c.b16 %v398, %v397
      %v417 = vpack.c.b16 %v400, %v399
      %v418 = vpack.c.b16 %v402, %v401
      %v419 = vpack.c.b16 %v404, %v403
      %v420 = vpack.c.b16 %v406, %v405
      %v421 = vpack.c.b16 %v408, %v407
      %v422 = vpack.c.b16 %v410, %v409
      %v436 = vsel %vm313, %v361, 0
      %438 = vmatprep.subr.bf16.mxu0 0
      %439 = vmatpush1.bf16.msra.mxu0 %v411
      %440 = vmatprep.subr.bf16.mxu0 0
      %441 = vmatpush1.bf16.msra.mxu0 %v412
      %442 = vmatprep.subr.bf16.mxu0 0
      %443 = vmatpush1.bf16.msra.mxu0 %v413
      %444 = vmatprep.subr.bf16.mxu0 0
      %445 = vmatpush1.bf16.msra.mxu0 %v414
      %446 = vmatprep.subr.bf16.mxu0 0
      %447 = vmatpush1.bf16.msra.mxu0 %v415
      %448 = vmatprep.subr.bf16.mxu0 0
      %449 = vmatpush1.bf16.msra.mxu0 %v416
      %450 = vmatprep.subr.bf16.mxu0 0
      %451 = vmatpush1.bf16.msra.mxu0 %v417
      %452 = vmatprep.subr.bf16.mxu0 0
      %453 = vmatpush1.bf16.msra.mxu0 %v418
      %454 = vmatprep.subr.bf16.mxu0 0
      %455 = vmatpush1.bf16.msra.mxu0 %v419
      %456 = vmatprep.subr.bf16.mxu0 0
      %457 = vmatpush1.bf16.msra.mxu0 %v420
      %458 = vmatprep.subr.bf16.mxu0 0
      %459 = vmatpush1.bf16.msra.mxu0 %v421
      %460 = vmatprep.subr.bf16.mxu0 0
      %461 = vmatpush1.bf16.msra.mxu0 %v422
      %462 = vmatprep.subr.bf16.mxu0 0
      %463 = vmatpush1.bf16.msra.mxu0 0
      %464 = vmatprep.subr.bf16.mxu0 0
      %465 = vmatpush1.bf16.msra.mxu0 0
      %466 = vmatprep.subr.bf16.mxu0 0
      %467 = vmatpush1.bf16.msra.mxu0 0
      %468 = vmatprep.subr.bf16.mxu0 0
      %469 = vmatpush1.bf16.msra.mxu0 0
      %470 = vmatprep.mubr.bf16.mxu0 %v436
      %471 = vmatmul.mubr.bf16.gmra.mrb[0].mxu0 %v360
      %v472 = vpop.f32.mrb[0].mxu0
      %v473 = vadd.f32 %v352, %v472
      %v474 = vpop.f32.mrb[0].mxu0
      %v475 = vpop.f32.mrb[0].mxu0
      %v476 = vpop.f32.mrb[0].mxu0
      %477 = vdwg.mxu0
      %v478 = vld [vmem:[%s164] sm:$0x66]
      %s479 = scalar_lea.vmem %s1, 192
      %v480 = vld [vmem:[%s479] sm:$0xf]
      %v481 = vld [vmem:[%s479 + $0x4] sm:$0xf]
      %v482 = vld [vmem:[%s479 + $0x8] sm:$0xf]
      %v483 = vld [vmem:[%s479 + $0xc] sm:$0xf]
      %v484 = vld [vmem:[%s479 + $0x10] sm:$0xf]
      %v485 = vld [vmem:[%s479 + $0x14] sm:$0xf]
      %v486 = vld [vmem:[%s479 + $0x18] sm:$0xf]
      %v487 = vld [vmem:[%s479 + $0x1c] sm:$0xf]
      %v488 = vld [vmem:[%s479 + $0x20] sm:$0xf]
      %v489 = vld [vmem:[%s479 + $0x24] sm:$0xf]
      %v490 = vld [vmem:[%s479 + $0x28] sm:$0xf]
      %v491 = vld [vmem:[%s479 + $0x2c] sm:$0xf]
      %v492 = vld [vmem:[%s479 + $0x30] sm:$0xf]
      %v493 = vld [vmem:[%s479 + $0x34] sm:$0xf]
      %v494 = vld [vmem:[%s479 + $0x38] sm:$0xf]
      %v495 = vld [vmem:[%s479 + $0x3c] sm:$0xf]
      %v496 = vld [vmem:[%s479 + $0x40] sm:$0xf]
      %v497 = vld [vmem:[%s479 + $0x44] sm:$0xf]
      %v498 = vld [vmem:[%s479 + $0x48] sm:$0xf]
      %v499 = vld [vmem:[%s479 + $0x4c] sm:$0xf]
      %v500 = vld [vmem:[%s479 + $0x50] sm:$0xf]
      %v501 = vld [vmem:[%s479 + $0x54] sm:$0xf]
      %v502 = vld [vmem:[%s479 + $0x58] sm:$0xf]
      %v503 = vld [vmem:[%s479 + $0x5c] sm:$0xf]
      %v505 = vunpack.c.l.b16 %v478
      %v506 = vunpack.c.h.b16 %v478
      %v507 = vpack.c.b16 %v505, %v505
      %v508 = vpack.c.b16 %v506, %v506
      %v509 = vrot.slane %v507, 1
      %v510 = vrot.slane %v508, 1
      %v536 = vunpack.c.l.b16 %v480
      %v537 = vunpack.c.l.b16 %v481
      %v538 = vunpack.c.l.b16 %v482
      %v539 = vunpack.c.l.b16 %v483
      %v540 = vunpack.c.l.b16 %v484
      %v541 = vunpack.c.l.b16 %v485
      %v542 = vunpack.c.l.b16 %v486
      %v543 = vunpack.c.l.b16 %v487
      %v544 = vunpack.c.l.b16 %v488
      %v545 = vunpack.c.l.b16 %v489
      %v546 = vunpack.c.l.b16 %v490
      %v547 = vunpack.c.l.b16 %v491
      %v548 = vunpack.c.l.b16 %v492
      %v549 = vunpack.c.l.b16 %v493
      %v550 = vunpack.c.l.b16 %v494
      %v551 = vunpack.c.l.b16 %v495
      %v552 = vunpack.c.l.b16 %v496
      %v553 = vunpack.c.l.b16 %v497
      %v554 = vunpack.c.l.b16 %v498
      %v555 = vunpack.c.l.b16 %v499
      %v556 = vunpack.c.l.b16 %v500
      %v557 = vunpack.c.l.b16 %v501
      %v558 = vunpack.c.l.b16 %v502
      %v559 = vunpack.c.l.b16 %v503
      %v560 = vpack.c.b16 %v537, %v536
      %v561 = vpack.c.b16 %v539, %v538
      %v562 = vpack.c.b16 %v541, %v540
      %v563 = vpack.c.b16 %v543, %v542
      %v564 = vpack.c.b16 %v545, %v544
      %v565 = vpack.c.b16 %v547, %v546
      %v566 = vpack.c.b16 %v549, %v548
      %v567 = vpack.c.b16 %v551, %v550
      %v568 = vpack.c.b16 %v553, %v552
      %v569 = vpack.c.b16 %v555, %v554
      %v570 = vpack.c.b16 %v557, %v556
      %v571 = vpack.c.b16 %v559, %v558
      %v585 = vsel %vm313, %v510, 0
      %587 = vmatprep.subr.bf16.mxu0 0
      %588 = vmatpush1.bf16.msra.mxu0 %v560
      %589 = vmatprep.subr.bf16.mxu0 0
      %590 = vmatpush1.bf16.msra.mxu0 %v561
      %591 = vmatprep.subr.bf16.mxu0 0
      %592 = vmatpush1.bf16.msra.mxu0 %v562
      %593 = vmatprep.subr.bf16.mxu0 0
      %594 = vmatpush1.bf16.msra.mxu0 %v563
      %595 = vmatprep.subr.bf16.mxu0 0
      %596 = vmatpush1.bf16.msra.mxu0 %v564
      %597 = vmatprep.subr.bf16.mxu0 0
      %598 = vmatpush1.bf16.msra.mxu0 %v565
      %599 = vmatprep.subr.bf16.mxu0 0
      %600 = vmatpush1.bf16.msra.mxu0 %v566
      %601 = vmatprep.subr.bf16.mxu0 0
      %602 = vmatpush1.bf16.msra.mxu0 %v567
      %603 = vmatprep.subr.bf16.mxu0 0
      %604 = vmatpush1.bf16.msra.mxu0 %v568
      %605 = vmatprep.subr.bf16.mxu0 0
      %606 = vmatpush1.bf16.msra.mxu0 %v569
      %607 = vmatprep.subr.bf16.mxu0 0
      %608 = vmatpush1.bf16.msra.mxu0 %v570
      %609 = vmatprep.subr.bf16.mxu0 0
      %610 = vmatpush1.bf16.msra.mxu0 %v571
      %611 = vmatprep.subr.bf16.mxu0 0
      %612 = vmatpush1.bf16.msra.mxu0 0
      %613 = vmatprep.subr.bf16.mxu0 0
      %614 = vmatpush1.bf16.msra.mxu0 0
      %615 = vmatprep.subr.bf16.mxu0 0
      %616 = vmatpush1.bf16.msra.mxu0 0
      %617 = vmatprep.subr.bf16.mxu0 0
      %618 = vmatpush1.bf16.msra.mxu0 0
      %619 = vmatprep.mubr.bf16.mxu0 %v585
      %620 = vmatmul.mubr.bf16.gmra.mrb[0].mxu0 %v509
      %v621 = vpop.f32.mrb[0].mxu0
      %v622 = vadd.f32 0.0, %v621
      %v623 = vpop.f32.mrb[0].mxu0
      %v624 = vpop.f32.mrb[0].mxu0
      %v625 = vpop.f32.mrb[0].mxu0
      %626 = vdwg.mxu0
      %v627 = vadd.f32 %v473, %v622
      %v628 = vld [vmem:[%s2] sm:$0x1]
      %v630 = vlaneseq
      %v631 = vshrl.u32 %v630, 7
      %v632 = vsub.s32 0, %v631
      %v633 = vrot.slane %v628, %v632
      %v635 = vadd.f32 %v627, %v633
      %v636 = vmax.f32 %v635, 0.0
      %637 = vst [vmem:[%s168] sm:$0xf] %v636
      %p638 = scmp.lt.s32.totalorder %s14, 1
      %s639 = scalar_select %p638, %s14, 1
      %s640 = smul.addr %s639, 4
      %s641 = scalar_lea.vmem %s3, %s640
      // Predicated region
      $region33: #{unet_forward.15} parent=31 // pred_check
        %p642 = pneg %p100
      $region34: #{unet_forward.15} parent=31 // pred_check_branch
        %644 = sbr.rel (%p642) target = $region36
      $region35: #{unet_forward.15} parent=31 // pred_region
        _
      $region36: #{unet_forward.15} parent=31 // pred_fallthru
        _
    $region32: #{unet_forward.15} parent=5 // pred_fallthru
      _
    %p645 = scmp.le.s32.totalorder 2, %s9
    // Predicated region
    $region37: #{unet_forward.15} parent=5 // pred_check
      %p646 = pneg %p645
    $region38: #{unet_forward.15} parent=5 // pred_check_branch
      %648 = sbr.rel (%p646) target = $region40
    $region39: #{unet_forward.15} parent=5 // pred_region
      %s649 = ssub.s32 %s9, 2
      // Predicated region
      $region41: #{unet_forward.15} parent=39 // pred_check
        %p650 = pneg %p106
      $region42: #{unet_forward.15} parent=39 // pred_check_branch
        %652 = sbr.rel (%p650) target = $region44
      $region43: #{unet_forward.15} parent=39 // pred_region
        %p653 = scmp.lt.s32.totalorder %s15, 1
        %s654 = scalar_select %p653, %s15, 1
        %s655 = smul.addr %s654, 4
        %s656 = scalar_lea.vmem %s3, %s655
      $region44: #{unet_forward.15} parent=39 // pred_fallthru
        _
    $region40: #{unet_forward.15} parent=5 // pred_fallthru
      _
  $region6: #{unet_forward.15} parent=0 // loop_footer
    %s13 = sadd.s32 1, %s9
  $region7: #{unet_forward.15} parent=0 // loop_footer_branch
    %8 = sbr.rel target = $region3
  $region8: #{unet_forward.15} parent=0 // loop_exit
    _

// kernel: unet_forward.17
$region0: #{unet_forward.17}
  #allocation0 [shape = 'u32[]', space=smem, size = 0x4, offset = 0x4, fixed_abs, tag = 'smem constant byte address 0x4 - core index']
  #allocation1 [shape = 'u32[144,128]{1,0:T(1,128)}', space=vmem, size = 0x12000, scoped, tag = 'internal scratch']
  %s0 = inlined_call_operand.vmem [shape: bf16[2,10,320], index: 0, kind: input, shape index: {}]
  %s1 = inlined_call_operand.vmem [shape: bf16[2,10,160], index: 1, kind: input, shape index: {}]
  %s2 = inlined_call_operand.vmem [shape: bf16[3,320,128], index: 2, kind: input, shape index: {}]
  %s3 = inlined_call_operand.vmem [shape: bf16[3,160,128], index: 3, kind: input, shape index: {}]
  %s4 = inlined_call_operand.vmem [shape: f32[1,128], index: 4, kind: input, shape index: {}]
  %s5 = inlined_call_operand.vmem [shape: f32[2,8,128], index: 5, kind: output, shape index: {}]
  %s6 = sld [smem:[#allocation0]]
  $region53: #{unet_forward.17} parent=0
    _
  %s8 = ssub.s32 1, %s6
  %s9 = scalar_select 0, %s8, %s6
  loop: start=0, step=1, limit=4
  $region2: #{unet_forward.17} parent=0 // loop_pre_header
    _
  $region3: #{unet_forward.17} parent=0 // loop_header
    %s11 = sphi 0, %s15
    %p12 = scmp.ge.s32.totalorder %s11, 4
    %s21 = sphi 0, %s23
    %s24 = sphi 0, %s21
    %s25 = sphi 0, %s24
    %s41 = sphi 0, %s25
    %s47 = sphi 0, %s49
    %s50 = sphi 0, %s47
    %s51 = sphi 0, %s50
    %s67 = sphi 0, %s51
    %s71 = sphi 0, %s71
    %s73 = sphi 0, %s71
    %s74 = sphi 0, %s73
    %s88 = sphi 0, %s74
    %s92 = sphi 0, %s92
    %s94 = sphi 0, %s92
    %s95 = sphi 0, %s94
    %s109 = sphi 0, %s95
    %s113 = sphi 0, %s113
    %s115 = sphi 0, %s113
    %s116 = sphi 0, %s115
    %s130 = sphi 0, %s116
    %s136 = sphi 0, %s138
    %s139 = sphi 0, %s136
    %s140 = sphi 0, %s139
    %s156 = sphi 0, %s140
  $region4: #{unet_forward.17} parent=0 // loop_header_branch
    %14 = sbr.rel (%p12) target = $region8
  $region5: #{unet_forward.17} parent=0 // loop_body
    %s16 = ssub.s32 %s11, 1
    %s17 = ssub.s32 %s11, 2
    %s18 = sadd.s32 %s11, 1
    %s19 = ssub.s32 %s11, %s18
    %p20 = scmp.eq.s32.totalorder %s19, 0
    %s22 = sadd.s32 %s21, 1
    %s23 = scalar_select %p20, %s21, %s22
    %p26 = pneg %p20
    %p27 = scmp.eq.s32.totalorder %s11, 1
    %p28 = por %p26, %p27
    %p29 = scmp.ne.s32.totalorder %s21, %s24
    %p30 = scmp.eq.s32.totalorder %s11, 0
    %p31 = por %p29, %p30
    %p32 = scmp.ne.s32.totalorder %s21, %s24
    %p33 = scmp.eq.s32.totalorder %s16, 1
    %p34 = por %p32, %p33
    %p35 = scmp.ne.s32.totalorder %s24, %s25
    %p36 = scmp.eq.s32.totalorder %s16, 0
    %p37 = por %p35, %p36
    %p38 = scmp.ne.s32.totalorder %s24, %s25
    %p39 = scmp.eq.s32.totalorder %s17, 1
    %p40 = por %p38, %p39
    %p42 = scmp.ne.s32.totalorder %s25, %s41
    %p43 = scmp.eq.s32.totalorder %s17, 0
    %p44 = por %p42, %p43
    %s45 = ssub.s32 %s11, %s18
    %p46 = scmp.eq.s32.totalorder %s45, 0
    %s48 = sadd.s32 %s47, 1
    %s49 = scalar_select %p46, %s47, %s48
    %p52 = pneg %p46
    %p53 = scmp.eq.s32.totalorder %s11, 1
    %p54 = por %p52, %p53
    %p55 = scmp.ne.s32.totalorder %s47, %s50
    %p56 = scmp.eq.s32.totalorder %s11, 0
    %p57 = por %p55, %p56
    %p58 = scmp.ne.s32.totalorder %s47, %s50
    %p59 = scmp.eq.s32.totalorder %s16, 1
    %p60 = por %p58, %p59
    %p61 = scmp.ne.s32.totalorder %s50, %s51
    %p62 = scmp.eq.s32.totalorder %s16, 0
    %p63 = por %p61, %p62
    %p64 = scmp.ne.s32.totalorder %s50, %s51
    %p65 = scmp.eq.s32.totalorder %s17, 1
    %p66 = por %p64, %p65
    %p68 = scmp.ne.s32.totalorder %s51, %s67
    %p69 = scmp.eq.s32.totalorder %s17, 0
    %p70 = por %p68, %p69
    %s72 = sadd.s32 %s71, 1
    %p75 = scmp.eq.s32.totalorder %s11, 1
    %p76 = scmp.ne.s32.totalorder %s71, %s73
    %p77 = scmp.eq.s32.totalorder %s11, 0
    %p78 = por %p76, %p77
    %p79 = scmp.ne.s32.totalorder %s71, %s73
    %p80 = scmp.eq.s32.totalorder %s16, 1
    %p81 = por %p79, %p80
    %p82 = scmp.ne.s32.totalorder %s73, %s74
    %p83 = scmp.eq.s32.totalorder %s16, 0
    %p84 = por %p82, %p83
    %p85 = scmp.ne.s32.totalorder %s73, %s74
    %p86 = scmp.eq.s32.totalorder %s17, 1
    %p87 = por %p85, %p86
    %p89 = scmp.ne.s32.totalorder %s74, %s88
    %p90 = scmp.eq.s32.totalorder %s17, 0
    %p91 = por %p89, %p90
    %s93 = sadd.s32 %s92, 1
    %p96 = scmp.eq.s32.totalorder %s11, 1
    %p97 = scmp.ne.s32.totalorder %s92, %s94
    %p98 = scmp.eq.s32.totalorder %s11, 0
    %p99 = por %p97, %p98
    %p100 = scmp.ne.s32.totalorder %s92, %s94
    %p101 = scmp.eq.s32.totalorder %s16, 1
    %p102 = por %p100, %p101
    %p103 = scmp.ne.s32.totalorder %s94, %s95
    %p104 = scmp.eq.s32.totalorder %s16, 0
    %p105 = por %p103, %p104
    %p106 = scmp.ne.s32.totalorder %s94, %s95
    %p107 = scmp.eq.s32.totalorder %s17, 1
    %p108 = por %p106, %p107
    %p110 = scmp.ne.s32.totalorder %s95, %s109
    %p111 = scmp.eq.s32.totalorder %s17, 0
    %p112 = por %p110, %p111
    %s114 = sadd.s32 %s113, 1
    %p117 = scmp.eq.s32.totalorder %s11, 1
    %p118 = scmp.ne.s32.totalorder %s113, %s115
    %p119 = scmp.eq.s32.totalorder %s11, 0
    %p120 = por %p118, %p119
    %p121 = scmp.ne.s32.totalorder %s113, %s115
    %p122 = scmp.eq.s32.totalorder %s16, 1
    %p123 = por %p121, %p122
    %p124 = scmp.ne.s32.totalorder %s115, %s116
    %p125 = scmp.eq.s32.totalorder %s16, 0
    %p126 = por %p124, %p125
    %p127 = scmp.ne.s32.totalorder %s115, %s116
    %p128 = scmp.eq.s32.totalorder %s17, 1
    %p129 = por %p127, %p128
    %p131 = scmp.ne.s32.totalorder %s116, %s130
    %p132 = scmp.eq.s32.totalorder %s17, 0
    %p133 = por %p131, %p132
    %s134 = ssub.s32 %s11, %s18
    %p135 = scmp.eq.s32.totalorder %s134, 0
    %s137 = sadd.s32 %s136, 1
    %s138 = scalar_select %p135, %s136, %s137
    %p141 = pneg %p135
    %p142 = scmp.eq.s32.totalorder %s11, 1
    %p143 = por %p141, %p142
    %p144 = scmp.ne.s32.totalorder %s136, %s139
    %p145 = scmp.eq.s32.totalorder %s11, 0
    %p146 = por %p144, %p145
    %p147 = scmp.ne.s32.totalorder %s136, %s139
    %p148 = scmp.eq.s32.totalorder %s16, 1
    %p149 = por %p147, %p148
    %p150 = scmp.ne.s32.totalorder %s139, %s140
    %p151 = scmp.eq.s32.totalorder %s16, 0
    %p152 = por %p150, %p151
    %p153 = scmp.ne.s32.totalorder %s139, %s140
    %p154 = scmp.eq.s32.totalorder %s17, 1
    %p155 = por %p153, %p154
    %p157 = scmp.ne.s32.totalorder %s140, %s156
    %p158 = scmp.eq.s32.totalorder %s17, 0
    %p159 = por %p157, %p158
    %p160 = scmp.le.s32.totalorder 1, %s11
    %p161 = scmp.lt.s32.totalorder %s11, 3
    %p162 = pnand %p160, %p161
    %p163 = pneg %p162
    // Predicated region
    $region9: #{unet_forward.17} parent=5 // pred_check
      _
    $region10: #{unet_forward.17} parent=5 // pred_check_branch
      %165 = sbr.rel (%p162) target = $region12
    $region11: #{unet_forward.17} parent=5 // pred_region
      %s166 = ssub.s32 %s11, 1
      // Predicated region
      $region13: #{unet_forward.17} parent=11 // pred_check
        %p167 = pneg %p84
      $region14: #{unet_forward.17} parent=11 // pred_check_branch
        %169 = sbr.rel (%p167) target = $region16
      $region15: #{unet_forward.17} parent=11 // pred_region
        _
      $region16: #{unet_forward.17} parent=11 // pred_fallthru
        _
      // Predicated region
      $region17: #{unet_forward.17} parent=11 // pred_check
        %p170 = pneg %p105
      $region18: #{unet_forward.17} parent=11 // pred_check_branch
        %172 = sbr.rel (%p170) target = $region20
      $region19: #{unet_forward.17} parent=11 // pred_region
        _
      $region20: #{unet_forward.17} parent=11 // pred_fallthru
        _
      // Predicated region
      $region21: #{unet_forward.17} parent=11 // pred_check
        %p173 = pneg %p126
      $region22: #{unet_forward.17} parent=11 // pred_check_branch
        %175 = sbr.rel (%p173) target = $region24
      $region23: #{unet_forward.17} parent=11 // pred_region
        _
      $region24: #{unet_forward.17} parent=11 // pred_fallthru
        _
    $region12: #{unet_forward.17} parent=5 // pred_fallthru
      _
    %p176 = scmp.lt.s32.totalorder %s11, 2
    // Predicated region
    $region25: #{unet_forward.17} parent=5 // pred_check
      %p177 = pneg %p176
    $region26: #{unet_forward.17} parent=5 // pred_check_branch
      %179 = sbr.rel (%p177) target = $region28
    $region27: #{unet_forward.17} parent=5 // pred_region
      // Predicated region
      $region29: #{unet_forward.17} parent=27 // pred_check
        %p180 = pneg %p31
      $region30: #{unet_forward.17} parent=27 // pred_check_branch
        %182 = sbr.rel (%p180) target = $region32
      $region31: #{unet_forward.17} parent=27 // pred_region
        %p183 = scmp.lt.s32.totalorder %s11, 1
        %s184 = scalar_select %p183, %s11, 1
        %s185 = smul.addr %s184, 6
        %s186 = smul.addr %s185, 4
        %s187 = scalar_lea.vmem %s0, %s186
      $region32: #{unet_forward.17} parent=27 // pred_fallthru
        _
      // Predicated region
      $region33: #{unet_forward.17} parent=27 // pred_check
        %p188 = pneg %p57
      $region34: #{unet_forward.17} parent=27 // pred_check_branch
        %190 = sbr.rel (%p188) target = $region36
      $region35: #{unet_forward.17} parent=27 // pred_region
        %p191 = scmp.lt.s32.totalorder %s11, 1
        %s192 = scalar_select %p191, %s11, 1
        %s193 = smul.addr %s192, 4
        %s194 = smul.addr %s193, 4
        %s195 = scalar_lea.vmem %s1, %s194
      $region36: #{unet_forward.17} parent=27 // pred_fallthru
        _
    $region28: #{unet_forward.17} parent=5 // pred_fallthru
      _
    %p196 = scmp.le.s32.totalorder 1, %s11
    %p197 = scmp.lt.s32.totalorder %s11, 3
    %p198 = pnand %p196, %p197
    %p199 = pneg %p198
    // Predicated region
    $region37: #{unet_forward.17} parent=5 // pred_check
      _
    $region38: #{unet_forward.17} parent=5 // pred_check_branch
      %201 = sbr.rel (%p198) target = $region40
    $region39: #{unet_forward.17} parent=5 // pred_region
      %s202 = ssub.s32 %s11, 1
      %p203 = scmp.lt.s32.totalorder %s16, 1
      %s204 = scalar_select %p203, %s16, 1
      %s205 = smul.addr %s204, 6
      %s206 = smul.addr %s205, 4
      %s207 = scalar_lea.vmem %s0, %s206
      %p208 = pneg %p37
      %p209 = pneg %p34
      %p210 = scmp.lt.s32.totalorder %s16, 1
      %s211 = scalar_select %p210, %s16, 1
      %s212 = smul.addr %s211, 4
      %s213 = smul.addr %s212, 4
      %s214 = scalar_lea.vmem %s1, %s213
      %p215 = pneg %p63
      %p216 = pneg %p60
      %p217 = pneg %p84
      %p218 = pneg %p81
      %p219 = pneg %p105
      %p220 = pneg %p102
      %p221 = pneg %p126
      %p222 = pneg %p123
      %p223 = pneg %p152
      %p224 = pneg %p149
      %p225 = scmp.lt.s32.totalorder %s16, 1
      %s226 = scalar_select %p225, %s16, 1
      %s227 = smul.addr %s226, 8
      %s228 = scalar_lea.vmem %s5, %s227
      %p229 = scmp.lt.s32.totalorder %s16, 1
      %s230 = scalar_select %p229, %s16, 1
      %s231 = smul.addr %s230, 6
      %s232 = smul.addr %s231, 4
      %s233 = scalar_lea.vmem %s0, %s232
      %p234 = scmp.lt.s32.totalorder %s16, 1
      %s235 = scalar_select %p234, %s16, 1
      %s236 = smul.addr %s235, 4
      %s237 = smul.addr %s236, 4
      %s238 = scalar_lea.vmem %s1, %s237
      %p239 = scmp.lt.s32.totalorder %s16, 1
      %s240 = scalar_select %p239, %s16, 1
      %s241 = smul.addr %s240, 8
      %s242 = scalar_lea.vmem %s5, %s241
      %v244 = vld [vmem:[%s233] sm:$0xff]
      %v245 = vld [vmem:[%s233 + $0x8] sm:$0xf]
      %v246 = vld [vmem:[%s2] sm:$0xf]
      %v247 = vld [vmem:[%s2 + $0x4] sm:$0xf]
      %v248 = vld [vmem:[%s2 + $0x8] sm:$0xf]
      %v249 = vld [vmem:[%s2 + $0xc] sm:$0xf]
      %v250 = vld [vmem:[%s2 + $0x10] sm:$0xf]
      %v251 = vld [vmem:[%s2 + $0x14] sm:$0xf]
      %v252 = vld [vmem:[%s2 + $0x18] sm:$0xf]
      %v253 = vld [vmem:[%s2 + $0x1c] sm:$0xf]
      %v254 = vld [vmem:[%s2 + $0x20] sm:$0xf]
      %v255 = vld [vmem:[%s2 + $0x24] sm:$0xf]
      %v256 = vld [vmem:[%s2 + $0x28] sm:$0xf]
      %v257 = vld [vmem:[%s2 + $0x2c] sm:$0xf]
      %v258 = vld [vmem:[%s2 + $0x30] sm:$0xf]
      %v259 = vld [vmem:[%s2 + $0x34] sm:$0xf]
      %v260 = vld [vmem:[%s2 + $0x38] sm:$0xf]
      %v261 = vld [vmem:[%s2 + $0x3c] sm:$0xf]
      %v262 = vld [vmem:[%s2 + $0x40] sm:$0xf]
      %v263 = vld [vmem:[%s2 + $0x44] sm:$0xf]
      %v264 = vld [vmem:[%s2 + $0x48] sm:$0xf]
      %v265 = vld [vmem:[%s2 + $0x4c] sm:$0xf]
      %v266 = vld [vmem:[%s2 + $0x50] sm:$0xf]
      %v267 = vld [vmem:[%s2 + $0x54] sm:$0xf]
      %v268 = vld [vmem:[%s2 + $0x58] sm:$0xf]
      %v269 = vld [vmem:[%s2 + $0x5c] sm:$0xf]
      %v270 = vld [vmem:[%s2 + $0x60] sm:$0xf]
      %v271 = vld [vmem:[%s2 + $0x64] sm:$0xf]
      %v272 = vld [vmem:[%s2 + $0x68] sm:$0xf]
      %v273 = vld [vmem:[%s2 + $0x6c] sm:$0xf]
      %v274 = vld [vmem:[%s2 + $0x70] sm:$0xf]
      %v275 = vld [vmem:[%s2 + $0x74] sm:$0xf]
      %v276 = vld [vmem:[%s2 + $0x78] sm:$0xf]
      %v277 = vld [vmem:[%s2 + $0x7c] sm:$0xf]
      %v278 = vld [vmem:[%s2 + $0x80] sm:$0xf]
      %v279 = vld [vmem:[%s2 + $0x84] sm:$0xf]
      %v280 = vld [vmem:[%s2 + $0x88] sm:$0xf]
      %v281 = vld [vmem:[%s2 + $0x8c] sm:$0xf]
      %v282 = vld [vmem:[%s2 + $0x90] sm:$0xf]
      %v283 = vld [vmem:[%s2 + $0x94] sm:$0xf]
      %v284 = vld [vmem:[%s2 + $0x98] sm:$0xf]
      %v285 = vld [vmem:[%s2 + $0x9c] sm:$0xf]
      %v286 = vld [vmem:[%s233 + $0xc] sm:$0x11]
      %v287 = vld [vmem:[%s233 + $0x14] sm:$0x1]
      %s288 = scalar_lea.vmem %s2, 160
      %v289 = vld [vmem:[%s288] sm:$0xf]
      %v290 = vld [vmem:[%s288 + $0x4] sm:$0xf]
      %v291 = vld [vmem:[%s288 + $0x8] sm:$0xf]
      %v292 = vld [vmem:[%s288 + $0xc] sm:$0xf]
      %v293 = vld [vmem:[%s288 + $0x10] sm:$0xf]
      %v294 = vld [vmem:[%s288 + $0x14] sm:$0xf]
      %v295 = vld [vmem:[%s288 + $0x18] sm:$0xf]
      %v296 = vld [vmem:[%s288 + $0x1c] sm:$0xf]
      %v297 = vld [vmem:[%s288 + $0x20] sm:$0xf]
      %v298 = vld [vmem:[%s288 + $0x24] sm:$0xf]
      %v299 = vld [vmem:[%s288 + $0x28] sm:$0xf]
      %v300 = vld [vmem:[%s288 + $0x2c] sm:$0xf]
      %v301 = vld [vmem:[%s288 + $0x30] sm:$0xf]
      %v302 = vld [vmem:[%s288 + $0x34] sm:$0xf]
      %v303 = vld [vmem:[%s288 + $0x38] sm:$0xf]
      %v304 = vld [vmem:[%s288 + $0x3c] sm:$0xf]
      %v305 = vld [vmem:[%s288 + $0x40] sm:$0xf]
      %v306 = vld [vmem:[%s288 + $0x44] sm:$0xf]
      %v307 = vld [vmem:[%s288 + $0x48] sm:$0xf]
      %v308 = vld [vmem:[%s288 + $0x4c] sm:$0xf]
      %v309 = vld [vmem:[%s288 + $0x50] sm:$0xf]
      %v310 = vld [vmem:[%s288 + $0x54] sm:$0xf]
      %v311 = vld [vmem:[%s288 + $0x58] sm:$0xf]
      %v312 = vld [vmem:[%s288 + $0x5c] sm:$0xf]
      %v313 = vld [vmem:[%s288 + $0x60] sm:$0xf]
      %v314 = vld [vmem:[%s288 + $0x64] sm:$0xf]
      %v315 = vld [vmem:[%s288 + $0x68] sm:$0xf]
      %v316 = vld [vmem:[%s288 + $0x6c] sm:$0xf]
      %v317 = vld [vmem:[%s288 + $0x70] sm:$0xf]
      %v318 = vld [vmem:[%s288 + $0x74] sm:$0xf]
      %v319 = vld [vmem:[%s288 + $0x78] sm:$0xf]
      %v320 = vld [vmem:[%s288 + $0x7c] sm:$0xf]
      %v321 = vld [vmem:[%s288 + $0x80] sm:$0xf]
      %v322 = vld [vmem:[%s288 + $0x84] sm:$0xf]
      %v323 = vld [vmem:[%s288 + $0x88] sm:$0xf]
      %v324 = vld [vmem:[%s288 + $0x8c] sm:$0xf]
      %v325 = vld [vmem:[%s288 + $0x90] sm:$0xf]
      %v326 = vld [vmem:[%s288 + $0x94] sm:$0xf]
      %v327 = vld [vmem:[%s288 + $0x98] sm:$0xf]
      %v328 = vld [vmem:[%s288 + $0x9c] sm:$0xf]
      %v333 = vunpack.c.l.b16 %v244
      %v334 = vunpack.c.h.b16 %v244
      %v335 = vunpack.c.l.b16 %v245
      %v336 = vunpack.c.l.b16 %v286
      %v337 = vunpack.c.h.b16 %v286
      %v338 = vunpack.c.l.b16 %v287
      %v339 = vpack.c.b16 %v336, %v333
      %v340 = vpack.c.b16 %v337, %v334
      %v341 = vpack.c.b16 %v338, %v335
      %v343 = vshrl.u32 %v339, 16
      %v345 = vshll.u32 %v339, 16
      %v347 = vrot.slane %v345, 1
      %v348 = vor.u32 %v343, %v347
      %v350 = vshrl.u32 %v340, 16
      %v352 = vshll.u32 %v340, 16
      %v354 = vrot.slane %v352, 1
      %v355 = vor.u32 %v350, %v354
      %v357 = vshrl.u32 %v341, 16
      %v359 = vshll.u32 %v341, 16
      %v361 = vrot.slane %v359, 1
      %v362 = vor.u32 %v357, %v361
      %v405 = vunpack.c.l.b16 %v289
      %v406 = vunpack.c.l.b16 %v290
      %v407 = vunpack.c.l.b16 %v291
      %v408 = vunpack.c.l.b16 %v292
      %v409 = vunpack.c.l.b16 %v293
      %v410 = vunpack.c.l.b16 %v294
      %v411 = vunpack.c.l.b16 %v295
      %v412 = vunpack.c.l.b16 %v296
      %v413 = vunpack.c.l.b16 %v297
      %v414 = vunpack.c.l.b16 %v298
      %v415 = vunpack.c.l.b16 %v299
      %v416 = vunpack.c.l.b16 %v300
      %v417 = vunpack.c.l.b16 %v301
      %v418 = vunpack.c.l.b16 %v302
      %v419 = vunpack.c.l.b16 %v303
      %v420 = vunpack.c.l.b16 %v304
      %v421 = vunpack.c.l.b16 %v305
      %v422 = vunpack.c.l.b16 %v306
      %v423 = vunpack.c.l.b16 %v307
      %v424 = vunpack.c.l.b16 %v308
      %v425 = vunpack.c.l.b16 %v309
      %v426 = vunpack.c.l.b16 %v310
      %v427 = vunpack.c.l.b16 %v311
      %v428 = vunpack.c.l.b16 %v312
      %v429 = vunpack.c.l.b16 %v313
      %v430 = vunpack.c.l.b16 %v314
      %v431 = vunpack.c.l.b16 %v315
      %v432 = vunpack.c.l.b16 %v316
      %v433 = vunpack.c.l.b16 %v317
      %v434 = vunpack.c.l.b16 %v318
      %v435 = vunpack.c.l.b16 %v319
      %v436 = vunpack.c.l.b16 %v320
      %v437 = vunpack.c.l.b16 %v321
      %v438 = vunpack.c.l.b16 %v322
      %v439 = vunpack.c.l.b16 %v323
      %v440 = vunpack.c.l.b16 %v324
      %v441 = vunpack.c.l.b16 %v325
      %v442 = vunpack.c.l.b16 %v326
      %v443 = vunpack.c.l.b16 %v327
      %v444 = vunpack.c.l.b16 %v328
      %v445 = vpack.c.b16 %v406, %v405
      %v446 = vpack.c.b16 %v408, %v407
      %v447 = vpack.c.b16 %v410, %v409
      %v448 = vpack.c.b16 %v412, %v411
      %v449 = vpack.c.b16 %v414, %v413
      %v450 = vpack.c.b16 %v416, %v415
      %v451 = vpack.c.b16 %v418, %v417
      %v452 = vpack.c.b16 %v420, %v419
      %v453 = vpack.c.b16 %v422, %v421
      %v454 = vpack.c.b16 %v424, %v423
      %v455 = vpack.c.b16 %v426, %v425
      %v456 = vpack.c.b16 %v428, %v427
      %v457 = vpack.c.b16 %v430, %v429
      %v458 = vpack.c.b16 %v432, %v431
      %v459 = vpack.c.b16 %v434, %v433
      %v460 = vpack.c.b16 %v436, %v435
      %v461 = vpack.c.b16 %v438, %v437
      %v462 = vpack.c.b16 %v440, %v439
      %v463 = vpack.c.b16 %v442, %v441
      %v464 = vpack.c.b16 %v444, %v443
      %vm485 = vcmask 523264
      %v487 = vsel %vm485, %v362, 0
      %489 = vmatprep.subr.bf16.mxu0 0
      %490 = vmatpush1.bf16.msra.mxu0 %v445
      %491 = vmatprep.subr.bf16.mxu0 0
      %492 = vmatpush1.bf16.msra.mxu0 %v446
      %493 = vmatprep.subr.bf16.mxu0 0
      %494 = vmatpush1.bf16.msra.mxu0 %v447
      %495 = vmatprep.subr.bf16.mxu0 0
      %496 = vmatpush1.bf16.msra.mxu0 %v448
      %497 = vmatprep.subr.bf16.mxu0 0
      %498 = vmatpush1.bf16.msra.mxu0 %v449
      %499 = vmatprep.subr.bf16.mxu0 0
      %500 = vmatpush1.bf16.msra.mxu0 %v450
      %501 = vmatprep.subr.bf16.mxu0 0
      %502 = vmatpush1.bf16.msra.mxu0 %v451
      %503 = vmatprep.subr.bf16.mxu0 0
      %504 = vmatpush1.bf16.msra.mxu0 %v452
      %505 = vmatprep.subr.bf16.mxu0 0
      %506 = vmatpush1.bf16.msra.mxu0 %v453
      %507 = vmatprep.subr.bf16.mxu0 0
      %508 = vmatpush1.bf16.msra.mxu0 %v454
      %509 = vmatprep.subr.bf16.mxu0 0
      %510 = vmatpush1.bf16.msra.mxu0 %v455
      %511 = vmatprep.subr.bf16.mxu0 0
      %512 = vmatpush1.bf16.msra.mxu0 %v456
      %513 = vmatprep.subr.bf16.mxu0 0
      %514 = vmatpush1.bf16.msra.mxu0 %v457
      %515 = vmatprep.subr.bf16.mxu0 0
      %516 = vmatpush1.bf16.msra.mxu0 %v458
      %517 = vmatprep.subr.bf16.mxu0 0
      %518 = vmatpush1.bf16.msra.mxu0 %v459
      %519 = vmatprep.subr.bf16.mxu0 0
      %520 = vmatpush1.bf16.msra.mxu0 %v460
      %521 = vmatprep.mubr.bf16.mxu0 %v355
      %522 = vmatmul.mubr.bf16.gmra.mrb[0].mxu0 %v348
      %v523 = vpop.f32.mrb[0].mxu0
      %v524 = vadd.f32 0.0, %v523
      %v525 = vpop.f32.mrb[0].mxu0
      %v526 = vpop.f32.mrb[0].mxu0
      %v527 = vpop.f32.mrb[0].mxu0
      %528 = vdwg.mxu0
      %529 = vmatprep.subr.bf16.mxu0 0
      %530 = vmatpush1.bf16.msra.mxu0 %v461
      %531 = vmatprep.subr.bf16.mxu0 0
      %532 = vmatpush1.bf16.msra.mxu0 %v462
      %533 = vmatprep.subr.bf16.mxu0 0
      %534 = vmatpush1.bf16.msra.mxu0 %v463
      %535 = vmatprep.subr.bf16.mxu0 0
      %536 = vmatpush1.bf16.msra.mxu0 %v464
      %537 = vmatprep.subr.bf16.mxu0 0
      %538 = vmatpush1.bf16.msra.mxu0 0
      %539 = vmatprep.subr.bf16.mxu0 0
      %540 = vmatpush1.bf16.msra.mxu0 0
      %541 = vmatprep.subr.bf16.mxu0 0
      %542 = vmatpush1.bf16.msra.mxu0 0
      %543 = vmatprep.subr.bf16.mxu0 0
      %544 = vmatpush1.bf16.msra.mxu0 0
      %545 = vmatprep.subr.bf16.mxu0 0
      %546 = vmatpush1.bf16.msra.mxu0 0
      %547 = vmatprep.subr.bf16.mxu0 0
      %548 = vmatpush1.bf16.msra.mxu0 0
      %549 = vmatprep.subr.bf16.mxu0 0
      %550 = vmatpush1.bf16.msra.mxu0 0
      %551 = vmatprep.subr.bf16.mxu0 0
      %552 = vmatpush1.bf16.msra.mxu0 0
      %553 = vmatprep.subr.bf16.mxu0 0
      %554 = vmatpush1.bf16.msra.mxu0 0
      %555 = vmatprep.subr.bf16.mxu0 0
      %556 = vmatpush1.bf16.msra.mxu0 0
      %557 = vmatprep.subr.bf16.mxu0 0
      %558 = vmatpush1.bf16.msra.mxu0 0
      %559 = vmatprep.subr.bf16.mxu0 0
      %560 = vmatpush1.bf16.msra.mxu0 0
      %561 = vmatprep.mubr.bf16.mxu0 0
      %562 = vmatmul.mubr.bf16.gmra.mrb[0].mxu0 %v487
      %v563 = vpop.f32.mrb[0].mxu0
      %v564 = vadd.f32 %v524, %v563
      %v565 = vpop.f32.mrb[0].mxu0
      %v566 = vpop.f32.mrb[0].mxu0
      %v567 = vpop.f32.mrb[0].mxu0
      %568 = vdwg.mxu0
      %v569 = vpack.c.b16 %v333, %v333
      %v570 = vpack.c.b16 %v334, %v334
      %v571 = vpack.c.b16 %v335, %v335
      %v614 = vunpack.c.l.b16 %v246
      %v615 = vunpack.c.l.b16 %v247
      %v616 = vunpack.c.l.b16 %v248
      %v617 = vunpack.c.l.b16 %v249
      %v618 = vunpack.c.l.b16 %v250
      %v619 = vunpack.c.l.b16 %v251
      %v620 = vunpack.c.l.b16 %v252
      %v621 = vunpack.c.l.b16 %v253
      %v622 = vunpack.c.l.b16 %v254
      %v623 = vunpack.c.l.b16 %v255
      %v624 = vunpack.c.l.b16 %v256
      %v625 = vunpack.c.l.b16 %v257
      %v626 = vunpack.c.l.b16 %v258
      %v627 = vunpack.c.l.b16 %v259
      %v628 = vunpack.c.l.b16 %v260
      %v629 = vunpack.c.l.b16 %v261
      %v630 = vunpack.c.l.b16 %v262
      %v631 = vunpack.c.l.b16 %v263
      %v632 = vunpack.c.l.b16 %v264
      %v633 = vunpack.c.l.b16 %v265
      %v634 = vunpack.c.l.b16 %v266
      %v635 = vunpack.c.l.b16 %v267
      %v636 = vunpack.c.l.b16 %v268
      %v637 = vunpack.c.l.b16 %v269
      %v638 = vunpack.c.l.b16 %v270
      %v639 = vunpack.c.l.b16 %v271
      %v640 = vunpack.c.l.b16 %v272
      %v641 = vunpack.c.l.b16 %v273
      %v642 = vunpack.c.l.b16 %v274
      %v643 = vunpack.c.l.b16 %v275
      %v644 = vunpack.c.l.b16 %v276
      %v645 = vunpack.c.l.b16 %v277
      %v646 = vunpack.c.l.b16 %v278
      %v647 = vunpack.c.l.b16 %v279
      %v648 = vunpack.c.l.b16 %v280
      %v649 = vunpack.c.l.b16 %v281
      %v650 = vunpack.c.l.b16 %v282
      %v651 = vunpack.c.l.b16 %v283
      %v652 = vunpack.c.l.b16 %v284
      %v653 = vunpack.c.l.b16 %v285
      %v654 = vpack.c.b16 %v615, %v614
      %v655 = vpack.c.b16 %v617, %v616
      %v656 = vpack.c.b16 %v619, %v618
      %v657 = vpack.c.b16 %v621, %v620
      %v658 = vpack.c.b16 %v623, %v622
      %v659 = vpack.c.b16 %v625, %v624
      %v660 = vpack.c.b16 %v627, %v626
      %v661 = vpack.c.b16 %v629, %v628
      %v662 = vpack.c.b16 %v631, %v630
      %v663 = vpack.c.b16 %v633, %v632
      %v664 = vpack.c.b16 %v635, %v634
      %v665 = vpack.c.b16 %v637, %v636
      %v666 = vpack.c.b16 %v639, %v638
      %v667 = vpack.c.b16 %v641, %v640
      %v668 = vpack.c.b16 %v643, %v642
      %v669 = vpack.c.b16 %v645, %v644
      %v670 = vpack.c.b16 %v647, %v646
      %v671 = vpack.c.b16 %v649, %v648
      %v672 = vpack.c.b16 %v651, %v650
      %v673 = vpack.c.b16 %v653, %v652
      %v695 = vsel %vm485, %v571, 0
      %697 = vmatprep.subr.bf16.mxu0 0
      %698 = vmatpush1.bf16.msra.mxu0 %v654
      %699 = vmatprep.subr.bf16.mxu0 0
      %700 = vmatpush1.bf16.msra.mxu0 %v655
      %701 = vmatprep.subr.bf16.mxu0 0
      %702 = vmatpush1.bf16.msra.mxu0 %v656
      %703 = vmatprep.subr.bf16.mxu0 0
      %704 = vmatpush1.bf16.msra.mxu0 %v657
      %705 = vmatprep.subr.bf16.mxu0 0
      %706 = vmatpush1.bf16.msra.mxu0 %v658
      %707 = vmatprep.subr.bf16.mxu0 0
      %708 = vmatpush1.bf16.msra.mxu0 %v659
      %709 = vmatprep.subr.bf16.mxu0 0
      %710 = vmatpush1.bf16.msra.mxu0 %v660
      %711 = vmatprep.subr.bf16.mxu0 0
      %712 = vmatpush1.bf16.msra.mxu0 %v661
      %713 = vmatprep.subr.bf16.mxu0 0
      %714 = vmatpush1.bf16.msra.mxu0 %v662
      %715 = vmatprep.subr.bf16.mxu0 0
      %716 = vmatpush1.bf16.msra.mxu0 %v663
      %717 = vmatprep.subr.bf16.mxu0 0
      %718 = vmatpush1.bf16.msra.mxu0 %v664
      %719 = vmatprep.subr.bf16.mxu0 0
      %720 = vmatpush1.bf16.msra.mxu0 %v665
      %721 = vmatprep.subr.bf16.mxu0 0
      %722 = vmatpush1.bf16.msra.mxu0 %v666
      %723 = vmatprep.subr.bf16.mxu0 0
      %724 = vmatpush1.bf16.msra.mxu0 %v667
      %725 = vmatprep.subr.bf16.mxu0 0
      %726 = vmatpush1.bf16.msra.mxu0 %v668
      %727 = vmatprep.subr.bf16.mxu0 0
      %728 = vmatpush1.bf16.msra.mxu0 %v669
      %729 = vmatprep.mubr.bf16.mxu0 %v570
      %730 = vmatmul.mubr.bf16.gmra.mrb[0].mxu0 %v569
      %v731 = vpop.f32.mrb[0].mxu0
      %v732 = vadd.f32 %v564, %v731
      %v733 = vpop.f32.mrb[0].mxu0
      %v734 = vpop.f32.mrb[0].mxu0
      %v735 = vpop.f32.mrb[0].mxu0
      %736 = vdwg.mxu0
      %737 = vmatprep.subr.bf16.mxu0 0
      %738 = vmatpush1.bf16.msra.mxu0 %v670
      %739 = vmatprep.subr.bf16.mxu0 0
      %740 = vmatpush1.bf16.msra.mxu0 %v671
      %741 = vmatprep.subr.bf16.mxu0 0
      %742 = vmatpush1.bf16.msra.mxu0 %v672
      %743 = vmatprep.subr.bf16.mxu0 0
      %744 = vmatpush1.bf16.msra.mxu0 %v673
      %745 = vmatprep.subr.bf16.mxu0 0
      %746 = vmatpush1.bf16.msra.mxu0 0
      %747 = vmatprep.subr.bf16.mxu0 0
      %748 = vmatpush1.bf16.msra.mxu0 0
      %749 = vmatprep.subr.bf16.mxu0 0
      %750 = vmatpush1.bf16.msra.mxu0 0
      %751 = vmatprep.subr.bf16.mxu0 0
      %752 = vmatpush1.bf16.msra.mxu0 0
      %753 = vmatprep.subr.bf16.mxu0 0
      %754 = vmatpush1.bf16.msra.mxu0 0
      %755 = vmatprep.subr.bf16.mxu0 0
      %756 = vmatpush1.bf16.msra.mxu0 0
      %757 = vmatprep.subr.bf16.mxu0 0
      %758 = vmatpush1.bf16.msra.mxu0 0
      %759 = vmatprep.subr.bf16.mxu0 0
      %760 = vmatpush1.bf16.msra.mxu0 0
      %761 = vmatprep.subr.bf16.mxu0 0
      %762 = vmatpush1.bf16.msra.mxu0 0
      %763 = vmatprep.subr.bf16.mxu0 0
      %764 = vmatpush1.bf16.msra.mxu0 0
      %765 = vmatprep.subr.bf16.mxu0 0
      %766 = vmatpush1.bf16.msra.mxu0 0
      %767 = vmatprep.subr.bf16.mxu0 0
      %768 = vmatpush1.bf16.msra.mxu0 0
      %769 = vmatprep.mubr.bf16.mxu0 0
      %770 = vmatmul.mubr.bf16.gmra.mrb[0].mxu0 %v695
      %v771 = vpop.f32.mrb[0].mxu0
      %v772 = vadd.f32 %v732, %v771
      %v773 = vpop.f32.mrb[0].mxu0
      %v774 = vpop.f32.mrb[0].mxu0
      %v775 = vpop.f32.mrb[0].mxu0
      %776 = vdwg.mxu0
      %v777 = vld [vmem:[%s233] sm:$0xee]
      %v778 = vld [vmem:[%s233 + $0x8] sm:$0xe]
      %s779 = scalar_lea.vmem %s2, 320
      %v780 = vld [vmem:[%s779] sm:$0xf]
      %v781 = vld [vmem:[%s779 + $0x4] sm:$0xf]
      %v782 = vld [vmem:[%s779 + $0x8] sm:$0xf]
      %v783 = vld [vmem:[%s779 + $0xc] sm:$0xf]
      %v784 = vld [vmem:[%s779 + $0x10] sm:$0xf]
      %v785 = vld [vmem:[%s779 + $0x14] sm:$0xf]
      %v786 = vld [vmem:[%s779 + $0x18] sm:$0xf]
      %v787 = vld [vmem:[%s779 + $0x1c] sm:$0xf]
      %v788 = vld [vmem:[%s779 + $0x20] sm:$0xf]
      %v789 = vld [vmem:[%s779 + $0x24] sm:$0xf]
      %v790 = vld [vmem:[%s779 + $0x28] sm:$0xf]
      %v791 = vld [vmem:[%s779 + $0x2c] sm:$0xf]
      %v792 = vld [vmem:[%s779 + $0x30] sm:$0xf]
      %v793 = vld [vmem:[%s779 + $0x34] sm:$0xf]
      %v794 = vld [vmem:[%s779 + $0x38] sm:$0xf]
      %v795 = vld [vmem:[%s779 + $0x3c] sm:$0xf]
      %v796 = vld [vmem:[%s779 + $0x40] sm:$0xf]
      %v797 = vld [vmem:[%s779 + $0x44] sm:$0xf]
      %v798 = vld [vmem:[%s779 + $0x48] sm:$0xf]
      %v799 = vld [vmem:[%s779 + $0x4c] sm:$0xf]
      %v800 = vld [vmem:[%s779 + $0x50] sm:$0xf]
      %v801 = vld [vmem:[%s779 + $0x54] sm:$0xf]
      %v802 = vld [vmem:[%s779 + $0x58] sm:$0xf]
      %v803 = vld [vmem:[%s779 + $0x5c] sm:$0xf]
      %v804 = vld [vmem:[%s779 + $0x60] sm:$0xf]
      %v805 = vld [vmem:[%s779 + $0x64] sm:$0xf]
      %v806 = vld [vmem:[%s779 + $0x68] sm:$0xf]
      %v807 = vld [vmem:[%s779 + $0x6c] sm:$0xf]
      %v808 = vld [vmem:[%s779 + $0x70] sm:$0xf]
      %v809 = vld [vmem:[%s779 + $0x74] sm:$0xf]
      %v810 = vld [vmem:[%s779 + $0x78] sm:$0xf]
      %v811 = vld [vmem:[%s779 + $0x7c] sm:$0xf]
      %v812 = vld [vmem:[%s779 + $0x80] sm:$0xf]
      %v813 = vld [vmem:[%s779 + $0x84] sm:$0xf]
      %v814 = vld [vmem:[%s779 + $0x88] sm:$0xf]
      %v815 = vld [vmem:[%s779 + $0x8c] sm:$0xf]
      %v816 = vld [vmem:[%s779 + $0x90] sm:$0xf]
      %v817 = vld [vmem:[%s779 + $0x94] sm:$0xf]
      %v818 = vld [vmem:[%s779 + $0x98] sm:$0xf]
      %v819 = vld [vmem:[%s779 + $0x9c] sm:$0xf]
      %v822 = vunpack.c.l.b16 %v777
      %v823 = vunpack.c.h.b16 %v777
      %v824 = vunpack.c.l.b16 %v778
      %v825 = vpack.c.b16 %v336, %v822
      %v826 = vpack.c.b16 %v337, %v823
      %v827 = vpack.c.b16 %v338, %v824
      %v828 = vrot.slane %v825, 1
      %v829 = vrot.slane %v826, 1
      %v830 = vrot.slane %v827, 1
      %v873 = vunpack.c.l.b16 %v780
      %v874 = vunpack.c.l.b16 %v781
      %v875 = vunpack.c.l.b16 %v782
      %v876 = vunpack.c.l.b16 %v783
      %v877 = vunpack.c.l.b16 %v784
      %v878 = vunpack.c.l.b16 %v785
      %v879 = vunpack.c.l.b16 %v786
      %v880 = vunpack.c.l.b16 %v787
      %v881 = vunpack.c.l.b16 %v788
      %v882 = vunpack.c.l.b16 %v789
      %v883 = vunpack.c.l.b16 %v790
      %v884 = vunpack.c.l.b16 %v791
      %v885 = vunpack.c.l.b16 %v792
      %v886 = vunpack.c.l.b16 %v793
      %v887 = vunpack.c.l.b16 %v794
      %v888 = vunpack.c.l.b16 %v795
      %v889 = vunpack.c.l.b16 %v796
      %v890 = vunpack.c.l.b16 %v797
      %v891 = vunpack.c.l.b16 %v798
      %v892 = vunpack.c.l.b16 %v799
      %v893 = vunpack.c.l.b16 %v800
      %v894 = vunpack.c.l.b16 %v801
      %v895 = vunpack.c.l.b16 %v802
      %v896 = vunpack.c.l.b16 %v803
      %v897 = vunpack.c.l.b16 %v804
      %v898 = vunpack.c.l.b16 %v805
      %v899 = vunpack.c.l.b16 %v806
      %v900 = vunpack.c.l.b16 %v807
      %v901 = vunpack.c.l.b16 %v808
      %v902 = vunpack.c.l.b16 %v809
      %v903 = vunpack.c.l.b16 %v810
      %v904 = vunpack.c.l.b16 %v811
      %v905 = vunpack.c.l.b16 %v812
      %v906 = vunpack.c.l.b16 %v813
      %v907 = vunpack.c.l.b16 %v814
      %v908 = vunpack.c.l.b16 %v815
      %v909 = vunpack.c.l.b16 %v816
      %v910 = vunpack.c.l.b16 %v817
      %v911 = vunpack.c.l.b16 %v818
      %v912 = vunpack.c.l.b16 %v819
      %v913 = vpack.c.b16 %v874, %v873
      %v914 = vpack.c.b16 %v876, %v875
      %v915 = vpack.c.b16 %v878, %v877
      %v916 = vpack.c.b16 %v880, %v879
      %v917 = vpack.c.b16 %v882, %v881
      %v918 = vpack.c.b16 %v884, %v883
      %v919 = vpack.c.b16 %v886, %v885
      %v920 = vpack.c.b16 %v888, %v887
      %v921 = vpack.c.b16 %v890, %v889
      %v922 = vpack.c.b16 %v892, %v891
      %v923 = vpack.c.b16 %v894, %v893
      %v924 = vpack.c.b16 %v896, %v895
      %v925 = vpack.c.b16 %v898, %v897
      %v926 = vpack.c.b16 %v900, %v899
      %v927 = vpack.c.b16 %v902, %v901
      %v928 = vpack.c.b16 %v904, %v903
      %v929 = vpack.c.b16 %v906, %v905
      %v930 = vpack.c.b16 %v908, %v907
      %v931 = vpack.c.b16 %v910, %v909
      %v932 = vpack.c.b16 %v912, %v911
      %v954 = vsel %vm485, %v830, 0
      %956 = vmatprep.subr.bf16.mxu0 0
      %957 = vmatpush1.bf16.msra.mxu0 %v913
      %958 = vmatprep.subr.bf16.mxu0 0
      %959 = vmatpush1.bf16.msra.mxu0 %v914
      %960 = vmatprep.subr.bf16.mxu0 0
      %961 = vmatpush1.bf16.msra.mxu0 %v915
      %962 = vmatprep.subr.bf16.mxu0 0
      %963 = vmatpush1.bf16.msra.mxu0 %v916
      %964 = vmatprep.subr.bf16.mxu0 0
      %965 = vmatpush1.bf16.msra.mxu0 %v917
      %966 = vmatprep.subr.bf16.mxu0 0
      %967 = vmatpush1.bf16.msra.mxu0 %v918
      %968 = vmatprep.subr.bf16.mxu0 0
      %969 = vmatpush1.bf16.msra.mxu0 %v919
      %970 = vmatprep.subr.bf16.mxu0 0
      %971 = vmatpush1.bf16.msra.mxu0 %v920
      %972 = vmatprep.subr.bf16.mxu0 0
      %973 = vmatpush1.bf16.msra.mxu0 %v921
      %974 = vmatprep.subr.bf16.mxu0 0
      %975 = vmatpush1.bf16.msra.mxu0 %v922
      %976 = vmatprep.subr.bf16.mxu0 0
      %977 = vmatpush1.bf16.msra.mxu0 %v923
      %978 = vmatprep.subr.bf16.mxu0 0
      %979 = vmatpush1.bf16.msra.mxu0 %v924
      %980 = vmatprep.subr.bf16.mxu0 0
      %981 = vmatpush1.bf16.msra.mxu0 %v925
      %982 = vmatprep.subr.bf16.mxu0 0
      %983 = vmatpush1.bf16.msra.mxu0 %v926
      %984 = vmatprep.subr.bf16.mxu0 0
      %985 = vmatpush1.bf16.msra.mxu0 %v927
      %986 = vmatprep.subr.bf16.mxu0 0
      %987 = vmatpush1.bf16.msra.mxu0 %v928
      %988 = vmatprep.mubr.bf16.mxu0 %v829
      %989 = vmatmul.mubr.bf16.gmra.mrb[0].mxu0 %v828
      %v990 = vpop.f32.mrb[0].mxu0
      %v991 = vadd.f32 0.0, %v990
      %v992 = vpop.f32.mrb[0].mxu0
      %v993 = vpop.f32.mrb[0].mxu0
      %v994 = vpop.f32.mrb[0].mxu0
      %995 = vdwg.mxu0
      %996 = vmatprep.subr.bf16.mxu0 0
      %997 = vmatpush1.bf16.msra.mxu0 %v929
      %998 = vmatprep.subr.bf16.mxu0 0
      %999 = vmatpush1.bf16.msra.mxu0 %v930
      %1000 = vmatprep.subr.bf16.mxu0 0
      %1001 = vmatpush1.bf16.msra.mxu0 %v931
      %1002 = vmatprep.subr.bf16.mxu0 0
      %1003 = vmatpush1.bf16.msra.mxu0 %v932
      %1004 = vmatprep.subr.bf16.mxu0 0
      %1005 = vmatpush1.bf16.msra.mxu0 0
      %1006 = vmatprep.subr.bf16.mxu0 0
      %1007 = vmatpush1.bf16.msra.mxu0 0
      %1008 = vmatprep.subr.bf16.mxu0 0
      %1009 = vmatpush1.bf16.msra.mxu0 0
      %1010 = vmatprep.subr.bf16.mxu0 0
      %1011 = vmatpush1.bf16.msra.mxu0 0
      %1012 = vmatprep.subr.bf16.mxu0 0
      %1013 = vmatpush1.bf16.msra.mxu0 0
      %1014 = vmatprep.subr.bf16.mxu0 0
      %1015 = vmatpush1.bf16.msra.mxu0 0
      %1016 = vmatprep.subr.bf16.mxu0 0
      %1017 = vmatpush1.bf16.msra.mxu0 0
      %1018 = vmatprep.subr.bf16.mxu0 0
      %1019 = vmatpush1.bf16.msra.mxu0 0
      %1020 = vmatprep.subr.bf16.mxu0 0
      %1021 = vmatpush1.bf16.msra.mxu0 0
      %1022 = vmatprep.subr.bf16.mxu0 0
      %1023 = vmatpush1.bf16.msra.mxu0 0
      %1024 = vmatprep.subr.bf16.mxu0 0
      %1025 = vmatpush1.bf16.msra.mxu0 0
      %1026 = vmatprep.subr.bf16.mxu0 0
      %1027 = vmatpush1.bf16.msra.mxu0 0
      %1028 = vmatprep.mubr.bf16.mxu0 0
      %1029 = vmatmul.mubr.bf16.gmra.mrb[0].mxu0 %v954
      %v1030 = vpop.f32.mrb[0].mxu0
      %v1031 = vadd.f32 %v991, %v1030
      %v1032 = vpop.f32.mrb[0].mxu0
      %v1033 = vpop.f32.mrb[0].mxu0
      %v1034 = vpop.f32.mrb[0].mxu0
      %1035 = vdwg.mxu0
      %v1036 = vadd.f32 %v772, %v1031
      %v1037 = vld [vmem:[%s238] sm:$0xff]
      %v1038 = vld [vmem:[%s3] sm:$0xf]
      %v1039 = vld [vmem:[%s3 + $0x4] sm:$0xf]
      %v1040 = vld [vmem:[%s3 + $0x8] sm:$0xf]
      %v1041 = vld [vmem:[%s3 + $0xc] sm:$0xf]
      %v1042 = vld [vmem:[%s3 + $0x10] sm:$0xf]
      %v1043 = vld [vmem:[%s3 + $0x14] sm:$0xf]
      %v1044 = vld [vmem:[%s3 + $0x18] sm:$0xf]
      %v1045 = vld [vmem:[%s3 + $0x1c] sm:$0xf]
      %v1046 = vld [vmem:[%s3 + $0x20] sm:$0xf]
      %v1047 = vld [vmem:[%s3 + $0x24] sm:$0xf]
      %v1048 = vld [vmem:[%s3 + $0x28] sm:$0xf]
      %v1049 = vld [vmem:[%s3 + $0x2c] sm:$0xf]
      %v1050 = vld [vmem:[%s3 + $0x30] sm:$0xf]
      %v1051 = vld [vmem:[%s3 + $0x34] sm:$0xf]
      %v1052 = vld [vmem:[%s3 + $0x38] sm:$0xf]
      %v1053 = vld [vmem:[%s3 + $0x3c] sm:$0xf]
      %v1054 = vld [vmem:[%s3 + $0x40] sm:$0xf]
      %v1055 = vld [vmem:[%s3 + $0x44] sm:$0xf]
      %v1056 = vld [vmem:[%s3 + $0x48] sm:$0xf]
      %v1057 = vld [vmem:[%s3 + $0x4c] sm:$0xf]
      %v1059 = vunpack.c.l.b16 %v1037
      %v1060 = vunpack.c.h.b16 %v1037
      %v1061 = vpack.c.b16 %v1059, %v1059
      %v1062 = vpack.c.b16 %v1060, %v1060
      %v1084 = vunpack.c.l.b16 %v1038
      %v1085 = vunpack.c.l.b16 %v1039
      %v1086 = vunpack.c.l.b16 %v1040
      %v1087 = vunpack.c.l.b16 %v1041
      %v1088 = vunpack.c.l.b16 %v1042
      %v1089 = vunpack.c.l.b16 %v1043
      %v1090 = vunpack.c.l.b16 %v1044
      %v1091 = vunpack.c.l.b16 %v1045
      %v1092 = vunpack.c.l.b16 %v1046
      %v1093 = vunpack.c.l.b16 %v1047
      %v1094 = vunpack.c.l.b16 %v1048
      %v1095 = vunpack.c.l.b16 %v1049
      %v1096 = vunpack.c.l.b16 %v1050
      %v1097 = vunpack.c.l.b16 %v1051
      %v1098 = vunpack.c.l.b16 %v1052
      %v1099 = vunpack.c.l.b16 %v1053
      %v1100 = vunpack.c.l.b16 %v1054
      %v1101 = vunpack.c.l.b16 %v1055
      %v1102 = vunpack.c.l.b16 %v1056
      %v1103 = vunpack.c.l.b16 %v1057
      %v1104 = vpack.c.b16 %v1085, %v1084
      %v1105 = vpack.c.b16 %v1087, %v1086
      %v1106 = vpack.c.b16 %v1089, %v1088
      %v1107 = vpack.c.b16 %v1091, %v1090
      %v1108 = vpack.c.b16 %v1093, %v1092
      %v1109 = vpack.c.b16 %v1095, %v1094
      %v1110 = vpack.c.b16 %v1097, %v1096
      %v1111 = vpack.c.b16 %v1099, %v1098
      %v1112 = vpack.c.b16 %v1101, %v1100
      %v1113 = vpack.c.b16 %v1103, %v1102
      %vm1124 = vcmask 261120
      %v1126 = vsel %vm1124, %v1062, 0
      %1128 = vmatprep.subr.bf16.mxu0 0
      %1129 = vmatpush1.bf16.msra.mxu0 %v1104
      %1130 = vmatprep.subr.bf16.mxu0 0
      %1131 = vmatpush1.bf16.msra.mxu0 %v1105
      %1132 = vmatprep.subr.bf16.mxu0 0
      %1133 = vmatpush1.bf16.msra.mxu0 %v1106
      %1134 = vmatprep.subr.bf16.mxu0 0
      %1135 = vmatpush1.bf16.msra.mxu0 %v1107
      %1136 = vmatprep.subr.bf16.mxu0 0
      %1137 = vmatpush1.bf16.msra.mxu0 %v1108
      %1138 = vmatprep.subr.bf16.mxu0 0
      %1139 = vmatpush1.bf16.msra.mxu0 %v1109
      %1140 = vmatprep.subr.bf16.mxu0 0
      %1141 = vmatpush1.bf16.msra.mxu0 %v1110
      %1142 = vmatprep.subr.bf16.mxu0 0
      %1143 = vmatpush1.bf16.msra.mxu0 %v1111
      %1144 = vmatprep.subr.bf16.mxu0 0
      %1145 = vmatpush1.bf16.msra.mxu0 %v1112
      %1146 = vmatprep.subr.bf16.mxu0 0
      %1147 = vmatpush1.bf16.msra.mxu0 %v1113
      %1148 = vmatprep.subr.bf16.mxu0 0
      %1149 = vmatpush1.bf16.msra.mxu0 0
      %1150 = vmatprep.subr.bf16.mxu0 0
      %1151 = vmatpush1.bf16.msra.mxu0 0
      %1152 = vmatprep.subr.bf16.mxu0 0
      %1153 = vmatpush1.bf16.msra.mxu0 0
      %1154 = vmatprep.subr.bf16.mxu0 0
      %1155 = vmatpush1.bf16.msra.mxu0 0
      %1156 = vmatprep.subr.bf16.mxu0 0
      %1157 = vmatpush1.bf16.msra.mxu0 0
      %1158 = vmatprep.subr.bf16.mxu0 0
      %1159 = vmatpush1.bf16.msra.mxu0 0
      %1160 = vmatprep.mubr.bf16.mxu0 %v1126
      %1161 = vmatmul.mubr.bf16.gmra.mrb[0].mxu0 %v1061
      %v1162 = vpop.f32.mrb[0].mxu0
      %v1163 = vadd.f32 0.0, %v1162
      %v1164 = vpop.f32.mrb[0].mxu0
      %v1165 = vpop.f32.mrb[0].mxu0
      %v1166 = vpop.f32.mrb[0].mxu0
      %1167 = vdwg.mxu0
      %v1168 = vadd.f32 %v1036, %v1163
      %v1169 = vld [vmem:[%s238] sm:$0xff]
      %v1170 = vld [vmem:[%s238 + $0x8] sm:$0x11]
      %s1171 = scalar_lea.vmem %s3, 80
      %v1172 = vld [vmem:[%s1171] sm:$0xf]
      %v1173 = vld [vmem:[%s1171 + $0x4] sm:$0xf]
      %v1174 = vld [vmem:[%s1171 + $0x8] sm:$0xf]
      %v1175 = vld [vmem:[%s1171 + $0xc] sm:$0xf]
      %v1176 = vld [vmem:[%s1171 + $0x10] sm:$0xf]
      %v1177 = vld [vmem:[%s1171 + $0x14] sm:$0xf]
      %v1178 = vld [vmem:[%s1171 + $0x18] sm:$0xf]
      %v1179 = vld [vmem:[%s1171 + $0x1c] sm:$0xf]
      %v1180 = vld [vmem:[%s1171 + $0x20] sm:$0xf]
      %v1181 = vld [vmem:[%s1171 + $0x24] sm:$0xf]
      %v1182 = vld [vmem:[%s1171 + $0x28] sm:$0xf]
      %v1183 = vld [vmem:[%s1171 + $0x2c] sm:$0xf]
      %v1184 = vld [vmem:[%s1171 + $0x30] sm:$0xf]
      %v1185 = vld [vmem:[%s1171 + $0x34] sm:$0xf]
      %v1186 = vld [vmem:[%s1171 + $0x38] sm:$0xf]
      %v1187 = vld [vmem:[%s1171 + $0x3c] sm:$0xf]
      %v1188 = vld [vmem:[%s1171 + $0x40] sm:$0xf]
      %v1189 = vld [vmem:[%s1171 + $0x44] sm:$0xf]
      %v1190 = vld [vmem:[%s1171 + $0x48] sm:$0xf]
      %v1191 = vld [vmem:[%s1171 + $0x4c] sm:$0xf]
      %v1194 = vunpack.c.l.b16 %v1169
      %v1195 = vunpack.c.h.b16 %v1169
      %v1196 = vunpack.c.l.b16 %v1170
      %v1197 = vunpack.c.h.b16 %v1170
      %v1198 = vpack.c.b16 %v1196, %v1194
      %v1199 = vpack.c.b16 %v1197, %v1195
      %v1201 = vshrl.u32 %v1198, 16
      %v1203 = vshll.u32 %v1198, 16
      %v1205 = vrot.slane %v1203, 1
      %v1206 = vor.u32 %v1201, %v1205
      %v1208 = vshrl.u32 %v1199, 16
      %v1210 = vshll.u32 %v1199, 16
      %v1212 = vrot.slane %v1210, 1
      %v1213 = vor.u32 %v1208, %v1212
      %v1235 = vunpack.c.l.b16 %v1172
      %v1236 = vunpack.c.l.b16 %v1173
      %v1237 = vunpack.c.l.b16 %v1174
      %v1238 = vunpack.c.l.b16 %v1175
      %v1239 = vunpack.c.l.b16 %v1176
      %v1240 = vunpack.c.l.b16 %v1177
      %v1241 = vunpack.c.l.b16 %v1178
      %v1242 = vunpack.c.l.b16 %v1179
      %v1243 = vunpack.c.l.b16 %v1180
      %v1244 = vunpack.c.l.b16 %v1181
      %v1245 = vunpack.c.l.b16 %v1182
      %v1246 = vunpack.c.l.b16 %v1183
      %v1247 = vunpack.c.l.b16 %v1184
      %v1248 = vunpack.c.l.b16 %v1185
      %v1249 = vunpack.c.l.b16 %v1186
      %v1250 = vunpack.c.l.b16 %v1187
      %v1251 = vunpack.c.l.b16 %v1188
      %v1252 = vunpack.c.l.b16 %v1189
      %v1253 = vunpack.c.l.b16 %v1190
      %v1254 = vunpack.c.l.b16 %v1191
      %v1255 = vpack.c.b16 %v1236, %v1235
      %v1256 = vpack.c.b16 %v1238, %v1237
      %v1257 = vpack.c.b16 %v1240, %v1239
      %v1258 = vpack.c.b16 %v1242, %v1241
      %v1259 = vpack.c.b16 %v1244, %v1243
      %v1260 = vpack.c.b16 %v1246, %v1245
      %v1261 = vpack.c.b16 %v1248, %v1247
      %v1262 = vpack.c.b16 %v1250, %v1249
      %v1263 = vpack.c.b16 %v1252, %v1251
      %v1264 = vpack.c.b16 %v1254, %v1253
      %v1276 = vsel %vm1124, %v1213, 0
      %1278 = vmatprep.subr.bf16.mxu0 0
      %1279 = vmatpush1.bf16.msra.mxu0 %v1255
      %1280 = vmatprep.subr.bf16.mxu0 0
      %1281 = vmatpush1.bf16.msra.mxu0 %v1256
      %1282 = vmatprep.subr.bf16.mxu0 0
      %1283 = vmatpush1.bf16.msra.mxu0 %v1257
      %1284 = vmatprep.subr.bf16.mxu0 0
      %1285 = vmatpush1.bf16.msra.mxu0 %v1258
      %1286 = vmatprep.subr.bf16.mxu0 0
      %1287 = vmatpush1.bf16.msra.mxu0 %v1259
      %1288 = vmatprep.subr.bf16.mxu0 0
      %1289 = vmatpush1.bf16.msra.mxu0 %v1260
      %1290 = vmatprep.subr.bf16.mxu0 0
      %1291 = vmatpush1.bf16.msra.mxu0 %v1261
      %1292 = vmatprep.subr.bf16.mxu0 0
      %1293 = vmatpush1.bf16.msra.mxu0 %v1262
      %1294 = vmatprep.subr.bf16.mxu0 0
      %1295 = vmatpush1.bf16.msra.mxu0 %v1263
      %1296 = vmatprep.subr.bf16.mxu0 0
      %1297 = vmatpush1.bf16.msra.mxu0 %v1264
      %1298 = vmatprep.subr.bf16.mxu0 0
      %1299 = vmatpush1.bf16.msra.mxu0 0
      %1300 = vmatprep.subr.bf16.mxu0 0
      %1301 = vmatpush1.bf16.msra.mxu0 0
      %1302 = vmatprep.subr.bf16.mxu0 0
      %1303 = vmatpush1.bf16.msra.mxu0 0
      %1304 = vmatprep.subr.bf16.mxu0 0
      %1305 = vmatpush1.bf16.msra.mxu0 0
      %1306 = vmatprep.subr.bf16.mxu0 0
      %1307 = vmatpush1.bf16.msra.mxu0 0
      %1308 = vmatprep.subr.bf16.mxu0 0
      %1309 = vmatpush1.bf16.msra.mxu0 0
      %1310 = vmatprep.mubr.bf16.mxu0 %v1276
      %1311 = vmatmul.mubr.bf16.gmra.mrb[0].mxu0 %v1206
      %v1312 = vpop.f32.mrb[0].mxu0
      %v1313 = vadd.f32 0.0, %v1312
      %v1314 = vpop.f32.mrb[0].mxu0
      %v1315 = vpop.f32.mrb[0].mxu0
      %v1316 = vpop.f32.mrb[0].mxu0
      %1317 = vdwg.mxu0
      %v1318 = vadd.f32 %v1168, %v1313
      %v1319 = vld [vmem:[%s238] sm:$0xee]
      %s1320 = scalar_lea.vmem %s3, 160
      %v1321 = vld [vmem:[%s1320] sm:$0xf]
      %v1322 = vld [vmem:[%s1320 + $0x4] sm:$0xf]
      %v1323 = vld [vmem:[%s1320 + $0x8] sm:$0xf]
      %v1324 = vld [vmem:[%s1320 + $0xc] sm:$0xf]
      %v1325 = vld [vmem:[%s1320 + $0x10] sm:$0xf]
      %v1326 = vld [vmem:[%s1320 + $0x14] sm:$0xf]
      %v1327 = vld [vmem:[%s1320 + $0x18] sm:$0xf]
      %v1328 = vld [vmem:[%s1320 + $0x1c] sm:$0xf]
      %v1329 = vld [vmem:[%s1320 + $0x20] sm:$0xf]
      %v1330 = vld [vmem:[%s1320 + $0x24] sm:$0xf]
      %v1331 = vld [vmem:[%s1320 + $0x28] sm:$0xf]
      %v1332 = vld [vmem:[%s1320 + $0x2c] sm:$0xf]
      %v1333 = vld [vmem:[%s1320 + $0x30] sm:$0xf]
      %v1334 = vld [vmem:[%s1320 + $0x34] sm:$0xf]
      %v1335 = vld [vmem:[%s1320 + $0x38] sm:$0xf]
      %v1336 = vld [vmem:[%s1320 + $0x3c] sm:$0xf]
      %v1337 = vld [vmem:[%s1320 + $0x40] sm:$0xf]
      %v1338 = vld [vmem:[%s1320 + $0x44] sm:$0xf]
      %v1339 = vld [vmem:[%s1320 + $0x48] sm:$0xf]
      %v1340 = vld [vmem:[%s1320 + $0x4c] sm:$0xf]
      %v1342 = vunpack.c.l.b16 %v1319
      %v1343 = vunpack.c.h.b16 %v1319
      %v1344 = vpack.c.b16 %v1196, %v1342
      %v1345 = vpack.c.b16 %v1197, %v1343
      %v1346 = vrot.slane %v1344, 1
      %v1347 = vrot.slane %v1345, 1
      %v1369 = vunpack.c.l.b16 %v1321
      %v1370 = vunpack.c.l.b16 %v1322
      %v1371 = vunpack.c.l.b16 %v1323
      %v1372 = vunpack.c.l.b16 %v1324
      %v1373 = vunpack.c.l.b16 %v1325
      %v1374 = vunpack.c.l.b16 %v1326
      %v1375 = vunpack.c.l.b16 %v1327
      %v1376 = vunpack.c.l.b16 %v1328
      %v1377 = vunpack.c.l.b16 %v1329
      %v1378 = vunpack.c.l.b16 %v1330
      %v1379 = vunpack.c.l.b16 %v1331
      %v1380 = vunpack.c.l.b16 %v1332
      %v1381 = vunpack.c.l.b16 %v1333
      %v1382 = vunpack.c.l.b16 %v1334
      %v1383 = vunpack.c.l.b16 %v1335
      %v1384 = vunpack.c.l.b16 %v1336
      %v1385 = vunpack.c.l.b16 %v1337
      %v1386 = vunpack.c.l.b16 %v1338
      %v1387 = vunpack.c.l.b16 %v1339
      %v1388 = vunpack.c.l.b16 %v1340
      %v1389 = vpack.c.b16 %v1370, %v1369
      %v1390 = vpack.c.b16 %v1372, %v1371
      %v1391 = vpack.c.b16 %v1374, %v1373
      %v1392 = vpack.c.b16 %v1376, %v1375
      %v1393 = vpack.c.b16 %v1378, %v1377
      %v1394 = vpack.c.b16 %v1380, %v1379
      %v1395 = vpack.c.b16 %v1382, %v1381
      %v1396 = vpack.c.b16 %v1384, %v1383
      %v1397 = vpack.c.b16 %v1386, %v1385
      %v1398 = vpack.c.b16 %v1388, %v1387
      %v1410 = vsel %vm1124, %v1347, 0
      %1412 = vmatprep.subr.bf16.mxu0 0
      %1413 = vmatpush1.bf16.msra.mxu0 %v1389
      %1414 = vmatprep.subr.bf16.mxu0 0
      %1415 = vmatpush1.bf16.msra.mxu0 %v1390
      %1416 = vmatprep.subr.bf16.mxu0 0
      %1417 = vmatpush1.bf16.msra.mxu0 %v1391
      %1418 = vmatprep.subr.bf16.mxu0 0
      %1419 = vmatpush1.bf16.msra.mxu0 %v1392
      %1420 = vmatprep.subr.bf16.mxu0 0
      %1421 = vmatpush1.bf16.msra.mxu0 %v1393
      %1422 = vmatprep.subr.bf16.mxu0 0
      %1423 = vmatpush1.bf16.msra.mxu0 %v1394
      %1424 = vmatprep.subr.bf16.mxu0 0
      %1425 = vmatpush1.bf16.msra.mxu0 %v1395
      %1426 = vmatprep.subr.bf16.mxu0 0
      %1427 = vmatpush1.bf16.msra.mxu0 %v1396
      %1428 = vmatprep.subr.bf16.mxu0 0
      %1429 = vmatpush1.bf16.msra.mxu0 %v1397
      %1430 = vmatprep.subr.bf16.mxu0 0
      %1431 = vmatpush1.bf16.msra.mxu0 %v1398
      %1432 = vmatprep.subr.bf16.mxu0 0
      %1433 = vmatpush1.bf16.msra.mxu0 0
      %1434 = vmatprep.subr.bf16.mxu0 0
      %1435 = vmatpush1.bf16.msra.mxu0 0
      %1436 = vmatprep.subr.bf16.mxu0 0
      %1437 = vmatpush1.bf16.msra.mxu0 0
      %1438 = vmatprep.subr.bf16.mxu0 0
      %1439 = vmatpush1.bf16.msra.mxu0 0
      %1440 = vmatprep.subr.bf16.mxu0 0
      %1441 = vmatpush1.bf16.msra.mxu0 0
      %1442 = vmatprep.subr.bf16.mxu0 0
      %1443 = vmatpush1.bf16.msra.mxu0 0
      %1444 = vmatprep.mubr.bf16.mxu0 %v1410
      %1445 = vmatmul.mubr.bf16.gmra.mrb[0].mxu0 %v1346
      %v1446 = vpop.f32.mrb[0].mxu0
      %v1447 = vadd.f32 0.0, %v1446
      %v1448 = vpop.f32.mrb[0].mxu0
      %v1449 = vpop.f32.mrb[0].mxu0
      %v1450 = vpop.f32.mrb[0].mxu0
      %1451 = vdwg.mxu0
      %v1452 = vadd.f32 %v1318, %v1447
      %v1453 = vld [vmem:[%s4] sm:$0x1]
      %v1455 = vlaneseq
      %v1456 = vshrl.u32 %v1455, 7
      %v1457 = vsub.s32 0, %v1456
      %v1458 = vrot.slane %v1453, %v1457
      %v1460 = vadd.f32 %v1452, %v1458
      %1461 = vst [vmem:[%s242] sm:$0xff] %v1460
      %p1462 = scmp.lt.s32.totalorder %s16, 1
      %s1463 = scalar_select %p1462, %s16, 1
      %s1464 = smul.addr %s1463, 8
      %s1465 = scalar_lea.vmem %s5, %s1464
      // Predicated region
      $region41: #{unet_forward.17} parent=39 // pred_check
        %p1466 = pneg %p149
      $region42: #{unet_forward.17} parent=39 // pred_check_branch
        %1468 = sbr.rel (%p1466) target = $region44
      $region43: #{unet_forward.17} parent=39 // pred_region
        _
      $region44: #{unet_forward.17} parent=39 // pred_fallthru
        _
    $region40: #{unet_forward.17} parent=5 // pred_fallthru
      _
    %p1469 = scmp.le.s32.totalorder 2, %s11
    // Predicated region
    $region45: #{unet_forward.17} parent=5 // pred_check
      %p1470 = pneg %p1469
    $region46: #{unet_forward.17} parent=5 // pred_check_branch
      %1472 = sbr.rel (%p1470) target = $region48
    $region47: #{unet_forward.17} parent=5 // pred_region
      %s1473 = ssub.s32 %s11, 2
      // Predicated region
      $region49: #{unet_forward.17} parent=47 // pred_check
        %p1474 = pneg %p155
      $region50: #{unet_forward.17} parent=47 // pred_check_branch
        %1476 = sbr.rel (%p1474) target = $region52
      $region51: #{unet_forward.17} parent=47 // pred_region
        %p1477 = scmp.lt.s32.totalorder %s17, 1
        %s1478 = scalar_select %p1477, %s17, 1
        %s1479 = smul.addr %s1478, 8
        %s1480 = scalar_lea.vmem %s5, %s1479
      $region52: #{unet_forward.17} parent=47 // pred_fallthru
        _
    $region48: #{unet_forward.17} parent=5 // pred_fallthru
      _
  $region6: #{unet_forward.17} parent=0 // loop_footer
    %s15 = sadd.s32 1, %s11
  $region7: #{unet_forward.17} parent=0 // loop_footer_branch
    %10 = sbr.rel target = $region3
  $region8: #{unet_forward.17} parent=0 // loop_exit
    _

// kernel: tile.93
$region0: #{tile.93}
  #allocation0 [shape = 's32[1]{0}', space=sflag, size = 0x4, scoped, tag = 'scoped memory for tile.93']
  %s0 = inlined_call_operand.vmem [shape: f32[16], index: 0, kind: input, shape index: {}]
  %s1 = inlined_call_operand.vmem [shape: f32[16,16], index: 1, kind: output, shape index: {}]
  // Predicated region
  $region2: #{tile.93} parent=0 // pred_check
    _
  $region3: #{tile.93} parent=0 // pred_check_branch
    %3 = sbr.rel (0) target = $region5
  $region4: #{tile.93} parent=0 // pred_region
    _
  $region5: #{tile.93} parent=0 // pred_fallthru
    _
  %v4 = vld [vmem:[%s0] ss:$0 sm:$0xff]
  %5 = vst [vmem:[%s1] sm:$0xff] %v4
  %s6 = scalar_lea.vmem %s1, 8
  %7 = vst [vmem:[%s6] sm:$0xff] %v4

// kernel: tile.94
$region0: #{tile.94}
  %s0 = inlined_call_operand.vmem [shape: f32[16,16], index: 0, kind: input, shape index: {}]
  %s1 = inlined_call_operand.vmem [shape: f32[1,256], index: 1, kind: output, shape index: {}]
  $region1: #{tile.94} parent=0
    #allocation0 [shape = 'u8[8192]{0}', space=vmem, size = 0x2000, scoped, tag = 'scoped mem for output reshape']
    %s2 = smov 3
    %v3 = vld [vmem:[%s0] ss:$8 sm:%s2]
    %vm4 = vcmask 130048
    %5 = vst.msk [vmem:[#allocation0] ss:$8 sm:$0x3] %vm4, %v3
    %s6 = scalar_lea.vmem %s0, 7
    %s7 = smov 3
    %v8 = vld [vmem:[%s6] ss:$8 sm:%s7]
    %9 = vrot.lane.b32.xlu0 %v8, 112
    %v10 = vpop.permute.xlu0 %9
    %vm11 = vcmask 1048448
    %12 = vst.msk [vmem:[#allocation0] ss:$8 sm:$0x3] %vm11, %v10
    %s13 = scalar_lea.vmem %s0, 6
    %s14 = smov 3
    %v15 = vld [vmem:[%s13] ss:$8 sm:%s14]
    %16 = vrot.lane.b32.xlu0 %v15, 96
    %v17 = vpop.permute.xlu0 %16
    %vm18 = vcmask 917248
    %19 = vst.msk [vmem:[#allocation0] ss:$8 sm:$0x3] %vm18, %v17
    %s20 = scalar_lea.vmem %s0, 5
    %s21 = smov 3
    %v22 = vld [vmem:[%s20] ss:$8 sm:%s21]
    %23 = vrot.lane.b32.xlu0 %v22, 80
    %v24 = vpop.permute.xlu0 %23
    %vm25 = vcmask 786048
    %26 = vst.msk [vmem:[#allocation0] ss:$8 sm:$0x3] %vm25, %v24
    %s27 = scalar_lea.vmem %s0, 4
    %s28 = smov 3
    %v29 = vld [vmem:[%s27] ss:$8 sm:%s28]
    %30 = vrot.lane.b32.xlu0 %v29, 64
    %v31 = vpop.permute.xlu0 %30
    %vm32 = vcmask 654848
    %33 = vst.msk [vmem:[#allocation0] ss:$8 sm:$0x3] %vm32, %v31
    %s34 = scalar_lea.vmem %s0, 3
    %s35 = smov 3
    %v36 = vld [vmem:[%s34] ss:$8 sm:%s35]
    %37 = vrot.lane.b32.xlu0 %v36, 48
    %v38 = vpop.permute.xlu0 %37
    %vm39 = vcmask 523648
    %40 = vst.msk [vmem:[#allocation0] ss:$8 sm:$0x3] %vm39, %v38
    %s41 = scalar_lea.vmem %s0, 2
    %s42 = smov 3
    %v43 = vld [vmem:[%s41] ss:$8 sm:%s42]
    %44 = vrot.lane.b32.xlu0 %v43, 32
    %v45 = vpop.permute.xlu0 %44
    %vm46 = vcmask 392448
    %47 = vst.msk [vmem:[#allocation0] ss:$8 sm:$0x3] %vm46, %v45
    %s48 = scalar_lea.vmem %s0, 1
    %s49 = smov 3
    %v50 = vld [vmem:[%s48] ss:$8 sm:%s49]
    %51 = vrot.lane.b32.xlu0 %v50, 16
    %v52 = vpop.permute.xlu0 %51
    %vm53 = vcmask 261248
    %54 = vst.msk [vmem:[#allocation0] ss:$8 sm:$0x3] %vm53, %v52
    %s56 = sshllo.u32 0, 1
    %v58 = vld [vmem:[#allocation0] sm:%s56]
    %s59 = sshllo.u32 0, 1
    %60 = vst [vmem:[%s1] sm:%s59] %v58
    %s61 = scalar_lea.vmem [#allocation0], 8
    %v62 = vld [vmem:[%s61] sm:%s56]
    %s63 = sshllo.u32 0, 1
    %s64 = scalar_lea.vmem %s1, 1
    %65 = vst [vmem:[%s64] sm:%s63] %v62

// kernel: unet_forward.18
$region0: #{unet_forward.18}
  #allocation0 [shape = 'u32[]', space=smem, size = 0x4, offset = 0x4, fixed_abs, tag = 'smem constant byte address 0x4 - core index']
  #allocation1 [shape = 'u32[144,128]{1,0:T(1,128)}', space=vmem, size = 0x12000, scoped, tag = 'internal scratch']
  %s0 = inlined_call_operand.vmem [shape: bf16[2,18,288], index: 0, kind: input, shape index: {}]
  %s1 = inlined_call_operand.vmem [shape: bf16[3,288,256], index: 1, kind: input, shape index: {}]
  %s2 = inlined_call_operand.vmem [shape: f32[1,256], index: 2, kind: input, shape index: {}]
  %s3 = inlined_call_operand.vmem [shape: f32[2,16,256], index: 3, kind: output, shape index: {}]
  %s4 = sld [smem:[#allocation0]]
  $region45: #{unet_forward.18} parent=0
    _
  %s6 = ssub.s32 1, %s4
  %s7 = scalar_select 0, %s6, %s4
  loop: start=0, step=1, limit=4
  $region2: #{unet_forward.18} parent=0 // loop_pre_header
    _
  $region3: #{unet_forward.18} parent=0 // loop_header
    %s9 = sphi 0, %s13
    %p10 = scmp.ge.s32.totalorder %s9, 4
    %s19 = sphi 0, %s21
    %s22 = sphi 0, %s19
    %s23 = sphi 0, %s22
    %s39 = sphi 0, %s23
    %s43 = sphi 0, %s43
    %s45 = sphi 0, %s43
    %s46 = sphi 0, %s45
    %s60 = sphi 0, %s46
    %s64 = sphi 0, %s64
    %s66 = sphi 0, %s64
    %s67 = sphi 0, %s66
    %s81 = sphi 0, %s67
    %s87 = sphi 0, %s89
    %s90 = sphi 0, %s87
    %s91 = sphi 0, %s90
    %s107 = sphi 0, %s91
  $region4: #{unet_forward.18} parent=0 // loop_header_branch
    %12 = sbr.rel (%p10) target = $region8
  $region5: #{unet_forward.18} parent=0 // loop_body
    %s14 = ssub.s32 %s9, 1
    %s15 = ssub.s32 %s9, 2
    %s16 = sadd.s32 %s9, 1
    %s17 = ssub.s32 %s9, %s16
    %p18 = scmp.eq.s32.totalorder %s17, 0
    %s20 = sadd.s32 %s19, 1
    %s21 = scalar_select %p18, %s19, %s20
    %p24 = pneg %p18
    %p25 = scmp.eq.s32.totalorder %s9, 1
    %p26 = por %p24, %p25
    %p27 = scmp.ne.s32.totalorder %s19, %s22
    %p28 = scmp.eq.s32.totalorder %s9, 0
    %p29 = por %p27, %p28
    %p30 = scmp.ne.s32.totalorder %s19, %s22
    %p31 = scmp.eq.s32.totalorder %s14, 1
    %p32 = por %p30, %p31
    %p33 = scmp.ne.s32.totalorder %s22, %s23
    %p34 = scmp.eq.s32.totalorder %s14, 0
    %p35 = por %p33, %p34
    %p36 = scmp.ne.s32.totalorder %s22, %s23
    %p37 = scmp.eq.s32.totalorder %s15, 1
    %p38 = por %p36, %p37
    %p40 = scmp.ne.s32.totalorder %s23, %s39
    %p41 = scmp.eq.s32.totalorder %s15, 0
    %p42 = por %p40, %p41
    %s44 = sadd.s32 %s43, 1
    %p47 = scmp.eq.s32.totalorder %s9, 1
    %p48 = scmp.ne.s32.totalorder %s43, %s45
    %p49 = scmp.eq.s32.totalorder %s9, 0
    %p50 = por %p48, %p49
    %p51 = scmp.ne.s32.totalorder %s43, %s45
    %p52 = scmp.eq.s32.totalorder %s14, 1
    %p53 = por %p51, %p52
    %p54 = scmp.ne.s32.totalorder %s45, %s46
    %p55 = scmp.eq.s32.totalorder %s14, 0
    %p56 = por %p54, %p55
    %p57 = scmp.ne.s32.totalorder %s45, %s46
    %p58 = scmp.eq.s32.totalorder %s15, 1
    %p59 = por %p57, %p58
    %p61 = scmp.ne.s32.totalorder %s46, %s60
    %p62 = scmp.eq.s32.totalorder %s15, 0
    %p63 = por %p61, %p62
    %s65 = sadd.s32 %s64, 1
    %p68 = scmp.eq.s32.totalorder %s9, 1
    %p69 = scmp.ne.s32.totalorder %s64, %s66
    %p70 = scmp.eq.s32.totalorder %s9, 0
    %p71 = por %p69, %p70
    %p72 = scmp.ne.s32.totalorder %s64, %s66
    %p73 = scmp.eq.s32.totalorder %s14, 1
    %p74 = por %p72, %p73
    %p75 = scmp.ne.s32.totalorder %s66, %s67
    %p76 = scmp.eq.s32.totalorder %s14, 0
    %p77 = por %p75, %p76
    %p78 = scmp.ne.s32.totalorder %s66, %s67
    %p79 = scmp.eq.s32.totalorder %s15, 1
    %p80 = por %p78, %p79
    %p82 = scmp.ne.s32.totalorder %s67, %s81
    %p83 = scmp.eq.s32.totalorder %s15, 0
    %p84 = por %p82, %p83
    %s85 = ssub.s32 %s9, %s16
    %p86 = scmp.eq.s32.totalorder %s85, 0
    %s88 = sadd.s32 %s87, 1
    %s89 = scalar_select %p86, %s87, %s88
    %p92 = pneg %p86
    %p93 = scmp.eq.s32.totalorder %s9, 1
    %p94 = por %p92, %p93
    %p95 = scmp.ne.s32.totalorder %s87, %s90
    %p96 = scmp.eq.s32.totalorder %s9, 0
    %p97 = por %p95, %p96
    %p98 = scmp.ne.s32.totalorder %s87, %s90
    %p99 = scmp.eq.s32.totalorder %s14, 1
    %p100 = por %p98, %p99
    %p101 = scmp.ne.s32.totalorder %s90, %s91
    %p102 = scmp.eq.s32.totalorder %s14, 0
    %p103 = por %p101, %p102
    %p104 = scmp.ne.s32.totalorder %s90, %s91
    %p105 = scmp.eq.s32.totalorder %s15, 1
    %p106 = por %p104, %p105
    %p108 = scmp.ne.s32.totalorder %s91, %s107
    %p109 = scmp.eq.s32.totalorder %s15, 0
    %p110 = por %p108, %p109
    %p111 = scmp.le.s32.totalorder 1, %s9
    %p112 = scmp.lt.s32.totalorder %s9, 3
    %p113 = pnand %p111, %p112
    %p114 = pneg %p113
    // Predicated region
    $region9: #{unet_forward.18} parent=5 // pred_check
      _
    $region10: #{unet_forward.18} parent=5 // pred_check_branch
      %116 = sbr.rel (%p113) target = $region12
    $region11: #{unet_forward.18} parent=5 // pred_region
      %s117 = ssub.s32 %s9, 1
      // Predicated region
      $region13: #{unet_forward.18} parent=11 // pred_check
        %p118 = pneg %p56
      $region14: #{unet_forward.18} parent=11 // pred_check_branch
        %120 = sbr.rel (%p118) target = $region16
      $region15: #{unet_forward.18} parent=11 // pred_region
        _
      $region16: #{unet_forward.18} parent=11 // pred_fallthru
        _
      // Predicated region
      $region17: #{unet_forward.18} parent=11 // pred_check
        %p121 = pneg %p77
      $region18: #{unet_forward.18} parent=11 // pred_check_branch
        %123 = sbr.rel (%p121) target = $region20
      $region19: #{unet_forward.18} parent=11 // pred_region
        _
      $region20: #{unet_forward.18} parent=11 // pred_fallthru
        _
    $region12: #{unet_forward.18} parent=5 // pred_fallthru
      _
    %p124 = scmp.lt.s32.totalorder %s9, 2
    // Predicated region
    $region21: #{unet_forward.18} parent=5 // pred_check
      %p125 = pneg %p124
    $region22: #{unet_forward.18} parent=5 // pred_check_branch
      %127 = sbr.rel (%p125) target = $region24
    $region23: #{unet_forward.18} parent=5 // pred_region
      // Predicated region
      $region25: #{unet_forward.18} parent=23 // pred_check
        %p128 = pneg %p29
      $region26: #{unet_forward.18} parent=23 // pred_check_branch
        %130 = sbr.rel (%p128) target = $region28
      $region27: #{unet_forward.18} parent=23 // pred_region
        %p131 = scmp.lt.s32.totalorder %s9, 1
        %s132 = scalar_select %p131, %s9, 1
        %s133 = smul.addr %s132, 9
        %s134 = smul.addr %s133, 4
        %s135 = scalar_lea.vmem %s0, %s134
      $region28: #{unet_forward.18} parent=23 // pred_fallthru
        _
    $region24: #{unet_forward.18} parent=5 // pred_fallthru
      _
    %p136 = scmp.le.s32.totalorder 1, %s9
    %p137 = scmp.lt.s32.totalorder %s9, 3
    %p138 = pnand %p136, %p137
    %p139 = pneg %p138
    // Predicated region
    $region29: #{unet_forward.18} parent=5 // pred_check
      _
    $region30: #{unet_forward.18} parent=5 // pred_check_branch
      %141 = sbr.rel (%p138) target = $region32
    $region31: #{unet_forward.18} parent=5 // pred_region
      %s142 = ssub.s32 %s9, 1
      %p143 = scmp.lt.s32.totalorder %s14, 1
      %s144 = scalar_select %p143, %s14, 1
      %s145 = smul.addr %s144, 9
      %s146 = smul.addr %s145, 4
      %s147 = scalar_lea.vmem %s0, %s146
      %p148 = pneg %p35
      %p149 = pneg %p32
      %p150 = pneg %p56
      %p151 = pneg %p53
      %p152 = pneg %p77
      %p153 = pneg %p74
      %p154 = pneg %p103
      %p155 = pneg %p100
      %p156 = scmp.lt.s32.totalorder %s14, 1
      %s157 = scalar_select %p156, %s14, 1
      %s158 = smul.addr %s157, 4
      %s159 = smul.addr %s158, 8
      %s160 = scalar_lea.vmem %s3, %s159
      %p161 = scmp.lt.s32.totalorder %s14, 1
      %s162 = scalar_select %p161, %s14, 1
      %s163 = smul.addr %s162, 9
      %s164 = smul.addr %s163, 4
      %s165 = scalar_lea.vmem %s0, %s164
      %p166 = scmp.lt.s32.totalorder %s14, 1
      %s167 = scalar_select %p166, %s14, 1
      %s168 = smul.addr %s167, 4
      %s169 = smul.addr %s168, 8
      %s170 = scalar_lea.vmem %s3, %s169
      %v172 = vld [vmem:[%s165] sm:$0xff]
      %v173 = vld [vmem:[%s165 + $0x8] sm:$0xf]
      %v174 = vld [vmem:[%s165 + $0xc] sm:$0xff]
      %v175 = vld [vmem:[%s165 + $0x14] sm:$0xf]
      %v176 = vld [vmem:[%s1] sm:$0xff]
      %v177 = vld [vmem:[%s1 + $0x8] sm:$0xff]
      %v178 = vld [vmem:[%s1 + $0x10] sm:$0xff]
      %v179 = vld [vmem:[%s1 + $0x18] sm:$0xff]
      %v180 = vld [vmem:[%s1 + $0x20] sm:$0xff]
      %v181 = vld [vmem:[%s1 + $0x28] sm:$0xff]
      %v182 = vld [vmem:[%s1 + $0x30] sm:$0xff]
      %v183 = vld [vmem:[%s1 + $0x38] sm:$0xff]
      %v184 = vld [vmem:[%s1 + $0x40] sm:$0xff]
      %v185 = vld [vmem:[%s1 + $0x48] sm:$0xff]
      %v186 = vld [vmem:[%s1 + $0x50] sm:$0xff]
      %v187 = vld [vmem:[%s1 + $0x58] sm:$0xff]
      %v188 = vld [vmem:[%s1 + $0x60] sm:$0xff]
      %v189 = vld [vmem:[%s1 + $0x68] sm:$0xff]
      %v190 = vld [vmem:[%s1 + $0x70] sm:$0xff]
      %v191 = vld [vmem:[%s1 + $0x78] sm:$0xff]
      %v192 = vld [vmem:[%s1 + $0x80] sm:$0xff]
      %v193 = vld [vmem:[%s1 + $0x88] sm:$0xff]
      %v194 = vld [vmem:[%s1 + $0x90] sm:$0xff]
      %v195 = vld [vmem:[%s1 + $0x98] sm:$0xff]
      %v196 = vld [vmem:[%s1 + $0xa0] sm:$0xff]
      %v197 = vld [vmem:[%s1 + $0xa8] sm:$0xff]
      %v198 = vld [vmem:[%s1 + $0xb0] sm:$0xff]
      %v199 = vld [vmem:[%s1 + $0xb8] sm:$0xff]
      %v200 = vld [vmem:[%s1 + $0xc0] sm:$0xff]
      %v201 = vld [vmem:[%s1 + $0xc8] sm:$0xff]
      %v202 = vld [vmem:[%s1 + $0xd0] sm:$0xff]
      %v203 = vld [vmem:[%s1 + $0xd8] sm:$0xff]
      %v204 = vld [vmem:[%s1 + $0xe0] sm:$0xff]
      %v205 = vld [vmem:[%s1 + $0xe8] sm:$0xff]
      %v206 = vld [vmem:[%s1 + $0xf0] sm:$0xff]
      %v207 = vld [vmem:[%s1 + $0xf8] sm:$0xff]
      %v208 = vld [vmem:[%s1 + $0x100] sm:$0xff]
      %v209 = vld [vmem:[%s1 + $0x108] sm:$0xff]
      %v210 = vld [vmem:[%s1 + $0x110] sm:$0xff]
      %v211 = vld [vmem:[%s1 + $0x118] sm:$0xff]
      %v212 = vld [vmem:[%s165 + $0x18] sm:$0x11]
      %v213 = vld [vmem:[%s165 + $0x20] sm:$0x1]
      %s214 = scalar_lea.vmem %s1, 288
      %v215 = vld [vmem:[%s214] sm:$0xff]
      %v216 = vld [vmem:[%s214 + $0x8] sm:$0xff]
      %v217 = vld [vmem:[%s214 + $0x10] sm:$0xff]
      %v218 = vld [vmem:[%s214 + $0x18] sm:$0xff]
      %v219 = vld [vmem:[%s214 + $0x20] sm:$0xff]
      %v220 = vld [vmem:[%s214 + $0x28] sm:$0xff]
      %v221 = vld [vmem:[%s214 + $0x30] sm:$0xff]
      %v222 = vld [vmem:[%s214 + $0x38] sm:$0xff]
      %v223 = vld [vmem:[%s214 + $0x40] sm:$0xff]
      %v224 = vld [vmem:[%s214 + $0x48] sm:$0xff]
      %v225 = vld [vmem:[%s214 + $0x50] sm:$0xff]
      %v226 = vld [vmem:[%s214 + $0x58] sm:$0xff]
      %v227 = vld [vmem:[%s214 + $0x60] sm:$0xff]
      %v228 = vld [vmem:[%s214 + $0x68] sm:$0xff]
      %v229 = vld [vmem:[%s214 + $0x70] sm:$0xff]
      %v230 = vld [vmem:[%s214 + $0x78] sm:$0xff]
      %v231 = vld [vmem:[%s214 + $0x80] sm:$0xff]
      %v232 = vld [vmem:[%s214 + $0x88] sm:$0xff]
      %v233 = vld [vmem:[%s214 + $0x90] sm:$0xff]
      %v234 = vld [vmem:[%s214 + $0x98] sm:$0xff]
      %v235 = vld [vmem:[%s214 + $0xa0] sm:$0xff]
      %v236 = vld [vmem:[%s214 + $0xa8] sm:$0xff]
      %v237 = vld [vmem:[%s214 + $0xb0] sm:$0xff]
      %v238 = vld [vmem:[%s214 + $0xb8] sm:$0xff]
      %v239 = vld [vmem:[%s214 + $0xc0] sm:$0xff]
      %v240 = vld [vmem:[%s214 + $0xc8] sm:$0xff]
      %v241 = vld [vmem:[%s214 + $0xd0] sm:$0xff]
      %v242 = vld [vmem:[%s214 + $0xd8] sm:$0xff]
      %v243 = vld [vmem:[%s214 + $0xe0] sm:$0xff]
      %v244 = vld [vmem:[%s214 + $0xe8] sm:$0xff]
      %v245 = vld [vmem:[%s214 + $0xf0] sm:$0xff]
      %v246 = vld [vmem:[%s214 + $0xf8] sm:$0xff]
      %v247 = vld [vmem:[%s214 + $0x100] sm:$0xff]
      %v248 = vld [vmem:[%s214 + $0x108] sm:$0xff]
      %v249 = vld [vmem:[%s214 + $0x110] sm:$0xff]
      %v250 = vld [vmem:[%s214 + $0x118] sm:$0xff]
      %v257 = vunpack.c.l.b16 %v172
      %v258 = vunpack.c.h.b16 %v172
      %v259 = vunpack.c.l.b16 %v173
      %v260 = vunpack.c.l.b16 %v174
      %v261 = vunpack.c.h.b16 %v174
      %v262 = vunpack.c.l.b16 %v175
      %v263 = vunpack.c.l.b16 %v212
      %v264 = vunpack.c.h.b16 %v212
      %v265 = vunpack.c.l.b16 %v213
      %v266 = vpack.c.b16 %v260, %v257
      %v267 = vpack.c.b16 %v261, %v258
      %v268 = vpack.c.b16 %v262, %v259
      %v269 = vpack.c.b16 %v263, %v263
      %v270 = vpack.c.b16 %v264, %v264
      %v271 = vpack.c.b16 %v265, %v265
      %vm272 = vsmask.f32 7424
      %v274 = vshrl.u32 %v266, 16
      %v276 = vshll.u32 %v266, 16
      %v278 = vrot.slane %v276, 1
      %v279 = vor.u32 %v274, %v278
      %v281 = vshll.u32 %v269, 16
      %v283 = vrot.slane %v281, 1
      %v284 = vsel %vm272, %v279, %v283
      %v286 = vshrl.u32 %v267, 16
      %v288 = vshll.u32 %v267, 16
      %v290 = vrot.slane %v288, 1
      %v291 = vor.u32 %v286, %v290
      %v293 = vshll.u32 %v270, 16
      %v295 = vrot.slane %v293, 1
      %v296 = vsel %vm272, %v291, %v295
      %v298 = vshrl.u32 %v268, 16
      %v300 = vshll.u32 %v268, 16
      %v302 = vrot.slane %v300, 1
      %v303 = vor.u32 %v298, %v302
      %v305 = vshll.u32 %v271, 16
      %v307 = vrot.slane %v305, 1
      %v308 = vsel %vm272, %v303, %v307
      %v347 = vunpack.c.l.b16 %v215
      %v348 = vunpack.c.h.b16 %v215
      %v349 = vunpack.c.l.b16 %v216
      %v350 = vunpack.c.h.b16 %v216
      %v351 = vunpack.c.l.b16 %v217
      %v352 = vunpack.c.h.b16 %v217
      %v353 = vunpack.c.l.b16 %v218
      %v354 = vunpack.c.h.b16 %v218
      %v355 = vunpack.c.l.b16 %v219
      %v356 = vunpack.c.h.b16 %v219
      %v357 = vunpack.c.l.b16 %v220
      %v358 = vunpack.c.h.b16 %v220
      %v359 = vunpack.c.l.b16 %v221
      %v360 = vunpack.c.h.b16 %v221
      %v361 = vunpack.c.l.b16 %v222
      %v362 = vunpack.c.h.b16 %v222
      %v363 = vunpack.c.l.b16 %v223
      %v364 = vunpack.c.h.b16 %v223
      %v365 = vunpack.c.l.b16 %v224
      %v366 = vunpack.c.h.b16 %v224
      %v367 = vunpack.c.l.b16 %v225
      %v368 = vunpack.c.h.b16 %v225
      %v369 = vunpack.c.l.b16 %v226
      %v370 = vunpack.c.h.b16 %v226
      %v371 = vunpack.c.l.b16 %v227
      %v372 = vunpack.c.h.b16 %v227
      %v373 = vunpack.c.l.b16 %v228
      %v374 = vunpack.c.h.b16 %v228
      %v375 = vunpack.c.l.b16 %v229
      %v376 = vunpack.c.h.b16 %v229
      %v377 = vunpack.c.l.b16 %v230
      %v378 = vunpack.c.h.b16 %v230
      %v379 = vunpack.c.l.b16 %v231
      %v380 = vunpack.c.h.b16 %v231
      %v381 = vunpack.c.l.b16 %v232
      %v382 = vunpack.c.h.b16 %v232
      %v383 = vunpack.c.l.b16 %v233
      %v384 = vunpack.c.h.b16 %v233
      %v385 = vunpack.c.l.b16 %v234
      %v386 = vunpack.c.h.b16 %v234
      %v387 = vunpack.c.l.b16 %v235
      %v388 = vunpack.c.h.b16 %v235
      %v389 = vunpack.c.l.b16 %v236
      %v390 = vunpack.c.h.b16 %v236
      %v391 = vunpack.c.l.b16 %v237
      %v392 = vunpack.c.h.b16 %v237
      %v393 = vunpack.c.l.b16 %v238
      %v394 = vunpack.c.h.b16 %v238
      %v395 = vunpack.c.l.b16 %v239
      %v396 = vunpack.c.h.b16 %v239
      %v397 = vunpack.c.l.b16 %v240
      %v398 = vunpack.c.h.b16 %v240
      %v399 = vunpack.c.l.b16 %v241
      %v400 = vunpack.c.h.b16 %v241
      %v401 = vunpack.c.l.b16 %v242
      %v402 = vunpack.c.h.b16 %v242
      %v403 = vunpack.c.l.b16 %v243
      %v404 = vunpack.c.h.b16 %v243
      %v405 = vunpack.c.l.b16 %v244
      %v406 = vunpack.c.h.b16 %v244
      %v407 = vunpack.c.l.b16 %v245
      %v408 = vunpack.c.h.b16 %v245
      %v409 = vunpack.c.l.b16 %v246
      %v410 = vunpack.c.h.b16 %v246
      %v411 = vunpack.c.l.b16 %v247
      %v412 = vunpack.c.h.b16 %v247
      %v413 = vunpack.c.l.b16 %v248
      %v414 = vunpack.c.h.b16 %v248
      %v415 = vunpack.c.l.b16 %v249
      %v416 = vunpack.c.h.b16 %v249
      %v417 = vunpack.c.l.b16 %v250
      %v418 = vunpack.c.h.b16 %v250
      %v419 = vpack.c.b16 %v349, %v347
      %v420 = vpack.c.b16 %v350, %v348
      %v421 = vpack.c.b16 %v353, %v351
      %v422 = vpack.c.b16 %v354, %v352
      %v423 = vpack.c.b16 %v357, %v355
      %v424 = vpack.c.b16 %v358, %v356
      %v425 = vpack.c.b16 %v361, %v359
      %v426 = vpack.c.b16 %v362, %v360
      %v427 = vpack.c.b16 %v365, %v363
      %v428 = vpack.c.b16 %v366, %v364
      %v429 = vpack.c.b16 %v369, %v367
      %v430 = vpack.c.b16 %v370, %v368
      %v431 = vpack.c.b16 %v373, %v371
      %v432 = vpack.c.b16 %v374, %v372
      %v433 = vpack.c.b16 %v377, %v375
      %v434 = vpack.c.b16 %v378, %v376
      %v435 = vpack.c.b16 %v381, %v379
      %v436 = vpack.c.b16 %v382, %v380
      %v437 = vpack.c.b16 %v385, %v383
      %v438 = vpack.c.b16 %v386, %v384
      %v439 = vpack.c.b16 %v389, %v387
      %v440 = vpack.c.b16 %v390, %v388
      %v441 = vpack.c.b16 %v393, %v391
      %v442 = vpack.c.b16 %v394, %v392
      %v443 = vpack.c.b16 %v397, %v395
      %v444 = vpack.c.b16 %v398, %v396
      %v445 = vpack.c.b16 %v401, %v399
      %v446 = vpack.c.b16 %v402, %v400
      %v447 = vpack.c.b16 %v405, %v403
      %v448 = vpack.c.b16 %v406, %v404
      %v449 = vpack.c.b16 %v409, %v407
      %v450 = vpack.c.b16 %v410, %v408
      %v451 = vpack.c.b16 %v413, %v411
      %v452 = vpack.c.b16 %v414, %v412
      %v453 = vpack.c.b16 %v417, %v415
      %v454 = vpack.c.b16 %v418, %v416
      %vm491 = vcmask 261120
      %v493 = vsel %vm491, %v308, 0
      %495 = vmatprep.subr.bf16.mxu0 %v420
      %496 = vmatpush1.bf16.msra.mxu0 %v419
      %497 = vmatprep.subr.bf16.mxu0 %v422
      %498 = vmatpush1.bf16.msra.mxu0 %v421
      %499 = vmatprep.subr.bf16.mxu0 %v424
      %500 = vmatpush1.bf16.msra.mxu0 %v423
      %501 = vmatprep.subr.bf16.mxu0 %v426
      %502 = vmatpush1.bf16.msra.mxu0 %v425
      %503 = vmatprep.subr.bf16.mxu0 %v428
      %504 = vmatpush1.bf16.msra.mxu0 %v427
      %505 = vmatprep.subr.bf16.mxu0 %v430
      %506 = vmatpush1.bf16.msra.mxu0 %v429
      %507 = vmatprep.subr.bf16.mxu0 %v432
      %508 = vmatpush1.bf16.msra.mxu0 %v431
      %509 = vmatprep.subr.bf16.mxu0 %v434
      %510 = vmatpush1.bf16.msra.mxu0 %v433
      %511 = vmatprep.subr.bf16.mxu0 %v436
      %512 = vmatpush1.bf16.msra.mxu0 %v435
      %513 = vmatprep.subr.bf16.mxu0 %v438
      %514 = vmatpush1.bf16.msra.mxu0 %v437
      %515 = vmatprep.subr.bf16.mxu0 %v440
      %516 = vmatpush1.bf16.msra.mxu0 %v439
      %517 = vmatprep.subr.bf16.mxu0 %v442
      %518 = vmatpush1.bf16.msra.mxu0 %v441
      %519 = vmatprep.subr.bf16.mxu0 %v444
      %520 = vmatpush1.bf16.msra.mxu0 %v443
      %521 = vmatprep.subr.bf16.mxu0 %v446
      %522 = vmatpush1.bf16.msra.mxu0 %v445
      %523 = vmatprep.subr.bf16.mxu0 %v448
      %524 = vmatpush1.bf16.msra.mxu0 %v447
      %525 = vmatprep.subr.bf16.mxu0 %v450
      %526 = vmatpush1.bf16.msra.mxu0 %v449
      %527 = vmatprep.mubr.bf16.mxu0 %v296
      %528 = vmatmul.mubr.bf16.gmra.mrb[0].mxu0 %v284
      %v529 = vpop.f32.mrb[0].mxu0
      %v530 = vadd.f32 0.0, %v529
      %v531 = vpop.f32.mrb[0].mxu0
      %v532 = vadd.f32 0.0, %v531
      %v533 = vpop.f32.mrb[0].mxu0
      %v534 = vadd.f32 0.0, %v533
      %v535 = vpop.f32.mrb[0].mxu0
      %v536 = vadd.f32 0.0, %v535
      %537 = vdwg.mxu0
      %538 = vmatprep.subr.bf16.mxu0 %v452
      %539 = vmatpush1.bf16.msra.mxu0 %v451
      %540 = vmatprep.subr.bf16.mxu0 %v454
      %541 = vmatpush1.bf16.msra.mxu0 %v453
      %542 = vmatprep.subr.bf16.mxu0 0
      %543 = vmatpush1.bf16.msra.mxu0 0
      %544 = vmatprep.subr.bf16.mxu0 0
      %545 = vmatpush1.bf16.msra.mxu0 0
      %546 = vmatprep.subr.bf16.mxu0 0
      %547 = vmatpush1.bf16.msra.mxu0 0
      %548 = vmatprep.subr.bf16.mxu0 0
      %549 = vmatpush1.bf16.msra.mxu0 0
      %550 = vmatprep.subr.bf16.mxu0 0
      %551 = vmatpush1.bf16.msra.mxu0 0
      %552 = vmatprep.subr.bf16.mxu0 0
      %553 = vmatpush1.bf16.msra.mxu0 0
      %554 = vmatprep.subr.bf16.mxu0 0
      %555 = vmatpush1.bf16.msra.mxu0 0
      %556 = vmatprep.subr.bf16.mxu0 0
      %557 = vmatpush1.bf16.msra.mxu0 0
      %558 = vmatprep.subr.bf16.mxu0 0
      %559 = vmatpush1.bf16.msra.mxu0 0
      %560 = vmatprep.subr.bf16.mxu0 0
      %561 = vmatpush1.bf16.msra.mxu0 0
      %562 = vmatprep.subr.bf16.mxu0 0
      %563 = vmatpush1.bf16.msra.mxu0 0
      %564 = vmatprep.subr.bf16.mxu0 0
      %565 = vmatpush1.bf16.msra.mxu0 0
      %566 = vmatprep.subr.bf16.mxu0 0
      %567 = vmatpush1.bf16.msra.mxu0 0
      %568 = vmatprep.subr.bf16.mxu0 0
      %569 = vmatpush1.bf16.msra.mxu0 0
      %570 = vmatprep.mubr.bf16.mxu0 0
      %571 = vmatmul.mubr.bf16.gmra.mrb[0].mxu0 %v493
      %v572 = vpop.f32.mrb[0].mxu0
      %v573 = vadd.f32 %v530, %v572
      %v574 = vpop.f32.mrb[0].mxu0
      %v575 = vadd.f32 %v532, %v574
      %v576 = vpop.f32.mrb[0].mxu0
      %v577 = vadd.f32 %v534, %v576
      %v578 = vpop.f32.mrb[0].mxu0
      %v579 = vadd.f32 %v536, %v578
      %580 = vdwg.mxu0
      %v619 = vunpack.c.l.b16 %v176
      %v620 = vunpack.c.h.b16 %v176
      %v621 = vunpack.c.l.b16 %v177
      %v622 = vunpack.c.h.b16 %v177
      %v623 = vunpack.c.l.b16 %v178
      %v624 = vunpack.c.h.b16 %v178
      %v625 = vunpack.c.l.b16 %v179
      %v626 = vunpack.c.h.b16 %v179
      %v627 = vunpack.c.l.b16 %v180
      %v628 = vunpack.c.h.b16 %v180
      %v629 = vunpack.c.l.b16 %v181
      %v630 = vunpack.c.h.b16 %v181
      %v631 = vunpack.c.l.b16 %v182
      %v632 = vunpack.c.h.b16 %v182
      %v633 = vunpack.c.l.b16 %v183
      %v634 = vunpack.c.h.b16 %v183
      %v635 = vunpack.c.l.b16 %v184
      %v636 = vunpack.c.h.b16 %v184
      %v637 = vunpack.c.l.b16 %v185
      %v638 = vunpack.c.h.b16 %v185
      %v639 = vunpack.c.l.b16 %v186
      %v640 = vunpack.c.h.b16 %v186
      %v641 = vunpack.c.l.b16 %v187
      %v642 = vunpack.c.h.b16 %v187
      %v643 = vunpack.c.l.b16 %v188
      %v644 = vunpack.c.h.b16 %v188
      %v645 = vunpack.c.l.b16 %v189
      %v646 = vunpack.c.h.b16 %v189
      %v647 = vunpack.c.l.b16 %v190
      %v648 = vunpack.c.h.b16 %v190
      %v649 = vunpack.c.l.b16 %v191
      %v650 = vunpack.c.h.b16 %v191
      %v651 = vunpack.c.l.b16 %v192
      %v652 = vunpack.c.h.b16 %v192
      %v653 = vunpack.c.l.b16 %v193
      %v654 = vunpack.c.h.b16 %v193
      %v655 = vunpack.c.l.b16 %v194
      %v656 = vunpack.c.h.b16 %v194
      %v657 = vunpack.c.l.b16 %v195
      %v658 = vunpack.c.h.b16 %v195
      %v659 = vunpack.c.l.b16 %v196
      %v660 = vunpack.c.h.b16 %v196
      %v661 = vunpack.c.l.b16 %v197
      %v662 = vunpack.c.h.b16 %v197
      %v663 = vunpack.c.l.b16 %v198
      %v664 = vunpack.c.h.b16 %v198
      %v665 = vunpack.c.l.b16 %v199
      %v666 = vunpack.c.h.b16 %v199
      %v667 = vunpack.c.l.b16 %v200
      %v668 = vunpack.c.h.b16 %v200
      %v669 = vunpack.c.l.b16 %v201
      %v670 = vunpack.c.h.b16 %v201
      %v671 = vunpack.c.l.b16 %v202
      %v672 = vunpack.c.h.b16 %v202
      %v673 = vunpack.c.l.b16 %v203
      %v674 = vunpack.c.h.b16 %v203
      %v675 = vunpack.c.l.b16 %v204
      %v676 = vunpack.c.h.b16 %v204
      %v677 = vunpack.c.l.b16 %v205
      %v678 = vunpack.c.h.b16 %v205
      %v679 = vunpack.c.l.b16 %v206
      %v680 = vunpack.c.h.b16 %v206
      %v681 = vunpack.c.l.b16 %v207
      %v682 = vunpack.c.h.b16 %v207
      %v683 = vunpack.c.l.b16 %v208
      %v684 = vunpack.c.h.b16 %v208
      %v685 = vunpack.c.l.b16 %v209
      %v686 = vunpack.c.h.b16 %v209
      %v687 = vunpack.c.l.b16 %v210
      %v688 = vunpack.c.h.b16 %v210
      %v689 = vunpack.c.l.b16 %v211
      %v690 = vunpack.c.h.b16 %v211
      %v691 = vpack.c.b16 %v621, %v619
      %v692 = vpack.c.b16 %v622, %v620
      %v693 = vpack.c.b16 %v625, %v623
      %v694 = vpack.c.b16 %v626, %v624
      %v695 = vpack.c.b16 %v629, %v627
      %v696 = vpack.c.b16 %v630, %v628
      %v697 = vpack.c.b16 %v633, %v631
      %v698 = vpack.c.b16 %v634, %v632
      %v699 = vpack.c.b16 %v637, %v635
      %v700 = vpack.c.b16 %v638, %v636
      %v701 = vpack.c.b16 %v641, %v639
      %v702 = vpack.c.b16 %v642, %v640
      %v703 = vpack.c.b16 %v645, %v643
      %v704 = vpack.c.b16 %v646, %v644
      %v705 = vpack.c.b16 %v649, %v647
      %v706 = vpack.c.b16 %v650, %v648
      %v707 = vpack.c.b16 %v653, %v651
      %v708 = vpack.c.b16 %v654, %v652
      %v709 = vpack.c.b16 %v657, %v655
      %v710 = vpack.c.b16 %v658, %v656
      %v711 = vpack.c.b16 %v661, %v659
      %v712 = vpack.c.b16 %v662, %v660
      %v713 = vpack.c.b16 %v665, %v663
      %v714 = vpack.c.b16 %v666, %v664
      %v715 = vpack.c.b16 %v669, %v667
      %v716 = vpack.c.b16 %v670, %v668
      %v717 = vpack.c.b16 %v673, %v671
      %v718 = vpack.c.b16 %v674, %v672
      %v719 = vpack.c.b16 %v677, %v675
      %v720 = vpack.c.b16 %v678, %v676
      %v721 = vpack.c.b16 %v681, %v679
      %v722 = vpack.c.b16 %v682, %v680
      %v723 = vpack.c.b16 %v685, %v683
      %v724 = vpack.c.b16 %v686, %v684
      %v725 = vpack.c.b16 %v689, %v687
      %v726 = vpack.c.b16 %v690, %v688
      %v763 = vsel %vm491, %v268, 0
      %765 = vmatprep.subr.bf16.mxu0 %v692
      %766 = vmatpush1.bf16.msra.mxu0 %v691
      %767 = vmatprep.subr.bf16.mxu0 %v694
      %768 = vmatpush1.bf16.msra.mxu0 %v693
      %769 = vmatprep.subr.bf16.mxu0 %v696
      %770 = vmatpush1.bf16.msra.mxu0 %v695
      %771 = vmatprep.subr.bf16.mxu0 %v698
      %772 = vmatpush1.bf16.msra.mxu0 %v697
      %773 = vmatprep.subr.bf16.mxu0 %v700
      %774 = vmatpush1.bf16.msra.mxu0 %v699
      %775 = vmatprep.subr.bf16.mxu0 %v702
      %776 = vmatpush1.bf16.msra.mxu0 %v701
      %777 = vmatprep.subr.bf16.mxu0 %v704
      %778 = vmatpush1.bf16.msra.mxu0 %v703
      %779 = vmatprep.subr.bf16.mxu0 %v706
      %780 = vmatpush1.bf16.msra.mxu0 %v705
      %781 = vmatprep.subr.bf16.mxu0 %v708
      %782 = vmatpush1.bf16.msra.mxu0 %v707
      %783 = vmatprep.subr.bf16.mxu0 %v710
      %784 = vmatpush1.bf16.msra.mxu0 %v709
      %785 = vmatprep.subr.bf16.mxu0 %v712
      %786 = vmatpush1.bf16.msra.mxu0 %v711
      %787 = vmatprep.subr.bf16.mxu0 %v714
      %788 = vmatpush1.bf16.msra.mxu0 %v713
      %789 = vmatprep.subr.bf16.mxu0 %v716
      %790 = vmatpush1.bf16.msra.mxu0 %v715
      %791 = vmatprep.subr.bf16.mxu0 %v718
      %792 = vmatpush1.bf16.msra.mxu0 %v717
      %793 = vmatprep.subr.bf16.mxu0 %v720
      %794 = vmatpush1.bf16.msra.mxu0 %v719
      %795 = vmatprep.subr.bf16.mxu0 %v722
      %796 = vmatpush1.bf16.msra.mxu0 %v721
      %797 = vmatprep.mubr.bf16.mxu0 %v267
      %798 = vmatmul.mubr.bf16.gmra.mrb[0].mxu0 %v266
      %v799 = vpop.f32.mrb[0].mxu0
      %v800 = vadd.f32 %v573, %v799
      %v801 = vpop.f32.mrb[0].mxu0
      %v802 = vadd.f32 %v575, %v801
      %v803 = vpop.f32.mrb[0].mxu0
      %v804 = vadd.f32 %v577, %v803
      %v805 = vpop.f32.mrb[0].mxu0
      %v806 = vadd.f32 %v579, %v805
      %807 = vdwg.mxu0
      %808 = vmatprep.subr.bf16.mxu0 %v724
      %809 = vmatpush1.bf16.msra.mxu0 %v723
      %810 = vmatprep.subr.bf16.mxu0 %v726
      %811 = vmatpush1.bf16.msra.mxu0 %v725
      %812 = vmatprep.subr.bf16.mxu0 0
      %813 = vmatpush1.bf16.msra.mxu0 0
      %814 = vmatprep.subr.bf16.mxu0 0
      %815 = vmatpush1.bf16.msra.mxu0 0
      %816 = vmatprep.subr.bf16.mxu0 0
      %817 = vmatpush1.bf16.msra.mxu0 0
      %818 = vmatprep.subr.bf16.mxu0 0
      %819 = vmatpush1.bf16.msra.mxu0 0
      %820 = vmatprep.subr.bf16.mxu0 0
      %821 = vmatpush1.bf16.msra.mxu0 0
      %822 = vmatprep.subr.bf16.mxu0 0
      %823 = vmatpush1.bf16.msra.mxu0 0
      %824 = vmatprep.subr.bf16.mxu0 0
      %825 = vmatpush1.bf16.msra.mxu0 0
      %826 = vmatprep.subr.bf16.mxu0 0
      %827 = vmatpush1.bf16.msra.mxu0 0
      %828 = vmatprep.subr.bf16.mxu0 0
      %829 = vmatpush1.bf16.msra.mxu0 0
      %830 = vmatprep.subr.bf16.mxu0 0
      %831 = vmatpush1.bf16.msra.mxu0 0
      %832 = vmatprep.subr.bf16.mxu0 0
      %833 = vmatpush1.bf16.msra.mxu0 0
      %834 = vmatprep.subr.bf16.mxu0 0
      %835 = vmatpush1.bf16.msra.mxu0 0
      %836 = vmatprep.subr.bf16.mxu0 0
      %837 = vmatpush1.bf16.msra.mxu0 0
      %838 = vmatprep.subr.bf16.mxu0 0
      %839 = vmatpush1.bf16.msra.mxu0 0
      %840 = vmatprep.mubr.bf16.mxu0 0
      %841 = vmatmul.mubr.bf16.gmra.mrb[0].mxu0 %v763
      %v842 = vpop.f32.mrb[0].mxu0
      %v843 = vadd.f32 %v800, %v842
      %v844 = vpop.f32.mrb[0].mxu0
      %v845 = vadd.f32 %v802, %v844
      %v846 = vpop.f32.mrb[0].mxu0
      %v847 = vadd.f32 %v804, %v846
      %v848 = vpop.f32.mrb[0].mxu0
      %v849 = vadd.f32 %v806, %v848
      %850 = vdwg.mxu0
      %v851 = vld [vmem:[%s165] sm:$0xee]
      %v852 = vld [vmem:[%s165 + $0x8] sm:$0xe]
      %s853 = scalar_lea.vmem %s1, 576
      %v854 = vld [vmem:[%s853] sm:$0xff]
      %v855 = vld [vmem:[%s853 + $0x8] sm:$0xff]
      %v856 = vld [vmem:[%s853 + $0x10] sm:$0xff]
      %v857 = vld [vmem:[%s853 + $0x18] sm:$0xff]
      %v858 = vld [vmem:[%s853 + $0x20] sm:$0xff]
      %v859 = vld [vmem:[%s853 + $0x28] sm:$0xff]
      %v860 = vld [vmem:[%s853 + $0x30] sm:$0xff]
      %v861 = vld [vmem:[%s853 + $0x38] sm:$0xff]
      %v862 = vld [vmem:[%s853 + $0x40] sm:$0xff]
      %v863 = vld [vmem:[%s853 + $0x48] sm:$0xff]
      %v864 = vld [vmem:[%s853 + $0x50] sm:$0xff]
      %v865 = vld [vmem:[%s853 + $0x58] sm:$0xff]
      %v866 = vld [vmem:[%s853 + $0x60] sm:$0xff]
      %v867 = vld [vmem:[%s853 + $0x68] sm:$0xff]
      %v868 = vld [vmem:[%s853 + $0x70] sm:$0xff]
      %v869 = vld [vmem:[%s853 + $0x78] sm:$0xff]
      %v870 = vld [vmem:[%s853 + $0x80] sm:$0xff]
      %v871 = vld [vmem:[%s853 + $0x88] sm:$0xff]
      %v872 = vld [vmem:[%s853 + $0x90] sm:$0xff]
      %v873 = vld [vmem:[%s853 + $0x98] sm:$0xff]
      %v874 = vld [vmem:[%s853 + $0xa0] sm:$0xff]
      %v875 = vld [vmem:[%s853 + $0xa8] sm:$0xff]
      %v876 = vld [vmem:[%s853 + $0xb0] sm:$0xff]
      %v877 = vld [vmem:[%s853 + $0xb8] sm:$0xff]
      %v878 = vld [vmem:[%s853 + $0xc0] sm:$0xff]
      %v879 = vld [vmem:[%s853 + $0xc8] sm:$0xff]
      %v880 = vld [vmem:[%s853 + $0xd0] sm:$0xff]
      %v881 = vld [vmem:[%s853 + $0xd8] sm:$0xff]
      %v882 = vld [vmem:[%s853 + $0xe0] sm:$0xff]
      %v883 = vld [vmem:[%s853 + $0xe8] sm:$0xff]
      %v884 = vld [vmem:[%s853 + $0xf0] sm:$0xff]
      %v885 = vld [vmem:[%s853 + $0xf8] sm:$0xff]
      %v886 = vld [vmem:[%s853 + $0x100] sm:$0xff]
      %v887 = vld [vmem:[%s853 + $0x108] sm:$0xff]
      %v888 = vld [vmem:[%s853 + $0x110] sm:$0xff]
      %v889 = vld [vmem:[%s853 + $0x118] sm:$0xff]
      %v892 = vunpack.c.l.b16 %v851
      %v893 = vunpack.c.h.b16 %v851
      %v894 = vunpack.c.l.b16 %v852
      %v895 = vpack.c.b16 %v260, %v892
      %v896 = vpack.c.b16 %v261, %v893
      %v897 = vpack.c.b16 %v262, %v894
      %vm898 = vcmask 1046528
      %v899 = vrot.slane %v895, 1
      %v900 = vrot.slane %v269, 1
      %v901 = vsel %vm898, %v899, %v900
      %v902 = vrot.slane %v896, 1
      %v903 = vrot.slane %v270, 1
      %v904 = vsel %vm898, %v902, %v903
      %v905 = vrot.slane %v897, 1
      %v906 = vrot.slane %v271, 1
      %v907 = vsel %vm898, %v905, %v906
      %v946 = vunpack.c.l.b16 %v854
      %v947 = vunpack.c.h.b16 %v854
      %v948 = vunpack.c.l.b16 %v855
      %v949 = vunpack.c.h.b16 %v855
      %v950 = vunpack.c.l.b16 %v856
      %v951 = vunpack.c.h.b16 %v856
      %v952 = vunpack.c.l.b16 %v857
      %v953 = vunpack.c.h.b16 %v857
      %v954 = vunpack.c.l.b16 %v858
      %v955 = vunpack.c.h.b16 %v858
      %v956 = vunpack.c.l.b16 %v859
      %v957 = vunpack.c.h.b16 %v859
      %v958 = vunpack.c.l.b16 %v860
      %v959 = vunpack.c.h.b16 %v860
      %v960 = vunpack.c.l.b16 %v861
      %v961 = vunpack.c.h.b16 %v861
      %v962 = vunpack.c.l.b16 %v862
      %v963 = vunpack.c.h.b16 %v862
      %v964 = vunpack.c.l.b16 %v863
      %v965 = vunpack.c.h.b16 %v863
      %v966 = vunpack.c.l.b16 %v864
      %v967 = vunpack.c.h.b16 %v864
      %v968 = vunpack.c.l.b16 %v865
      %v969 = vunpack.c.h.b16 %v865
      %v970 = vunpack.c.l.b16 %v866
      %v971 = vunpack.c.h.b16 %v866
      %v972 = vunpack.c.l.b16 %v867
      %v973 = vunpack.c.h.b16 %v867
      %v974 = vunpack.c.l.b16 %v868
      %v975 = vunpack.c.h.b16 %v868
      %v976 = vunpack.c.l.b16 %v869
      %v977 = vunpack.c.h.b16 %v869
      %v978 = vunpack.c.l.b16 %v870
      %v979 = vunpack.c.h.b16 %v870
      %v980 = vunpack.c.l.b16 %v871
      %v981 = vunpack.c.h.b16 %v871
      %v982 = vunpack.c.l.b16 %v872
      %v983 = vunpack.c.h.b16 %v872
      %v984 = vunpack.c.l.b16 %v873
      %v985 = vunpack.c.h.b16 %v873
      %v986 = vunpack.c.l.b16 %v874
      %v987 = vunpack.c.h.b16 %v874
      %v988 = vunpack.c.l.b16 %v875
      %v989 = vunpack.c.h.b16 %v875
      %v990 = vunpack.c.l.b16 %v876
      %v991 = vunpack.c.h.b16 %v876
      %v992 = vunpack.c.l.b16 %v877
      %v993 = vunpack.c.h.b16 %v877
      %v994 = vunpack.c.l.b16 %v878
      %v995 = vunpack.c.h.b16 %v878
      %v996 = vunpack.c.l.b16 %v879
      %v997 = vunpack.c.h.b16 %v879
      %v998 = vunpack.c.l.b16 %v880
      %v999 = vunpack.c.h.b16 %v880
      %v1000 = vunpack.c.l.b16 %v881
      %v1001 = vunpack.c.h.b16 %v881
      %v1002 = vunpack.c.l.b16 %v882
      %v1003 = vunpack.c.h.b16 %v882
      %v1004 = vunpack.c.l.b16 %v883
      %v1005 = vunpack.c.h.b16 %v883
      %v1006 = vunpack.c.l.b16 %v884
      %v1007 = vunpack.c.h.b16 %v884
      %v1008 = vunpack.c.l.b16 %v885
      %v1009 = vunpack.c.h.b16 %v885
      %v1010 = vunpack.c.l.b16 %v886
      %v1011 = vunpack.c.h.b16 %v886
      %v1012 = vunpack.c.l.b16 %v887
      %v1013 = vunpack.c.h.b16 %v887
      %v1014 = vunpack.c.l.b16 %v888
      %v1015 = vunpack.c.h.b16 %v888
      %v1016 = vunpack.c.l.b16 %v889
      %v1017 = vunpack.c.h.b16 %v889
      %v1018 = vpack.c.b16 %v948, %v946
      %v1019 = vpack.c.b16 %v949, %v947
      %v1020 = vpack.c.b16 %v952, %v950
      %v1021 = vpack.c.b16 %v953, %v951
      %v1022 = vpack.c.b16 %v956, %v954
      %v1023 = vpack.c.b16 %v957, %v955
      %v1024 = vpack.c.b16 %v960, %v958
      %v1025 = vpack.c.b16 %v961, %v959
      %v1026 = vpack.c.b16 %v964, %v962
      %v1027 = vpack.c.b16 %v965, %v963
      %v1028 = vpack.c.b16 %v968, %v966
      %v1029 = vpack.c.b16 %v969, %v967
      %v1030 = vpack.c.b16 %v972, %v970
      %v1031 = vpack.c.b16 %v973, %v971
      %v1032 = vpack.c.b16 %v976, %v974
      %v1033 = vpack.c.b16 %v977, %v975
      %v1034 = vpack.c.b16 %v980, %v978
      %v1035 = vpack.c.b16 %v981, %v979
      %v1036 = vpack.c.b16 %v984, %v982
      %v1037 = vpack.c.b16 %v985, %v983
      %v1038 = vpack.c.b16 %v988, %v986
      %v1039 = vpack.c.b16 %v989, %v987
      %v1040 = vpack.c.b16 %v992, %v990
      %v1041 = vpack.c.b16 %v993, %v991
      %v1042 = vpack.c.b16 %v996, %v994
      %v1043 = vpack.c.b16 %v997, %v995
      %v1044 = vpack.c.b16 %v1000, %v998
      %v1045 = vpack.c.b16 %v1001, %v999
      %v1046 = vpack.c.b16 %v1004, %v1002
      %v1047 = vpack.c.b16 %v1005, %v1003
      %v1048 = vpack.c.b16 %v1008, %v1006
      %v1049 = vpack.c.b16 %v1009, %v1007
      %v1050 = vpack.c.b16 %v1012, %v1010
      %v1051 = vpack.c.b16 %v1013, %v1011
      %v1052 = vpack.c.b16 %v1016, %v1014
      %v1053 = vpack.c.b16 %v1017, %v1015
      %v1091 = vsel %vm491, %v907, 0
      %1093 = vmatprep.subr.bf16.mxu0 %v1019
      %1094 = vmatpush1.bf16.msra.mxu0 %v1018
      %1095 = vmatprep.subr.bf16.mxu0 %v1021
      %1096 = vmatpush1.bf16.msra.mxu0 %v1020
      %1097 = vmatprep.subr.bf16.mxu0 %v1023
      %1098 = vmatpush1.bf16.msra.mxu0 %v1022
      %1099 = vmatprep.subr.bf16.mxu0 %v1025
      %1100 = vmatpush1.bf16.msra.mxu0 %v1024
      %1101 = vmatprep.subr.bf16.mxu0 %v1027
      %1102 = vmatpush1.bf16.msra.mxu0 %v1026
      %1103 = vmatprep.subr.bf16.mxu0 %v1029
      %1104 = vmatpush1.bf16.msra.mxu0 %v1028
      %1105 = vmatprep.subr.bf16.mxu0 %v1031
      %1106 = vmatpush1.bf16.msra.mxu0 %v1030
      %1107 = vmatprep.subr.bf16.mxu0 %v1033
      %1108 = vmatpush1.bf16.msra.mxu0 %v1032
      %1109 = vmatprep.subr.bf16.mxu0 %v1035
      %1110 = vmatpush1.bf16.msra.mxu0 %v1034
      %1111 = vmatprep.subr.bf16.mxu0 %v1037
      %1112 = vmatpush1.bf16.msra.mxu0 %v1036
      %1113 = vmatprep.subr.bf16.mxu0 %v1039
      %1114 = vmatpush1.bf16.msra.mxu0 %v1038
      %1115 = vmatprep.subr.bf16.mxu0 %v1041
      %1116 = vmatpush1.bf16.msra.mxu0 %v1040
      %1117 = vmatprep.subr.bf16.mxu0 %v1043
      %1118 = vmatpush1.bf16.msra.mxu0 %v1042
      %1119 = vmatprep.subr.bf16.mxu0 %v1045
      %1120 = vmatpush1.bf16.msra.mxu0 %v1044
      %1121 = vmatprep.subr.bf16.mxu0 %v1047
      %1122 = vmatpush1.bf16.msra.mxu0 %v1046
      %1123 = vmatprep.subr.bf16.mxu0 %v1049
      %1124 = vmatpush1.bf16.msra.mxu0 %v1048
      %1125 = vmatprep.mubr.bf16.mxu0 %v904
      %1126 = vmatmul.mubr.bf16.gmra.mrb[0].mxu0 %v901
      %v1127 = vpop.f32.mrb[0].mxu0
      %v1128 = vadd.f32 0.0, %v1127
      %v1129 = vpop.f32.mrb[0].mxu0
      %v1130 = vadd.f32 0.0, %v1129
      %v1131 = vpop.f32.mrb[0].mxu0
      %v1132 = vadd.f32 0.0, %v1131
      %v1133 = vpop.f32.mrb[0].mxu0
      %v1134 = vadd.f32 0.0, %v1133
      %1135 = vdwg.mxu0
      %1136 = vmatprep.subr.bf16.mxu0 %v1051
      %1137 = vmatpush1.bf16.msra.mxu0 %v1050
      %1138 = vmatprep.subr.bf16.mxu0 %v1053
      %1139 = vmatpush1.bf16.msra.mxu0 %v1052
      %1140 = vmatprep.subr.bf16.mxu0 0
      %1141 = vmatpush1.bf16.msra.mxu0 0
      %1142 = vmatprep.subr.bf16.mxu0 0
      %1143 = vmatpush1.bf16.msra.mxu0 0
      %1144 = vmatprep.subr.bf16.mxu0 0
      %1145 = vmatpush1.bf16.msra.mxu0 0
      %1146 = vmatprep.subr.bf16.mxu0 0
      %1147 = vmatpush1.bf16.msra.mxu0 0
      %1148 = vmatprep.subr.bf16.mxu0 0
      %1149 = vmatpush1.bf16.msra.mxu0 0
      %1150 = vmatprep.subr.bf16.mxu0 0
      %1151 = vmatpush1.bf16.msra.mxu0 0
      %1152 = vmatprep.subr.bf16.mxu0 0
      %1153 = vmatpush1.bf16.msra.mxu0 0
      %1154 = vmatprep.subr.bf16.mxu0 0
      %1155 = vmatpush1.bf16.msra.mxu0 0
      %1156 = vmatprep.subr.bf16.mxu0 0
      %1157 = vmatpush1.bf16.msra.mxu0 0
      %1158 = vmatprep.subr.bf16.mxu0 0
      %1159 = vmatpush1.bf16.msra.mxu0 0
      %1160 = vmatprep.subr.bf16.mxu0 0
      %1161 = vmatpush1.bf16.msra.mxu0 0
      %1162 = vmatprep.subr.bf16.mxu0 0
      %1163 = vmatpush1.bf16.msra.mxu0 0
      %1164 = vmatprep.subr.bf16.mxu0 0
      %1165 = vmatpush1.bf16.msra.mxu0 0
      %1166 = vmatprep.subr.bf16.mxu0 0
      %1167 = vmatpush1.bf16.msra.mxu0 0
      %1168 = vmatprep.mubr.bf16.mxu0 0
      %1169 = vmatmul.mubr.bf16.gmra.mrb[0].mxu0 %v1091
      %v1170 = vpop.f32.mrb[0].mxu0
      %v1171 = vadd.f32 %v1128, %v1170
      %v1172 = vpop.f32.mrb[0].mxu0
      %v1173 = vadd.f32 %v1130, %v1172
      %v1174 = vpop.f32.mrb[0].mxu0
      %v1175 = vadd.f32 %v1132, %v1174
      %v1176 = vpop.f32.mrb[0].mxu0
      %v1177 = vadd.f32 %v1134, %v1176
      %1178 = vdwg.mxu0
      %v1179 = vadd.f32 %v843, %v1171
      %v1180 = vadd.f32 %v845, %v1173
      %v1181 = vadd.f32 %v847, %v1175
      %v1182 = vadd.f32 %v849, %v1177
      %v1183 = vld [vmem:[%s2] sm:$0x3]
      %v1185 = vlaneseq
      %v1186 = vshrl.u32 %v1185, 7
      %v1187 = vsub.s32 0, %v1186
      %v1188 = vrot.slane %v1183, %v1187
      %v1189 = vlaneseq
      %v1190 = vshrl.u32 %v1189, 7
      %v1191 = vsub.s32 1, %v1190
      %v1192 = vrot.slane %v1183, %v1191
      %v1195 = vadd.f32 %v1179, %v1188
      %v1196 = vadd.f32 %v1180, %v1192
      %v1197 = vadd.f32 %v1181, %v1188
      %v1198 = vadd.f32 %v1182, %v1192
      %v1199 = vmax.f32 %v1195, 0.0
      %v1200 = vmax.f32 %v1196, 0.0
      %v1201 = vmax.f32 %v1197, 0.0
      %v1202 = vmax.f32 %v1198, 0.0
      %1203 = vst [vmem:[%s170] sm:$0xff] %v1199
      %1204 = vst [vmem:[%s170 + $0x8] sm:$0xff] %v1200
      %1205 = vst [vmem:[%s170 + $0x10] sm:$0xff] %v1201
      %1206 = vst [vmem:[%s170 + $0x18] sm:$0xff] %v1202
      %p1207 = scmp.lt.s32.totalorder %s14, 1
      %s1208 = scalar_select %p1207, %s14, 1
      %s1209 = smul.addr %s1208, 4
      %s1210 = smul.addr %s1209, 8
      %s1211 = scalar_lea.vmem %s3, %s1210
      // Predicated region
      $region33: #{unet_forward.18} parent=31 // pred_check
        %p1212 = pneg %p100
      $region34: #{unet_forward.18} parent=31 // pred_check_branch
        %1214 = sbr.rel (%p1212) target = $region36
      $region35: #{unet_forward.18} parent=31 // pred_region
        _
      $region36: #{unet_forward.18} parent=31 // pred_fallthru
        _
    $region32: #{unet_forward.18} parent=5 // pred_fallthru
      _
    %p1215 = scmp.le.s32.totalorder 2, %s9
    // Predicated region
    $region37: #{unet_forward.18} parent=5 // pred_check
      %p1216 = pneg %p1215
    $region38: #{unet_forward.18} parent=5 // pred_check_branch
      %1218 = sbr.rel (%p1216) target = $region40
    $region39: #{unet_forward.18} parent=5 // pred_region
      %s1219 = ssub.s32 %s9, 2
      // Predicated region
      $region41: #{unet_forward.18} parent=39 // pred_check
        %p1220 = pneg %p106
      $region42: #{unet_forward.18} parent=39 // pred_check_branch
        %1222 = sbr.rel (%p1220) target = $region44
      $region43: #{unet_forward.18} parent=39 // pred_region
        %p1223 = scmp.lt.s32.totalorder %s15, 1
        %s1224 = scalar_select %p1223, %s15, 1
        %s1225 = smul.addr %s1224, 4
        %s1226 = smul.addr %s1225, 8
        %s1227 = scalar_lea.vmem %s3, %s1226
      $region44: #{unet_forward.18} parent=39 // pred_fallthru
        _
    $region40: #{unet_forward.18} parent=5 // pred_fallthru
      _
  $region6: #{unet_forward.18} parent=0 // loop_footer
    %s13 = sadd.s32 1, %s9
  $region7: #{unet_forward.18} parent=0 // loop_footer_branch
    %8 = sbr.rel target = $region3
  $region8: #{unet_forward.18} parent=0 // loop_exit
    _

// kernel: unet_forward.19
$region0: #{unet_forward.19}
  #allocation0 [shape = 'u32[]', space=smem, size = 0x4, offset = 0x4, fixed_abs, tag = 'smem constant byte address 0x4 - core index']
  #allocation1 [shape = 'u32[144,128]{1,0:T(1,128)}', space=vmem, size = 0x12000, scoped, tag = 'internal scratch']
  %s0 = inlined_call_operand.vmem [shape: bf16[2,18,288], index: 0, kind: input, shape index: {}]
  %s1 = inlined_call_operand.vmem [shape: bf16[2,18,144], index: 1, kind: input, shape index: {}]
  %s2 = inlined_call_operand.vmem [shape: bf16[2,18,54], index: 2, kind: input, shape index: {}]
  %s3 = inlined_call_operand.vmem [shape: bf16[3,288,128], index: 3, kind: input, shape index: {}]
  %s4 = inlined_call_operand.vmem [shape: bf16[3,144,128], index: 4, kind: input, shape index: {}]
  %s5 = inlined_call_operand.vmem [shape: bf16[3,54,128], index: 5, kind: input, shape index: {}]
  %s6 = inlined_call_operand.vmem [shape: f32[1,128], index: 6, kind: input, shape index: {}]
  %s7 = inlined_call_operand.vmem [shape: f32[2,16,128], index: 7, kind: output, shape index: {}]
  %s8 = sld [smem:[#allocation0]]
  $region61: #{unet_forward.19} parent=0
    _
  %s10 = ssub.s32 1, %s8
  %s11 = scalar_select 0, %s10, %s8
  loop: start=0, step=1, limit=4
  $region2: #{unet_forward.19} parent=0 // loop_pre_header
    _
  $region3: #{unet_forward.19} parent=0 // loop_header
    %s13 = sphi 0, %s17
    %p14 = scmp.ge.s32.totalorder %s13, 4
    %s23 = sphi 0, %s25
    %s26 = sphi 0, %s23
    %s27 = sphi 0, %s26
    %s43 = sphi 0, %s27
    %s49 = sphi 0, %s51
    %s52 = sphi 0, %s49
    %s53 = sphi 0, %s52
    %s69 = sphi 0, %s53
    %s75 = sphi 0, %s77
    %s78 = sphi 0, %s75
    %s79 = sphi 0, %s78
    %s95 = sphi 0, %s79
    %s99 = sphi 0, %s99
    %s101 = sphi 0, %s99
    %s102 = sphi 0, %s101
    %s116 = sphi 0, %s102
    %s120 = sphi 0, %s120
    %s122 = sphi 0, %s120
    %s123 = sphi 0, %s122
    %s137 = sphi 0, %s123
    %s141 = sphi 0, %s141
    %s143 = sphi 0, %s141
    %s144 = sphi 0, %s143
    %s158 = sphi 0, %s144
    %s162 = sphi 0, %s162
    %s164 = sphi 0, %s162
    %s165 = sphi 0, %s164
    %s179 = sphi 0, %s165
    %s185 = sphi 0, %s187
    %s188 = sphi 0, %s185
    %s189 = sphi 0, %s188
    %s205 = sphi 0, %s189
  $region4: #{unet_forward.19} parent=0 // loop_header_branch
    %16 = sbr.rel (%p14) target = $region8
  $region5: #{unet_forward.19} parent=0 // loop_body
    %s18 = ssub.s32 %s13, 1
    %s19 = ssub.s32 %s13, 2
    %s20 = sadd.s32 %s13, 1
    %s21 = ssub.s32 %s13, %s20
    %p22 = scmp.eq.s32.totalorder %s21, 0
    %s24 = sadd.s32 %s23, 1
    %s25 = scalar_select %p22, %s23, %s24
    %p28 = pneg %p22
    %p29 = scmp.eq.s32.totalorder %s13, 1
    %p30 = por %p28, %p29
    %p31 = scmp.ne.s32.totalorder %s23, %s26
    %p32 = scmp.eq.s32.totalorder %s13, 0
    %p33 = por %p31, %p32
    %p34 = scmp.ne.s32.totalorder %s23, %s26
    %p35 = scmp.eq.s32.totalorder %s18, 1
    %p36 = por %p34, %p35
    %p37 = scmp.ne.s32.totalorder %s26, %s27
    %p38 = scmp.eq.s32.totalorder %s18, 0
    %p39 = por %p37, %p38
    %p40 = scmp.ne.s32.totalorder %s26, %s27
    %p41 = scmp.eq.s32.totalorder %s19, 1
    %p42 = por %p40, %p41
    %p44 = scmp.ne.s32.totalorder %s27, %s43
    %p45 = scmp.eq.s32.totalorder %s19, 0
    %p46 = por %p44, %p45
    %s47 = ssub.s32 %s13, %s20
    %p48 = scmp.eq.s32.totalorder %s47, 0
    %s50 = sadd.s32 %s49, 1
    %s51 = scalar_select %p48, %s49, %s50
    %p54 = pneg %p48
    %p55 = scmp.eq.s32.totalorder %s13, 1
    %p56 = por %p54, %p55
    %p57 = scmp.ne.s32.totalorder %s49, %s52
    %p58 = scmp.eq.s32.totalorder %s13, 0
    %p59 = por %p57, %p58
    %p60 = scmp.ne.s32.totalorder %s49, %s52
    %p61 = scmp.eq.s32.totalorder %s18, 1
    %p62 = por %p60, %p61
    %p63 = scmp.ne.s32.totalorder %s52, %s53
    %p64 = scmp.eq.s32.totalorder %s18, 0
    %p65 = por %p63, %p64
    %p66 = scmp.ne.s32.totalorder %s52, %s53
    %p67 = scmp.eq.s32.totalorder %s19, 1
    %p68 = por %p66, %p67
    %p70 = scmp.ne.s32.totalorder %s53, %s69
    %p71 = scmp.eq.s32.totalorder %s19, 0
    %p72 = por %p70, %p71
    %s73 = ssub.s32 %s13, %s20
    %p74 = scmp.eq.s32.totalorder %s73, 0
    %s76 = sadd.s32 %s75, 1
    %s77 = scalar_select %p74, %s75, %s76
    %p80 = pneg %p74
    %p81 = scmp.eq.s32.totalorder %s13, 1
    %p82 = por %p80, %p81
    %p83 = scmp.ne.s32.totalorder %s75, %s78
    %p84 = scmp.eq.s32.totalorder %s13, 0
    %p85 = por %p83, %p84
    %p86 = scmp.ne.s32.totalorder %s75, %s78
    %p87 = scmp.eq.s32.totalorder %s18, 1
    %p88 = por %p86, %p87
    %p89 = scmp.ne.s32.totalorder %s78, %s79
    %p90 = scmp.eq.s32.totalorder %s18, 0
    %p91 = por %p89, %p90
    %p92 = scmp.ne.s32.totalorder %s78, %s79
    %p93 = scmp.eq.s32.totalorder %s19, 1
    %p94 = por %p92, %p93
    %p96 = scmp.ne.s32.totalorder %s79, %s95
    %p97 = scmp.eq.s32.totalorder %s19, 0
    %p98 = por %p96, %p97
    %s100 = sadd.s32 %s99, 1
    %p103 = scmp.eq.s32.totalorder %s13, 1
    %p104 = scmp.ne.s32.totalorder %s99, %s101
    %p105 = scmp.eq.s32.totalorder %s13, 0
    %p106 = por %p104, %p105
    %p107 = scmp.ne.s32.totalorder %s99, %s101
    %p108 = scmp.eq.s32.totalorder %s18, 1
    %p109 = por %p107, %p108
    %p110 = scmp.ne.s32.totalorder %s101, %s102
    %p111 = scmp.eq.s32.totalorder %s18, 0
    %p112 = por %p110, %p111
    %p113 = scmp.ne.s32.totalorder %s101, %s102
    %p114 = scmp.eq.s32.totalorder %s19, 1
    %p115 = por %p113, %p114
    %p117 = scmp.ne.s32.totalorder %s102, %s116
    %p118 = scmp.eq.s32.totalorder %s19, 0
    %p119 = por %p117, %p118
    %s121 = sadd.s32 %s120, 1
    %p124 = scmp.eq.s32.totalorder %s13, 1
    %p125 = scmp.ne.s32.totalorder %s120, %s122
    %p126 = scmp.eq.s32.totalorder %s13, 0
    %p127 = por %p125, %p126
    %p128 = scmp.ne.s32.totalorder %s120, %s122
    %p129 = scmp.eq.s32.totalorder %s18, 1
    %p130 = por %p128, %p129
    %p131 = scmp.ne.s32.totalorder %s122, %s123
    %p132 = scmp.eq.s32.totalorder %s18, 0
    %p133 = por %p131, %p132
    %p134 = scmp.ne.s32.totalorder %s122, %s123
    %p135 = scmp.eq.s32.totalorder %s19, 1
    %p136 = por %p134, %p135
    %p138 = scmp.ne.s32.totalorder %s123, %s137
    %p139 = scmp.eq.s32.totalorder %s19, 0
    %p140 = por %p138, %p139
    %s142 = sadd.s32 %s141, 1
    %p145 = scmp.eq.s32.totalorder %s13, 1
    %p146 = scmp.ne.s32.totalorder %s141, %s143
    %p147 = scmp.eq.s32.totalorder %s13, 0
    %p148 = por %p146, %p147
    %p149 = scmp.ne.s32.totalorder %s141, %s143
    %p150 = scmp.eq.s32.totalorder %s18, 1
    %p151 = por %p149, %p150
    %p152 = scmp.ne.s32.totalorder %s143, %s144
    %p153 = scmp.eq.s32.totalorder %s18, 0
    %p154 = por %p152, %p153
    %p155 = scmp.ne.s32.totalorder %s143, %s144
    %p156 = scmp.eq.s32.totalorder %s19, 1
    %p157 = por %p155, %p156
    %p159 = scmp.ne.s32.totalorder %s144, %s158
    %p160 = scmp.eq.s32.totalorder %s19, 0
    %p161 = por %p159, %p160
    %s163 = sadd.s32 %s162, 1
    %p166 = scmp.eq.s32.totalorder %s13, 1
    %p167 = scmp.ne.s32.totalorder %s162, %s164
    %p168 = scmp.eq.s32.totalorder %s13, 0
    %p169 = por %p167, %p168
    %p170 = scmp.ne.s32.totalorder %s162, %s164
    %p171 = scmp.eq.s32.totalorder %s18, 1
    %p172 = por %p170, %p171
    %p173 = scmp.ne.s32.totalorder %s164, %s165
    %p174 = scmp.eq.s32.totalorder %s18, 0
    %p175 = por %p173, %p174
    %p176 = scmp.ne.s32.totalorder %s164, %s165
    %p177 = scmp.eq.s32.totalorder %s19, 1
    %p178 = por %p176, %p177
    %p180 = scmp.ne.s32.totalorder %s165, %s179
    %p181 = scmp.eq.s32.totalorder %s19, 0
    %p182 = por %p180, %p181
    %s183 = ssub.s32 %s13, %s20
    %p184 = scmp.eq.s32.totalorder %s183, 0
    %s186 = sadd.s32 %s185, 1
    %s187 = scalar_select %p184, %s185, %s186
    %p190 = pneg %p184
    %p191 = scmp.eq.s32.totalorder %s13, 1
    %p192 = por %p190, %p191
    %p193 = scmp.ne.s32.totalorder %s185, %s188
    %p194 = scmp.eq.s32.totalorder %s13, 0
    %p195 = por %p193, %p194
    %p196 = scmp.ne.s32.totalorder %s185, %s188
    %p197 = scmp.eq.s32.totalorder %s18, 1
    %p198 = por %p196, %p197
    %p199 = scmp.ne.s32.totalorder %s188, %s189
    %p200 = scmp.eq.s32.totalorder %s18, 0
    %p201 = por %p199, %p200
    %p202 = scmp.ne.s32.totalorder %s188, %s189
    %p203 = scmp.eq.s32.totalorder %s19, 1
    %p204 = por %p202, %p203
    %p206 = scmp.ne.s32.totalorder %s189, %s205
    %p207 = scmp.eq.s32.totalorder %s19, 0
    %p208 = por %p206, %p207
    %p209 = scmp.le.s32.totalorder 1, %s13
    %p210 = scmp.lt.s32.totalorder %s13, 3
    %p211 = pnand %p209, %p210
    %p212 = pneg %p211
    // Predicated region
    $region9: #{unet_forward.19} parent=5 // pred_check
      _
    $region10: #{unet_forward.19} parent=5 // pred_check_branch
      %214 = sbr.rel (%p211) target = $region12
    $region11: #{unet_forward.19} parent=5 // pred_region
      %s215 = ssub.s32 %s13, 1
      // Predicated region
      $region13: #{unet_forward.19} parent=11 // pred_check
        %p216 = pneg %p112
      $region14: #{unet_forward.19} parent=11 // pred_check_branch
        %218 = sbr.rel (%p216) target = $region16
      $region15: #{unet_forward.19} parent=11 // pred_region
        _
      $region16: #{unet_forward.19} parent=11 // pred_fallthru
        _
      // Predicated region
      $region17: #{unet_forward.19} parent=11 // pred_check
        %p219 = pneg %p133
      $region18: #{unet_forward.19} parent=11 // pred_check_branch
        %221 = sbr.rel (%p219) target = $region20
      $region19: #{unet_forward.19} parent=11 // pred_region
        _
      $region20: #{unet_forward.19} parent=11 // pred_fallthru
        _
      // Predicated region
      $region21: #{unet_forward.19} parent=11 // pred_check
        %p222 = pneg %p154
      $region22: #{unet_forward.19} parent=11 // pred_check_branch
        %224 = sbr.rel (%p222) target = $region24
      $region23: #{unet_forward.19} parent=11 // pred_region
        _
      $region24: #{unet_forward.19} parent=11 // pred_fallthru
        _
      // Predicated region
      $region25: #{unet_forward.19} parent=11 // pred_check
        %p225 = pneg %p175
      $region26: #{unet_forward.19} parent=11 // pred_check_branch
        %227 = sbr.rel (%p225) target = $region28
      $region27: #{unet_forward.19} parent=11 // pred_region
        _
      $region28: #{unet_forward.19} parent=11 // pred_fallthru
        _
    $region12: #{unet_forward.19} parent=5 // pred_fallthru
      _
    %p228 = scmp.lt.s32.totalorder %s13, 2
    // Predicated region
    $region29: #{unet_forward.19} parent=5 // pred_check
      %p229 = pneg %p228
    $region30: #{unet_forward.19} parent=5 // pred_check_branch
      %231 = sbr.rel (%p229) target = $region32
    $region31: #{unet_forward.19} parent=5 // pred_region
      // Predicated region
      $region33: #{unet_forward.19} parent=31 // pred_check
        %p232 = pneg %p33
      $region34: #{unet_forward.19} parent=31 // pred_check_branch
        %234 = sbr.rel (%p232) target = $region36
      $region35: #{unet_forward.19} parent=31 // pred_region
        %p235 = scmp.lt.s32.totalorder %s13, 1
        %s236 = scalar_select %p235, %s13, 1
        %s237 = smul.addr %s236, 9
        %s238 = smul.addr %s237, 4
        %s239 = scalar_lea.vmem %s0, %s238
      $region36: #{unet_forward.19} parent=31 // pred_fallthru
        _
      // Predicated region
      $region37: #{unet_forward.19} parent=31 // pred_check
        %p240 = pneg %p59
      $region38: #{unet_forward.19} parent=31 // pred_check_branch
        %242 = sbr.rel (%p240) target = $region40
      $region39: #{unet_forward.19} parent=31 // pred_region
        %p243 = scmp.lt.s32.totalorder %s13, 1
        %s244 = scalar_select %p243, %s13, 1
        %s245 = smul.addr %s244, 6
        %s246 = smul.addr %s245, 4
        %s247 = scalar_lea.vmem %s1, %s246
      $region40: #{unet_forward.19} parent=31 // pred_fallthru
        _
      // Predicated region
      $region41: #{unet_forward.19} parent=31 // pred_check
        %p248 = pneg %p85
      $region42: #{unet_forward.19} parent=31 // pred_check_branch
        %250 = sbr.rel (%p248) target = $region44
      $region43: #{unet_forward.19} parent=31 // pred_region
        %p251 = scmp.lt.s32.totalorder %s13, 1
        %s252 = scalar_select %p251, %s13, 1
        %s253 = smul.addr %s252, 3
        %s254 = smul.addr %s253, 4
        %s255 = scalar_lea.vmem %s2, %s254
      $region44: #{unet_forward.19} parent=31 // pred_fallthru
        _
    $region32: #{unet_forward.19} parent=5 // pred_fallthru
      _
    %p256 = scmp.le.s32.totalorder 1, %s13
    %p257 = scmp.lt.s32.totalorder %s13, 3
    %p258 = pnand %p256, %p257
    %p259 = pneg %p258
    // Predicated region
    $region45: #{unet_forward.19} parent=5 // pred_check
      _
    $region46: #{unet_forward.19} parent=5 // pred_check_branch
      %261 = sbr.rel (%p258) target = $region48
    $region47: #{unet_forward.19} parent=5 // pred_region
      %s262 = ssub.s32 %s13, 1
      %p263 = scmp.lt.s32.totalorder %s18, 1
      %s264 = scalar_select %p263, %s18, 1
      %s265 = smul.addr %s264, 9
      %s266 = smul.addr %s265, 4
      %s267 = scalar_lea.vmem %s0, %s266
      %p268 = pneg %p39
      %p269 = pneg %p36
      %p270 = scmp.lt.s32.totalorder %s18, 1
      %s271 = scalar_select %p270, %s18, 1
      %s272 = smul.addr %s271, 6
      %s273 = smul.addr %s272, 4
      %s274 = scalar_lea.vmem %s1, %s273
      %p275 = pneg %p65
      %p276 = pneg %p62
      %p277 = scmp.lt.s32.totalorder %s18, 1
      %s278 = scalar_select %p277, %s18, 1
      %s279 = smul.addr %s278, 3
      %s280 = smul.addr %s279, 4
      %s281 = scalar_lea.vmem %s2, %s280
      %p282 = pneg %p91
      %p283 = pneg %p88
      %p284 = pneg %p112
      %p285 = pneg %p109
      %p286 = pneg %p133
      %p287 = pneg %p130
      %p288 = pneg %p154
      %p289 = pneg %p151
      %p290 = pneg %p175
      %p291 = pneg %p172
      %p292 = pneg %p201
      %p293 = pneg %p198
      %p294 = scmp.lt.s32.totalorder %s18, 1
      %s295 = scalar_select %p294, %s18, 1
      %s296 = smul.addr %s295, 2
      %s297 = smul.addr %s296, 8
      %s298 = scalar_lea.vmem %s7, %s297
      %p299 = scmp.lt.s32.totalorder %s18, 1
      %s300 = scalar_select %p299, %s18, 1
      %s301 = smul.addr %s300, 9
      %s302 = smul.addr %s301, 4
      %s303 = scalar_lea.vmem %s0, %s302
      %p304 = scmp.lt.s32.totalorder %s18, 1
      %s305 = scalar_select %p304, %s18, 1
      %s306 = smul.addr %s305, 6
      %s307 = smul.addr %s306, 4
      %s308 = scalar_lea.vmem %s1, %s307
      %p309 = scmp.lt.s32.totalorder %s18, 1
      %s310 = scalar_select %p309, %s18, 1
      %s311 = smul.addr %s310, 3
      %s312 = smul.addr %s311, 4
      %s313 = scalar_lea.vmem %s2, %s312
      %p314 = scmp.lt.s32.totalorder %s18, 1
      %s315 = scalar_select %p314, %s18, 1
      %s316 = smul.addr %s315, 2
      %s317 = smul.addr %s316, 8
      %s318 = scalar_lea.vmem %s7, %s317
      %v320 = vld [vmem:[%s303] sm:$0xff]
      %v321 = vld [vmem:[%s303 + $0x8] sm:$0xf]
      %v322 = vld [vmem:[%s303 + $0xc] sm:$0xff]
      %v323 = vld [vmem:[%s303 + $0x14] sm:$0xf]
      %v324 = vld [vmem:[%s3] sm:$0xf]
      %v325 = vld [vmem:[%s3 + $0x4] sm:$0xf]
      %v326 = vld [vmem:[%s3 + $0x8] sm:$0xf]
      %v327 = vld [vmem:[%s3 + $0xc] sm:$0xf]
      %v328 = vld [vmem:[%s3 + $0x10] sm:$0xf]
      %v329 = vld [vmem:[%s3 + $0x14] sm:$0xf]
      %v330 = vld [vmem:[%s3 + $0x18] sm:$0xf]
      %v331 = vld [vmem:[%s3 + $0x1c] sm:$0xf]
      %v332 = vld [vmem:[%s3 + $0x20] sm:$0xf]
      %v333 = vld [vmem:[%s3 + $0x24] sm:$0xf]
      %v334 = vld [vmem:[%s3 + $0x28] sm:$0xf]
      %v335 = vld [vmem:[%s3 + $0x2c] sm:$0xf]
      %v336 = vld [vmem:[%s3 + $0x30] sm:$0xf]
      %v337 = vld [vmem:[%s3 + $0x34] sm:$0xf]
      %v338 = vld [vmem:[%s3 + $0x38] sm:$0xf]
      %v339 = vld [vmem:[%s3 + $0x3c] sm:$0xf]
      %v340 = vld [vmem:[%s3 + $0x40] sm:$0xf]
      %v341 = vld [vmem:[%s3 + $0x44] sm:$0xf]
      %v342 = vld [vmem:[%s3 + $0x48] sm:$0xf]
      %v343 = vld [vmem:[%s3 + $0x4c] sm:$0xf]
      %v344 = vld [vmem:[%s3 + $0x50] sm:$0xf]
      %v345 = vld [vmem:[%s3 + $0x54] sm:$0xf]
      %v346 = vld [vmem:[%s3 + $0x58] sm:$0xf]
      %v347 = vld [vmem:[%s3 + $0x5c] sm:$0xf]
      %v348 = vld [vmem:[%s3 + $0x60] sm:$0xf]
      %v349 = vld [vmem:[%s3 + $0x64] sm:$0xf]
      %v350 = vld [vmem:[%s3 + $0x68] sm:$0xf]
      %v351 = vld [vmem:[%s3 + $0x6c] sm:$0xf]
      %v352 = vld [vmem:[%s3 + $0x70] sm:$0xf]
      %v353 = vld [vmem:[%s3 + $0x74] sm:$0xf]
      %v354 = vld [vmem:[%s3 + $0x78] sm:$0xf]
      %v355 = vld [vmem:[%s3 + $0x7c] sm:$0xf]
      %v356 = vld [vmem:[%s3 + $0x80] sm:$0xf]
      %v357 = vld [vmem:[%s3 + $0x84] sm:$0xf]
      %v358 = vld [vmem:[%s3 + $0x88] sm:$0xf]
      %v359 = vld [vmem:[%s3 + $0x8c] sm:$0xf]
      %v360 = vld [vmem:[%s303 + $0x18] sm:$0x11]
      %v361 = vld [vmem:[%s303 + $0x20] sm:$0x1]
      %s362 = scalar_lea.vmem %s3, 144
      %v363 = vld [vmem:[%s362] sm:$0xf]
      %v364 = vld [vmem:[%s362 + $0x4] sm:$0xf]
      %v365 = vld [vmem:[%s362 + $0x8] sm:$0xf]
      %v366 = vld [vmem:[%s362 + $0xc] sm:$0xf]
      %v367 = vld [vmem:[%s362 + $0x10] sm:$0xf]
      %v368 = vld [vmem:[%s362 + $0x14] sm:$0xf]
      %v369 = vld [vmem:[%s362 + $0x18] sm:$0xf]
      %v370 = vld [vmem:[%s362 + $0x1c] sm:$0xf]
      %v371 = vld [vmem:[%s362 + $0x20] sm:$0xf]
      %v372 = vld [vmem:[%s362 + $0x24] sm:$0xf]
      %v373 = vld [vmem:[%s362 + $0x28] sm:$0xf]
      %v374 = vld [vmem:[%s362 + $0x2c] sm:$0xf]
      %v375 = vld [vmem:[%s362 + $0x30] sm:$0xf]
      %v376 = vld [vmem:[%s362 + $0x34] sm:$0xf]
      %v377 = vld [vmem:[%s362 + $0x38] sm:$0xf]
      %v378 = vld [vmem:[%s362 + $0x3c] sm:$0xf]
      %v379 = vld [vmem:[%s362 + $0x40] sm:$0xf]
      %v380 = vld [vmem:[%s362 + $0x44] sm:$0xf]
      %v381 = vld [vmem:[%s362 + $0x48] sm:$0xf]
      %v382 = vld [vmem:[%s362 + $0x4c] sm:$0xf]
      %v383 = vld [vmem:[%s362 + $0x50] sm:$0xf]
      %v384 = vld [vmem:[%s362 + $0x54] sm:$0xf]
      %v385 = vld [vmem:[%s362 + $0x58] sm:$0xf]
      %v386 = vld [vmem:[%s362 + $0x5c] sm:$0xf]
      %v387 = vld [vmem:[%s362 + $0x60] sm:$0xf]
      %v388 = vld [vmem:[%s362 + $0x64] sm:$0xf]
      %v389 = vld [vmem:[%s362 + $0x68] sm:$0xf]
      %v390 = vld [vmem:[%s362 + $0x6c] sm:$0xf]
      %v391 = vld [vmem:[%s362 + $0x70] sm:$0xf]
      %v392 = vld [vmem:[%s362 + $0x74] sm:$0xf]
      %v393 = vld [vmem:[%s362 + $0x78] sm:$0xf]
      %v394 = vld [vmem:[%s362 + $0x7c] sm:$0xf]
      %v395 = vld [vmem:[%s362 + $0x80] sm:$0xf]
      %v396 = vld [vmem:[%s362 + $0x84] sm:$0xf]
      %v397 = vld [vmem:[%s362 + $0x88] sm:$0xf]
      %v398 = vld [vmem:[%s362 + $0x8c] sm:$0xf]
      %v405 = vunpack.c.l.b16 %v320
      %v406 = vunpack.c.h.b16 %v320
      %v407 = vunpack.c.l.b16 %v321
      %v408 = vunpack.c.l.b16 %v322
      %v409 = vunpack.c.h.b16 %v322
      %v410 = vunpack.c.l.b16 %v323
      %v411 = vunpack.c.l.b16 %v360
      %v412 = vunpack.c.h.b16 %v360
      %v413 = vunpack.c.l.b16 %v361
      %v414 = vpack.c.b16 %v408, %v405
      %v415 = vpack.c.b16 %v409, %v406
      %v416 = vpack.c.b16 %v410, %v407
      %v417 = vpack.c.b16 %v411, %v411
      %v418 = vpack.c.b16 %v412, %v412
      %v419 = vpack.c.b16 %v413, %v413
      %vm420 = vsmask.f32 7424
      %v422 = vshrl.u32 %v414, 16
      %v424 = vshll.u32 %v414, 16
      %v426 = vrot.slane %v424, 1
      %v427 = vor.u32 %v422, %v426
      %v429 = vshll.u32 %v417, 16
      %v431 = vrot.slane %v429, 1
      %v432 = vsel %vm420, %v427, %v431
      %v434 = vshrl.u32 %v415, 16
      %v436 = vshll.u32 %v415, 16
      %v438 = vrot.slane %v436, 1
      %v439 = vor.u32 %v434, %v438
      %v441 = vshll.u32 %v418, 16
      %v443 = vrot.slane %v441, 1
      %v444 = vsel %vm420, %v439, %v443
      %v446 = vshrl.u32 %v416, 16
      %v448 = vshll.u32 %v416, 16
      %v450 = vrot.slane %v448, 1
      %v451 = vor.u32 %v446, %v450
      %v453 = vshll.u32 %v419, 16
      %v455 = vrot.slane %v453, 1
      %v456 = vsel %vm420, %v451, %v455
      %v495 = vunpack.c.l.b16 %v363
      %v496 = vunpack.c.l.b16 %v364
      %v497 = vunpack.c.l.b16 %v365
      %v498 = vunpack.c.l.b16 %v366
      %v499 = vunpack.c.l.b16 %v367
      %v500 = vunpack.c.l.b16 %v368
      %v501 = vunpack.c.l.b16 %v369
      %v502 = vunpack.c.l.b16 %v370
      %v503 = vunpack.c.l.b16 %v371
      %v504 = vunpack.c.l.b16 %v372
      %v505 = vunpack.c.l.b16 %v373
      %v506 = vunpack.c.l.b16 %v374
      %v507 = vunpack.c.l.b16 %v375
      %v508 = vunpack.c.l.b16 %v376
      %v509 = vunpack.c.l.b16 %v377
      %v510 = vunpack.c.l.b16 %v378
      %v511 = vunpack.c.l.b16 %v379
      %v512 = vunpack.c.l.b16 %v380
      %v513 = vunpack.c.l.b16 %v381
      %v514 = vunpack.c.l.b16 %v382
      %v515 = vunpack.c.l.b16 %v383
      %v516 = vunpack.c.l.b16 %v384
      %v517 = vunpack.c.l.b16 %v385
      %v518 = vunpack.c.l.b16 %v386
      %v519 = vunpack.c.l.b16 %v387
      %v520 = vunpack.c.l.b16 %v388
      %v521 = vunpack.c.l.b16 %v389
      %v522 = vunpack.c.l.b16 %v390
      %v523 = vunpack.c.l.b16 %v391
      %v524 = vunpack.c.l.b16 %v392
      %v525 = vunpack.c.l.b16 %v393
      %v526 = vunpack.c.l.b16 %v394
      %v527 = vunpack.c.l.b16 %v395
      %v528 = vunpack.c.l.b16 %v396
      %v529 = vunpack.c.l.b16 %v397
      %v530 = vunpack.c.l.b16 %v398
      %v531 = vpack.c.b16 %v496, %v495
      %v532 = vpack.c.b16 %v498, %v497
      %v533 = vpack.c.b16 %v500, %v499
      %v534 = vpack.c.b16 %v502, %v501
      %v535 = vpack.c.b16 %v504, %v503
      %v536 = vpack.c.b16 %v506, %v505
      %v537 = vpack.c.b16 %v508, %v507
      %v538 = vpack.c.b16 %v510, %v509
      %v539 = vpack.c.b16 %v512, %v511
      %v540 = vpack.c.b16 %v514, %v513
      %v541 = vpack.c.b16 %v516, %v515
      %v542 = vpack.c.b16 %v518, %v517
      %v543 = vpack.c.b16 %v520, %v519
      %v544 = vpack.c.b16 %v522, %v521
      %v545 = vpack.c.b16 %v524, %v523
      %v546 = vpack.c.b16 %v526, %v525
      %v547 = vpack.c.b16 %v528, %v527
      %v548 = vpack.c.b16 %v530, %v529
      %vm567 = vcmask 261120
      %v569 = vsel %vm567, %v456, 0
      %571 = vmatprep.subr.bf16.mxu0 0
      %572 = vmatpush1.bf16.msra.mxu0 %v531
      %573 = vmatprep.subr.bf16.mxu0 0
      %574 = vmatpush1.bf16.msra.mxu0 %v532
      %575 = vmatprep.subr.bf16.mxu0 0
      %576 = vmatpush1.bf16.msra.mxu0 %v533
      %577 = vmatprep.subr.bf16.mxu0 0
      %578 = vmatpush1.bf16.msra.mxu0 %v534
      %579 = vmatprep.subr.bf16.mxu0 0
      %580 = vmatpush1.bf16.msra.mxu0 %v535
      %581 = vmatprep.subr.bf16.mxu0 0
      %582 = vmatpush1.bf16.msra.mxu0 %v536
      %583 = vmatprep.subr.bf16.mxu0 0
      %584 = vmatpush1.bf16.msra.mxu0 %v537
      %585 = vmatprep.subr.bf16.mxu0 0
      %586 = vmatpush1.bf16.msra.mxu0 %v538
      %587 = vmatprep.subr.bf16.mxu0 0
      %588 = vmatpush1.bf16.msra.mxu0 %v539
      %589 = vmatprep.subr.bf16.mxu0 0
      %590 = vmatpush1.bf16.msra.mxu0 %v540
      %591 = vmatprep.subr.bf16.mxu0 0
      %592 = vmatpush1.bf16.msra.mxu0 %v541
      %593 = vmatprep.subr.bf16.mxu0 0
      %594 = vmatpush1.bf16.msra.mxu0 %v542
      %595 = vmatprep.subr.bf16.mxu0 0
      %596 = vmatpush1.bf16.msra.mxu0 %v543
      %597 = vmatprep.subr.bf16.mxu0 0
      %598 = vmatpush1.bf16.msra.mxu0 %v544
      %599 = vmatprep.subr.bf16.mxu0 0
      %600 = vmatpush1.bf16.msra.mxu0 %v545
      %601 = vmatprep.subr.bf16.mxu0 0
      %602 = vmatpush1.bf16.msra.mxu0 %v546
      %603 = vmatprep.mubr.bf16.mxu0 %v444
      %604 = vmatmul.mubr.bf16.gmra.mrb[0].mxu0 %v432
      %v605 = vpop.f32.mrb[0].mxu0
      %v606 = vadd.f32 0.0, %v605
      %v607 = vpop.f32.mrb[0].mxu0
      %v608 = vpop.f32.mrb[0].mxu0
      %v609 = vadd.f32 0.0, %v608
      %v610 = vpop.f32.mrb[0].mxu0
      %611 = vdwg.mxu0
      %612 = vmatprep.subr.bf16.mxu0 0
      %613 = vmatpush1.bf16.msra.mxu0 %v547
      %614 = vmatprep.subr.bf16.mxu0 0
      %615 = vmatpush1.bf16.msra.mxu0 %v548
      %616 = vmatprep.subr.bf16.mxu0 0
      %617 = vmatpush1.bf16.msra.mxu0 0
      %618 = vmatprep.subr.bf16.mxu0 0
      %619 = vmatpush1.bf16.msra.mxu0 0
      %620 = vmatprep.subr.bf16.mxu0 0
      %621 = vmatpush1.bf16.msra.mxu0 0
      %622 = vmatprep.subr.bf16.mxu0 0
      %623 = vmatpush1.bf16.msra.mxu0 0
      %624 = vmatprep.subr.bf16.mxu0 0
      %625 = vmatpush1.bf16.msra.mxu0 0
      %626 = vmatprep.subr.bf16.mxu0 0
      %627 = vmatpush1.bf16.msra.mxu0 0
      %628 = vmatprep.subr.bf16.mxu0 0
      %629 = vmatpush1.bf16.msra.mxu0 0
      %630 = vmatprep.subr.bf16.mxu0 0
      %631 = vmatpush1.bf16.msra.mxu0 0
      %632 = vmatprep.subr.bf16.mxu0 0
      %633 = vmatpush1.bf16.msra.mxu0 0
      %634 = vmatprep.subr.bf16.mxu0 0
      %635 = vmatpush1.bf16.msra.mxu0 0
      %636 = vmatprep.subr.bf16.mxu0 0
      %637 = vmatpush1.bf16.msra.mxu0 0
      %638 = vmatprep.subr.bf16.mxu0 0
      %639 = vmatpush1.bf16.msra.mxu0 0
      %640 = vmatprep.subr.bf16.mxu0 0
      %641 = vmatpush1.bf16.msra.mxu0 0
      %642 = vmatprep.subr.bf16.mxu0 0
      %643 = vmatpush1.bf16.msra.mxu0 0
      %644 = vmatprep.mubr.bf16.mxu0 0
      %645 = vmatmul.mubr.bf16.gmra.mrb[0].mxu0 %v569
      %v646 = vpop.f32.mrb[0].mxu0
      %v647 = vadd.f32 %v606, %v646
      %v648 = vpop.f32.mrb[0].mxu0
      %v649 = vpop.f32.mrb[0].mxu0
      %v650 = vadd.f32 %v609, %v649
      %v651 = vpop.f32.mrb[0].mxu0
      %652 = vdwg.mxu0
      %v691 = vunpack.c.l.b16 %v324
      %v692 = vunpack.c.l.b16 %v325
      %v693 = vunpack.c.l.b16 %v326
      %v694 = vunpack.c.l.b16 %v327
      %v695 = vunpack.c.l.b16 %v328
      %v696 = vunpack.c.l.b16 %v329
      %v697 = vunpack.c.l.b16 %v330
      %v698 = vunpack.c.l.b16 %v331
      %v699 = vunpack.c.l.b16 %v332
      %v700 = vunpack.c.l.b16 %v333
      %v701 = vunpack.c.l.b16 %v334
      %v702 = vunpack.c.l.b16 %v335
      %v703 = vunpack.c.l.b16 %v336
      %v704 = vunpack.c.l.b16 %v337
      %v705 = vunpack.c.l.b16 %v338
      %v706 = vunpack.c.l.b16 %v339
      %v707 = vunpack.c.l.b16 %v340
      %v708 = vunpack.c.l.b16 %v341
      %v709 = vunpack.c.l.b16 %v342
      %v710 = vunpack.c.l.b16 %v343
      %v711 = vunpack.c.l.b16 %v344
      %v712 = vunpack.c.l.b16 %v345
      %v713 = vunpack.c.l.b16 %v346
      %v714 = vunpack.c.l.b16 %v347
      %v715 = vunpack.c.l.b16 %v348
      %v716 = vunpack.c.l.b16 %v349
      %v717 = vunpack.c.l.b16 %v350
      %v718 = vunpack.c.l.b16 %v351
      %v719 = vunpack.c.l.b16 %v352
      %v720 = vunpack.c.l.b16 %v353
      %v721 = vunpack.c.l.b16 %v354
      %v722 = vunpack.c.l.b16 %v355
      %v723 = vunpack.c.l.b16 %v356
      %v724 = vunpack.c.l.b16 %v357
      %v725 = vunpack.c.l.b16 %v358
      %v726 = vunpack.c.l.b16 %v359
      %v727 = vpack.c.b16 %v692, %v691
      %v728 = vpack.c.b16 %v694, %v693
      %v729 = vpack.c.b16 %v696, %v695
      %v730 = vpack.c.b16 %v698, %v697
      %v731 = vpack.c.b16 %v700, %v699
      %v732 = vpack.c.b16 %v702, %v701
      %v733 = vpack.c.b16 %v704, %v703
      %v734 = vpack.c.b16 %v706, %v705
      %v735 = vpack.c.b16 %v708, %v707
      %v736 = vpack.c.b16 %v710, %v709
      %v737 = vpack.c.b16 %v712, %v711
      %v738 = vpack.c.b16 %v714, %v713
      %v739 = vpack.c.b16 %v716, %v715
      %v740 = vpack.c.b16 %v718, %v717
      %v741 = vpack.c.b16 %v720, %v719
      %v742 = vpack.c.b16 %v722, %v721
      %v743 = vpack.c.b16 %v724, %v723
      %v744 = vpack.c.b16 %v726, %v725
      %v763 = vsel %vm567, %v416, 0
      %765 = vmatprep.subr.bf16.mxu0 0
      %766 = vmatpush1.bf16.msra.mxu0 %v727
      %767 = vmatprep.subr.bf16.mxu0 0
      %768 = vmatpush1.bf16.msra.mxu0 %v728
      %769 = vmatprep.subr.bf16.mxu0 0
      %770 = vmatpush1.bf16.msra.mxu0 %v729
      %771 = vmatprep.subr.bf16.mxu0 0
      %772 = vmatpush1.bf16.msra.mxu0 %v730
      %773 = vmatprep.subr.bf16.mxu0 0
      %774 = vmatpush1.bf16.msra.mxu0 %v731
      %775 = vmatprep.subr.bf16.mxu0 0
      %776 = vmatpush1.bf16.msra.mxu0 %v732
      %777 = vmatprep.subr.bf16.mxu0 0
      %778 = vmatpush1.bf16.msra.mxu0 %v733
      %779 = vmatprep.subr.bf16.mxu0 0
      %780 = vmatpush1.bf16.msra.mxu0 %v734
      %781 = vmatprep.subr.bf16.mxu0 0
      %782 = vmatpush1.bf16.msra.mxu0 %v735
      %783 = vmatprep.subr.bf16.mxu0 0
      %784 = vmatpush1.bf16.msra.mxu0 %v736
      %785 = vmatprep.subr.bf16.mxu0 0
      %786 = vmatpush1.bf16.msra.mxu0 %v737
      %787 = vmatprep.subr.bf16.mxu0 0
      %788 = vmatpush1.bf16.msra.mxu0 %v738
      %789 = vmatprep.subr.bf16.mxu0 0
      %790 = vmatpush1.bf16.msra.mxu0 %v739
      %791 = vmatprep.subr.bf16.mxu0 0
      %792 = vmatpush1.bf16.msra.mxu0 %v740
      %793 = vmatprep.subr.bf16.mxu0 0
      %794 = vmatpush1.bf16.msra.mxu0 %v741
      %795 = vmatprep.subr.bf16.mxu0 0
      %796 = vmatpush1.bf16.msra.mxu0 %v742
      %797 = vmatprep.mubr.bf16.mxu0 %v415
      %798 = vmatmul.mubr.bf16.gmra.mrb[0].mxu0 %v414
      %v799 = vpop.f32.mrb[0].mxu0
      %v800 = vadd.f32 %v647, %v799
      %v801 = vpop.f32.mrb[0].mxu0
      %v802 = vpop.f32.mrb[0].mxu0
      %v803 = vadd.f32 %v650, %v802
      %v804 = vpop.f32.mrb[0].mxu0
      %805 = vdwg.mxu0
      %806 = vmatprep.subr.bf16.mxu0 0
      %807 = vmatpush1.bf16.msra.mxu0 %v743
      %808 = vmatprep.subr.bf16.mxu0 0
      %809 = vmatpush1.bf16.msra.mxu0 %v744
      %810 = vmatprep.subr.bf16.mxu0 0
      %811 = vmatpush1.bf16.msra.mxu0 0
      %812 = vmatprep.subr.bf16.mxu0 0
      %813 = vmatpush1.bf16.msra.mxu0 0
      %814 = vmatprep.subr.bf16.mxu0 0
      %815 = vmatpush1.bf16.msra.mxu0 0
      %816 = vmatprep.subr.bf16.mxu0 0
      %817 = vmatpush1.bf16.msra.mxu0 0
      %818 = vmatprep.subr.bf16.mxu0 0
      %819 = vmatpush1.bf16.msra.mxu0 0
      %820 = vmatprep.subr.bf16.mxu0 0
      %821 = vmatpush1.bf16.msra.mxu0 0
      %822 = vmatprep.subr.bf16.mxu0 0
      %823 = vmatpush1.bf16.msra.mxu0 0
      %824 = vmatprep.subr.bf16.mxu0 0
      %825 = vmatpush1.bf16.msra.mxu0 0
      %826 = vmatprep.subr.bf16.mxu0 0
      %827 = vmatpush1.bf16.msra.mxu0 0
      %828 = vmatprep.subr.bf16.mxu0 0
      %829 = vmatpush1.bf16.msra.mxu0 0
      %830 = vmatprep.subr.bf16.mxu0 0
      %831 = vmatpush1.bf16.msra.mxu0 0
      %832 = vmatprep.subr.bf16.mxu0 0
      %833 = vmatpush1.bf16.msra.mxu0 0
      %834 = vmatprep.subr.bf16.mxu0 0
      %835 = vmatpush1.bf16.msra.mxu0 0
      %836 = vmatprep.subr.bf16.mxu0 0
      %837 = vmatpush1.bf16.msra.mxu0 0
      %838 = vmatprep.mubr.bf16.mxu0 0
      %839 = vmatmul.mubr.bf16.gmra.mrb[0].mxu0 %v763
      %v840 = vpop.f32.mrb[0].mxu0
      %v841 = vadd.f32 %v800, %v840
      %v842 = vpop.f32.mrb[0].mxu0
      %v843 = vpop.f32.mrb[0].mxu0
      %v844 = vadd.f32 %v803, %v843
      %v845 = vpop.f32.mrb[0].mxu0
      %846 = vdwg.mxu0
      %v847 = vld [vmem:[%s303] sm:$0xee]
      %v848 = vld [vmem:[%s303 + $0x8] sm:$0xe]
      %s849 = scalar_lea.vmem %s3, 288
      %v850 = vld [vmem:[%s849] sm:$0xf]
      %v851 = vld [vmem:[%s849 + $0x4] sm:$0xf]
      %v852 = vld [vmem:[%s849 + $0x8] sm:$0xf]
      %v853 = vld [vmem:[%s849 + $0xc] sm:$0xf]
      %v854 = vld [vmem:[%s849 + $0x10] sm:$0xf]
      %v855 = vld [vmem:[%s849 + $0x14] sm:$0xf]
      %v856 = vld [vmem:[%s849 + $0x18] sm:$0xf]
      %v857 = vld [vmem:[%s849 + $0x1c] sm:$0xf]
      %v858 = vld [vmem:[%s849 + $0x20] sm:$0xf]
      %v859 = vld [vmem:[%s849 + $0x24] sm:$0xf]
      %v860 = vld [vmem:[%s849 + $0x28] sm:$0xf]
      %v861 = vld [vmem:[%s849 + $0x2c] sm:$0xf]
      %v862 = vld [vmem:[%s849 + $0x30] sm:$0xf]
      %v863 = vld [vmem:[%s849 + $0x34] sm:$0xf]
      %v864 = vld [vmem:[%s849 + $0x38] sm:$0xf]
      %v865 = vld [vmem:[%s849 + $0x3c] sm:$0xf]
      %v866 = vld [vmem:[%s849 + $0x40] sm:$0xf]
      %v867 = vld [vmem:[%s849 + $0x44] sm:$0xf]
      %v868 = vld [vmem:[%s849 + $0x48] sm:$0xf]
      %v869 = vld [vmem:[%s849 + $0x4c] sm:$0xf]
      %v870 = vld [vmem:[%s849 + $0x50] sm:$0xf]
      %v871 = vld [vmem:[%s849 + $0x54] sm:$0xf]
      %v872 = vld [vmem:[%s849 + $0x58] sm:$0xf]
      %v873 = vld [vmem:[%s849 + $0x5c] sm:$0xf]
      %v874 = vld [vmem:[%s849 + $0x60] sm:$0xf]
      %v875 = vld [vmem:[%s849 + $0x64] sm:$0xf]
      %v876 = vld [vmem:[%s849 + $0x68] sm:$0xf]
      %v877 = vld [vmem:[%s849 + $0x6c] sm:$0xf]
      %v878 = vld [vmem:[%s849 + $0x70] sm:$0xf]
      %v879 = vld [vmem:[%s849 + $0x74] sm:$0xf]
      %v880 = vld [vmem:[%s849 + $0x78] sm:$0xf]
      %v881 = vld [vmem:[%s849 + $0x7c] sm:$0xf]
      %v882 = vld [vmem:[%s849 + $0x80] sm:$0xf]
      %v883 = vld [vmem:[%s849 + $0x84] sm:$0xf]
      %v884 = vld [vmem:[%s849 + $0x88] sm:$0xf]
      %v885 = vld [vmem:[%s849 + $0x8c] sm:$0xf]
      %v888 = vunpack.c.l.b16 %v847
      %v889 = vunpack.c.h.b16 %v847
      %v890 = vunpack.c.l.b16 %v848
      %v891 = vpack.c.b16 %v408, %v888
      %v892 = vpack.c.b16 %v409, %v889
      %v893 = vpack.c.b16 %v410, %v890
      %vm894 = vcmask 1046528
      %v895 = vrot.slane %v891, 1
      %v896 = vrot.slane %v417, 1
      %v897 = vsel %vm894, %v895, %v896
      %v898 = vrot.slane %v892, 1
      %v899 = vrot.slane %v418, 1
      %v900 = vsel %vm894, %v898, %v899
      %v901 = vrot.slane %v893, 1
      %v902 = vrot.slane %v419, 1
      %v903 = vsel %vm894, %v901, %v902
      %v942 = vunpack.c.l.b16 %v850
      %v943 = vunpack.c.l.b16 %v851
      %v944 = vunpack.c.l.b16 %v852
      %v945 = vunpack.c.l.b16 %v853
      %v946 = vunpack.c.l.b16 %v854
      %v947 = vunpack.c.l.b16 %v855
      %v948 = vunpack.c.l.b16 %v856
      %v949 = vunpack.c.l.b16 %v857
      %v950 = vunpack.c.l.b16 %v858
      %v951 = vunpack.c.l.b16 %v859
      %v952 = vunpack.c.l.b16 %v860
      %v953 = vunpack.c.l.b16 %v861
      %v954 = vunpack.c.l.b16 %v862
      %v955 = vunpack.c.l.b16 %v863
      %v956 = vunpack.c.l.b16 %v864
      %v957 = vunpack.c.l.b16 %v865
      %v958 = vunpack.c.l.b16 %v866
      %v959 = vunpack.c.l.b16 %v867
      %v960 = vunpack.c.l.b16 %v868
      %v961 = vunpack.c.l.b16 %v869
      %v962 = vunpack.c.l.b16 %v870
      %v963 = vunpack.c.l.b16 %v871
      %v964 = vunpack.c.l.b16 %v872
      %v965 = vunpack.c.l.b16 %v873
      %v966 = vunpack.c.l.b16 %v874
      %v967 = vunpack.c.l.b16 %v875
      %v968 = vunpack.c.l.b16 %v876
      %v969 = vunpack.c.l.b16 %v877
      %v970 = vunpack.c.l.b16 %v878
      %v971 = vunpack.c.l.b16 %v879
      %v972 = vunpack.c.l.b16 %v880
      %v973 = vunpack.c.l.b16 %v881
      %v974 = vunpack.c.l.b16 %v882
      %v975 = vunpack.c.l.b16 %v883
      %v976 = vunpack.c.l.b16 %v884
      %v977 = vunpack.c.l.b16 %v885
      %v978 = vpack.c.b16 %v943, %v942
      %v979 = vpack.c.b16 %v945, %v944
      %v980 = vpack.c.b16 %v947, %v946
      %v981 = vpack.c.b16 %v949, %v948
      %v982 = vpack.c.b16 %v951, %v950
      %v983 = vpack.c.b16 %v953, %v952
      %v984 = vpack.c.b16 %v955, %v954
      %v985 = vpack.c.b16 %v957, %v956
      %v986 = vpack.c.b16 %v959, %v958
      %v987 = vpack.c.b16 %v961, %v960
      %v988 = vpack.c.b16 %v963, %v962
      %v989 = vpack.c.b16 %v965, %v964
      %v990 = vpack.c.b16 %v967, %v966
      %v991 = vpack.c.b16 %v969, %v968
      %v992 = vpack.c.b16 %v971, %v970
      %v993 = vpack.c.b16 %v973, %v972
      %v994 = vpack.c.b16 %v975, %v974
      %v995 = vpack.c.b16 %v977, %v976
      %v1015 = vsel %vm567, %v903, 0
      %1017 = vmatprep.subr.bf16.mxu0 0
      %1018 = vmatpush1.bf16.msra.mxu0 %v978
      %1019 = vmatprep.subr.bf16.mxu0 0
      %1020 = vmatpush1.bf16.msra.mxu0 %v979
      %1021 = vmatprep.subr.bf16.mxu0 0
      %1022 = vmatpush1.bf16.msra.mxu0 %v980
      %1023 = vmatprep.subr.bf16.mxu0 0
      %1024 = vmatpush1.bf16.msra.mxu0 %v981
      %1025 = vmatprep.subr.bf16.mxu0 0
      %1026 = vmatpush1.bf16.msra.mxu0 %v982
      %1027 = vmatprep.subr.bf16.mxu0 0
      %1028 = vmatpush1.bf16.msra.mxu0 %v983
      %1029 = vmatprep.subr.bf16.mxu0 0
      %1030 = vmatpush1.bf16.msra.mxu0 %v984
      %1031 = vmatprep.subr.bf16.mxu0 0
      %1032 = vmatpush1.bf16.msra.mxu0 %v985
      %1033 = vmatprep.subr.bf16.mxu0 0
      %1034 = vmatpush1.bf16.msra.mxu0 %v986
      %1035 = vmatprep.subr.bf16.mxu0 0
      %1036 = vmatpush1.bf16.msra.mxu0 %v987
      %1037 = vmatprep.subr.bf16.mxu0 0
      %1038 = vmatpush1.bf16.msra.mxu0 %v988
      %1039 = vmatprep.subr.bf16.mxu0 0
      %1040 = vmatpush1.bf16.msra.mxu0 %v989
      %1041 = vmatprep.subr.bf16.mxu0 0
      %1042 = vmatpush1.bf16.msra.mxu0 %v990
      %1043 = vmatprep.subr.bf16.mxu0 0
      %1044 = vmatpush1.bf16.msra.mxu0 %v991
      %1045 = vmatprep.subr.bf16.mxu0 0
      %1046 = vmatpush1.bf16.msra.mxu0 %v992
      %1047 = vmatprep.subr.bf16.mxu0 0
      %1048 = vmatpush1.bf16.msra.mxu0 %v993
      %1049 = vmatprep.mubr.bf16.mxu0 %v900
      %1050 = vmatmul.mubr.bf16.gmra.mrb[0].mxu0 %v897
      %v1051 = vpop.f32.mrb[0].mxu0
      %v1052 = vadd.f32 0.0, %v1051
      %v1053 = vpop.f32.mrb[0].mxu0
      %v1054 = vpop.f32.mrb[0].mxu0
      %v1055 = vadd.f32 0.0, %v1054
      %v1056 = vpop.f32.mrb[0].mxu0
      %1057 = vdwg.mxu0
      %1058 = vmatprep.subr.bf16.mxu0 0
      %1059 = vmatpush1.bf16.msra.mxu0 %v994
      %1060 = vmatprep.subr.bf16.mxu0 0
      %1061 = vmatpush1.bf16.msra.mxu0 %v995
      %1062 = vmatprep.subr.bf16.mxu0 0
      %1063 = vmatpush1.bf16.msra.mxu0 0
      %1064 = vmatprep.subr.bf16.mxu0 0
      %1065 = vmatpush1.bf16.msra.mxu0 0
      %1066 = vmatprep.subr.bf16.mxu0 0
      %1067 = vmatpush1.bf16.msra.mxu0 0
      %1068 = vmatprep.subr.bf16.mxu0 0
      %1069 = vmatpush1.bf16.msra.mxu0 0
      %1070 = vmatprep.subr.bf16.mxu0 0
      %1071 = vmatpush1.bf16.msra.mxu0 0
      %1072 = vmatprep.subr.bf16.mxu0 0
      %1073 = vmatpush1.bf16.msra.mxu0 0
      %1074 = vmatprep.subr.bf16.mxu0 0
      %1075 = vmatpush1.bf16.msra.mxu0 0
      %1076 = vmatprep.subr.bf16.mxu0 0
      %1077 = vmatpush1.bf16.msra.mxu0 0
      %1078 = vmatprep.subr.bf16.mxu0 0
      %1079 = vmatpush1.bf16.msra.mxu0 0
      %1080 = vmatprep.subr.bf16.mxu0 0
      %1081 = vmatpush1.bf16.msra.mxu0 0
      %1082 = vmatprep.subr.bf16.mxu0 0
      %1083 = vmatpush1.bf16.msra.mxu0 0
      %1084 = vmatprep.subr.bf16.mxu0 0
      %1085 = vmatpush1.bf16.msra.mxu0 0
      %1086 = vmatprep.subr.bf16.mxu0 0
      %1087 = vmatpush1.bf16.msra.mxu0 0
      %1088 = vmatprep.subr.bf16.mxu0 0
      %1089 = vmatpush1.bf16.msra.mxu0 0
      %1090 = vmatprep.mubr.bf16.mxu0 0
      %1091 = vmatmul.mubr.bf16.gmra.mrb[0].mxu0 %v1015
      %v1092 = vpop.f32.mrb[0].mxu0
      %v1093 = vadd.f32 %v1052, %v1092
      %v1094 = vpop.f32.mrb[0].mxu0
      %v1095 = vpop.f32.mrb[0].mxu0
      %v1096 = vadd.f32 %v1055, %v1095
      %v1097 = vpop.f32.mrb[0].mxu0
      %1098 = vdwg.mxu0
      %v1099 = vadd.f32 %v841, %v1093
      %v1100 = vadd.f32 %v844, %v1096
      %v1101 = vld [vmem:[%s308] sm:$0xff]
      %v1102 = vld [vmem:[%s308 + $0x8] sm:$0xff]
      %v1103 = vld [vmem:[%s4] sm:$0xf]
      %v1104 = vld [vmem:[%s4 + $0x4] sm:$0xf]
      %v1105 = vld [vmem:[%s4 + $0x8] sm:$0xf]
      %v1106 = vld [vmem:[%s4 + $0xc] sm:$0xf]
      %v1107 = vld [vmem:[%s4 + $0x10] sm:$0xf]
      %v1108 = vld [vmem:[%s4 + $0x14] sm:$0xf]
      %v1109 = vld [vmem:[%s4 + $0x18] sm:$0xf]
      %v1110 = vld [vmem:[%s4 + $0x1c] sm:$0xf]
      %v1111 = vld [vmem:[%s4 + $0x20] sm:$0xf]
      %v1112 = vld [vmem:[%s4 + $0x24] sm:$0xf]
      %v1113 = vld [vmem:[%s4 + $0x28] sm:$0xf]
      %v1114 = vld [vmem:[%s4 + $0x2c] sm:$0xf]
      %v1115 = vld [vmem:[%s4 + $0x30] sm:$0xf]
      %v1116 = vld [vmem:[%s4 + $0x34] sm:$0xf]
      %v1117 = vld [vmem:[%s4 + $0x38] sm:$0xf]
      %v1118 = vld [vmem:[%s4 + $0x3c] sm:$0xf]
      %v1119 = vld [vmem:[%s4 + $0x40] sm:$0xf]
      %v1120 = vld [vmem:[%s4 + $0x44] sm:$0xf]
      %v1123 = vunpack.c.l.b16 %v1101
      %v1124 = vunpack.c.h.b16 %v1101
      %v1125 = vunpack.c.l.b16 %v1102
      %v1126 = vunpack.c.h.b16 %v1102
      %v1127 = vpack.c.b16 %v1125, %v1123
      %v1128 = vpack.c.b16 %v1126, %v1124
      %v1148 = vunpack.c.l.b16 %v1103
      %v1149 = vunpack.c.l.b16 %v1104
      %v1150 = vunpack.c.l.b16 %v1105
      %v1151 = vunpack.c.l.b16 %v1106
      %v1152 = vunpack.c.l.b16 %v1107
      %v1153 = vunpack.c.l.b16 %v1108
      %v1154 = vunpack.c.l.b16 %v1109
      %v1155 = vunpack.c.l.b16 %v1110
      %v1156 = vunpack.c.l.b16 %v1111
      %v1157 = vunpack.c.l.b16 %v1112
      %v1158 = vunpack.c.l.b16 %v1113
      %v1159 = vunpack.c.l.b16 %v1114
      %v1160 = vunpack.c.l.b16 %v1115
      %v1161 = vunpack.c.l.b16 %v1116
      %v1162 = vunpack.c.l.b16 %v1117
      %v1163 = vunpack.c.l.b16 %v1118
      %v1164 = vunpack.c.l.b16 %v1119
      %v1165 = vunpack.c.l.b16 %v1120
      %v1166 = vpack.c.b16 %v1149, %v1148
      %v1167 = vpack.c.b16 %v1151, %v1150
      %v1168 = vpack.c.b16 %v1153, %v1152
      %v1169 = vpack.c.b16 %v1155, %v1154
      %v1170 = vpack.c.b16 %v1157, %v1156
      %v1171 = vpack.c.b16 %v1159, %v1158
      %v1172 = vpack.c.b16 %v1161, %v1160
      %v1173 = vpack.c.b16 %v1163, %v1162
      %v1174 = vpack.c.b16 %v1165, %v1164
      %vm1184 = vcmask 130048
      %v1186 = vsel %vm1184, %v1128, 0
      %1188 = vmatprep.subr.bf16.mxu0 0
      %1189 = vmatpush1.bf16.msra.mxu0 %v1166
      %1190 = vmatprep.subr.bf16.mxu0 0
      %1191 = vmatpush1.bf16.msra.mxu0 %v1167
      %1192 = vmatprep.subr.bf16.mxu0 0
      %1193 = vmatpush1.bf16.msra.mxu0 %v1168
      %1194 = vmatprep.subr.bf16.mxu0 0
      %1195 = vmatpush1.bf16.msra.mxu0 %v1169
      %1196 = vmatprep.subr.bf16.mxu0 0
      %1197 = vmatpush1.bf16.msra.mxu0 %v1170
      %1198 = vmatprep.subr.bf16.mxu0 0
      %1199 = vmatpush1.bf16.msra.mxu0 %v1171
      %1200 = vmatprep.subr.bf16.mxu0 0
      %1201 = vmatpush1.bf16.msra.mxu0 %v1172
      %1202 = vmatprep.subr.bf16.mxu0 0
      %1203 = vmatpush1.bf16.msra.mxu0 %v1173
      %1204 = vmatprep.subr.bf16.mxu0 0
      %1205 = vmatpush1.bf16.msra.mxu0 %v1174
      %1206 = vmatprep.subr.bf16.mxu0 0
      %1207 = vmatpush1.bf16.msra.mxu0 0
      %1208 = vmatprep.subr.bf16.mxu0 0
      %1209 = vmatpush1.bf16.msra.mxu0 0
      %1210 = vmatprep.subr.bf16.mxu0 0
      %1211 = vmatpush1.bf16.msra.mxu0 0
      %1212 = vmatprep.subr.bf16.mxu0 0
      %1213 = vmatpush1.bf16.msra.mxu0 0
      %1214 = vmatprep.subr.bf16.mxu0 0
      %1215 = vmatpush1.bf16.msra.mxu0 0
      %1216 = vmatprep.subr.bf16.mxu0 0
      %1217 = vmatpush1.bf16.msra.mxu0 0
      %1218 = vmatprep.subr.bf16.mxu0 0
      %1219 = vmatpush1.bf16.msra.mxu0 0
      %1220 = vmatprep.mubr.bf16.mxu0 %v1186
      %1221 = vmatmul.mubr.bf16.gmra.mrb[0].mxu0 %v1127
      %v1222 = vpop.f32.mrb[0].mxu0
      %v1223 = vadd.f32 0.0, %v1222
      %v1224 = vpop.f32.mrb[0].mxu0
      %v1225 = vpop.f32.mrb[0].mxu0
      %v1226 = vadd.f32 0.0, %v1225
      %v1227 = vpop.f32.mrb[0].mxu0
      %1228 = vdwg.mxu0
      %v1229 = vadd.f32 %v1099, %v1223
      %v1230 = vadd.f32 %v1100, %v1226
      %v1231 = vld [vmem:[%s308] sm:$0xff]
      %v1232 = vld [vmem:[%s308 + $0x8] sm:$0xff]
      %v1233 = vld [vmem:[%s308 + $0x10] sm:$0x11]
      %s1234 = scalar_lea.vmem %s4, 72
      %v1235 = vld [vmem:[%s1234] sm:$0xf]
      %v1236 = vld [vmem:[%s1234 + $0x4] sm:$0xf]
      %v1237 = vld [vmem:[%s1234 + $0x8] sm:$0xf]
      %v1238 = vld [vmem:[%s1234 + $0xc] sm:$0xf]
      %v1239 = vld [vmem:[%s1234 + $0x10] sm:$0xf]
      %v1240 = vld [vmem:[%s1234 + $0x14] sm:$0xf]
      %v1241 = vld [vmem:[%s1234 + $0x18] sm:$0xf]
      %v1242 = vld [vmem:[%s1234 + $0x1c] sm:$0xf]
      %v1243 = vld [vmem:[%s1234 + $0x20] sm:$0xf]
      %v1244 = vld [vmem:[%s1234 + $0x24] sm:$0xf]
      %v1245 = vld [vmem:[%s1234 + $0x28] sm:$0xf]
      %v1246 = vld [vmem:[%s1234 + $0x2c] sm:$0xf]
      %v1247 = vld [vmem:[%s1234 + $0x30] sm:$0xf]
      %v1248 = vld [vmem:[%s1234 + $0x34] sm:$0xf]
      %v1249 = vld [vmem:[%s1234 + $0x38] sm:$0xf]
      %v1250 = vld [vmem:[%s1234 + $0x3c] sm:$0xf]
      %v1251 = vld [vmem:[%s1234 + $0x40] sm:$0xf]
      %v1252 = vld [vmem:[%s1234 + $0x44] sm:$0xf]
      %v1256 = vunpack.c.l.b16 %v1231
      %v1257 = vunpack.c.h.b16 %v1231
      %v1258 = vunpack.c.l.b16 %v1232
      %v1259 = vunpack.c.h.b16 %v1232
      %v1260 = vunpack.c.l.b16 %v1233
      %v1261 = vunpack.c.h.b16 %v1233
      %v1262 = vpack.c.b16 %v1258, %v1256
      %v1263 = vpack.c.b16 %v1259, %v1257
      %v1264 = vpack.c.b16 %v1260, %v1260
      %v1265 = vpack.c.b16 %v1261, %v1261
      %v1267 = vshrl.u32 %v1262, 16
      %v1269 = vshll.u32 %v1262, 16
      %v1271 = vrot.slane %v1269, 1
      %v1272 = vor.u32 %v1267, %v1271
      %v1274 = vshll.u32 %v1264, 16
      %v1276 = vrot.slane %v1274, 1
      %v1277 = vsel %vm420, %v1272, %v1276
      %v1279 = vshrl.u32 %v1263, 16
      %v1281 = vshll.u32 %v1263, 16
      %v1283 = vrot.slane %v1281, 1
      %v1284 = vor.u32 %v1279, %v1283
      %v1286 = vshll.u32 %v1265, 16
      %v1288 = vrot.slane %v1286, 1
      %v1289 = vsel %vm420, %v1284, %v1288
      %v1309 = vunpack.c.l.b16 %v1235
      %v1310 = vunpack.c.l.b16 %v1236
      %v1311 = vunpack.c.l.b16 %v1237
      %v1312 = vunpack.c.l.b16 %v1238
      %v1313 = vunpack.c.l.b16 %v1239
      %v1314 = vunpack.c.l.b16 %v1240
      %v1315 = vunpack.c.l.b16 %v1241
      %v1316 = vunpack.c.l.b16 %v1242
      %v1317 = vunpack.c.l.b16 %v1243
      %v1318 = vunpack.c.l.b16 %v1244
      %v1319 = vunpack.c.l.b16 %v1245
      %v1320 = vunpack.c.l.b16 %v1246
      %v1321 = vunpack.c.l.b16 %v1247
      %v1322 = vunpack.c.l.b16 %v1248
      %v1323 = vunpack.c.l.b16 %v1249
      %v1324 = vunpack.c.l.b16 %v1250
      %v1325 = vunpack.c.l.b16 %v1251
      %v1326 = vunpack.c.l.b16 %v1252
      %v1327 = vpack.c.b16 %v1310, %v1309
      %v1328 = vpack.c.b16 %v1312, %v1311
      %v1329 = vpack.c.b16 %v1314, %v1313
      %v1330 = vpack.c.b16 %v1316, %v1315
      %v1331 = vpack.c.b16 %v1318, %v1317
      %v1332 = vpack.c.b16 %v1320, %v1319
      %v1333 = vpack.c.b16 %v1322, %v1321
      %v1334 = vpack.c.b16 %v1324, %v1323
      %v1335 = vpack.c.b16 %v1326, %v1325
      %v1346 = vsel %vm1184, %v1289, 0
      %1348 = vmatprep.subr.bf16.mxu0 0
      %1349 = vmatpush1.bf16.msra.mxu0 %v1327
      %1350 = vmatprep.subr.bf16.mxu0 0
      %1351 = vmatpush1.bf16.msra.mxu0 %v1328
      %1352 = vmatprep.subr.bf16.mxu0 0
      %1353 = vmatpush1.bf16.msra.mxu0 %v1329
      %1354 = vmatprep.subr.bf16.mxu0 0
      %1355 = vmatpush1.bf16.msra.mxu0 %v1330
      %1356 = vmatprep.subr.bf16.mxu0 0
      %1357 = vmatpush1.bf16.msra.mxu0 %v1331
      %1358 = vmatprep.subr.bf16.mxu0 0
      %1359 = vmatpush1.bf16.msra.mxu0 %v1332
      %1360 = vmatprep.subr.bf16.mxu0 0
      %1361 = vmatpush1.bf16.msra.mxu0 %v1333
      %1362 = vmatprep.subr.bf16.mxu0 0
      %1363 = vmatpush1.bf16.msra.mxu0 %v1334
      %1364 = vmatprep.subr.bf16.mxu0 0
      %1365 = vmatpush1.bf16.msra.mxu0 %v1335
      %1366 = vmatprep.subr.bf16.mxu0 0
      %1367 = vmatpush1.bf16.msra.mxu0 0
      %1368 = vmatprep.subr.bf16.mxu0 0
      %1369 = vmatpush1.bf16.msra.mxu0 0
      %1370 = vmatprep.subr.bf16.mxu0 0
      %1371 = vmatpush1.bf16.msra.mxu0 0
      %1372 = vmatprep.subr.bf16.mxu0 0
      %1373 = vmatpush1.bf16.msra.mxu0 0
      %1374 = vmatprep.subr.bf16.mxu0 0
      %1375 = vmatpush1.bf16.msra.mxu0 0
      %1376 = vmatprep.subr.bf16.mxu0 0
      %1377 = vmatpush1.bf16.msra.mxu0 0
      %1378 = vmatprep.subr.bf16.mxu0 0
      %1379 = vmatpush1.bf16.msra.mxu0 0
      %1380 = vmatprep.mubr.bf16.mxu0 %v1346
      %1381 = vmatmul.mubr.bf16.gmra.mrb[0].mxu0 %v1277
      %v1382 = vpop.f32.mrb[0].mxu0
      %v1383 = vadd.f32 0.0, %v1382
      %v1384 = vpop.f32.mrb[0].mxu0
      %v1385 = vpop.f32.mrb[0].mxu0
      %v1386 = vadd.f32 0.0, %v1385
      %v1387 = vpop.f32.mrb[0].mxu0
      %1388 = vdwg.mxu0
      %v1389 = vadd.f32 %v1229, %v1383
      %v1390 = vadd.f32 %v1230, %v1386
      %v1391 = vld [vmem:[%s308] sm:$0xee]
      %s1392 = scalar_lea.vmem %s4, 144
      %v1393 = vld [vmem:[%s1392] sm:$0xf]
      %v1394 = vld [vmem:[%s1392 + $0x4] sm:$0xf]
      %v1395 = vld [vmem:[%s1392 + $0x8] sm:$0xf]
      %v1396 = vld [vmem:[%s1392 + $0xc] sm:$0xf]
      %v1397 = vld [vmem:[%s1392 + $0x10] sm:$0xf]
      %v1398 = vld [vmem:[%s1392 + $0x14] sm:$0xf]
      %v1399 = vld [vmem:[%s1392 + $0x18] sm:$0xf]
      %v1400 = vld [vmem:[%s1392 + $0x1c] sm:$0xf]
      %v1401 = vld [vmem:[%s1392 + $0x20] sm:$0xf]
      %v1402 = vld [vmem:[%s1392 + $0x24] sm:$0xf]
      %v1403 = vld [vmem:[%s1392 + $0x28] sm:$0xf]
      %v1404 = vld [vmem:[%s1392 + $0x2c] sm:$0xf]
      %v1405 = vld [vmem:[%s1392 + $0x30] sm:$0xf]
      %v1406 = vld [vmem:[%s1392 + $0x34] sm:$0xf]
      %v1407 = vld [vmem:[%s1392 + $0x38] sm:$0xf]
      %v1408 = vld [vmem:[%s1392 + $0x3c] sm:$0xf]
      %v1409 = vld [vmem:[%s1392 + $0x40] sm:$0xf]
      %v1410 = vld [vmem:[%s1392 + $0x44] sm:$0xf]
      %v1412 = vunpack.c.l.b16 %v1391
      %v1413 = vunpack.c.h.b16 %v1391
      %v1414 = vpack.c.b16 %v1258, %v1412
      %v1415 = vpack.c.b16 %v1259, %v1413
      %v1416 = vrot.slane %v1414, 1
      %v1417 = vrot.slane %v1264, 1
      %v1418 = vsel %vm894, %v1416, %v1417
      %v1419 = vrot.slane %v1415, 1
      %v1420 = vrot.slane %v1265, 1
      %v1421 = vsel %vm894, %v1419, %v1420
      %v1441 = vunpack.c.l.b16 %v1393
      %v1442 = vunpack.c.l.b16 %v1394
      %v1443 = vunpack.c.l.b16 %v1395
      %v1444 = vunpack.c.l.b16 %v1396
      %v1445 = vunpack.c.l.b16 %v1397
      %v1446 = vunpack.c.l.b16 %v1398
      %v1447 = vunpack.c.l.b16 %v1399
      %v1448 = vunpack.c.l.b16 %v1400
      %v1449 = vunpack.c.l.b16 %v1401
      %v1450 = vunpack.c.l.b16 %v1402
      %v1451 = vunpack.c.l.b16 %v1403
      %v1452 = vunpack.c.l.b16 %v1404
      %v1453 = vunpack.c.l.b16 %v1405
      %v1454 = vunpack.c.l.b16 %v1406
      %v1455 = vunpack.c.l.b16 %v1407
      %v1456 = vunpack.c.l.b16 %v1408
      %v1457 = vunpack.c.l.b16 %v1409
      %v1458 = vunpack.c.l.b16 %v1410
      %v1459 = vpack.c.b16 %v1442, %v1441
      %v1460 = vpack.c.b16 %v1444, %v1443
      %v1461 = vpack.c.b16 %v1446, %v1445
      %v1462 = vpack.c.b16 %v1448, %v1447
      %v1463 = vpack.c.b16 %v1450, %v1449
      %v1464 = vpack.c.b16 %v1452, %v1451
      %v1465 = vpack.c.b16 %v1454, %v1453
      %v1466 = vpack.c.b16 %v1456, %v1455
      %v1467 = vpack.c.b16 %v1458, %v1457
      %v1478 = vsel %vm1184, %v1421, 0
      %1480 = vmatprep.subr.bf16.mxu0 0
      %1481 = vmatpush1.bf16.msra.mxu0 %v1459
      %1482 = vmatprep.subr.bf16.mxu0 0
      %1483 = vmatpush1.bf16.msra.mxu0 %v1460
      %1484 = vmatprep.subr.bf16.mxu0 0
      %1485 = vmatpush1.bf16.msra.mxu0 %v1461
      %1486 = vmatprep.subr.bf16.mxu0 0
      %1487 = vmatpush1.bf16.msra.mxu0 %v1462
      %1488 = vmatprep.subr.bf16.mxu0 0
      %1489 = vmatpush1.bf16.msra.mxu0 %v1463
      %1490 = vmatprep.subr.bf16.mxu0 0
      %1491 = vmatpush1.bf16.msra.mxu0 %v1464
      %1492 = vmatprep.subr.bf16.mxu0 0
      %1493 = vmatpush1.bf16.msra.mxu0 %v1465
      %1494 = vmatprep.subr.bf16.mxu0 0
      %1495 = vmatpush1.bf16.msra.mxu0 %v1466
      %1496 = vmatprep.subr.bf16.mxu0 0
      %1497 = vmatpush1.bf16.msra.mxu0 %v1467
      %1498 = vmatprep.subr.bf16.mxu0 0
      %1499 = vmatpush1.bf16.msra.mxu0 0
      %1500 = vmatprep.subr.bf16.mxu0 0
      %1501 = vmatpush1.bf16.msra.mxu0 0
      %1502 = vmatprep.subr.bf16.mxu0 0
      %1503 = vmatpush1.bf16.msra.mxu0 0
      %1504 = vmatprep.subr.bf16.mxu0 0
      %1505 = vmatpush1.bf16.msra.mxu0 0
      %1506 = vmatprep.subr.bf16.mxu0 0
      %1507 = vmatpush1.bf16.msra.mxu0 0
      %1508 = vmatprep.subr.bf16.mxu0 0
      %1509 = vmatpush1.bf16.msra.mxu0 0
      %1510 = vmatprep.subr.bf16.mxu0 0
      %1511 = vmatpush1.bf16.msra.mxu0 0
      %1512 = vmatprep.mubr.bf16.mxu0 %v1478
      %1513 = vmatmul.mubr.bf16.gmra.mrb[0].mxu0 %v1418
      %v1514 = vpop.f32.mrb[0].mxu0
      %v1515 = vadd.f32 0.0, %v1514
      %v1516 = vpop.f32.mrb[0].mxu0
      %v1517 = vpop.f32.mrb[0].mxu0
      %v1518 = vadd.f32 0.0, %v1517
      %v1519 = vpop.f32.mrb[0].mxu0
      %1520 = vdwg.mxu0
      %v1521 = vadd.f32 %v1389, %v1515
      %v1522 = vadd.f32 %v1390, %v1518
      %v1523 = vld [vmem:[%s313] sm:$0xf]
      %v1524 = vld [vmem:[%s313 + $0x4] sm:$0xf]
      %v1525 = vld [vmem:[%s5] sm:$0xf]
      %v1526 = vld [vmem:[%s5 + $0x4] sm:$0xf]
      %v1527 = vld [vmem:[%s5 + $0x8] sm:$0xf]
      %v1528 = vld [vmem:[%s5 + $0xc] sm:$0xf]
      %v1529 = vld [vmem:[%s5 + $0x10] sm:$0xf]
      %v1530 = vld [vmem:[%s5 + $0x14] sm:$0xf]
      %v1531 = vld [vmem:[%s5 + $0x18] sm:$0x7]
      %v1534 = vunpack.c.l.b16 %v1523
      %v1535 = vunpack.c.l.b16 %v1524
      %v1536 = vpack.c.b16 %v1535, %v1534
      %v1544 = vunpack.c.l.b16 %v1525
      %v1545 = vunpack.c.l.b16 %v1526
      %v1546 = vunpack.c.l.b16 %v1527
      %v1547 = vunpack.c.l.b16 %v1528
      %v1548 = vunpack.c.l.b16 %v1529
      %v1549 = vunpack.c.l.b16 %v1530
      %v1550 = vunpack.c.l.b16 %v1531
      %v1551 = vpack.c.b16 %v1545, %v1544
      %v1552 = vpack.c.b16 %v1547, %v1546
      %v1553 = vpack.c.b16 %v1549, %v1548
      %v1554 = vpack.c.b16 %v1550, %v1550
      %vm1558 = vcmask 441344
      %v1560 = vsel %vm1558, %v1536, 0
      %vm1562 = vcmask 1042432
      %v1564 = vsel %vm1562, %v1554, 0
      %1566 = vmatprep.subr.bf16.mxu0 0
      %1567 = vmatpush1.bf16.msra.mxu0 %v1551
      %1568 = vmatprep.subr.bf16.mxu0 0
      %1569 = vmatpush1.bf16.msra.mxu0 %v1552
      %1570 = vmatprep.subr.bf16.mxu0 0
      %1571 = vmatpush1.bf16.msra.mxu0 %v1553
      %1572 = vmatprep.subr.bf16.mxu0 0
      %1573 = vmatpush1.bf16.msra.mxu0 %v1564
      %1574 = vmatprep.subr.bf16.mxu0 0
      %1575 = vmatpush1.bf16.msra.mxu0 0
      %1576 = vmatprep.subr.bf16.mxu0 0
      %1577 = vmatpush1.bf16.msra.mxu0 0
      %1578 = vmatprep.subr.bf16.mxu0 0
      %1579 = vmatpush1.bf16.msra.mxu0 0
      %1580 = vmatprep.subr.bf16.mxu0 0
      %1581 = vmatpush1.bf16.msra.mxu0 0
      %1582 = vmatprep.subr.bf16.mxu0 0
      %1583 = vmatpush1.bf16.msra.mxu0 0
      %1584 = vmatprep.subr.bf16.mxu0 0
      %1585 = vmatpush1.bf16.msra.mxu0 0
      %1586 = vmatprep.subr.bf16.mxu0 0
      %1587 = vmatpush1.bf16.msra.mxu0 0
      %1588 = vmatprep.subr.bf16.mxu0 0
      %1589 = vmatpush1.bf16.msra.mxu0 0
      %1590 = vmatprep.subr.bf16.mxu0 0
      %1591 = vmatpush1.bf16.msra.mxu0 0
      %1592 = vmatprep.subr.bf16.mxu0 0
      %1593 = vmatpush1.bf16.msra.mxu0 0
      %1594 = vmatprep.subr.bf16.mxu0 0
      %1595 = vmatpush1.bf16.msra.mxu0 0
      %1596 = vmatprep.subr.bf16.mxu0 0
      %1597 = vmatpush1.bf16.msra.mxu0 0
      %1598 = vmatprep.mubr.bf16.mxu0 0
      %1599 = vmatmul.mubr.bf16.gmra.mrb[0].mxu0 %v1560
      %v1600 = vpop.f32.mrb[0].mxu0
      %v1601 = vadd.f32 0.0, %v1600
      %v1602 = vpop.f32.mrb[0].mxu0
      %v1603 = vpop.f32.mrb[0].mxu0
      %v1604 = vadd.f32 0.0, %v1603
      %v1605 = vpop.f32.mrb[0].mxu0
      %1606 = vdwg.mxu0
      %v1607 = vadd.f32 %v1521, %v1601
      %v1608 = vadd.f32 %v1522, %v1604
      %v1609 = vld [vmem:[%s313] sm:$0xf]
      %v1610 = vld [vmem:[%s313 + $0x4] sm:$0xf]
      %v1611 = vld [vmem:[%s313 + $0x8] sm:$0x1]
      %s1612 = scalar_lea.vmem %s5, 28
      %v1613 = vld [vmem:[%s1612] sm:$0xf]
      %v1614 = vld [vmem:[%s1612 + $0x4] sm:$0xf]
      %v1615 = vld [vmem:[%s1612 + $0x8] sm:$0xf]
      %v1616 = vld [vmem:[%s1612 + $0xc] sm:$0xf]
      %v1617 = vld [vmem:[%s1612 + $0x10] sm:$0xf]
      %v1618 = vld [vmem:[%s1612 + $0x14] sm:$0xf]
      %v1619 = vld [vmem:[%s1612 + $0x18] sm:$0x7]
      %v1623 = vunpack.c.l.b16 %v1609
      %v1624 = vunpack.c.l.b16 %v1610
      %v1625 = vunpack.c.l.b16 %v1611
      %v1626 = vpack.c.b16 %v1624, %v1623
      %v1627 = vpack.c.b16 %v1625, %v1625
      %v1629 = vshrl.u32 %v1626, 16
      %v1631 = vshll.u32 %v1626, 16
      %v1633 = vrot.slane %v1631, 1
      %v1634 = vor.u32 %v1629, %v1633
      %v1636 = vshll.u32 %v1627, 16
      %v1638 = vrot.slane %v1636, 1
      %v1639 = vsel %vm420, %v1634, %v1638
      %v1647 = vunpack.c.l.b16 %v1613
      %v1648 = vunpack.c.l.b16 %v1614
      %v1649 = vunpack.c.l.b16 %v1615
      %v1650 = vunpack.c.l.b16 %v1616
      %v1651 = vunpack.c.l.b16 %v1617
      %v1652 = vunpack.c.l.b16 %v1618
      %v1653 = vunpack.c.l.b16 %v1619
      %v1654 = vpack.c.b16 %v1648, %v1647
      %v1655 = vpack.c.b16 %v1650, %v1649
      %v1656 = vpack.c.b16 %v1652, %v1651
      %v1657 = vpack.c.b16 %v1653, %v1653
      %v1662 = vsel %vm1558, %v1639, 0
      %v1665 = vsel %vm1562, %v1657, 0
      %1667 = vmatprep.subr.bf16.mxu0 0
      %1668 = vmatpush1.bf16.msra.mxu0 %v1654
      %1669 = vmatprep.subr.bf16.mxu0 0
      %1670 = vmatpush1.bf16.msra.mxu0 %v1655
      %1671 = vmatprep.subr.bf16.mxu0 0
      %1672 = vmatpush1.bf16.msra.mxu0 %v1656
      %1673 = vmatprep.subr.bf16.mxu0 0
      %1674 = vmatpush1.bf16.msra.mxu0 %v1665
      %1675 = vmatprep.subr.bf16.mxu0 0
      %1676 = vmatpush1.bf16.msra.mxu0 0
      %1677 = vmatprep.subr.bf16.mxu0 0
      %1678 = vmatpush1.bf16.msra.mxu0 0
      %1679 = vmatprep.subr.bf16.mxu0 0
      %1680 = vmatpush1.bf16.msra.mxu0 0
      %1681 = vmatprep.subr.bf16.mxu0 0
      %1682 = vmatpush1.bf16.msra.mxu0 0
      %1683 = vmatprep.subr.bf16.mxu0 0
      %1684 = vmatpush1.bf16.msra.mxu0 0
      %1685 = vmatprep.subr.bf16.mxu0 0
      %1686 = vmatpush1.bf16.msra.mxu0 0
      %1687 = vmatprep.subr.bf16.mxu0 0
      %1688 = vmatpush1.bf16.msra.mxu0 0
      %1689 = vmatprep.subr.bf16.mxu0 0
      %1690 = vmatpush1.bf16.msra.mxu0 0
      %1691 = vmatprep.subr.bf16.mxu0 0
      %1692 = vmatpush1.bf16.msra.mxu0 0
      %1693 = vmatprep.subr.bf16.mxu0 0
      %1694 = vmatpush1.bf16.msra.mxu0 0
      %1695 = vmatprep.subr.bf16.mxu0 0
      %1696 = vmatpush1.bf16.msra.mxu0 0
      %1697 = vmatprep.subr.bf16.mxu0 0
      %1698 = vmatpush1.bf16.msra.mxu0 0
      %1699 = vmatprep.mubr.bf16.mxu0 0
      %1700 = vmatmul.mubr.bf16.gmra.mrb[0].mxu0 %v1662
      %v1701 = vpop.f32.mrb[0].mxu0
      %v1702 = vadd.f32 0.0, %v1701
      %v1703 = vpop.f32.mrb[0].mxu0
      %v1704 = vpop.f32.mrb[0].mxu0
      %v1705 = vadd.f32 0.0, %v1704
      %v1706 = vpop.f32.mrb[0].mxu0
      %1707 = vdwg.mxu0
      %v1708 = vadd.f32 %v1607, %v1702
      %v1709 = vadd.f32 %v1608, %v1705
      %v1710 = vld [vmem:[%s313] sm:$0xe]
      %s1711 = scalar_lea.vmem %s5, 56
      %v1712 = vld [vmem:[%s1711] sm:$0xf]
      %v1713 = vld [vmem:[%s1711 + $0x4] sm:$0xf]
      %v1714 = vld [vmem:[%s1711 + $0x8] sm:$0xf]
      %v1715 = vld [vmem:[%s1711 + $0xc] sm:$0xf]
      %v1716 = vld [vmem:[%s1711 + $0x10] sm:$0xf]
      %v1717 = vld [vmem:[%s1711 + $0x14] sm:$0xf]
      %v1718 = vld [vmem:[%s1711 + $0x18] sm:$0x7]
      %v1720 = vunpack.c.l.b16 %v1710
      %v1721 = vpack.c.b16 %v1624, %v1720
      %v1722 = vrot.slane %v1721, 1
      %v1723 = vrot.slane %v1627, 1
      %v1724 = vsel %vm894, %v1722, %v1723
      %v1732 = vunpack.c.l.b16 %v1712
      %v1733 = vunpack.c.l.b16 %v1713
      %v1734 = vunpack.c.l.b16 %v1714
      %v1735 = vunpack.c.l.b16 %v1715
      %v1736 = vunpack.c.l.b16 %v1716
      %v1737 = vunpack.c.l.b16 %v1717
      %v1738 = vunpack.c.l.b16 %v1718
      %v1739 = vpack.c.b16 %v1733, %v1732
      %v1740 = vpack.c.b16 %v1735, %v1734
      %v1741 = vpack.c.b16 %v1737, %v1736
      %v1742 = vpack.c.b16 %v1738, %v1738
      %v1747 = vsel %vm1558, %v1724, 0
      %v1750 = vsel %vm1562, %v1742, 0
      %1752 = vmatprep.subr.bf16.mxu0 0
      %1753 = vmatpush1.bf16.msra.mxu0 %v1739
      %1754 = vmatprep.subr.bf16.mxu0 0
      %1755 = vmatpush1.bf16.msra.mxu0 %v1740
      %1756 = vmatprep.subr.bf16.mxu0 0
      %1757 = vmatpush1.bf16.msra.mxu0 %v1741
      %1758 = vmatprep.subr.bf16.mxu0 0
      %1759 = vmatpush1.bf16.msra.mxu0 %v1750
      %1760 = vmatprep.subr.bf16.mxu0 0
      %1761 = vmatpush1.bf16.msra.mxu0 0
      %1762 = vmatprep.subr.bf16.mxu0 0
      %1763 = vmatpush1.bf16.msra.mxu0 0
      %1764 = vmatprep.subr.bf16.mxu0 0
      %1765 = vmatpush1.bf16.msra.mxu0 0
      %1766 = vmatprep.subr.bf16.mxu0 0
      %1767 = vmatpush1.bf16.msra.mxu0 0
      %1768 = vmatprep.subr.bf16.mxu0 0
      %1769 = vmatpush1.bf16.msra.mxu0 0
      %1770 = vmatprep.subr.bf16.mxu0 0
      %1771 = vmatpush1.bf16.msra.mxu0 0
      %1772 = vmatprep.subr.bf16.mxu0 0
      %1773 = vmatpush1.bf16.msra.mxu0 0
      %1774 = vmatprep.subr.bf16.mxu0 0
      %1775 = vmatpush1.bf16.msra.mxu0 0
      %1776 = vmatprep.subr.bf16.mxu0 0
      %1777 = vmatpush1.bf16.msra.mxu0 0
      %1778 = vmatprep.subr.bf16.mxu0 0
      %1779 = vmatpush1.bf16.msra.mxu0 0
      %1780 = vmatprep.subr.bf16.mxu0 0
      %1781 = vmatpush1.bf16.msra.mxu0 0
      %1782 = vmatprep.subr.bf16.mxu0 0
      %1783 = vmatpush1.bf16.msra.mxu0 0
      %1784 = vmatprep.mubr.bf16.mxu0 0
      %1785 = vmatmul.mubr.bf16.gmra.mrb[0].mxu0 %v1747
      %v1786 = vpop.f32.mrb[0].mxu0
      %v1787 = vadd.f32 0.0, %v1786
      %v1788 = vpop.f32.mrb[0].mxu0
      %v1789 = vpop.f32.mrb[0].mxu0
      %v1790 = vadd.f32 0.0, %v1789
      %v1791 = vpop.f32.mrb[0].mxu0
      %1792 = vdwg.mxu0
      %v1793 = vadd.f32 %v1708, %v1787
      %v1794 = vadd.f32 %v1709, %v1790
      %v1795 = vld [vmem:[%s6] sm:$0x1]
      %v1797 = vlaneseq
      %v1798 = vshrl.u32 %v1797, 7
      %v1799 = vsub.s32 0, %v1798
      %v1800 = vrot.slane %v1795, %v1799
      %v1802 = vadd.f32 %v1793, %v1800
      %v1803 = vadd.f32 %v1794, %v1800
      %v1804 = vmax.f32 %v1802, 0.0
      %v1805 = vmax.f32 %v1803, 0.0
      %1806 = vst [vmem:[%s318] sm:$0xff] %v1804
      %1807 = vst [vmem:[%s318 + $0x8] sm:$0xff] %v1805
      %p1808 = scmp.lt.s32.totalorder %s18, 1
      %s1809 = scalar_select %p1808, %s18, 1
      %s1810 = smul.addr %s1809, 2
      %s1811 = smul.addr %s1810, 8
      %s1812 = scalar_lea.vmem %s7, %s1811
      // Predicated region
      $region49: #{unet_forward.19} parent=47 // pred_check
        %p1813 = pneg %p198
      $region50: #{unet_forward.19} parent=47 // pred_check_branch
        %1815 = sbr.rel (%p1813) target = $region52
      $region51: #{unet_forward.19} parent=47 // pred_region
        _
      $region52: #{unet_forward.19} parent=47 // pred_fallthru
        _
    $region48: #{unet_forward.19} parent=5 // pred_fallthru
      _
    %p1816 = scmp.le.s32.totalorder 2, %s13
    // Predicated region
    $region53: #{unet_forward.19} parent=5 // pred_check
      %p1817 = pneg %p1816
    $region54: #{unet_forward.19} parent=5 // pred_check_branch
      %1819 = sbr.rel (%p1817) target = $region56
    $region55: #{unet_forward.19} parent=5 // pred_region
      %s1820 = ssub.s32 %s13, 2
      // Predicated region
      $region57: #{unet_forward.19} parent=55 // pred_check
        %p1821 = pneg %p204
      $region58: #{unet_forward.19} parent=55 // pred_check_branch
        %1823 = sbr.rel (%p1821) target = $region60
      $region59: #{unet_forward.19} parent=55 // pred_region
        %p1824 = scmp.lt.s32.totalorder %s19, 1
        %s1825 = scalar_select %p1824, %s19, 1
        %s1826 = smul.addr %s1825, 2
        %s1827 = smul.addr %s1826, 8
        %s1828 = scalar_lea.vmem %s7, %s1827
      $region60: #{unet_forward.19} parent=55 // pred_fallthru
        _
    $region56: #{unet_forward.19} parent=5 // pred_fallthru
      _
  $region6: #{unet_forward.19} parent=0 // loop_footer
    %s17 = sadd.s32 1, %s13
  $region7: #{unet_forward.19} parent=0 // loop_footer_branch
    %12 = sbr.rel target = $region3
  $region8: #{unet_forward.19} parent=0 // loop_exit
    _

// kernel: unet_forward.20
$region0: #{unet_forward.20}
  #allocation0 [shape = 'u32[]', space=smem, size = 0x4, offset = 0x4, fixed_abs, tag = 'smem constant byte address 0x4 - core index']
  #allocation1 [shape = 'u32[144,128]{1,0:T(1,128)}', space=vmem, size = 0x12000, scoped, tag = 'internal scratch']
  %s0 = inlined_call_operand.vmem [shape: bf16[2,18,144], index: 0, kind: input, shape index: {}]
  %s1 = inlined_call_operand.vmem [shape: bf16[3,144,128], index: 1, kind: input, shape index: {}]
  %s2 = inlined_call_operand.vmem [shape: f32[1,128], index: 2, kind: input, shape index: {}]
  %s3 = inlined_call_operand.vmem [shape: f32[2,16,128], index: 3, kind: output, shape index: {}]
  %s4 = sld [smem:[#allocation0]]
  $region45: #{unet_forward.20} parent=0
    _
  %s6 = ssub.s32 1, %s4
  %s7 = scalar_select 0, %s6, %s4
  loop: start=0, step=1, limit=4
  $region2: #{unet_forward.20} parent=0 // loop_pre_header
    _
  $region3: #{unet_forward.20} parent=0 // loop_header
    %s9 = sphi 0, %s13
    %p10 = scmp.ge.s32.totalorder %s9, 4
    %s19 = sphi 0, %s21
    %s22 = sphi 0, %s19
    %s23 = sphi 0, %s22
    %s39 = sphi 0, %s23
    %s43 = sphi 0, %s43
    %s45 = sphi 0, %s43
    %s46 = sphi 0, %s45
    %s60 = sphi 0, %s46
    %s64 = sphi 0, %s64
    %s66 = sphi 0, %s64
    %s67 = sphi 0, %s66
    %s81 = sphi 0, %s67
    %s87 = sphi 0, %s89
    %s90 = sphi 0, %s87
    %s91 = sphi 0, %s90
    %s107 = sphi 0, %s91
  $region4: #{unet_forward.20} parent=0 // loop_header_branch
    %12 = sbr.rel (%p10) target = $region8
  $region5: #{unet_forward.20} parent=0 // loop_body
    %s14 = ssub.s32 %s9, 1
    %s15 = ssub.s32 %s9, 2
    %s16 = sadd.s32 %s9, 1
    %s17 = ssub.s32 %s9, %s16
    %p18 = scmp.eq.s32.totalorder %s17, 0
    %s20 = sadd.s32 %s19, 1
    %s21 = scalar_select %p18, %s19, %s20
    %p24 = pneg %p18
    %p25 = scmp.eq.s32.totalorder %s9, 1
    %p26 = por %p24, %p25
    %p27 = scmp.ne.s32.totalorder %s19, %s22
    %p28 = scmp.eq.s32.totalorder %s9, 0
    %p29 = por %p27, %p28
    %p30 = scmp.ne.s32.totalorder %s19, %s22
    %p31 = scmp.eq.s32.totalorder %s14, 1
    %p32 = por %p30, %p31
    %p33 = scmp.ne.s32.totalorder %s22, %s23
    %p34 = scmp.eq.s32.totalorder %s14, 0
    %p35 = por %p33, %p34
    %p36 = scmp.ne.s32.totalorder %s22, %s23
    %p37 = scmp.eq.s32.totalorder %s15, 1
    %p38 = por %p36, %p37
    %p40 = scmp.ne.s32.totalorder %s23, %s39
    %p41 = scmp.eq.s32.totalorder %s15, 0
    %p42 = por %p40, %p41
    %s44 = sadd.s32 %s43, 1
    %p47 = scmp.eq.s32.totalorder %s9, 1
    %p48 = scmp.ne.s32.totalorder %s43, %s45
    %p49 = scmp.eq.s32.totalorder %s9, 0
    %p50 = por %p48, %p49
    %p51 = scmp.ne.s32.totalorder %s43, %s45
    %p52 = scmp.eq.s32.totalorder %s14, 1
    %p53 = por %p51, %p52
    %p54 = scmp.ne.s32.totalorder %s45, %s46
    %p55 = scmp.eq.s32.totalorder %s14, 0
    %p56 = por %p54, %p55
    %p57 = scmp.ne.s32.totalorder %s45, %s46
    %p58 = scmp.eq.s32.totalorder %s15, 1
    %p59 = por %p57, %p58
    %p61 = scmp.ne.s32.totalorder %s46, %s60
    %p62 = scmp.eq.s32.totalorder %s15, 0
    %p63 = por %p61, %p62
    %s65 = sadd.s32 %s64, 1
    %p68 = scmp.eq.s32.totalorder %s9, 1
    %p69 = scmp.ne.s32.totalorder %s64, %s66
    %p70 = scmp.eq.s32.totalorder %s9, 0
    %p71 = por %p69, %p70
    %p72 = scmp.ne.s32.totalorder %s64, %s66
    %p73 = scmp.eq.s32.totalorder %s14, 1
    %p74 = por %p72, %p73
    %p75 = scmp.ne.s32.totalorder %s66, %s67
    %p76 = scmp.eq.s32.totalorder %s14, 0
    %p77 = por %p75, %p76
    %p78 = scmp.ne.s32.totalorder %s66, %s67
    %p79 = scmp.eq.s32.totalorder %s15, 1
    %p80 = por %p78, %p79
    %p82 = scmp.ne.s32.totalorder %s67, %s81
    %p83 = scmp.eq.s32.totalorder %s15, 0
    %p84 = por %p82, %p83
    %s85 = ssub.s32 %s9, %s16
    %p86 = scmp.eq.s32.totalorder %s85, 0
    %s88 = sadd.s32 %s87, 1
    %s89 = scalar_select %p86, %s87, %s88
    %p92 = pneg %p86
    %p93 = scmp.eq.s32.totalorder %s9, 1
    %p94 = por %p92, %p93
    %p95 = scmp.ne.s32.totalorder %s87, %s90
    %p96 = scmp.eq.s32.totalorder %s9, 0
    %p97 = por %p95, %p96
    %p98 = scmp.ne.s32.totalorder %s87, %s90
    %p99 = scmp.eq.s32.totalorder %s14, 1
    %p100 = por %p98, %p99
    %p101 = scmp.ne.s32.totalorder %s90, %s91
    %p102 = scmp.eq.s32.totalorder %s14, 0
    %p103 = por %p101, %p102
    %p104 = scmp.ne.s32.totalorder %s90, %s91
    %p105 = scmp.eq.s32.totalorder %s15, 1
    %p106 = por %p104, %p105
    %p108 = scmp.ne.s32.totalorder %s91, %s107
    %p109 = scmp.eq.s32.totalorder %s15, 0
    %p110 = por %p108, %p109
    %p111 = scmp.le.s32.totalorder 1, %s9
    %p112 = scmp.lt.s32.totalorder %s9, 3
    %p113 = pnand %p111, %p112
    %p114 = pneg %p113
    // Predicated region
    $region9: #{unet_forward.20} parent=5 // pred_check
      _
    $region10: #{unet_forward.20} parent=5 // pred_check_branch
      %116 = sbr.rel (%p113) target = $region12
    $region11: #{unet_forward.20} parent=5 // pred_region
      %s117 = ssub.s32 %s9, 1
      // Predicated region
      $region13: #{unet_forward.20} parent=11 // pred_check
        %p118 = pneg %p56
      $region14: #{unet_forward.20} parent=11 // pred_check_branch
        %120 = sbr.rel (%p118) target = $region16
      $region15: #{unet_forward.20} parent=11 // pred_region
        _
      $region16: #{unet_forward.20} parent=11 // pred_fallthru
        _
      // Predicated region
      $region17: #{unet_forward.20} parent=11 // pred_check
        %p121 = pneg %p77
      $region18: #{unet_forward.20} parent=11 // pred_check_branch
        %123 = sbr.rel (%p121) target = $region20
      $region19: #{unet_forward.20} parent=11 // pred_region
        _
      $region20: #{unet_forward.20} parent=11 // pred_fallthru
        _
    $region12: #{unet_forward.20} parent=5 // pred_fallthru
      _
    %p124 = scmp.lt.s32.totalorder %s9, 2
    // Predicated region
    $region21: #{unet_forward.20} parent=5 // pred_check
      %p125 = pneg %p124
    $region22: #{unet_forward.20} parent=5 // pred_check_branch
      %127 = sbr.rel (%p125) target = $region24
    $region23: #{unet_forward.20} parent=5 // pred_region
      // Predicated region
      $region25: #{unet_forward.20} parent=23 // pred_check
        %p128 = pneg %p29
      $region26: #{unet_forward.20} parent=23 // pred_check_branch
        %130 = sbr.rel (%p128) target = $region28
      $region27: #{unet_forward.20} parent=23 // pred_region
        %p131 = scmp.lt.s32.totalorder %s9, 1
        %s132 = scalar_select %p131, %s9, 1
        %s133 = smul.addr %s132, 6
        %s134 = smul.addr %s133, 4
        %s135 = scalar_lea.vmem %s0, %s134
      $region28: #{unet_forward.20} parent=23 // pred_fallthru
        _
    $region24: #{unet_forward.20} parent=5 // pred_fallthru
      _
    %p136 = scmp.le.s32.totalorder 1, %s9
    %p137 = scmp.lt.s32.totalorder %s9, 3
    %p138 = pnand %p136, %p137
    %p139 = pneg %p138
    // Predicated region
    $region29: #{unet_forward.20} parent=5 // pred_check
      _
    $region30: #{unet_forward.20} parent=5 // pred_check_branch
      %141 = sbr.rel (%p138) target = $region32
    $region31: #{unet_forward.20} parent=5 // pred_region
      %s142 = ssub.s32 %s9, 1
      %p143 = scmp.lt.s32.totalorder %s14, 1
      %s144 = scalar_select %p143, %s14, 1
      %s145 = smul.addr %s144, 6
      %s146 = smul.addr %s145, 4
      %s147 = scalar_lea.vmem %s0, %s146
      %p148 = pneg %p35
      %p149 = pneg %p32
      %p150 = pneg %p56
      %p151 = pneg %p53
      %p152 = pneg %p77
      %p153 = pneg %p74
      %p154 = pneg %p103
      %p155 = pneg %p100
      %p156 = scmp.lt.s32.totalorder %s14, 1
      %s157 = scalar_select %p156, %s14, 1
      %s158 = smul.addr %s157, 2
      %s159 = smul.addr %s158, 8
      %s160 = scalar_lea.vmem %s3, %s159
      %p161 = scmp.lt.s32.totalorder %s14, 1
      %s162 = scalar_select %p161, %s14, 1
      %s163 = smul.addr %s162, 6
      %s164 = smul.addr %s163, 4
      %s165 = scalar_lea.vmem %s0, %s164
      %p166 = scmp.lt.s32.totalorder %s14, 1
      %s167 = scalar_select %p166, %s14, 1
      %s168 = smul.addr %s167, 2
      %s169 = smul.addr %s168, 8
      %s170 = scalar_lea.vmem %s3, %s169
      %v172 = vld [vmem:[%s165] sm:$0xff]
      %v173 = vld [vmem:[%s165 + $0x8] sm:$0xff]
      %v174 = vld [vmem:[%s1] sm:$0xf]
      %v175 = vld [vmem:[%s1 + $0x4] sm:$0xf]
      %v176 = vld [vmem:[%s1 + $0x8] sm:$0xf]
      %v177 = vld [vmem:[%s1 + $0xc] sm:$0xf]
      %v178 = vld [vmem:[%s1 + $0x10] sm:$0xf]
      %v179 = vld [vmem:[%s1 + $0x14] sm:$0xf]
      %v180 = vld [vmem:[%s1 + $0x18] sm:$0xf]
      %v181 = vld [vmem:[%s1 + $0x1c] sm:$0xf]
      %v182 = vld [vmem:[%s1 + $0x20] sm:$0xf]
      %v183 = vld [vmem:[%s1 + $0x24] sm:$0xf]
      %v184 = vld [vmem:[%s1 + $0x28] sm:$0xf]
      %v185 = vld [vmem:[%s1 + $0x2c] sm:$0xf]
      %v186 = vld [vmem:[%s1 + $0x30] sm:$0xf]
      %v187 = vld [vmem:[%s1 + $0x34] sm:$0xf]
      %v188 = vld [vmem:[%s1 + $0x38] sm:$0xf]
      %v189 = vld [vmem:[%s1 + $0x3c] sm:$0xf]
      %v190 = vld [vmem:[%s1 + $0x40] sm:$0xf]
      %v191 = vld [vmem:[%s1 + $0x44] sm:$0xf]
      %v192 = vld [vmem:[%s165 + $0x10] sm:$0x11]
      %s193 = scalar_lea.vmem %s1, 72
      %v194 = vld [vmem:[%s193] sm:$0xf]
      %v195 = vld [vmem:[%s193 + $0x4] sm:$0xf]
      %v196 = vld [vmem:[%s193 + $0x8] sm:$0xf]
      %v197 = vld [vmem:[%s193 + $0xc] sm:$0xf]
      %v198 = vld [vmem:[%s193 + $0x10] sm:$0xf]
      %v199 = vld [vmem:[%s193 + $0x14] sm:$0xf]
      %v200 = vld [vmem:[%s193 + $0x18] sm:$0xf]
      %v201 = vld [vmem:[%s193 + $0x1c] sm:$0xf]
      %v202 = vld [vmem:[%s193 + $0x20] sm:$0xf]
      %v203 = vld [vmem:[%s193 + $0x24] sm:$0xf]
      %v204 = vld [vmem:[%s193 + $0x28] sm:$0xf]
      %v205 = vld [vmem:[%s193 + $0x2c] sm:$0xf]
      %v206 = vld [vmem:[%s193 + $0x30] sm:$0xf]
      %v207 = vld [vmem:[%s193 + $0x34] sm:$0xf]
      %v208 = vld [vmem:[%s193 + $0x38] sm:$0xf]
      %v209 = vld [vmem:[%s193 + $0x3c] sm:$0xf]
      %v210 = vld [vmem:[%s193 + $0x40] sm:$0xf]
      %v211 = vld [vmem:[%s193 + $0x44] sm:$0xf]
      %v215 = vunpack.c.l.b16 %v172
      %v216 = vunpack.c.h.b16 %v172
      %v217 = vunpack.c.l.b16 %v173
      %v218 = vunpack.c.h.b16 %v173
      %v219 = vunpack.c.l.b16 %v192
      %v220 = vunpack.c.h.b16 %v192
      %v221 = vpack.c.b16 %v217, %v215
      %v222 = vpack.c.b16 %v218, %v216
      %v223 = vpack.c.b16 %v219, %v219
      %v224 = vpack.c.b16 %v220, %v220
      %vm225 = vsmask.f32 7424
      %v227 = vshrl.u32 %v221, 16
      %v229 = vshll.u32 %v221, 16
      %v231 = vrot.slane %v229, 1
      %v232 = vor.u32 %v227, %v231
      %v234 = vshll.u32 %v223, 16
      %v236 = vrot.slane %v234, 1
      %v237 = vsel %vm225, %v232, %v236
      %v239 = vshrl.u32 %v222, 16
      %v241 = vshll.u32 %v222, 16
      %v243 = vrot.slane %v241, 1
      %v244 = vor.u32 %v239, %v243
      %v246 = vshll.u32 %v224, 16
      %v248 = vrot.slane %v246, 1
      %v249 = vsel %vm225, %v244, %v248
      %v269 = vunpack.c.l.b16 %v194
      %v270 = vunpack.c.l.b16 %v195
      %v271 = vunpack.c.l.b16 %v196
      %v272 = vunpack.c.l.b16 %v197
      %v273 = vunpack.c.l.b16 %v198
      %v274 = vunpack.c.l.b16 %v199
      %v275 = vunpack.c.l.b16 %v200
      %v276 = vunpack.c.l.b16 %v201
      %v277 = vunpack.c.l.b16 %v202
      %v278 = vunpack.c.l.b16 %v203
      %v279 = vunpack.c.l.b16 %v204
      %v280 = vunpack.c.l.b16 %v205
      %v281 = vunpack.c.l.b16 %v206
      %v282 = vunpack.c.l.b16 %v207
      %v283 = vunpack.c.l.b16 %v208
      %v284 = vunpack.c.l.b16 %v209
      %v285 = vunpack.c.l.b16 %v210
      %v286 = vunpack.c.l.b16 %v211
      %v287 = vpack.c.b16 %v270, %v269
      %v288 = vpack.c.b16 %v272, %v271
      %v289 = vpack.c.b16 %v274, %v273
      %v290 = vpack.c.b16 %v276, %v275
      %v291 = vpack.c.b16 %v278, %v277
      %v292 = vpack.c.b16 %v280, %v279
      %v293 = vpack.c.b16 %v282, %v281
      %v294 = vpack.c.b16 %v284, %v283
      %v295 = vpack.c.b16 %v286, %v285
      %vm305 = vcmask 130048
      %v307 = vsel %vm305, %v249, 0
      %309 = vmatprep.subr.bf16.mxu0 0
      %310 = vmatpush1.bf16.msra.mxu0 %v287
      %311 = vmatprep.subr.bf16.mxu0 0
      %312 = vmatpush1.bf16.msra.mxu0 %v288
      %313 = vmatprep.subr.bf16.mxu0 0
      %314 = vmatpush1.bf16.msra.mxu0 %v289
      %315 = vmatprep.subr.bf16.mxu0 0
      %316 = vmatpush1.bf16.msra.mxu0 %v290
      %317 = vmatprep.subr.bf16.mxu0 0
      %318 = vmatpush1.bf16.msra.mxu0 %v291
      %319 = vmatprep.subr.bf16.mxu0 0
      %320 = vmatpush1.bf16.msra.mxu0 %v292
      %321 = vmatprep.subr.bf16.mxu0 0
      %322 = vmatpush1.bf16.msra.mxu0 %v293
      %323 = vmatprep.subr.bf16.mxu0 0
      %324 = vmatpush1.bf16.msra.mxu0 %v294
      %325 = vmatprep.subr.bf16.mxu0 0
      %326 = vmatpush1.bf16.msra.mxu0 %v295
      %327 = vmatprep.subr.bf16.mxu0 0
      %328 = vmatpush1.bf16.msra.mxu0 0
      %329 = vmatprep.subr.bf16.mxu0 0
      %330 = vmatpush1.bf16.msra.mxu0 0
      %331 = vmatprep.subr.bf16.mxu0 0
      %332 = vmatpush1.bf16.msra.mxu0 0
      %333 = vmatprep.subr.bf16.mxu0 0
      %334 = vmatpush1.bf16.msra.mxu0 0
      %335 = vmatprep.subr.bf16.mxu0 0
      %336 = vmatpush1.bf16.msra.mxu0 0
      %337 = vmatprep.subr.bf16.mxu0 0
      %338 = vmatpush1.bf16.msra.mxu0 0
      %339 = vmatprep.subr.bf16.mxu0 0
      %340 = vmatpush1.bf16.msra.mxu0 0
      %341 = vmatprep.mubr.bf16.mxu0 %v307
      %342 = vmatmul.mubr.bf16.gmra.mrb[0].mxu0 %v237
      %v343 = vpop.f32.mrb[0].mxu0
      %v344 = vadd.f32 0.0, %v343
      %v345 = vpop.f32.mrb[0].mxu0
      %v346 = vpop.f32.mrb[0].mxu0
      %v347 = vadd.f32 0.0, %v346
      %v348 = vpop.f32.mrb[0].mxu0
      %349 = vdwg.mxu0
      %v369 = vunpack.c.l.b16 %v174
      %v370 = vunpack.c.l.b16 %v175
      %v371 = vunpack.c.l.b16 %v176
      %v372 = vunpack.c.l.b16 %v177
      %v373 = vunpack.c.l.b16 %v178
      %v374 = vunpack.c.l.b16 %v179
      %v375 = vunpack.c.l.b16 %v180
      %v376 = vunpack.c.l.b16 %v181
      %v377 = vunpack.c.l.b16 %v182
      %v378 = vunpack.c.l.b16 %v183
      %v379 = vunpack.c.l.b16 %v184
      %v380 = vunpack.c.l.b16 %v185
      %v381 = vunpack.c.l.b16 %v186
      %v382 = vunpack.c.l.b16 %v187
      %v383 = vunpack.c.l.b16 %v188
      %v384 = vunpack.c.l.b16 %v189
      %v385 = vunpack.c.l.b16 %v190
      %v386 = vunpack.c.l.b16 %v191
      %v387 = vpack.c.b16 %v370, %v369
      %v388 = vpack.c.b16 %v372, %v371
      %v389 = vpack.c.b16 %v374, %v373
      %v390 = vpack.c.b16 %v376, %v375
      %v391 = vpack.c.b16 %v378, %v377
      %v392 = vpack.c.b16 %v380, %v379
      %v393 = vpack.c.b16 %v382, %v381
      %v394 = vpack.c.b16 %v384, %v383
      %v395 = vpack.c.b16 %v386, %v385
      %v405 = vsel %vm305, %v222, 0
      %407 = vmatprep.subr.bf16.mxu0 0
      %408 = vmatpush1.bf16.msra.mxu0 %v387
      %409 = vmatprep.subr.bf16.mxu0 0
      %410 = vmatpush1.bf16.msra.mxu0 %v388
      %411 = vmatprep.subr.bf16.mxu0 0
      %412 = vmatpush1.bf16.msra.mxu0 %v389
      %413 = vmatprep.subr.bf16.mxu0 0
      %414 = vmatpush1.bf16.msra.mxu0 %v390
      %415 = vmatprep.subr.bf16.mxu0 0
      %416 = vmatpush1.bf16.msra.mxu0 %v391
      %417 = vmatprep.subr.bf16.mxu0 0
      %418 = vmatpush1.bf16.msra.mxu0 %v392
      %419 = vmatprep.subr.bf16.mxu0 0
      %420 = vmatpush1.bf16.msra.mxu0 %v393
      %421 = vmatprep.subr.bf16.mxu0 0
      %422 = vmatpush1.bf16.msra.mxu0 %v394
      %423 = vmatprep.subr.bf16.mxu0 0
      %424 = vmatpush1.bf16.msra.mxu0 %v395
      %425 = vmatprep.subr.bf16.mxu0 0
      %426 = vmatpush1.bf16.msra.mxu0 0
      %427 = vmatprep.subr.bf16.mxu0 0
      %428 = vmatpush1.bf16.msra.mxu0 0
      %429 = vmatprep.subr.bf16.mxu0 0
      %430 = vmatpush1.bf16.msra.mxu0 0
      %431 = vmatprep.subr.bf16.mxu0 0
      %432 = vmatpush1.bf16.msra.mxu0 0
      %433 = vmatprep.subr.bf16.mxu0 0
      %434 = vmatpush1.bf16.msra.mxu0 0
      %435 = vmatprep.subr.bf16.mxu0 0
      %436 = vmatpush1.bf16.msra.mxu0 0
      %437 = vmatprep.subr.bf16.mxu0 0
      %438 = vmatpush1.bf16.msra.mxu0 0
      %439 = vmatprep.mubr.bf16.mxu0 %v405
      %440 = vmatmul.mubr.bf16.gmra.mrb[0].mxu0 %v221
      %v441 = vpop.f32.mrb[0].mxu0
      %v442 = vadd.f32 %v344, %v441
      %v443 = vpop.f32.mrb[0].mxu0
      %v444 = vpop.f32.mrb[0].mxu0
      %v445 = vadd.f32 %v347, %v444
      %v446 = vpop.f32.mrb[0].mxu0
      %447 = vdwg.mxu0
      %v448 = vld [vmem:[%s165] sm:$0xee]
      %s449 = scalar_lea.vmem %s1, 144
      %v450 = vld [vmem:[%s449] sm:$0xf]
      %v451 = vld [vmem:[%s449 + $0x4] sm:$0xf]
      %v452 = vld [vmem:[%s449 + $0x8] sm:$0xf]
      %v453 = vld [vmem:[%s449 + $0xc] sm:$0xf]
      %v454 = vld [vmem:[%s449 + $0x10] sm:$0xf]
      %v455 = vld [vmem:[%s449 + $0x14] sm:$0xf]
      %v456 = vld [vmem:[%s449 + $0x18] sm:$0xf]
      %v457 = vld [vmem:[%s449 + $0x1c] sm:$0xf]
      %v458 = vld [vmem:[%s449 + $0x20] sm:$0xf]
      %v459 = vld [vmem:[%s449 + $0x24] sm:$0xf]
      %v460 = vld [vmem:[%s449 + $0x28] sm:$0xf]
      %v461 = vld [vmem:[%s449 + $0x2c] sm:$0xf]
      %v462 = vld [vmem:[%s449 + $0x30] sm:$0xf]
      %v463 = vld [vmem:[%s449 + $0x34] sm:$0xf]
      %v464 = vld [vmem:[%s449 + $0x38] sm:$0xf]
      %v465 = vld [vmem:[%s449 + $0x3c] sm:$0xf]
      %v466 = vld [vmem:[%s449 + $0x40] sm:$0xf]
      %v467 = vld [vmem:[%s449 + $0x44] sm:$0xf]
      %v469 = vunpack.c.l.b16 %v448
      %v470 = vunpack.c.h.b16 %v448
      %v471 = vpack.c.b16 %v217, %v469
      %v472 = vpack.c.b16 %v218, %v470
      %vm473 = vcmask 1046528
      %v474 = vrot.slane %v471, 1
      %v475 = vrot.slane %v223, 1
      %v476 = vsel %vm473, %v474, %v475
      %v477 = vrot.slane %v472, 1
      %v478 = vrot.slane %v224, 1
      %v479 = vsel %vm473, %v477, %v478
      %v499 = vunpack.c.l.b16 %v450
      %v500 = vunpack.c.l.b16 %v451
      %v501 = vunpack.c.l.b16 %v452
      %v502 = vunpack.c.l.b16 %v453
      %v503 = vunpack.c.l.b16 %v454
      %v504 = vunpack.c.l.b16 %v455
      %v505 = vunpack.c.l.b16 %v456
      %v506 = vunpack.c.l.b16 %v457
      %v507 = vunpack.c.l.b16 %v458
      %v508 = vunpack.c.l.b16 %v459
      %v509 = vunpack.c.l.b16 %v460
      %v510 = vunpack.c.l.b16 %v461
      %v511 = vunpack.c.l.b16 %v462
      %v512 = vunpack.c.l.b16 %v463
      %v513 = vunpack.c.l.b16 %v464
      %v514 = vunpack.c.l.b16 %v465
      %v515 = vunpack.c.l.b16 %v466
      %v516 = vunpack.c.l.b16 %v467
      %v517 = vpack.c.b16 %v500, %v499
      %v518 = vpack.c.b16 %v502, %v501
      %v519 = vpack.c.b16 %v504, %v503
      %v520 = vpack.c.b16 %v506, %v505
      %v521 = vpack.c.b16 %v508, %v507
      %v522 = vpack.c.b16 %v510, %v509
      %v523 = vpack.c.b16 %v512, %v511
      %v524 = vpack.c.b16 %v514, %v513
      %v525 = vpack.c.b16 %v516, %v515
      %v536 = vsel %vm305, %v479, 0
      %538 = vmatprep.subr.bf16.mxu0 0
      %539 = vmatpush1.bf16.msra.mxu0 %v517
      %540 = vmatprep.subr.bf16.mxu0 0
      %541 = vmatpush1.bf16.msra.mxu0 %v518
      %542 = vmatprep.subr.bf16.mxu0 0
      %543 = vmatpush1.bf16.msra.mxu0 %v519
      %544 = vmatprep.subr.bf16.mxu0 0
      %545 = vmatpush1.bf16.msra.mxu0 %v520
      %546 = vmatprep.subr.bf16.mxu0 0
      %547 = vmatpush1.bf16.msra.mxu0 %v521
      %548 = vmatprep.subr.bf16.mxu0 0
      %549 = vmatpush1.bf16.msra.mxu0 %v522
      %550 = vmatprep.subr.bf16.mxu0 0
      %551 = vmatpush1.bf16.msra.mxu0 %v523
      %552 = vmatprep.subr.bf16.mxu0 0
      %553 = vmatpush1.bf16.msra.mxu0 %v524
      %554 = vmatprep.subr.bf16.mxu0 0
      %555 = vmatpush1.bf16.msra.mxu0 %v525
      %556 = vmatprep.subr.bf16.mxu0 0
      %557 = vmatpush1.bf16.msra.mxu0 0
      %558 = vmatprep.subr.bf16.mxu0 0
      %559 = vmatpush1.bf16.msra.mxu0 0
      %560 = vmatprep.subr.bf16.mxu0 0
      %561 = vmatpush1.bf16.msra.mxu0 0
      %562 = vmatprep.subr.bf16.mxu0 0
      %563 = vmatpush1.bf16.msra.mxu0 0
      %564 = vmatprep.subr.bf16.mxu0 0
      %565 = vmatpush1.bf16.msra.mxu0 0
      %566 = vmatprep.subr.bf16.mxu0 0
      %567 = vmatpush1.bf16.msra.mxu0 0
      %568 = vmatprep.subr.bf16.mxu0 0
      %569 = vmatpush1.bf16.msra.mxu0 0
      %570 = vmatprep.mubr.bf16.mxu0 %v536
      %571 = vmatmul.mubr.bf16.gmra.mrb[0].mxu0 %v476
      %v572 = vpop.f32.mrb[0].mxu0
      %v573 = vadd.f32 0.0, %v572
      %v574 = vpop.f32.mrb[0].mxu0
      %v575 = vpop.f32.mrb[0].mxu0
      %v576 = vadd.f32 0.0, %v575
      %v577 = vpop.f32.mrb[0].mxu0
      %578 = vdwg.mxu0
      %v579 = vadd.f32 %v442, %v573
      %v580 = vadd.f32 %v445, %v576
      %v581 = vld [vmem:[%s2] sm:$0x1]
      %v583 = vlaneseq
      %v584 = vshrl.u32 %v583, 7
      %v585 = vsub.s32 0, %v584
      %v586 = vrot.slane %v581, %v585
      %v588 = vadd.f32 %v579, %v586
      %v589 = vadd.f32 %v580, %v586
      %v590 = vmax.f32 %v588, 0.0
      %v591 = vmax.f32 %v589, 0.0
      %592 = vst [vmem:[%s170] sm:$0xff] %v590
      %593 = vst [vmem:[%s170 + $0x8] sm:$0xff] %v591
      %p594 = scmp.lt.s32.totalorder %s14, 1
      %s595 = scalar_select %p594, %s14, 1
      %s596 = smul.addr %s595, 2
      %s597 = smul.addr %s596, 8
      %s598 = scalar_lea.vmem %s3, %s597
      // Predicated region
      $region33: #{unet_forward.20} parent=31 // pred_check
        %p599 = pneg %p100
      $region34: #{unet_forward.20} parent=31 // pred_check_branch
        %601 = sbr.rel (%p599) target = $region36
      $region35: #{unet_forward.20} parent=31 // pred_region
        _
      $region36: #{unet_forward.20} parent=31 // pred_fallthru
        _
    $region32: #{unet_forward.20} parent=5 // pred_fallthru
      _
    %p602 = scmp.le.s32.totalorder 2, %s9
    // Predicated region
    $region37: #{unet_forward.20} parent=5 // pred_check
      %p603 = pneg %p602
    $region38: #{unet_forward.20} parent=5 // pred_check_branch
      %605 = sbr.rel (%p603) target = $region40
    $region39: #{unet_forward.20} parent=5 // pred_region
      %s606 = ssub.s32 %s9, 2
      // Predicated region
      $region41: #{unet_forward.20} parent=39 // pred_check
        %p607 = pneg %p106
      $region42: #{unet_forward.20} parent=39 // pred_check_branch
        %609 = sbr.rel (%p607) target = $region44
      $region43: #{unet_forward.20} parent=39 // pred_region
        %p610 = scmp.lt.s32.totalorder %s15, 1
        %s611 = scalar_select %p610, %s15, 1
        %s612 = smul.addr %s611, 2
        %s613 = smul.addr %s612, 8
        %s614 = scalar_lea.vmem %s3, %s613
      $region44: #{unet_forward.20} parent=39 // pred_fallthru
        _
    $region40: #{unet_forward.20} parent=5 // pred_fallthru
      _
  $region6: #{unet_forward.20} parent=0 // loop_footer
    %s13 = sadd.s32 1, %s9
  $region7: #{unet_forward.20} parent=0 // loop_footer_branch
    %8 = sbr.rel target = $region3
  $region8: #{unet_forward.20} parent=0 // loop_exit
    _

// kernel: unet_forward.21
$region0: #{unet_forward.21}
  #allocation0 [shape = 'u32[]', space=smem, size = 0x4, offset = 0x4, fixed_abs, tag = 'smem constant byte address 0x4 - core index']
  #allocation1 [shape = 'u32[144,128]{1,0:T(1,128)}', space=vmem, size = 0x12000, scoped, tag = 'internal scratch']
  %s0 = inlined_call_operand.vmem [shape: bf16[2,18,144], index: 0, kind: input, shape index: {}]
  %s1 = inlined_call_operand.vmem [shape: bf16[3,144,16], index: 1, kind: input, shape index: {}]
  %s2 = inlined_call_operand.vmem [shape: f32[1,16], index: 2, kind: input, shape index: {}]
  %s3 = inlined_call_operand.hbm [shape: f32[2,16,16], index: 3, kind: output, shape index: {}]
  %s4 = sld [smem:[#allocation0]]
  $region45: #{unet_forward.21} parent=0
    _
  %s6 = ssub.s32 1, %s4
  %s7 = scalar_select 0, %s6, %s4
  $region1: #{unet_forward.21} parent=0
    #allocation2 [shape = 'u8[16384]{0}', space=vmem, size = 0x4000, scoped, tag = 'output window, operand 0']
    #allocation3 [shape = 's32[2]{0}', space=sflag, size = 0x8, scoped, tag = 'scoped memory for unet_forward.21']
    %8 = vsyncpa [#allocation3], 0
    %s9 = scalar_lea.sflag [#allocation3], 1
    %10 = vsyncpa %s9, 0
    loop: start=0, step=1, limit=4
    $region2: #{unet_forward.21} parent=1 // loop_pre_header
      _
    $region3: #{unet_forward.21} parent=1 // loop_header
      %s12 = sphi 0, %s16
      %p13 = scmp.ge.s32.totalorder %s12, 4
      %s22 = sphi 0, %s24
      %s25 = sphi 0, %s22
      %s26 = sphi 0, %s25
      %s42 = sphi 0, %s26
      %s46 = sphi 0, %s46
      %s48 = sphi 0, %s46
      %s49 = sphi 0, %s48
      %s63 = sphi 0, %s49
      %s67 = sphi 0, %s67
      %s69 = sphi 0, %s67
      %s70 = sphi 0, %s69
      %s84 = sphi 0, %s70
      %s90 = sphi 0, %s92
      %s93 = sphi 0, %s90
      %s94 = sphi 0, %s93
      %s110 = sphi 0, %s94
    $region4: #{unet_forward.21} parent=1 // loop_header_branch
      %15 = sbr.rel (%p13) target = $region8
    $region5: #{unet_forward.21} parent=1 // loop_body
      %s17 = ssub.s32 %s12, 1
      %s18 = ssub.s32 %s12, 2
      %s19 = sadd.s32 %s12, 1
      %s20 = ssub.s32 %s12, %s19
      %p21 = scmp.eq.s32.totalorder %s20, 0
      %s23 = sadd.s32 %s22, 1
      %s24 = scalar_select %p21, %s22, %s23
      %p27 = pneg %p21
      %p28 = scmp.eq.s32.totalorder %s12, 1
      %p29 = por %p27, %p28
      %p30 = scmp.ne.s32.totalorder %s22, %s25
      %p31 = scmp.eq.s32.totalorder %s12, 0
      %p32 = por %p30, %p31
      %p33 = scmp.ne.s32.totalorder %s22, %s25
      %p34 = scmp.eq.s32.totalorder %s17, 1
      %p35 = por %p33, %p34
      %p36 = scmp.ne.s32.totalorder %s25, %s26
      %p37 = scmp.eq.s32.totalorder %s17, 0
      %p38 = por %p36, %p37
      %p39 = scmp.ne.s32.totalorder %s25, %s26
      %p40 = scmp.eq.s32.totalorder %s18, 1
      %p41 = por %p39, %p40
      %p43 = scmp.ne.s32.totalorder %s26, %s42
      %p44 = scmp.eq.s32.totalorder %s18, 0
      %p45 = por %p43, %p44
      %s47 = sadd.s32 %s46, 1
      %p50 = scmp.eq.s32.totalorder %s12, 1
      %p51 = scmp.ne.s32.totalorder %s46, %s48
      %p52 = scmp.eq.s32.totalorder %s12, 0
      %p53 = por %p51, %p52
      %p54 = scmp.ne.s32.totalorder %s46, %s48
      %p55 = scmp.eq.s32.totalorder %s17, 1
      %p56 = por %p54, %p55
      %p57 = scmp.ne.s32.totalorder %s48, %s49
      %p58 = scmp.eq.s32.totalorder %s17, 0
      %p59 = por %p57, %p58
      %p60 = scmp.ne.s32.totalorder %s48, %s49
      %p61 = scmp.eq.s32.totalorder %s18, 1
      %p62 = por %p60, %p61
      %p64 = scmp.ne.s32.totalorder %s49, %s63
      %p65 = scmp.eq.s32.totalorder %s18, 0
      %p66 = por %p64, %p65
      %s68 = sadd.s32 %s67, 1
      %p71 = scmp.eq.s32.totalorder %s12, 1
      %p72 = scmp.ne.s32.totalorder %s67, %s69
      %p73 = scmp.eq.s32.totalorder %s12, 0
      %p74 = por %p72, %p73
      %p75 = scmp.ne.s32.totalorder %s67, %s69
      %p76 = scmp.eq.s32.totalorder %s17, 1
      %p77 = por %p75, %p76
      %p78 = scmp.ne.s32.totalorder %s69, %s70
      %p79 = scmp.eq.s32.totalorder %s17, 0
      %p80 = por %p78, %p79
      %p81 = scmp.ne.s32.totalorder %s69, %s70
      %p82 = scmp.eq.s32.totalorder %s18, 1
      %p83 = por %p81, %p82
      %p85 = scmp.ne.s32.totalorder %s70, %s84
      %p86 = scmp.eq.s32.totalorder %s18, 0
      %p87 = por %p85, %p86
      %s88 = ssub.s32 %s12, %s19
      %p89 = scmp.eq.s32.totalorder %s88, 0
      %s91 = sadd.s32 %s90, 1
      %s92 = scalar_select %p89, %s90, %s91
      %p95 = pneg %p89
      %p96 = scmp.eq.s32.totalorder %s12, 1
      %p97 = por %p95, %p96
      %p98 = scmp.ne.s32.totalorder %s90, %s93
      %p99 = scmp.eq.s32.totalorder %s12, 0
      %p100 = por %p98, %p99
      %p101 = scmp.ne.s32.totalorder %s90, %s93
      %p102 = scmp.eq.s32.totalorder %s17, 1
      %p103 = por %p101, %p102
      %p104 = scmp.ne.s32.totalorder %s93, %s94
      %p105 = scmp.eq.s32.totalorder %s17, 0
      %p106 = por %p104, %p105
      %p107 = scmp.ne.s32.totalorder %s93, %s94
      %p108 = scmp.eq.s32.totalorder %s18, 1
      %p109 = por %p107, %p108
      %p111 = scmp.ne.s32.totalorder %s94, %s110
      %p112 = scmp.eq.s32.totalorder %s18, 0
      %p113 = por %p111, %p112
      %p114 = scmp.le.s32.totalorder 1, %s12
      %p115 = scmp.lt.s32.totalorder %s12, 3
      %p116 = pnand %p114, %p115
      %p117 = pneg %p116
      // Predicated region
      $region9: #{unet_forward.21} parent=5 // pred_check
        _
      $region10: #{unet_forward.21} parent=5 // pred_check_branch
        %119 = sbr.rel (%p116) target = $region12
      $region11: #{unet_forward.21} parent=5 // pred_region
        %s120 = ssub.s32 %s12, 1
        // Predicated region
        $region13: #{unet_forward.21} parent=11 // pred_check
          %p121 = pneg %p59
        $region14: #{unet_forward.21} parent=11 // pred_check_branch
          %123 = sbr.rel (%p121) target = $region16
        $region15: #{unet_forward.21} parent=11 // pred_region
          _
        $region16: #{unet_forward.21} parent=11 // pred_fallthru
          _
        // Predicated region
        $region17: #{unet_forward.21} parent=11 // pred_check
          %p124 = pneg %p80
        $region18: #{unet_forward.21} parent=11 // pred_check_branch
          %126 = sbr.rel (%p124) target = $region20
        $region19: #{unet_forward.21} parent=11 // pred_region
          _
        $region20: #{unet_forward.21} parent=11 // pred_fallthru
          _
      $region12: #{unet_forward.21} parent=5 // pred_fallthru
        _
      %p127 = scmp.lt.s32.totalorder %s12, 2
      // Predicated region
      $region21: #{unet_forward.21} parent=5 // pred_check
        %p128 = pneg %p127
      $region22: #{unet_forward.21} parent=5 // pred_check_branch
        %130 = sbr.rel (%p128) target = $region24
      $region23: #{unet_forward.21} parent=5 // pred_region
        // Predicated region
        $region25: #{unet_forward.21} parent=23 // pred_check
          %p131 = pneg %p32
        $region26: #{unet_forward.21} parent=23 // pred_check_branch
          %133 = sbr.rel (%p131) target = $region28
        $region27: #{unet_forward.21} parent=23 // pred_region
          %p134 = scmp.lt.s32.totalorder %s12, 1
          %s135 = scalar_select %p134, %s12, 1
          %s136 = smul.addr %s135, 6
          %s137 = smul.addr %s136, 4
          %s138 = scalar_lea.vmem %s0, %s137
        $region28: #{unet_forward.21} parent=23 // pred_fallthru
          _
      $region24: #{unet_forward.21} parent=5 // pred_fallthru
        _
      %p139 = scmp.le.s32.totalorder 1, %s12
      %p140 = scmp.lt.s32.totalorder %s12, 3
      %p141 = pnand %p139, %p140
      %p142 = pneg %p141
      // Predicated region
      $region29: #{unet_forward.21} parent=5 // pred_check
        _
      $region30: #{unet_forward.21} parent=5 // pred_check_branch
        %144 = sbr.rel (%p141) target = $region32
      $region31: #{unet_forward.21} parent=5 // pred_region
        %s145 = ssub.s32 %s12, 1
        %p146 = scmp.lt.s32.totalorder %s17, 1
        %s147 = scalar_select %p146, %s17, 1
        %s148 = smul.addr %s147, 6
        %s149 = smul.addr %s148, 4
        %s150 = scalar_lea.vmem %s0, %s149
        %p151 = pneg %p38
        %p152 = pneg %p35
        %p153 = pneg %p59
        %p154 = pneg %p56
        %p155 = pneg %p80
        %p156 = pneg %p77
        %p157 = pneg %p106
        %p158 = pneg %p103
        %s159 = sand.u32 %s93, 1
        %s160 = scalar_lea.sflag [#allocation3], %s159
        %s161 = sand.u32 %s93, 1
        %s162 = smul.addr %s161, 16
        %s163 = scalar_lea.vmem [#allocation2], %s162
        %p164 = scmp.lt.s32.totalorder %s17, 1
        %s165 = scalar_select %p164, %s17, 1
        %s166 = smul.addr %s165, 6
        %s167 = smul.addr %s166, 4
        %s168 = scalar_lea.vmem %s0, %s167
        %v170 = vld [vmem:[%s168] sm:$0xff]
        %v171 = vld [vmem:[%s168 + $0x8] sm:$0xff]
        %v172 = vld [vmem:[%s1] sm:$0xf]
        %v173 = vld [vmem:[%s1 + $0x4] sm:$0xf]
        %v174 = vld [vmem:[%s1 + $0x8] sm:$0xf]
        %v175 = vld [vmem:[%s1 + $0xc] sm:$0xf]
        %v176 = vld [vmem:[%s1 + $0x10] sm:$0xf]
        %v177 = vld [vmem:[%s1 + $0x14] sm:$0xf]
        %v178 = vld [vmem:[%s1 + $0x18] sm:$0xf]
        %v179 = vld [vmem:[%s1 + $0x1c] sm:$0xf]
        %v180 = vld [vmem:[%s1 + $0x20] sm:$0xf]
        %v181 = vld [vmem:[%s1 + $0x24] sm:$0xf]
        %v182 = vld [vmem:[%s1 + $0x28] sm:$0xf]
        %v183 = vld [vmem:[%s1 + $0x2c] sm:$0xf]
        %v184 = vld [vmem:[%s1 + $0x30] sm:$0xf]
        %v185 = vld [vmem:[%s1 + $0x34] sm:$0xf]
        %v186 = vld [vmem:[%s1 + $0x38] sm:$0xf]
        %v187 = vld [vmem:[%s1 + $0x3c] sm:$0xf]
        %v188 = vld [vmem:[%s1 + $0x40] sm:$0xf]
        %v189 = vld [vmem:[%s1 + $0x44] sm:$0xf]
        %v190 = vld [vmem:[%s168 + $0x10] sm:$0x11]
        %s191 = scalar_lea.vmem %s1, 72
        %v192 = vld [vmem:[%s191] sm:$0xf]
        %v193 = vld [vmem:[%s191 + $0x4] sm:$0xf]
        %v194 = vld [vmem:[%s191 + $0x8] sm:$0xf]
        %v195 = vld [vmem:[%s191 + $0xc] sm:$0xf]
        %v196 = vld [vmem:[%s191 + $0x10] sm:$0xf]
        %v197 = vld [vmem:[%s191 + $0x14] sm:$0xf]
        %v198 = vld [vmem:[%s191 + $0x18] sm:$0xf]
        %v199 = vld [vmem:[%s191 + $0x1c] sm:$0xf]
        %v200 = vld [vmem:[%s191 + $0x20] sm:$0xf]
        %v201 = vld [vmem:[%s191 + $0x24] sm:$0xf]
        %v202 = vld [vmem:[%s191 + $0x28] sm:$0xf]
        %v203 = vld [vmem:[%s191 + $0x2c] sm:$0xf]
        %v204 = vld [vmem:[%s191 + $0x30] sm:$0xf]
        %v205 = vld [vmem:[%s191 + $0x34] sm:$0xf]
        %v206 = vld [vmem:[%s191 + $0x38] sm:$0xf]
        %v207 = vld [vmem:[%s191 + $0x3c] sm:$0xf]
        %v208 = vld [vmem:[%s191 + $0x40] sm:$0xf]
        %v209 = vld [vmem:[%s191 + $0x44] sm:$0xf]
        %v213 = vunpack.c.l.b16 %v170
        %v214 = vunpack.c.h.b16 %v170
        %v215 = vunpack.c.l.b16 %v171
        %v216 = vunpack.c.h.b16 %v171
        %v217 = vunpack.c.l.b16 %v190
        %v218 = vunpack.c.h.b16 %v190
        %v219 = vpack.c.b16 %v215, %v213
        %v220 = vpack.c.b16 %v216, %v214
        %v221 = vpack.c.b16 %v217, %v217
        %v222 = vpack.c.b16 %v218, %v218
        %vm223 = vsmask.f32 7424
        %v225 = vshrl.u32 %v219, 16
        %v227 = vshll.u32 %v219, 16
        %v229 = vrot.slane %v227, 1
        %v230 = vor.u32 %v225, %v229
        %v232 = vshll.u32 %v221, 16
        %v234 = vrot.slane %v232, 1
        %v235 = vsel %vm223, %v230, %v234
        %v237 = vshrl.u32 %v220, 16
        %v239 = vshll.u32 %v220, 16
        %v241 = vrot.slane %v239, 1
        %v242 = vor.u32 %v237, %v241
        %v244 = vshll.u32 %v222, 16
        %v246 = vrot.slane %v244, 1
        %v247 = vsel %vm223, %v242, %v246
        %v267 = vunpack.c.l.b16 %v192
        %v268 = vunpack.c.l.b16 %v193
        %v269 = vunpack.c.l.b16 %v194
        %v270 = vunpack.c.l.b16 %v195
        %v271 = vunpack.c.l.b16 %v196
        %v272 = vunpack.c.l.b16 %v197
        %v273 = vunpack.c.l.b16 %v198
        %v274 = vunpack.c.l.b16 %v199
        %v275 = vunpack.c.l.b16 %v200
        %v276 = vunpack.c.l.b16 %v201
        %v277 = vunpack.c.l.b16 %v202
        %v278 = vunpack.c.l.b16 %v203
        %v279 = vunpack.c.l.b16 %v204
        %v280 = vunpack.c.l.b16 %v205
        %v281 = vunpack.c.l.b16 %v206
        %v282 = vunpack.c.l.b16 %v207
        %v283 = vunpack.c.l.b16 %v208
        %v284 = vunpack.c.l.b16 %v209
        %v285 = vpack.c.b16 %v268, %v267
        %v286 = vpack.c.b16 %v270, %v269
        %v287 = vpack.c.b16 %v272, %v271
        %v288 = vpack.c.b16 %v274, %v273
        %v289 = vpack.c.b16 %v276, %v275
        %v290 = vpack.c.b16 %v278, %v277
        %v291 = vpack.c.b16 %v280, %v279
        %v292 = vpack.c.b16 %v282, %v281
        %v293 = vpack.c.b16 %v284, %v283
        %vm303 = vcmask 130048
        %v305 = vsel %vm303, %v247, 0
        %307 = vmatprep.subr.bf16.mxu0 0
        %308 = vmatpush1.bf16.msra.mxu0 %v285
        %309 = vmatprep.subr.bf16.mxu0 0
        %310 = vmatpush1.bf16.msra.mxu0 %v286
        %311 = vmatprep.subr.bf16.mxu0 0
        %312 = vmatpush1.bf16.msra.mxu0 %v287
        %313 = vmatprep.subr.bf16.mxu0 0
        %314 = vmatpush1.bf16.msra.mxu0 %v288
        %315 = vmatprep.subr.bf16.mxu0 0
        %316 = vmatpush1.bf16.msra.mxu0 %v289
        %317 = vmatprep.subr.bf16.mxu0 0
        %318 = vmatpush1.bf16.msra.mxu0 %v290
        %319 = vmatprep.subr.bf16.mxu0 0
        %320 = vmatpush1.bf16.msra.mxu0 %v291
        %321 = vmatprep.subr.bf16.mxu0 0
        %322 = vmatpush1.bf16.msra.mxu0 %v292
        %323 = vmatprep.subr.bf16.mxu0 0
        %324 = vmatpush1.bf16.msra.mxu0 %v293
        %325 = vmatprep.subr.bf16.mxu0 0
        %326 = vmatpush1.bf16.msra.mxu0 0
        %327 = vmatprep.subr.bf16.mxu0 0
        %328 = vmatpush1.bf16.msra.mxu0 0
        %329 = vmatprep.subr.bf16.mxu0 0
        %330 = vmatpush1.bf16.msra.mxu0 0
        %331 = vmatprep.subr.bf16.mxu0 0
        %332 = vmatpush1.bf16.msra.mxu0 0
        %333 = vmatprep.subr.bf16.mxu0 0
        %334 = vmatpush1.bf16.msra.mxu0 0
        %335 = vmatprep.subr.bf16.mxu0 0
        %336 = vmatpush1.bf16.msra.mxu0 0
        %337 = vmatprep.subr.bf16.mxu0 0
        %338 = vmatpush1.bf16.msra.mxu0 0
        %339 = vmatprep.mubr.bf16.mxu0 %v305
        %340 = vmatmul.mubr.bf16.gmra.mrb[0].mxu0 %v235
        %v341 = vpop.f32.mrb[0].mxu0
        %v342 = vadd.f32 0.0, %v341
        %v343 = vpop.f32.mrb[0].mxu0
        %v344 = vpop.f32.mrb[0].mxu0
        %v345 = vadd.f32 0.0, %v344
        %v346 = vpop.f32.mrb[0].mxu0
        %347 = vdwg.mxu0
        %v367 = vunpack.c.l.b16 %v172
        %v368 = vunpack.c.l.b16 %v173
        %v369 = vunpack.c.l.b16 %v174
        %v370 = vunpack.c.l.b16 %v175
        %v371 = vunpack.c.l.b16 %v176
        %v372 = vunpack.c.l.b16 %v177
        %v373 = vunpack.c.l.b16 %v178
        %v374 = vunpack.c.l.b16 %v179
        %v375 = vunpack.c.l.b16 %v180
        %v376 = vunpack.c.l.b16 %v181
        %v377 = vunpack.c.l.b16 %v182
        %v378 = vunpack.c.l.b16 %v183
        %v379 = vunpack.c.l.b16 %v184
        %v380 = vunpack.c.l.b16 %v185
        %v381 = vunpack.c.l.b16 %v186
        %v382 = vunpack.c.l.b16 %v187
        %v383 = vunpack.c.l.b16 %v188
        %v384 = vunpack.c.l.b16 %v189
        %v385 = vpack.c.b16 %v368, %v367
        %v386 = vpack.c.b16 %v370, %v369
        %v387 = vpack.c.b16 %v372, %v371
        %v388 = vpack.c.b16 %v374, %v373
        %v389 = vpack.c.b16 %v376, %v375
        %v390 = vpack.c.b16 %v378, %v377
        %v391 = vpack.c.b16 %v380, %v379
        %v392 = vpack.c.b16 %v382, %v381
        %v393 = vpack.c.b16 %v384, %v383
        %v403 = vsel %vm303, %v220, 0
        %405 = vmatprep.subr.bf16.mxu0 0
        %406 = vmatpush1.bf16.msra.mxu0 %v385
        %407 = vmatprep.subr.bf16.mxu0 0
        %408 = vmatpush1.bf16.msra.mxu0 %v386
        %409 = vmatprep.subr.bf16.mxu0 0
        %410 = vmatpush1.bf16.msra.mxu0 %v387
        %411 = vmatprep.subr.bf16.mxu0 0
        %412 = vmatpush1.bf16.msra.mxu0 %v388
        %413 = vmatprep.subr.bf16.mxu0 0
        %414 = vmatpush1.bf16.msra.mxu0 %v389
        %415 = vmatprep.subr.bf16.mxu0 0
        %416 = vmatpush1.bf16.msra.mxu0 %v390
        %417 = vmatprep.subr.bf16.mxu0 0
        %418 = vmatpush1.bf16.msra.mxu0 %v391
        %419 = vmatprep.subr.bf16.mxu0 0
        %420 = vmatpush1.bf16.msra.mxu0 %v392
        %421 = vmatprep.subr.bf16.mxu0 0
        %422 = vmatpush1.bf16.msra.mxu0 %v393
        %423 = vmatprep.subr.bf16.mxu0 0
        %424 = vmatpush1.bf16.msra.mxu0 0
        %425 = vmatprep.subr.bf16.mxu0 0
        %426 = vmatpush1.bf16.msra.mxu0 0
        %427 = vmatprep.subr.bf16.mxu0 0
        %428 = vmatpush1.bf16.msra.mxu0 0
        %429 = vmatprep.subr.bf16.mxu0 0
        %430 = vmatpush1.bf16.msra.mxu0 0
        %431 = vmatprep.subr.bf16.mxu0 0
        %432 = vmatpush1.bf16.msra.mxu0 0
        %433 = vmatprep.subr.bf16.mxu0 0
        %434 = vmatpush1.bf16.msra.mxu0 0
        %435 = vmatprep.subr.bf16.mxu0 0
        %436 = vmatpush1.bf16.msra.mxu0 0
        %437 = vmatprep.mubr.bf16.mxu0 %v403
        %438 = vmatmul.mubr.bf16.gmra.mrb[0].mxu0 %v219
        %v439 = vpop.f32.mrb[0].mxu0
        %v440 = vadd.f32 %v342, %v439
        %v441 = vpop.f32.mrb[0].mxu0
        %v442 = vpop.f32.mrb[0].mxu0
        %v443 = vadd.f32 %v345, %v442
        %v444 = vpop.f32.mrb[0].mxu0
        %445 = vdwg.mxu0
        %v446 = vld [vmem:[%s168] sm:$0xee]
        %s447 = scalar_lea.vmem %s1, 144
        %v448 = vld [vmem:[%s447] sm:$0xf]
        %v449 = vld [vmem:[%s447 + $0x4] sm:$0xf]
        %v450 = vld [vmem:[%s447 + $0x8] sm:$0xf]
        %v451 = vld [vmem:[%s447 + $0xc] sm:$0xf]
        %v452 = vld [vmem:[%s447 + $0x10] sm:$0xf]
        %v453 = vld [vmem:[%s447 + $0x14] sm:$0xf]
        %v454 = vld [vmem:[%s447 + $0x18] sm:$0xf]
        %v455 = vld [vmem:[%s447 + $0x1c] sm:$0xf]
        %v456 = vld [vmem:[%s447 + $0x20] sm:$0xf]
        %v457 = vld [vmem:[%s447 + $0x24] sm:$0xf]
        %v458 = vld [vmem:[%s447 + $0x28] sm:$0xf]
        %v459 = vld [vmem:[%s447 + $0x2c] sm:$0xf]
        %v460 = vld [vmem:[%s447 + $0x30] sm:$0xf]
        %v461 = vld [vmem:[%s447 + $0x34] sm:$0xf]
        %v462 = vld [vmem:[%s447 + $0x38] sm:$0xf]
        %v463 = vld [vmem:[%s447 + $0x3c] sm:$0xf]
        %v464 = vld [vmem:[%s447 + $0x40] sm:$0xf]
        %v465 = vld [vmem:[%s447 + $0x44] sm:$0xf]
        %v467 = vunpack.c.l.b16 %v446
        %v468 = vunpack.c.h.b16 %v446
        %v469 = vpack.c.b16 %v215, %v467
        %v470 = vpack.c.b16 %v216, %v468
        %vm471 = vcmask 1046528
        %v472 = vrot.slane %v469, 1
        %v473 = vrot.slane %v221, 1
        %v474 = vsel %vm471, %v472, %v473
        %v475 = vrot.slane %v470, 1
        %v476 = vrot.slane %v222, 1
        %v477 = vsel %vm471, %v475, %v476
        %v497 = vunpack.c.l.b16 %v448
        %v498 = vunpack.c.l.b16 %v449
        %v499 = vunpack.c.l.b16 %v450
        %v500 = vunpack.c.l.b16 %v451
        %v501 = vunpack.c.l.b16 %v452
        %v502 = vunpack.c.l.b16 %v453
        %v503 = vunpack.c.l.b16 %v454
        %v504 = vunpack.c.l.b16 %v455
        %v505 = vunpack.c.l.b16 %v456
        %v506 = vunpack.c.l.b16 %v457
        %v507 = vunpack.c.l.b16 %v458
        %v508 = vunpack.c.l.b16 %v459
        %v509 = vunpack.c.l.b16 %v460
        %v510 = vunpack.c.l.b16 %v461
        %v511 = vunpack.c.l.b16 %v462
        %v512 = vunpack.c.l.b16 %v463
        %v513 = vunpack.c.l.b16 %v464
        %v514 = vunpack.c.l.b16 %v465
        %v515 = vpack.c.b16 %v498, %v497
        %v516 = vpack.c.b16 %v500, %v499
        %v517 = vpack.c.b16 %v502, %v501
        %v518 = vpack.c.b16 %v504, %v503
        %v519 = vpack.c.b16 %v506, %v505
        %v520 = vpack.c.b16 %v508, %v507
        %v521 = vpack.c.b16 %v510, %v509
        %v522 = vpack.c.b16 %v512, %v511
        %v523 = vpack.c.b16 %v514, %v513
        %v534 = vsel %vm303, %v477, 0
        %536 = vmatprep.subr.bf16.mxu0 0
        %537 = vmatpush1.bf16.msra.mxu0 %v515
        %538 = vmatprep.subr.bf16.mxu0 0
        %539 = vmatpush1.bf16.msra.mxu0 %v516
        %540 = vmatprep.subr.bf16.mxu0 0
        %541 = vmatpush1.bf16.msra.mxu0 %v517
        %542 = vmatprep.subr.bf16.mxu0 0
        %543 = vmatpush1.bf16.msra.mxu0 %v518
        %544 = vmatprep.subr.bf16.mxu0 0
        %545 = vmatpush1.bf16.msra.mxu0 %v519
        %546 = vmatprep.subr.bf16.mxu0 0
        %547 = vmatpush1.bf16.msra.mxu0 %v520
        %548 = vmatprep.subr.bf16.mxu0 0
        %549 = vmatpush1.bf16.msra.mxu0 %v521
        %550 = vmatprep.subr.bf16.mxu0 0
        %551 = vmatpush1.bf16.msra.mxu0 %v522
        %552 = vmatprep.subr.bf16.mxu0 0
        %553 = vmatpush1.bf16.msra.mxu0 %v523
        %554 = vmatprep.subr.bf16.mxu0 0
        %555 = vmatpush1.bf16.msra.mxu0 0
        %556 = vmatprep.subr.bf16.mxu0 0
        %557 = vmatpush1.bf16.msra.mxu0 0
        %558 = vmatprep.subr.bf16.mxu0 0
        %559 = vmatpush1.bf16.msra.mxu0 0
        %560 = vmatprep.subr.bf16.mxu0 0
        %561 = vmatpush1.bf16.msra.mxu0 0
        %562 = vmatprep.subr.bf16.mxu0 0
        %563 = vmatpush1.bf16.msra.mxu0 0
        %564 = vmatprep.subr.bf16.mxu0 0
        %565 = vmatpush1.bf16.msra.mxu0 0
        %566 = vmatprep.subr.bf16.mxu0 0
        %567 = vmatpush1.bf16.msra.mxu0 0
        %568 = vmatprep.mubr.bf16.mxu0 %v534
        %569 = vmatmul.mubr.bf16.gmra.mrb[0].mxu0 %v474
        %v570 = vpop.f32.mrb[0].mxu0
        %v571 = vadd.f32 0.0, %v570
        %v572 = vpop.f32.mrb[0].mxu0
        %v573 = vpop.f32.mrb[0].mxu0
        %v574 = vadd.f32 0.0, %v573
        %v575 = vpop.f32.mrb[0].mxu0
        %576 = vdwg.mxu0
        %v577 = vadd.f32 %v440, %v571
        %v578 = vadd.f32 %v443, %v574
        %v579 = vld [vmem:[%s2] sm:$0x1]
        %v581 = vlaneseq
        %v582 = vshrl.u32 %v581, 7
        %v583 = vsub.s32 0, %v582
        %v584 = vrot.slane %v579, %v583
        %v586 = vadd.f32 %v577, %v584
        %v587 = vadd.f32 %v578, %v584
        %588 = vst.msk [vmem:[%s163] sm:$0xff] %vm303, %v586
        %589 = vst.msk [vmem:[%s163 + $0x8] sm:$0xff] %vm303, %v587
        %s590 = sand.u32 %s93, 1
        %s591 = scalar_lea.sflag [#allocation3], %s590
        %s592 = sand.u32 %s93, 1
        %s593 = smul.addr %s592, 16
        %s594 = scalar_lea.vmem [#allocation2], %s593
        // Predicated region
        $region33: #{unet_forward.21} parent=31 // pred_check
          %p595 = pneg %p103
        $region34: #{unet_forward.21} parent=31 // pred_check_branch
          %597 = sbr.rel (%p595) target = $region36
        $region35: #{unet_forward.21} parent=31 // pred_region
          %s599 = ssub.s32 256, 256
          %600 = vsyncadd %s591, %s599
          %s601 = smul.addr %s17, 2
          %s602 = smul.addr %s601, 128
          %s603 = scalar_lea.hbm %s3, %s602
          %s604 = sshll.u32 %s594, 4
          %s605 = int_to_ptr.vmem [resolvable:$true] %s604
          %610 = dma.vmem_to_hbm [thread:$0]  %s605, 256, %s603, %s591, 128, 128, 8
        $region36: #{unet_forward.21} parent=31 // pred_fallthru
          _
      $region32: #{unet_forward.21} parent=5 // pred_fallthru
        _
      %p611 = scmp.le.s32.totalorder 2, %s12
      // Predicated region
      $region37: #{unet_forward.21} parent=5 // pred_check
        %p612 = pneg %p611
      $region38: #{unet_forward.21} parent=5 // pred_check_branch
        %614 = sbr.rel (%p612) target = $region40
      $region39: #{unet_forward.21} parent=5 // pred_region
        %s615 = ssub.s32 %s12, 2
        // Predicated region
        $region41: #{unet_forward.21} parent=39 // pred_check
          %p616 = pneg %p109
        $region42: #{unet_forward.21} parent=39 // pred_check_branch
          %618 = sbr.rel (%p616) target = $region44
        $region43: #{unet_forward.21} parent=39 // pred_region
          %s619 = sand.u32 %s94, 1
          %s620 = scalar_lea.sflag [#allocation3], %s619
          %s621 = sand.u32 %s94, 1
          %s622 = smul.addr %s621, 16
          %s623 = scalar_lea.vmem [#allocation2], %s622
          %624 = dma.done %s620, 256
        $region44: #{unet_forward.21} parent=39 // pred_fallthru
          _
      $region40: #{unet_forward.21} parent=5 // pred_fallthru
        _
    $region6: #{unet_forward.21} parent=1 // loop_footer
      %s16 = sadd.s32 1, %s12
    $region7: #{unet_forward.21} parent=1 // loop_footer_branch
      %11 = sbr.rel target = $region3
    $region8: #{unet_forward.21} parent=1 // loop_exit
      _
    %625 = vsyncpa [#allocation3], 1
    %s626 = scalar_lea.sflag [#allocation3], 1
    %627 = vsyncpa %s626, 1

</llo_original>
